<compile_context>
chip_gen: v7x
topology: tpu7x:2x2x1
jax: 0.10.0
libtpu: 0.0.40
codegen_flags: <defaults>
</compile_context>

<pallas_src>
import functools

import numpy as np
import jax
import jax.numpy as jnp
from jax.experimental import pallas as pl
from jax.experimental.pallas import tpu as pltpu

# ---------------- synthetic config ----------------
CONV_NET_WIDTH = [4, 8, 16]
KERNEL_SIZE = [3, 3]
STRIDE = 1
POOLING_SHAPE = [2, 2]
BN_EPS = 1e-5
# input 16x16 -> pool -> 8x8 -> pool -> 4x4 ; flatten = 16*4*4 = 256
CNN_FC_NET_WIDTH = [16 * 4 * 4, 32, 1]

N_BLK = 8   # per-grid-step batch; (H/4)*(W/4)*N_BLK = 128 lanes after pool2


# ---------------- in-kernel building blocks ----------------
def _conv_bn_relu(x_cf, w_ref, shift_ref, masks_ref, col_ref, *, H, W, N, K):
    """3x3 'same' Conv2d + folded BatchNorm(eval) + ReLU as one im2col matmul.

    x_cf:      (Cin, H*W*N), lane index r = (h*W + w)*N + n
    w_ref:     (Cout, K*K*Cin)  -- BN scale already folded in
    shift_ref: (Cout, 1)        -- conv bias + BN shift folded
    masks_ref: (K*K, H*W*N)     -- precomputed 'same'-padding border masks
    col_ref:   (K*K*Cin, H*W*N) -- VMEM scratch for the im2col matrix
    returns    (Cout, H*W*N)."""
    n_pix = H * W * N
    cin = x_cf.shape[0]
    for kh in range(K):
        for kw in range(K):
            dh, dw = kh - (K - 1) // 2, kw - (K - 1) // 2
            t = kh * K + kw
            s = (dh * W + dw) * N
            v = x_cf if s == 0 else pltpu.roll(x_cf, shift=(-s) % n_pix, axis=1)
            if (dh, dw) != (0, 0):
                v = v * masks_ref[pl.ds(t, 1), :]      # zero out-of-image pixels
            col_ref[pl.ds(t * cin, cin), :] = v        # independent sublane store
    # one deep MXU contraction instead of 9 chained shallow ones
    acc = jnp.dot(w_ref[...], col_ref[...], preferred_element_type=jnp.float32)
    return jnp.maximum(acc + shift_ref[...], 0.0)      # +shift (bias+BN), ReLU


def _max_pool_2x2(y, sel_ref, *, W, N):
    """2x2 / stride-2 maxpool in the (C, H*W*N) layout.

    Two lane rolls + max put each window's max at its (even h, even w) pixel;
    a fixed 0/1 selection matrix compacts those lanes on the MXU. Kept in f32
    so pooled maxima are not rounded."""
    n_pix = y.shape[1]
    m = jnp.maximum(y, pltpu.roll(y, shift=(-N) % n_pix, axis=1))        # w, w+1
    m = jnp.maximum(m, pltpu.roll(m, shift=(-W * N) % n_pix, axis=1))    # h, h+1
    return jnp.dot(m, sel_ref[...], preferred_element_type=jnp.float32)


# ---------------- fused forward kernel ----------------
def _fused_forward_kernel(x_ref, w1_ref, sh1_ref, m1_ref, sel1_ref,
                          w2_ref, sh2_ref, m2_ref, sel2_ref,
                          wf1_ref, bf1_ref, wf2_ref, bf2_ref, o_ref,
                          col1_ref, col2_ref, xcol_ref, *, N, H, W, K):
    # ---- conv block 1: (C0, H*W*N) -> (C1, (H/2)*(W/2)*N)
    x = x_ref[...].reshape(x_ref.shape[1], x_ref.shape[2])
    y1 = _conv_bn_relu(x, w1_ref, sh1_ref, m1_ref, col1_ref,
                       H=H, W=W, N=N, K=K)
    p1 = _max_pool_2x2(y1, sel1_ref, W=W, N=N)
    H2, W2 = H // 2, W // 2

    # ---- conv block 2: (C1, ...) -> (C2, (H/4)*(W/4)*N)
    y2 = _conv_bn_relu(p1, w2_ref, sh2_ref, m2_ref, col2_ref,
                       H=H2, W=W2, N=N, K=K)
    p2 = _max_pool_2x2(y2, sel2_ref, W=W2, N=N)        # (C2, P*N)

    # ---- FC1 + ReLU: lane->sublane rearrangement, then ONE deep matmul.
    # wf1 was permuted offline to (F1, P*C2) (column = p*C2 + c), so xcol rows
    # are position-major / channel-minor. The P stores below are independent.
    c2 = p2.shape[0]
    P = p2.shape[1] // N
    for p in range(P):
        xcol_ref[pl.ds(p * c2, c2), :] = p2[:, p * N:(p + 1) * N]
    h1 = jnp.maximum(
        jnp.dot(wf1_ref[...], xcol_ref[...],
                preferred_element_type=jnp.float32) + bf1_ref[...], 0.0)  # (F1, N)

    # ---- FC2 + sigmoid (numerically stable tanh form, runs on the EUP).
    z = jnp.dot(wf2_ref[...], h1, preferred_element_type=jnp.float32) \
        + bf2_ref[...]                                                    # (1, N)
    o_ref[...] = (0.5 * (jnp.tanh(0.5 * z) + 1.0)).reshape(1, 1, z.shape[-1])


# ---------------- offline constants ----------------
def _tap_masks(H, W, N, K):
    """f32 (K*K, H*W*N) border masks for 'same' padding, lane r=(h*W+w)*N+n."""
    n_pix = H * W * N
    r = np.arange(n_pix)
    w = (r // N) % W
    h = r // (N * W)
    masks = np.zeros((K * K, n_pix), np.float32)
    for kh in range(K):
        for kw in range(K):
            dh, dw = kh - (K - 1) // 2, kw - (K - 1) // 2
            ok = (h + dh >= 0) & (h + dh < H) & (w + dw >= 0) & (w + dw < W)
            masks[kh * K + kw] = ok.astype(np.float32)
    return jnp.asarray(masks)


def _pool_select_matrix(H, W, N):
    """0/1 matrix mapping lane r=(h*W+w)*N+n to pooled lane q=(h2*(W/2)+w2)*N+n."""
    Ho, Wo = H // 2, W // 2
    S = np.zeros((H * W * N, Ho * Wo * N), np.float32)
    for h2 in range(Ho):
        for w2 in range(Wo):
            for n in range(N):
                S[(2 * h2 * W + 2 * w2) * N + n, (h2 * Wo + w2) * N + n] = 1.0
    return jnp.asarray(S)


def _const_spec(a):
    # Weights / masks / selection matrices: full block, same block every grid
    # step -> fetched once, resident in VMEM across the batch grid.
    return pl.BlockSpec(a.shape, lambda i: (0,) * a.ndim)


# ---------------- wrapper ----------------
def cnn_net_forward(x_nchw, params, *, n_blk=N_BLK):
    """Forward pass of CNN_net. x_nchw: (N, C, H, W), like the PyTorch module."""
    Nb, C0, H, W = x_nchw.shape
    K = KERNEL_SIZE[0]
    assert K % 2 == 1 and H % 4 == 0 and W % 4 == 0
    C1, C2 = CONV_NET_WIDTH[1], CONV_NET_WIDTH[2]

    # pad batch to a multiple of the per-step block
    n_pad = ((Nb + n_blk - 1) // n_blk) * n_blk
    nb = n_pad // n_blk
    x = x_nchw.astype(jnp.float32)
    if n_pad != Nb:
        x = jnp.concatenate(
            [x, jnp.zeros((n_pad - Nb, C0, H, W), jnp.float32)], axis=0)

    # (nb, C0, H*W*n_blk): lane index r = (h*W + w)*n_blk + n_local.
    # TODO(synk): at large batch, fuse this transpose into the upstream
    # producer (it is an extra HBM pass; negligible at batch=2).
    x_cf = x.reshape(nb, n_blk, C0, H, W).transpose(0, 2, 3, 4, 1) \
            .reshape(nb, C0, H * W * n_blk)

    c1p, c2p = params["conv"]
    f1p, f2p = params["fc"]
    masks1 = _tap_masks(H, W, n_blk, K)
    sel1 = _pool_select_matrix(H, W, n_blk)
    masks2 = _tap_masks(H // 2, W // 2, n_blk, K)
    sel2 = _pool_select_matrix(H // 2, W // 2, n_blk)

    args = (x_cf,
            c1p["w"], c1p["shift"], masks1, sel1,
            c2p["w"], c2p["shift"], masks2, sel2,
            f1p["w"], f1p["b"], f2p["w"], f2p["b"])

    P = (H // 4) * (W // 4)
    out = pl.pallas_call(
        functools.partial(_fused_forward_kernel, N=n_blk, H=H, W=W, K=K),
        out_shape=jax.ShapeDtypeStruct((nb, 1, n_blk), jnp.float32),
        grid=(nb,),
        in_specs=[pl.BlockSpec((1, C0, H * W * n_blk), lambda i: (i, 0, 0))]
                + [_const_spec(a) for a in args[1:]],
        out_specs=pl.BlockSpec((1, 1, n_blk), lambda i: (i, 0, 0)),
        scratch_shapes=[
            pltpu.VMEM((K * K * C0, H * W * n_blk), jnp.float32),            # im2col 1
            pltpu.VMEM((K * K * C1, (H // 2) * (W // 2) * n_blk), jnp.float32),  # im2col 2
            pltpu.VMEM((C2 * P, n_blk), jnp.float32),                        # FC1 xcol
        ],
        compiler_params=pltpu.CompilerParams(
            dimension_semantics=("parallel",),          # megacore-shardable batch
            vmem_limit_bytes=32 * 1024 * 1024),
    )(*args)
    return out.reshape(n_pad, 1)[:Nb]


# ---------------- parameter init (deterministic, PyTorch-like uniform) ----------------
def init_params(key):
    params = {"conv": [], "fc": []}
    for i in range(len(CONV_NET_WIDTH) - 1):
        cin, cout, k = CONV_NET_WIDTH[i], CONV_NET_WIDTH[i + 1], KERNEL_SIZE[i]
        key, kw_, kb_ = jax.random.split(key, 3)
        bound = 1.0 / np.sqrt(cin * k * k)
        w = jax.random.uniform(kw_, (k, k, cin, cout), jnp.float32, -bound, bound)
        b = jax.random.uniform(kb_, (cout,), jnp.float32, -bound, bound)
        # BatchNorm2d eval-mode defaults: gamma=1, beta=0, mean=0, var=1.
        gamma = jnp.ones((cout,), jnp.float32)
        beta = jnp.zeros((cout,), jnp.float32)
        r_mean = jnp.zeros((cout,), jnp.float32)
        r_var = jnp.ones((cout,), jnp.float32)
        scale = gamma / jnp.sqrt(r_var + BN_EPS)
        shift = beta + scale * (b - r_mean)             # conv bias + BN folded
        # Fold BN scale into the weight, flatten to (Cout, K*K*Cin),
        # column index = (kh*K + kw)*Cin + cin  (matches im2col row order).
        w_folded = w * scale[None, None, None, :]
        w_flat = jnp.transpose(w_folded, (3, 0, 1, 2)).reshape(cout, k * k * cin)
        params["conv"].append(dict(w=w_flat, shift=shift.reshape(cout, 1)))

    # FC layers. torch.flatten(x, 1) flattens NCHW as j = c*P + p; the kernel's
    # xcol rows are p*C + c, so the first FC weight is permuted ONCE here.
    c_last = CONV_NET_WIDTH[-1]
    p_last = CNN_FC_NET_WIDTH[0] // c_last
    for i in range(len(CNN_FC_NET_WIDTH) - 1):
        fin, fout = CNN_FC_NET_WIDTH[i], CNN_FC_NET_WIDTH[i + 1]
        key, kw_, kb_ = jax.random.split(key, 3)
        bound = 1.0 / np.sqrt(fin)
        w = jax.random.uniform(kw_, (fin, fout), jnp.float32, -bound, bound)
        b = jax.random.uniform(kb_, (fout,), jnp.float32, -bound, bound)
        if i == 0:
            w_k = jnp.transpose(w.reshape(c_last, p_last, fout), (2, 1, 0)) \
                     .reshape(fout, p_last * c_last)          # (F1, P*C2)
            params["fc"].append(dict(w=w_k, b=b.reshape(fout, 1)))
        else:
            params["fc"].append(dict(w=jnp.transpose(w),      # (Fout, Fin)
                                     b=b.reshape(fout, 1)))
    return params


if __name__ == "__main__":
    key = jax.random.PRNGKey(0)
    key, kparam, kx = jax.random.split(key, 3)
    params = init_params(kparam)
    # small deterministic input: batch=2, channels=4, spatial=16x16 (NCHW)
    x = jax.random.normal(kx, (2, CONV_NET_WIDTH[0], 16, 16), jnp.float32)
    out = cnn_net_forward(x, params)
    out = jax.block_until_ready(out)
    assert out.shape == (2, CNN_FC_NET_WIDTH[-1])
    assert bool(jnp.all(jnp.isfinite(out)))
    assert bool(jnp.all((out >= 0.0) & (out <= 1.0)))  # sigmoid range
    print("KERNEL_OK")
</pallas_src>

<mosaic_0001>
module attributes {stable_mosaic.version = 11 : i64} {
  func.func @_fused_forward_kernel(%arg0: i32, %arg1: memref<1x4x2048xf32, #tpu.memory_space<vmem>>, %arg2: memref<8x36xf32, #tpu.memory_space<vmem>>, %arg3: memref<8x1xf32, #tpu.memory_space<vmem>>, %arg4: memref<9x2048xf32, #tpu.memory_space<vmem>>, %arg5: memref<2048x512xf32, #tpu.memory_space<vmem>>, %arg6: memref<16x72xf32, #tpu.memory_space<vmem>>, %arg7: memref<16x1xf32, #tpu.memory_space<vmem>>, %arg8: memref<9x512xf32, #tpu.memory_space<vmem>>, %arg9: memref<512x128xf32, #tpu.memory_space<vmem>>, %arg10: memref<32x256xf32, #tpu.memory_space<vmem>>, %arg11: memref<32x1xf32, #tpu.memory_space<vmem>>, %arg12: memref<1x32xf32, #tpu.memory_space<vmem>>, %arg13: memref<1x1xf32, #tpu.memory_space<vmem>>, %arg14: memref<1x1x8xf32, #tpu.memory_space<vmem>>, %arg15: memref<36x2048xf32, #tpu.memory_space<vmem>>, %arg16: memref<72x512xf32, #tpu.memory_space<vmem>>, %arg17: memref<256x8xf32, #tpu.memory_space<vmem>>) attributes {dimension_semantics = [#tpu.dimension_semantics<parallel>], iteration_bounds = array<i64: 1>, scalar_prefetch = 0 : i64, scratch_operands = 3 : i64, tpu.core_type = #tpu.core_type<tc>, window_params = [{transform_indices = @transform_0, window_bounds = array<i64: 1, 4, 2048>}, {pipeline_mode = #tpu.pipeline_mode<synchronous>, transform_indices = @transform_1, window_bounds = array<i64: 8, 36>}, {pipeline_mode = #tpu.pipeline_mode<synchronous>, transform_indices = @transform_2, window_bounds = array<i64: 8, 1>}, {pipeline_mode = #tpu.pipeline_mode<synchronous>, transform_indices = @transform_3, window_bounds = array<i64: 9, 2048>}, {pipeline_mode = #tpu.pipeline_mode<synchronous>, transform_indices = @transform_4, window_bounds = array<i64: 2048, 512>}, {pipeline_mode = #tpu.pipeline_mode<synchronous>, transform_indices = @transform_5, window_bounds = array<i64: 16, 72>}, {pipeline_mode = #tpu.pipeline_mode<synchronous>, transform_indices = @transform_6, window_bounds = array<i64: 16, 1>}, {pipeline_mode = #tpu.pipeline_mode<synchronous>, transform_indices = @transform_7, window_bounds = array<i64: 9, 512>}, {pipeline_mode = #tpu.pipeline_mode<synchronous>, transform_indices = @transform_8, window_bounds = array<i64: 512, 128>}, {pipeline_mode = #tpu.pipeline_mode<synchronous>, transform_indices = @transform_9, window_bounds = array<i64: 32, 256>}, {pipeline_mode = #tpu.pipeline_mode<synchronous>, transform_indices = @transform_10, window_bounds = array<i64: 32, 1>}, {pipeline_mode = #tpu.pipeline_mode<synchronous>, transform_indices = @transform_11, window_bounds = array<i64: 1, 32>}, {pipeline_mode = #tpu.pipeline_mode<synchronous>, transform_indices = @transform_12, window_bounds = array<i64: 1, 1>}, {transform_indices = @transform_13, window_bounds = array<i64: 1, 1, 8>}]} {
    %c0 = arith.constant 0 : index
    %c0_0 = arith.constant 0 : index
    %c0_1 = arith.constant 0 : index
    %0 = vector.load %arg1[%c0, %c0_0, %c0_1] : memref<1x4x2048xf32, #tpu.memory_space<vmem>>, vector<1x4x2048xf32>
    %1 = vector.shape_cast %0 : vector<1x4x2048xf32> to vector<4x2048xf32>
    %c136_i32 = arith.constant 136 : i32
    %2 = tpu.dynamic_rotate %1 by %c136_i32 dim 1 : vector<4x2048xf32>, i32 -> vector<4x2048xf32>
    %c0_2 = arith.constant 0 : index
    %c0_3 = arith.constant 0 : index
    %3 = vector.load %arg4[%c0_2, %c0_3] : memref<9x2048xf32, #tpu.memory_space<vmem>>, vector<1x2048xf32>
    %4 = vector.broadcast %3 : vector<1x2048xf32> to vector<4x2048xf32>
    %5 = arith.mulf %2, %4 : vector<4x2048xf32>
    %c0_4 = arith.constant 0 : index
    %c0_5 = arith.constant 0 : index
    %6 = vector.load %arg15[%c0_4, %c0_5] : memref<36x2048xf32, #tpu.memory_space<vmem>>, vector<4x2048xf32>
    tpu.vector_store %arg15[%c0_4, %c0_5], %5 {strides = array<i32>} : memref<36x2048xf32, #tpu.memory_space<vmem>>, vector<4x2048xf32>,
    %c128_i32 = arith.constant 128 : i32
    %7 = tpu.dynamic_rotate %1 by %c128_i32 dim 1 : vector<4x2048xf32>, i32 -> vector<4x2048xf32>
    %c1 = arith.constant 1 : index
    %c0_6 = arith.constant 0 : index
    %8 = vector.load %arg4[%c1, %c0_6] : memref<9x2048xf32, #tpu.memory_space<vmem>>, vector<1x2048xf32>
    %9 = vector.broadcast %8 : vector<1x2048xf32> to vector<4x2048xf32>
    %10 = arith.mulf %7, %9 : vector<4x2048xf32>
    %c4 = arith.constant 4 : index
    %c0_7 = arith.constant 0 : index
    %11 = vector.load %arg15[%c4, %c0_7] : memref<36x2048xf32, #tpu.memory_space<vmem>>, vector<4x2048xf32>
    tpu.vector_store %arg15[%c4, %c0_7], %10 {strides = array<i32>} : memref<36x2048xf32, #tpu.memory_space<vmem>>, vector<4x2048xf32>,
    %c120_i32 = arith.constant 120 : i32
    %12 = tpu.dynamic_rotate %1 by %c120_i32 dim 1 : vector<4x2048xf32>, i32 -> vector<4x2048xf32>
    %c2 = arith.constant 2 : index
    %c0_8 = arith.constant 0 : index
    %13 = vector.load %arg4[%c2, %c0_8] : memref<9x2048xf32, #tpu.memory_space<vmem>>, vector<1x2048xf32>
    %14 = vector.broadcast %13 : vector<1x2048xf32> to vector<4x2048xf32>
    %15 = arith.mulf %12, %14 : vector<4x2048xf32>
    %c8 = arith.constant 8 : index
    %c0_9 = arith.constant 0 : index
    %16 = vector.load %arg15[%c8, %c0_9] : memref<36x2048xf32, #tpu.memory_space<vmem>>, vector<4x2048xf32>
    tpu.vector_store %arg15[%c8, %c0_9], %15 {strides = array<i32>} : memref<36x2048xf32, #tpu.memory_space<vmem>>, vector<4x2048xf32>,
    %c8_i32 = arith.constant 8 : i32
    %17 = tpu.dynamic_rotate %1 by %c8_i32 dim 1 : vector<4x2048xf32>, i32 -> vector<4x2048xf32>
    %c3 = arith.constant 3 : index
    %c0_10 = arith.constant 0 : index
    %18 = vector.load %arg4[%c3, %c0_10] : memref<9x2048xf32, #tpu.memory_space<vmem>>, vector<1x2048xf32>
    %19 = vector.broadcast %18 : vector<1x2048xf32> to vector<4x2048xf32>
    %20 = arith.mulf %17, %19 : vector<4x2048xf32>
    %c12 = arith.constant 12 : index
    %c0_11 = arith.constant 0 : index
    %21 = vector.load %arg15[%c12, %c0_11] : memref<36x2048xf32, #tpu.memory_space<vmem>>, vector<4x2048xf32>
    tpu.vector_store %arg15[%c12, %c0_11], %20 {strides = array<i32>} : memref<36x2048xf32, #tpu.memory_space<vmem>>, vector<4x2048xf32>,
    %c16 = arith.constant 16 : index
    %c0_12 = arith.constant 0 : index
    %22 = vector.load %arg15[%c16, %c0_12] : memref<36x2048xf32, #tpu.memory_space<vmem>>, vector<4x2048xf32>
    tpu.vector_store %arg15[%c16, %c0_12], %1 {strides = array<i32>} : memref<36x2048xf32, #tpu.memory_space<vmem>>, vector<4x2048xf32>,
    %c2040_i32 = arith.constant 2040 : i32
    %23 = tpu.dynamic_rotate %1 by %c2040_i32 dim 1 : vector<4x2048xf32>, i32 -> vector<4x2048xf32>
    %c5 = arith.constant 5 : index
    %c0_13 = arith.constant 0 : index
    %24 = vector.load %arg4[%c5, %c0_13] : memref<9x2048xf32, #tpu.memory_space<vmem>>, vector<1x2048xf32>
    %25 = vector.broadcast %24 : vector<1x2048xf32> to vector<4x2048xf32>
    %26 = arith.mulf %23, %25 : vector<4x2048xf32>
    %c20 = arith.constant 20 : index
    %c0_14 = arith.constant 0 : index
    %27 = vector.load %arg15[%c20, %c0_14] : memref<36x2048xf32, #tpu.memory_space<vmem>>, vector<4x2048xf32>
    tpu.vector_store %arg15[%c20, %c0_14], %26 {strides = array<i32>} : memref<36x2048xf32, #tpu.memory_space<vmem>>, vector<4x2048xf32>,
    %c1928_i32 = arith.constant 1928 : i32
    %28 = tpu.dynamic_rotate %1 by %c1928_i32 dim 1 : vector<4x2048xf32>, i32 -> vector<4x2048xf32>
    %c6 = arith.constant 6 : index
    %c0_15 = arith.constant 0 : index
    %29 = vector.load %arg4[%c6, %c0_15] : memref<9x2048xf32, #tpu.memory_space<vmem>>, vector<1x2048xf32>
    %30 = vector.broadcast %29 : vector<1x2048xf32> to vector<4x2048xf32>
    %31 = arith.mulf %28, %30 : vector<4x2048xf32>
    %c24 = arith.constant 24 : index
    %c0_16 = arith.constant 0 : index
    %32 = vector.load %arg15[%c24, %c0_16] : memref<36x2048xf32, #tpu.memory_space<vmem>>, vector<4x2048xf32>
    tpu.vector_store %arg15[%c24, %c0_16], %31 {strides = array<i32>} : memref<36x2048xf32, #tpu.memory_space<vmem>>, vector<4x2048xf32>,
    %c1920_i32 = arith.constant 1920 : i32
    %33 = tpu.dynamic_rotate %1 by %c1920_i32 dim 1 : vector<4x2048xf32>, i32 -> vector<4x2048xf32>
    %c7 = arith.constant 7 : index
    %c0_17 = arith.constant 0 : index
    %34 = vector.load %arg4[%c7, %c0_17] : memref<9x2048xf32, #tpu.memory_space<vmem>>, vector<1x2048xf32>
    %35 = vector.broadcast %34 : vector<1x2048xf32> to vector<4x2048xf32>
    %36 = arith.mulf %33, %35 : vector<4x2048xf32>
    %c28 = arith.constant 28 : index
    %c0_18 = arith.constant 0 : index
    %37 = vector.load %arg15[%c28, %c0_18] : memref<36x2048xf32, #tpu.memory_space<vmem>>, vector<4x2048xf32>
    tpu.vector_store %arg15[%c28, %c0_18], %36 {strides = array<i32>} : memref<36x2048xf32, #tpu.memory_space<vmem>>, vector<4x2048xf32>,
    %c1912_i32 = arith.constant 1912 : i32
    %38 = tpu.dynamic_rotate %1 by %c1912_i32 dim 1 : vector<4x2048xf32>, i32 -> vector<4x2048xf32>
    %c8_19 = arith.constant 8 : index
    %c0_20 = arith.constant 0 : index
    %39 = vector.load %arg4[%c8_19, %c0_20] : memref<9x2048xf32, #tpu.memory_space<vmem>>, vector<1x2048xf32>
    %40 = vector.broadcast %39 : vector<1x2048xf32> to vector<4x2048xf32>
    %41 = arith.mulf %38, %40 : vector<4x2048xf32>
    %c32 = arith.constant 32 : index
    %c0_21 = arith.constant 0 : index
    %42 = vector.load %arg15[%c32, %c0_21] : memref<36x2048xf32, #tpu.memory_space<vmem>>, vector<4x2048xf32>
    tpu.vector_store %arg15[%c32, %c0_21], %41 {strides = array<i32>} : memref<36x2048xf32, #tpu.memory_space<vmem>>, vector<4x2048xf32>,
    %c0_22 = arith.constant 0 : index
    %c0_23 = arith.constant 0 : index
    %43 = vector.load %arg2[%c0_22, %c0_23] : memref<8x36xf32, #tpu.memory_space<vmem>>, vector<8x36xf32>
    %c0_24 = arith.constant 0 : index
    %c0_25 = arith.constant 0 : index
    %44 = vector.load %arg15[%c0_24, %c0_25] : memref<36x2048xf32, #tpu.memory_space<vmem>>, vector<36x2048xf32>
    %cst = arith.constant dense<0.000000e+00> : vector<8x2048xf32>
    %45 = tpu.matmul %43, %44, %cst {dimension_numbers = #tpu.dot_dimension_numbers<[1], [0], [0], [1], [0, 0, 1, 1], [], []>} : vector<8x36xf32>, vector<36x2048xf32>, vector<8x2048xf32> -> vector<8x2048xf32>
    %c0_26 = arith.constant 0 : index
    %c0_27 = arith.constant 0 : index
    %46 = vector.load %arg3[%c0_26, %c0_27] : memref<8x1xf32, #tpu.memory_space<vmem>>, vector<8x1xf32>
    %47 = vector.broadcast %46 : vector<8x1xf32> to vector<8x2048xf32>
    %48 = arith.addf %45, %47 : vector<8x2048xf32>
    %cst_28 = arith.constant 0.000000e+00 : f32
    %49 = vector.broadcast %cst_28 : f32 to vector<8x2048xf32>
    %50 = arith.maximumf %48, %49 : vector<8x2048xf32>
    %c2040_i32_29 = arith.constant 2040 : i32
    %51 = tpu.dynamic_rotate %50 by %c2040_i32_29 dim 1 : vector<8x2048xf32>, i32 -> vector<8x2048xf32>
    %52 = arith.maximumf %50, %51 : vector<8x2048xf32>
    %c1920_i32_30 = arith.constant 1920 : i32
    %53 = tpu.dynamic_rotate %52 by %c1920_i32_30 dim 1 : vector<8x2048xf32>, i32 -> vector<8x2048xf32>
    %54 = arith.maximumf %52, %53 : vector<8x2048xf32>
    %c0_31 = arith.constant 0 : index
    %c0_32 = arith.constant 0 : index
    %55 = vector.load %arg5[%c0_31, %c0_32] : memref<2048x512xf32, #tpu.memory_space<vmem>>, vector<2048x512xf32>
    %cst_33 = arith.constant dense<0.000000e+00> : vector<8x512xf32>
    %56 = tpu.matmul %54, %55, %cst_33 {dimension_numbers = #tpu.dot_dimension_numbers<[1], [0], [0], [1], [0, 0, 1, 1], [], []>} : vector<8x2048xf32>, vector<2048x512xf32>, vector<8x512xf32> -> vector<8x512xf32>
    %c72_i32 = arith.constant 72 : i32
    %57 = tpu.dynamic_rotate %56 by %c72_i32 dim 1 : vector<8x512xf32>, i32 -> vector<8x512xf32>
    %c0_34 = arith.constant 0 : index
    %c0_35 = arith.constant 0 : index
    %58 = vector.load %arg8[%c0_34, %c0_35] : memref<9x512xf32, #tpu.memory_space<vmem>>, vector<1x512xf32>
    %59 = vector.broadcast %58 : vector<1x512xf32> to vector<8x512xf32>
    %60 = arith.mulf %57, %59 : vector<8x512xf32>
    %c0_36 = arith.constant 0 : index
    %c0_37 = arith.constant 0 : index
    %61 = vector.load %arg16[%c0_36, %c0_37] : memref<72x512xf32, #tpu.memory_space<vmem>>, vector<8x512xf32>
    tpu.vector_store %arg16[%c0_36, %c0_37], %60 {strides = array<i32>} : memref<72x512xf32, #tpu.memory_space<vmem>>, vector<8x512xf32>,
    %c64_i32 = arith.constant 64 : i32
    %62 = tpu.dynamic_rotate %56 by %c64_i32 dim 1 : vector<8x512xf32>, i32 -> vector<8x512xf32>
    %c1_38 = arith.constant 1 : index
    %c0_39 = arith.constant 0 : index
    %63 = vector.load %arg8[%c1_38, %c0_39] : memref<9x512xf32, #tpu.memory_space<vmem>>, vector<1x512xf32>
    %64 = vector.broadcast %63 : vector<1x512xf32> to vector<8x512xf32>
    %65 = arith.mulf %62, %64 : vector<8x512xf32>
    %c8_40 = arith.constant 8 : index
    %c0_41 = arith.constant 0 : index
    %66 = vector.load %arg16[%c8_40, %c0_41] : memref<72x512xf32, #tpu.memory_space<vmem>>, vector<8x512xf32>
    tpu.vector_store %arg16[%c8_40, %c0_41], %65 {strides = array<i32>} : memref<72x512xf32, #tpu.memory_space<vmem>>, vector<8x512xf32>,
    %c56_i32 = arith.constant 56 : i32
    %67 = tpu.dynamic_rotate %56 by %c56_i32 dim 1 : vector<8x512xf32>, i32 -> vector<8x512xf32>
    %c2_42 = arith.constant 2 : index
    %c0_43 = arith.constant 0 : index
    %68 = vector.load %arg8[%c2_42, %c0_43] : memref<9x512xf32, #tpu.memory_space<vmem>>, vector<1x512xf32>
    %69 = vector.broadcast %68 : vector<1x512xf32> to vector<8x512xf32>
    %70 = arith.mulf %67, %69 : vector<8x512xf32>
    %c16_44 = arith.constant 16 : index
    %c0_45 = arith.constant 0 : index
    %71 = vector.load %arg16[%c16_44, %c0_45] : memref<72x512xf32, #tpu.memory_space<vmem>>, vector<8x512xf32>
    tpu.vector_store %arg16[%c16_44, %c0_45], %70 {strides = array<i32>} : memref<72x512xf32, #tpu.memory_space<vmem>>, vector<8x512xf32>,
    %c8_i32_46 = arith.constant 8 : i32
    %72 = tpu.dynamic_rotate %56 by %c8_i32_46 dim 1 : vector<8x512xf32>, i32 -> vector<8x512xf32>
    %c3_47 = arith.constant 3 : index
    %c0_48 = arith.constant 0 : index
    %73 = vector.load %arg8[%c3_47, %c0_48] : memref<9x512xf32, #tpu.memory_space<vmem>>, vector<1x512xf32>
    %74 = vector.broadcast %73 : vector<1x512xf32> to vector<8x512xf32>
    %75 = arith.mulf %72, %74 : vector<8x512xf32>
    %c24_49 = arith.constant 24 : index
    %c0_50 = arith.constant 0 : index
    %76 = vector.load %arg16[%c24_49, %c0_50] : memref<72x512xf32, #tpu.memory_space<vmem>>, vector<8x512xf32>
    tpu.vector_store %arg16[%c24_49, %c0_50], %75 {strides = array<i32>} : memref<72x512xf32, #tpu.memory_space<vmem>>, vector<8x512xf32>,
    %c32_51 = arith.constant 32 : index
    %c0_52 = arith.constant 0 : index
    %77 = vector.load %arg16[%c32_51, %c0_52] : memref<72x512xf32, #tpu.memory_space<vmem>>, vector<8x512xf32>
    tpu.vector_store %arg16[%c32_51, %c0_52], %56 {strides = array<i32>} : memref<72x512xf32, #tpu.memory_space<vmem>>, vector<8x512xf32>,
    %c504_i32 = arith.constant 504 : i32
    %78 = tpu.dynamic_rotate %56 by %c504_i32 dim 1 : vector<8x512xf32>, i32 -> vector<8x512xf32>
    %c5_53 = arith.constant 5 : index
    %c0_54 = arith.constant 0 : index
    %79 = vector.load %arg8[%c5_53, %c0_54] : memref<9x512xf32, #tpu.memory_space<vmem>>, vector<1x512xf32>
    %80 = vector.broadcast %79 : vector<1x512xf32> to vector<8x512xf32>
    %81 = arith.mulf %78, %80 : vector<8x512xf32>
    %c40 = arith.constant 40 : index
    %c0_55 = arith.constant 0 : index
    %82 = vector.load %arg16[%c40, %c0_55] : memref<72x512xf32, #tpu.memory_space<vmem>>, vector<8x512xf32>
    tpu.vector_store %arg16[%c40, %c0_55], %81 {strides = array<i32>} : memref<72x512xf32, #tpu.memory_space<vmem>>, vector<8x512xf32>,
    %c456_i32 = arith.constant 456 : i32
    %83 = tpu.dynamic_rotate %56 by %c456_i32 dim 1 : vector<8x512xf32>, i32 -> vector<8x512xf32>
    %c6_56 = arith.constant 6 : index
    %c0_57 = arith.constant 0 : index
    %84 = vector.load %arg8[%c6_56, %c0_57] : memref<9x512xf32, #tpu.memory_space<vmem>>, vector<1x512xf32>
    %85 = vector.broadcast %84 : vector<1x512xf32> to vector<8x512xf32>
    %86 = arith.mulf %83, %85 : vector<8x512xf32>
    %c48 = arith.constant 48 : index
    %c0_58 = arith.constant 0 : index
    %87 = vector.load %arg16[%c48, %c0_58] : memref<72x512xf32, #tpu.memory_space<vmem>>, vector<8x512xf32>
    tpu.vector_store %arg16[%c48, %c0_58], %86 {strides = array<i32>} : memref<72x512xf32, #tpu.memory_space<vmem>>, vector<8x512xf32>,
    %c448_i32 = arith.constant 448 : i32
    %88 = tpu.dynamic_rotate %56 by %c448_i32 dim 1 : vector<8x512xf32>, i32 -> vector<8x512xf32>
    %c7_59 = arith.constant 7 : index
    %c0_60 = arith.constant 0 : index
    %89 = vector.load %arg8[%c7_59, %c0_60] : memref<9x512xf32, #tpu.memory_space<vmem>>, vector<1x512xf32>
    %90 = vector.broadcast %89 : vector<1x512xf32> to vector<8x512xf32>
    %91 = arith.mulf %88, %90 : vector<8x512xf32>
    %c56 = arith.constant 56 : index
    %c0_61 = arith.constant 0 : index
    %92 = vector.load %arg16[%c56, %c0_61] : memref<72x512xf32, #tpu.memory_space<vmem>>, vector<8x512xf32>
    tpu.vector_store %arg16[%c56, %c0_61], %91 {strides = array<i32>} : memref<72x512xf32, #tpu.memory_space<vmem>>, vector<8x512xf32>,
    %c440_i32 = arith.constant 440 : i32
    %93 = tpu.dynamic_rotate %56 by %c440_i32 dim 1 : vector<8x512xf32>, i32 -> vector<8x512xf32>
    %c8_62 = arith.constant 8 : index
    %c0_63 = arith.constant 0 : index
    %94 = vector.load %arg8[%c8_62, %c0_63] : memref<9x512xf32, #tpu.memory_space<vmem>>, vector<1x512xf32>
    %95 = vector.broadcast %94 : vector<1x512xf32> to vector<8x512xf32>
    %96 = arith.mulf %93, %95 : vector<8x512xf32>
    %c64 = arith.constant 64 : index
    %c0_64 = arith.constant 0 : index
    %97 = vector.load %arg16[%c64, %c0_64] : memref<72x512xf32, #tpu.memory_space<vmem>>, vector<8x512xf32>
    tpu.vector_store %arg16[%c64, %c0_64], %96 {strides = array<i32>} : memref<72x512xf32, #tpu.memory_space<vmem>>, vector<8x512xf32>,
    %c0_65 = arith.constant 0 : index
    %c0_66 = arith.constant 0 : index
    %98 = vector.load %arg6[%c0_65, %c0_66] : memref<16x72xf32, #tpu.memory_space<vmem>>, vector<16x72xf32>
    %c0_67 = arith.constant 0 : index
    %c0_68 = arith.constant 0 : index
    %99 = vector.load %arg16[%c0_67, %c0_68] : memref<72x512xf32, #tpu.memory_space<vmem>>, vector<72x512xf32>
    %cst_69 = arith.constant dense<0.000000e+00> : vector<16x512xf32>
    %100 = tpu.matmul %98, %99, %cst_69 {dimension_numbers = #tpu.dot_dimension_numbers<[1], [0], [0], [1], [0, 0, 1, 1], [], []>} : vector<16x72xf32>, vector<72x512xf32>, vector<16x512xf32> -> vector<16x512xf32>
    %c0_70 = arith.constant 0 : index
    %c0_71 = arith.constant 0 : index
    %101 = vector.load %arg7[%c0_70, %c0_71] : memref<16x1xf32, #tpu.memory_space<vmem>>, vector<16x1xf32>
    %102 = vector.broadcast %101 : vector<16x1xf32> to vector<16x512xf32>
    %103 = arith.addf %100, %102 : vector<16x512xf32>
    %cst_72 = arith.constant 0.000000e+00 : f32
    %104 = vector.broadcast %cst_72 : f32 to vector<16x512xf32>
    %105 = arith.maximumf %103, %104 : vector<16x512xf32>
    %c504_i32_73 = arith.constant 504 : i32
    %106 = tpu.dynamic_rotate %105 by %c504_i32_73 dim 1 : vector<16x512xf32>, i32 -> vector<16x512xf32>
    %107 = arith.maximumf %105, %106 : vector<16x512xf32>
    %c448_i32_74 = arith.constant 448 : i32
    %108 = tpu.dynamic_rotate %107 by %c448_i32_74 dim 1 : vector<16x512xf32>, i32 -> vector<16x512xf32>
    %109 = arith.maximumf %107, %108 : vector<16x512xf32>
    %c0_75 = arith.constant 0 : index
    %c0_76 = arith.constant 0 : index
    %110 = vector.load %arg9[%c0_75, %c0_76] : memref<512x128xf32, #tpu.memory_space<vmem>>, vector<512x128xf32>
    %cst_77 = arith.constant dense<0.000000e+00> : vector<16x128xf32>
    %111 = tpu.matmul %109, %110, %cst_77 {dimension_numbers = #tpu.dot_dimension_numbers<[1], [0], [0], [1], [0, 0, 1, 1], [], []>} : vector<16x512xf32>, vector<512x128xf32>, vector<16x128xf32> -> vector<16x128xf32>
    %112 = vector.extract_strided_slice %111 {offsets = [0, 0], sizes = [16, 8], strides = [1, 1]} : vector<16x128xf32> to vector<16x8xf32>
    %c0_78 = arith.constant 0 : index
    %c0_79 = arith.constant 0 : index
    %113 = vector.load %arg17[%c0_78, %c0_79] : memref<256x8xf32, #tpu.memory_space<vmem>>, vector<16x8xf32>
    tpu.vector_store %arg17[%c0_78, %c0_79], %112 {strides = array<i32>} : memref<256x8xf32, #tpu.memory_space<vmem>>, vector<16x8xf32>,
    %114 = vector.extract_strided_slice %111 {offsets = [0, 8], sizes = [16, 8], strides = [1, 1]} : vector<16x128xf32> to vector<16x8xf32>
    %c16_80 = arith.constant 16 : index
    %c0_81 = arith.constant 0 : index
    %115 = vector.load %arg17[%c16_80, %c0_81] : memref<256x8xf32, #tpu.memory_space<vmem>>, vector<16x8xf32>
    tpu.vector_store %arg17[%c16_80, %c0_81], %114 {strides = array<i32>} : memref<256x8xf32, #tpu.memory_space<vmem>>, vector<16x8xf32>,
    %116 = vector.extract_strided_slice %111 {offsets = [0, 16], sizes = [16, 8], strides = [1, 1]} : vector<16x128xf32> to vector<16x8xf32>
    %c32_82 = arith.constant 32 : index
    %c0_83 = arith.constant 0 : index
    %117 = vector.load %arg17[%c32_82, %c0_83] : memref<256x8xf32, #tpu.memory_space<vmem>>, vector<16x8xf32>
    tpu.vector_store %arg17[%c32_82, %c0_83], %116 {strides = array<i32>} : memref<256x8xf32, #tpu.memory_space<vmem>>, vector<16x8xf32>,
    %118 = vector.extract_strided_slice %111 {offsets = [0, 24], sizes = [16, 8], strides = [1, 1]} : vector<16x128xf32> to vector<16x8xf32>
    %c48_84 = arith.constant 48 : index
    %c0_85 = arith.constant 0 : index
    %119 = vector.load %arg17[%c48_84, %c0_85] : memref<256x8xf32, #tpu.memory_space<vmem>>, vector<16x8xf32>
    tpu.vector_store %arg17[%c48_84, %c0_85], %118 {strides = array<i32>} : memref<256x8xf32, #tpu.memory_space<vmem>>, vector<16x8xf32>,
    %120 = vector.extract_strided_slice %111 {offsets = [0, 32], sizes = [16, 8], strides = [1, 1]} : vector<16x128xf32> to vector<16x8xf32>
    %c64_86 = arith.constant 64 : index
    %c0_87 = arith.constant 0 : index
    %121 = vector.load %arg17[%c64_86, %c0_87] : memref<256x8xf32, #tpu.memory_space<vmem>>, vector<16x8xf32>
    tpu.vector_store %arg17[%c64_86, %c0_87], %120 {strides = array<i32>} : memref<256x8xf32, #tpu.memory_space<vmem>>, vector<16x8xf32>,
    %122 = vector.extract_strided_slice %111 {offsets = [0, 40], sizes = [16, 8], strides = [1, 1]} : vector<16x128xf32> to vector<16x8xf32>
    %c80 = arith.constant 80 : index
    %c0_88 = arith.constant 0 : index
    %123 = vector.load %arg17[%c80, %c0_88] : memref<256x8xf32, #tpu.memory_space<vmem>>, vector<16x8xf32>
    tpu.vector_store %arg17[%c80, %c0_88], %122 {strides = array<i32>} : memref<256x8xf32, #tpu.memory_space<vmem>>, vector<16x8xf32>,
    %124 = vector.extract_strided_slice %111 {offsets = [0, 48], sizes = [16, 8], strides = [1, 1]} : vector<16x128xf32> to vector<16x8xf32>
    %c96 = arith.constant 96 : index
    %c0_89 = arith.constant 0 : index
    %125 = vector.load %arg17[%c96, %c0_89] : memref<256x8xf32, #tpu.memory_space<vmem>>, vector<16x8xf32>
    tpu.vector_store %arg17[%c96, %c0_89], %124 {strides = array<i32>} : memref<256x8xf32, #tpu.memory_space<vmem>>, vector<16x8xf32>,
    %126 = vector.extract_strided_slice %111 {offsets = [0, 56], sizes = [16, 8], strides = [1, 1]} : vector<16x128xf32> to vector<16x8xf32>
    %c112 = arith.constant 112 : index
    %c0_90 = arith.constant 0 : index
    %127 = vector.load %arg17[%c112, %c0_90] : memref<256x8xf32, #tpu.memory_space<vmem>>, vector<16x8xf32>
    tpu.vector_store %arg17[%c112, %c0_90], %126 {strides = array<i32>} : memref<256x8xf32, #tpu.memory_space<vmem>>, vector<16x8xf32>,
    %128 = vector.extract_strided_slice %111 {offsets = [0, 64], sizes = [16, 8], strides = [1, 1]} : vector<16x128xf32> to vector<16x8xf32>
    %c128 = arith.constant 128 : index
    %c0_91 = arith.constant 0 : index
    %129 = vector.load %arg17[%c128, %c0_91] : memref<256x8xf32, #tpu.memory_space<vmem>>, vector<16x8xf32>
    tpu.vector_store %arg17[%c128, %c0_91], %128 {strides = array<i32>} : memref<256x8xf32, #tpu.memory_space<vmem>>, vector<16x8xf32>,
    %130 = vector.extract_strided_slice %111 {offsets = [0, 72], sizes = [16, 8], strides = [1, 1]} : vector<16x128xf32> to vector<16x8xf32>
    %c144 = arith.constant 144 : index
    %c0_92 = arith.constant 0 : index
    %131 = vector.load %arg17[%c144, %c0_92] : memref<256x8xf32, #tpu.memory_space<vmem>>, vector<16x8xf32>
    tpu.vector_store %arg17[%c144, %c0_92], %130 {strides = array<i32>} : memref<256x8xf32, #tpu.memory_space<vmem>>, vector<16x8xf32>,
    %132 = vector.extract_strided_slice %111 {offsets = [0, 80], sizes = [16, 8], strides = [1, 1]} : vector<16x128xf32> to vector<16x8xf32>
    %c160 = arith.constant 160 : index
    %c0_93 = arith.constant 0 : index
    %133 = vector.load %arg17[%c160, %c0_93] : memref<256x8xf32, #tpu.memory_space<vmem>>, vector<16x8xf32>
    tpu.vector_store %arg17[%c160, %c0_93], %132 {strides = array<i32>} : memref<256x8xf32, #tpu.memory_space<vmem>>, vector<16x8xf32>,
    %134 = vector.extract_strided_slice %111 {offsets = [0, 88], sizes = [16, 8], strides = [1, 1]} : vector<16x128xf32> to vector<16x8xf32>
    %c176 = arith.constant 176 : index
    %c0_94 = arith.constant 0 : index
    %135 = vector.load %arg17[%c176, %c0_94] : memref<256x8xf32, #tpu.memory_space<vmem>>, vector<16x8xf32>
    tpu.vector_store %arg17[%c176, %c0_94], %134 {strides = array<i32>} : memref<256x8xf32, #tpu.memory_space<vmem>>, vector<16x8xf32>,
    %136 = vector.extract_strided_slice %111 {offsets = [0, 96], sizes = [16, 8], strides = [1, 1]} : vector<16x128xf32> to vector<16x8xf32>
    %c192 = arith.constant 192 : index
    %c0_95 = arith.constant 0 : index
    %137 = vector.load %arg17[%c192, %c0_95] : memref<256x8xf32, #tpu.memory_space<vmem>>, vector<16x8xf32>
    tpu.vector_store %arg17[%c192, %c0_95], %136 {strides = array<i32>} : memref<256x8xf32, #tpu.memory_space<vmem>>, vector<16x8xf32>,
    %138 = vector.extract_strided_slice %111 {offsets = [0, 104], sizes = [16, 8], strides = [1, 1]} : vector<16x128xf32> to vector<16x8xf32>
    %c208 = arith.constant 208 : index
    %c0_96 = arith.constant 0 : index
    %139 = vector.load %arg17[%c208, %c0_96] : memref<256x8xf32, #tpu.memory_space<vmem>>, vector<16x8xf32>
    tpu.vector_store %arg17[%c208, %c0_96], %138 {strides = array<i32>} : memref<256x8xf32, #tpu.memory_space<vmem>>, vector<16x8xf32>,
    %140 = vector.extract_strided_slice %111 {offsets = [0, 112], sizes = [16, 8], strides = [1, 1]} : vector<16x128xf32> to vector<16x8xf32>
    %c224 = arith.constant 224 : index
    %c0_97 = arith.constant 0 : index
    %141 = vector.load %arg17[%c224, %c0_97] : memref<256x8xf32, #tpu.memory_space<vmem>>, vector<16x8xf32>
    tpu.vector_store %arg17[%c224, %c0_97], %140 {strides = array<i32>} : memref<256x8xf32, #tpu.memory_space<vmem>>, vector<16x8xf32>,
    %142 = vector.extract_strided_slice %111 {offsets = [0, 120], sizes = [16, 8], strides = [1, 1]} : vector<16x128xf32> to vector<16x8xf32>
    %c240 = arith.constant 240 : index
    %c0_98 = arith.constant 0 : index
    %143 = vector.load %arg17[%c240, %c0_98] : memref<256x8xf32, #tpu.memory_space<vmem>>, vector<16x8xf32>
    tpu.vector_store %arg17[%c240, %c0_98], %142 {strides = array<i32>} : memref<256x8xf32, #tpu.memory_space<vmem>>, vector<16x8xf32>,
    %c0_99 = arith.constant 0 : index
    %c0_100 = arith.constant 0 : index
    %144 = vector.load %arg10[%c0_99, %c0_100] : memref<32x256xf32, #tpu.memory_space<vmem>>, vector<32x256xf32>
    %c0_101 = arith.constant 0 : index
    %c0_102 = arith.constant 0 : index
    %145 = vector.load %arg17[%c0_101, %c0_102] : memref<256x8xf32, #tpu.memory_space<vmem>>, vector<256x8xf32>
    %cst_103 = arith.constant dense<0.000000e+00> : vector<32x8xf32>
    %146 = tpu.matmul %144, %145, %cst_103 {dimension_numbers = #tpu.dot_dimension_numbers<[1], [0], [0], [1], [0, 0, 1, 1], [], []>} : vector<32x256xf32>, vector<256x8xf32>, vector<32x8xf32> -> vector<32x8xf32>
    %c0_104 = arith.constant 0 : index
    %c0_105 = arith.constant 0 : index
    %147 = vector.load %arg11[%c0_104, %c0_105] : memref<32x1xf32, #tpu.memory_space<vmem>>, vector<32x1xf32>
    %148 = vector.broadcast %147 : vector<32x1xf32> to vector<32x8xf32>
    %149 = arith.addf %146, %148 : vector<32x8xf32>
    %cst_106 = arith.constant 0.000000e+00 : f32
    %150 = vector.broadcast %cst_106 : f32 to vector<32x8xf32>
    %151 = arith.maximumf %149, %150 : vector<32x8xf32>
    %c0_107 = arith.constant 0 : index
    %c0_108 = arith.constant 0 : index
    %152 = vector.load %arg12[%c0_107, %c0_108] : memref<1x32xf32, #tpu.memory_space<vmem>>, vector<1x32xf32>
    %cst_109 = arith.constant dense<0.000000e+00> : vector<1x8xf32>
    %153 = tpu.matmul %152, %151, %cst_109 {dimension_numbers = #tpu.dot_dimension_numbers<[1], [0], [0], [1], [0, 0, 1, 1], [], []>} : vector<1x32xf32>, vector<32x8xf32>, vector<1x8xf32> -> vector<1x8xf32>
    %c0_110 = arith.constant 0 : index
    %c0_111 = arith.constant 0 : index
    %154 = vector.load %arg13[%c0_110, %c0_111] : memref<1x1xf32, #tpu.memory_space<vmem>>, vector<1x1xf32>
    %155 = vector.broadcast %154 : vector<1x1xf32> to vector<1x8xf32>
    %156 = arith.addf %153, %155 : vector<1x8xf32>
    %cst_112 = arith.constant 5.000000e-01 : f32
    %157 = vector.broadcast %cst_112 : f32 to vector<1x8xf32>
    %158 = arith.mulf %157, %156 : vector<1x8xf32>
    %159 = math.tanh %158 : vector<1x8xf32>
    %cst_113 = arith.constant 1.000000e+00 : f32
    %160 = vector.broadcast %cst_113 : f32 to vector<1x8xf32>
    %161 = arith.addf %159, %160 : vector<1x8xf32>
    %cst_114 = arith.constant 5.000000e-01 : f32
    %162 = vector.broadcast %cst_114 : f32 to vector<1x8xf32>
    %163 = arith.mulf %162, %161 : vector<1x8xf32>
    %164 = vector.shape_cast %163 : vector<1x8xf32> to vector<1x1x8xf32>
    %c0_115 = arith.constant 0 : index
    %c0_116 = arith.constant 0 : index
    %c0_117 = arith.constant 0 : index
    %165 = vector.load %arg14[%c0_115, %c0_116, %c0_117] : memref<1x1x8xf32, #tpu.memory_space<vmem>>, vector<1x1x8xf32>
    tpu.vector_store %arg14[%c0_115, %c0_116, %c0_117], %164 {strides = array<i32>} : memref<1x1x8xf32, #tpu.memory_space<vmem>>, vector<1x1x8xf32>,
    return
  }
  func.func @transform_0(%arg0: i32) -> (i32, i32, i32) {
    %c0_i32 = arith.constant 0 : i32
    %c0_i32_0 = arith.constant 0 : i32
    %c0_i32_1 = arith.constant 0 : i32
    return %arg0, %c0_i32, %c0_i32_0 : i32, i32, i32
  }
  func.func @transform_1(%arg0: i32) -> (i32, i32) {
    %c0_i32 = arith.constant 0 : i32
    %c0_i32_0 = arith.constant 0 : i32
    %c0_i32_1 = arith.constant 0 : i32
    return %c0_i32, %c0_i32_0 : i32, i32
  }
  func.func @transform_2(%arg0: i32) -> (i32, i32) {
    %c0_i32 = arith.constant 0 : i32
    %c0_i32_0 = arith.constant 0 : i32
    %c0_i32_1 = arith.constant 0 : i32
    return %c0_i32, %c0_i32_0 : i32, i32
  }
  func.func @transform_3(%arg0: i32) -> (i32, i32) {
    %c0_i32 = arith.constant 0 : i32
    %c0_i32_0 = arith.constant 0 : i32
    %c0_i32_1 = arith.constant 0 : i32
    return %c0_i32, %c0_i32_0 : i32, i32
  }
  func.func @transform_4(%arg0: i32) -> (i32, i32) {
    %c0_i32 = arith.constant 0 : i32
    %c0_i32_0 = arith.constant 0 : i32
    %c0_i32_1 = arith.constant 0 : i32
    return %c0_i32, %c0_i32_0 : i32, i32
  }
  func.func @transform_5(%arg0: i32) -> (i32, i32) {
    %c0_i32 = arith.constant 0 : i32
    %c0_i32_0 = arith.constant 0 : i32
    %c0_i32_1 = arith.constant 0 : i32
    return %c0_i32, %c0_i32_0 : i32, i32
  }
  func.func @transform_6(%arg0: i32) -> (i32, i32) {
    %c0_i32 = arith.constant 0 : i32
    %c0_i32_0 = arith.constant 0 : i32
    %c0_i32_1 = arith.constant 0 : i32
    return %c0_i32, %c0_i32_0 : i32, i32
  }
  func.func @transform_7(%arg0: i32) -> (i32, i32) {
    %c0_i32 = arith.constant 0 : i32
    %c0_i32_0 = arith.constant 0 : i32
    %c0_i32_1 = arith.constant 0 : i32
    return %c0_i32, %c0_i32_0 : i32, i32
  }
  func.func @transform_8(%arg0: i32) -> (i32, i32) {
    %c0_i32 = arith.constant 0 : i32
    %c0_i32_0 = arith.constant 0 : i32
    %c0_i32_1 = arith.constant 0 : i32
    return %c0_i32, %c0_i32_0 : i32, i32
  }
  func.func @transform_9(%arg0: i32) -> (i32, i32) {
    %c0_i32 = arith.constant 0 : i32
    %c0_i32_0 = arith.constant 0 : i32
    %c0_i32_1 = arith.constant 0 : i32
    return %c0_i32, %c0_i32_0 : i32, i32
  }
  func.func @transform_10(%arg0: i32) -> (i32, i32) {
    %c0_i32 = arith.constant 0 : i32
    %c0_i32_0 = arith.constant 0 : i32
    %c0_i32_1 = arith.constant 0 : i32
    return %c0_i32, %c0_i32_0 : i32, i32
  }
  func.func @transform_11(%arg0: i32) -> (i32, i32) {
    %c0_i32 = arith.constant 0 : i32
    %c0_i32_0 = arith.constant 0 : i32
    %c0_i32_1 = arith.constant 0 : i32
    return %c0_i32, %c0_i32_0 : i32, i32
  }
  func.func @transform_12(%arg0: i32) -> (i32, i32) {
    %c0_i32 = arith.constant 0 : i32
    %c0_i32_0 = arith.constant 0 : i32
    %c0_i32_1 = arith.constant 0 : i32
    return %c0_i32, %c0_i32_0 : i32, i32
  }
  func.func @transform_13(%arg0: i32) -> (i32, i32, i32) {
    %c0_i32 = arith.constant 0 : i32
    %c0_i32_0 = arith.constant 0 : i32
    %c0_i32_1 = arith.constant 0 : i32
    return %arg0, %c0_i32, %c0_i32_0 : i32, i32, i32
  }
}

</mosaic_0001>

<llo_original>
// kernel: tpu_custom_call.1
$region0: #{tpu_custom_call.1}
  #allocation0 [shape = 'u32[]', space=smem, size = 0x4, offset = 0x4, fixed_abs, tag = 'smem constant byte address 0x4 - core index']
  #allocation1 [shape = 'u32[144,128]{1,0:T(1,128)}', space=vmem, size = 0x12000, scoped, tag = 'internal scratch']
  #allocation2 [shape = 'f32[36,2048]{1,0:T(8,128)}', space=vmem, size = 0x50000, scoped, tag = 'scratch operand']
  #allocation3 [shape = 'f32[72,512]{1,0:T(8,128)}', space=vmem, size = 0x24000, scoped, tag = 'scratch operand']
  #allocation4 [shape = 'f32[256,8]{1,0:T(8,128)}', space=vmem, size = 0x20000, scoped, tag = 'scratch operand']
  #allocation5 [shape = 'f32[1,1]{1,0:T(1,128)S(1)}', space=vmem, size = 0x200, scoped, tag = 'scoped memory for tpu_custom_call.1']
  %s0 = inlined_call_operand.hbm [shape: f32[1,4,2048], index: 0, kind: input, shape index: {}]
  %s1 = inlined_call_operand.hbm [shape: f32[8,36], index: 1, kind: input, shape index: {}]
  %s2 = inlined_call_operand.vmem [shape: f32[8,1], index: 2, kind: input, shape index: {}]
  %s3 = inlined_call_operand.hbm [shape: f32[9,2048], index: 3, kind: input, shape index: {}]
  %s4 = inlined_call_operand.hbm [shape: f32[2048,512], index: 4, kind: input, shape index: {}]
  %s5 = inlined_call_operand.hbm [shape: f32[16,72], index: 5, kind: input, shape index: {}]
  %s6 = inlined_call_operand.vmem [shape: f32[16,1], index: 6, kind: input, shape index: {}]
  %s7 = inlined_call_operand.hbm [shape: f32[9,512], index: 7, kind: input, shape index: {}]
  %s8 = inlined_call_operand.hbm [shape: f32[512,128], index: 8, kind: input, shape index: {}]
  %s9 = inlined_call_operand.hbm [shape: f32[32,256], index: 9, kind: input, shape index: {}]
  %s10 = inlined_call_operand.vmem [shape: f32[32,1], index: 10, kind: input, shape index: {}]
  %s11 = inlined_call_operand.hbm [shape: f32[1,32], index: 11, kind: input, shape index: {}]
  %s12 = inlined_call_operand.<no memory space> [shape: f32[1,1], index: 12, kind: input, shape index: {}]
  %s13 = inlined_call_operand.hbm [shape: f32[1,1,8], index: 13, kind: output, shape index: {}]
  %s14 = sld [smem:[#allocation0]]
  $region98: #{tpu_custom_call.1} parent=0
    _
  %s16 = ssub.s32 1, %s14
  %s17 = scalar_select 0, %s16, %s14
  %v18 = vstv %s12
  %19 = vst [vmem:[#allocation5] sm:$0x1] %v18
  $region1: #{tpu_custom_call.1} parent=0
    #allocation6 [shape = 'u8[32768]{0}', space=vmem, size = 0x8000, scoped, tag = 'input window, operand 0, single buffered']
    #allocation7 [shape = 's32[1]{0}', space=sflag, size = 0x4, scoped, tag = 'scoped memory for tpu_custom_call.1']
    #allocation8 [shape = 's32[1]{0}', space=sflag, size = 0x4, scoped, tag = 'scoped memory for tpu_custom_call.1']
    #allocation9 [shape = 'u8[4096]{0}', space=vmem, size = 0x1000, scoped, tag = 'input window, operand 1, single buffered']
    #allocation10 [shape = 's32[1]{0}', space=sflag, size = 0x4, scoped, tag = 'scoped memory for tpu_custom_call.1']
    #allocation11 [shape = 'u8[131072]{0}', space=vmem, size = 0x20000, scoped, tag = 'input window, operand 3, single buffered']
    #allocation12 [shape = 'u8[4194304]{0}', space=vmem, size = 0x400000, scoped, tag = 'input window, operand 4, single buffered']
    #allocation13 [shape = 's32[1]{0}', space=sflag, size = 0x4, scoped, tag = 'scoped memory for tpu_custom_call.1']
    #allocation14 [shape = 'u8[8192]{0}', space=vmem, size = 0x2000, scoped, tag = 'input window, operand 5, single buffered']
    #allocation15 [shape = 'u8[32768]{0}', space=vmem, size = 0x8000, scoped, tag = 'input window, operand 7, single buffered']
    #allocation16 [shape = 's32[1]{0}', space=sflag, size = 0x4, scoped, tag = 'scoped memory for tpu_custom_call.1']
    #allocation17 [shape = 'u8[262144]{0}', space=vmem, size = 0x40000, scoped, tag = 'input window, operand 8, single buffered']
    #allocation18 [shape = 'u8[32768]{0}', space=vmem, size = 0x8000, scoped, tag = 'input window, operand 9, single buffered']
    #allocation19 [shape = 's32[1]{0}', space=sflag, size = 0x4, scoped, tag = 'scoped memory for tpu_custom_call.1']
    #allocation20 [shape = 'u8[512]{0}', space=vmem, size = 0x400, scoped, tag = 'input window, operand 11, single buffered']
    #allocation21 [shape = 'u8[512]{0}', space=vmem, size = 0x400, scoped, tag = 'output window, operand 0, single buffered']
    %20 = vsyncpa [#allocation7], 0
    %21 = vsyncpa [#allocation10], 0
    %22 = vsyncpa [#allocation13], 0
    %23 = vsyncpa [#allocation16], 0
    %24 = vsyncpa [#allocation19], 0
    %25 = vsyncpa [#allocation8], 0
    // Predicated region
    $region2: #{tpu_custom_call.1} parent=1 // pred_check
      _
    $region3: #{tpu_custom_call.1} parent=1 // pred_check_branch
      %27 = sbr.rel (0) target = $region5
    $region4: #{tpu_custom_call.1} parent=1 // pred_region
      %s29 = ssub.s32 1024, 1024
      %30 = vsyncadd [#allocation7], %s29
      %s32 = sshll.u32 [#allocation6], 4
      %s33 = int_to_ptr.vmem [resolvable:$true] %s32
      %35 = dma.hbm_to_vmem [thread:$0]  %s0, 1024, %s33, [#allocation7]
    $region5: #{tpu_custom_call.1} parent=1 // pred_fallthru
      _
    // Predicated region
    $region6: #{tpu_custom_call.1} parent=1 // pred_check
      _
    $region7: #{tpu_custom_call.1} parent=1 // pred_check_branch
      %37 = sbr.rel (0) target = $region9
    $region8: #{tpu_custom_call.1} parent=1 // pred_region
      %s39 = ssub.s32 128, 128
      %40 = vsyncadd [#allocation10], %s39
      %s42 = sshll.u32 [#allocation9], 4
      %s43 = int_to_ptr.vmem [resolvable:$true] %s42
      %45 = dma.hbm_to_vmem [thread:$0]  %s1, 128, %s43, [#allocation10]
    $region9: #{tpu_custom_call.1} parent=1 // pred_fallthru
      _
    // Predicated region
    $region10: #{tpu_custom_call.1} parent=1 // pred_check
      _
    $region11: #{tpu_custom_call.1} parent=1 // pred_check_branch
      %47 = sbr.rel (0) target = $region13
    $region12: #{tpu_custom_call.1} parent=1 // pred_region
      _
    $region13: #{tpu_custom_call.1} parent=1 // pred_fallthru
      _
    // Predicated region
    $region14: #{tpu_custom_call.1} parent=1 // pred_check
      _
    $region15: #{tpu_custom_call.1} parent=1 // pred_check_branch
      %49 = sbr.rel (0) target = $region17
    $region16: #{tpu_custom_call.1} parent=1 // pred_region
      %s51 = ssub.s32 4096, 4096
      %52 = vsyncadd [#allocation10], %s51
      %s53 = sshll.u32 [#allocation11], 4
      %s54 = int_to_ptr.vmem [resolvable:$true] %s53
      %59 = dma.hbm_to_vmem [thread:$0]  %s3, 4096, %s54, [#allocation10], 2048, 2048, 128
    $region17: #{tpu_custom_call.1} parent=1 // pred_fallthru
      _
    // Predicated region
    $region18: #{tpu_custom_call.1} parent=1 // pred_check
      _
    $region19: #{tpu_custom_call.1} parent=1 // pred_check_branch
      %61 = sbr.rel (0) target = $region21
    $region20: #{tpu_custom_call.1} parent=1 // pred_region
      %s63 = ssub.s32 131072, 131072
      %64 = vsyncadd [#allocation13], %s63
      %s65 = sshll.u32 [#allocation12], 4
      %s66 = int_to_ptr.vmem [resolvable:$true] %s65
      %71 = dma.hbm_to_vmem [thread:$0]  %s4, 131072, %s66, [#allocation13], 512, 512, 32
    $region21: #{tpu_custom_call.1} parent=1 // pred_fallthru
      _
    // Predicated region
    $region22: #{tpu_custom_call.1} parent=1 // pred_check
      _
    $region23: #{tpu_custom_call.1} parent=1 // pred_check_branch
      %73 = sbr.rel (0) target = $region25
    $region24: #{tpu_custom_call.1} parent=1 // pred_region
      %s75 = ssub.s32 256, 256
      %76 = vsyncadd [#allocation13], %s75
      %s77 = sshll.u32 [#allocation14], 4
      %s78 = int_to_ptr.vmem [resolvable:$true] %s77
      %83 = dma.hbm_to_vmem [thread:$0]  %s5, 256, %s78, [#allocation13], 128, 128, 8
    $region25: #{tpu_custom_call.1} parent=1 // pred_fallthru
      _
    // Predicated region
    $region26: #{tpu_custom_call.1} parent=1 // pred_check
      _
    $region27: #{tpu_custom_call.1} parent=1 // pred_check_branch
      %85 = sbr.rel (0) target = $region29
    $region28: #{tpu_custom_call.1} parent=1 // pred_region
      _
    $region29: #{tpu_custom_call.1} parent=1 // pred_fallthru
      _
    // Predicated region
    $region30: #{tpu_custom_call.1} parent=1 // pred_check
      _
    $region31: #{tpu_custom_call.1} parent=1 // pred_check_branch
      %87 = sbr.rel (0) target = $region33
    $region32: #{tpu_custom_call.1} parent=1 // pred_region
      %s89 = ssub.s32 1024, 1024
      %90 = vsyncadd [#allocation16], %s89
      %s91 = sshll.u32 [#allocation15], 4
      %s92 = int_to_ptr.vmem [resolvable:$true] %s91
      %97 = dma.hbm_to_vmem [thread:$0]  %s7, 1024, %s92, [#allocation16], 512, 512, 32
    $region33: #{tpu_custom_call.1} parent=1 // pred_fallthru
      _
    // Predicated region
    $region34: #{tpu_custom_call.1} parent=1 // pred_check
      _
    $region35: #{tpu_custom_call.1} parent=1 // pred_check_branch
      %99 = sbr.rel (0) target = $region37
    $region36: #{tpu_custom_call.1} parent=1 // pred_region
      %s101 = ssub.s32 8192, 8192
      %102 = vsyncadd [#allocation16], %s101
      %s103 = sshll.u32 [#allocation17], 4
      %s104 = int_to_ptr.vmem [resolvable:$true] %s103
      %109 = dma.hbm_to_vmem [thread:$0]  %s8, 8192, %s104, [#allocation16], 128, 128, 8
    $region37: #{tpu_custom_call.1} parent=1 // pred_fallthru
      _
    // Predicated region
    $region38: #{tpu_custom_call.1} parent=1 // pred_check
      _
    $region39: #{tpu_custom_call.1} parent=1 // pred_check_branch
      %111 = sbr.rel (0) target = $region41
    $region40: #{tpu_custom_call.1} parent=1 // pred_region
      %s113 = ssub.s32 1024, 1024
      %114 = vsyncadd [#allocation19], %s113
      %s115 = sshll.u32 [#allocation18], 4
      %s116 = int_to_ptr.vmem [resolvable:$true] %s115
      %121 = dma.hbm_to_vmem [thread:$0]  %s9, 1024, %s116, [#allocation19], 256, 256, 16
    $region41: #{tpu_custom_call.1} parent=1 // pred_fallthru
      _
    // Predicated region
    $region42: #{tpu_custom_call.1} parent=1 // pred_check
      _
    $region43: #{tpu_custom_call.1} parent=1 // pred_check_branch
      %123 = sbr.rel (0) target = $region45
    $region44: #{tpu_custom_call.1} parent=1 // pred_region
      _
    $region45: #{tpu_custom_call.1} parent=1 // pred_fallthru
      _
    // Predicated region
    $region46: #{tpu_custom_call.1} parent=1 // pred_check
      _
    $region47: #{tpu_custom_call.1} parent=1 // pred_check_branch
      %125 = sbr.rel (0) target = $region49
    $region48: #{tpu_custom_call.1} parent=1 // pred_region
      %s127 = ssub.s32 16, 16
      %128 = vsyncadd [#allocation19], %s127
      %s130 = sshll.u32 [#allocation20], 4
      %s131 = int_to_ptr.vmem [resolvable:$true] %s130
      %133 = dma.hbm_to_vmem [thread:$0]  %s11, 16, %s131, [#allocation19]
    $region49: #{tpu_custom_call.1} parent=1 // pred_fallthru
      _
    // Predicated region
    $region50: #{tpu_custom_call.1} parent=1 // pred_check
      _
    $region51: #{tpu_custom_call.1} parent=1 // pred_check_branch
      %135 = sbr.rel (0) target = $region53
    $region52: #{tpu_custom_call.1} parent=1 // pred_region
      _
    $region53: #{tpu_custom_call.1} parent=1 // pred_fallthru
      _
    // Predicated region
    $region54: #{tpu_custom_call.1} parent=1 // pred_check
      _
    $region55: #{tpu_custom_call.1} parent=1 // pred_check_branch
      %137 = sbr.rel (0) target = $region57
    $region56: #{tpu_custom_call.1} parent=1 // pred_region
      %138 = dma.done [#allocation7], 1024
    $region57: #{tpu_custom_call.1} parent=1 // pred_fallthru
      _
    // Predicated region
    $region58: #{tpu_custom_call.1} parent=1 // pred_check
      _
    $region59: #{tpu_custom_call.1} parent=1 // pred_check_branch
      %140 = sbr.rel (0) target = $region61
    $region60: #{tpu_custom_call.1} parent=1 // pred_region
      %141 = dma.done [#allocation10], 128
    $region61: #{tpu_custom_call.1} parent=1 // pred_fallthru
      _
    // Predicated region
    $region62: #{tpu_custom_call.1} parent=1 // pred_check
      _
    $region63: #{tpu_custom_call.1} parent=1 // pred_check_branch
      %143 = sbr.rel (0) target = $region65
    $region64: #{tpu_custom_call.1} parent=1 // pred_region
      %144 = dma.done [#allocation10], 4096
    $region65: #{tpu_custom_call.1} parent=1 // pred_fallthru
      _
    // Predicated region
    $region66: #{tpu_custom_call.1} parent=1 // pred_check
      _
    $region67: #{tpu_custom_call.1} parent=1 // pred_check_branch
      %146 = sbr.rel (0) target = $region69
    $region68: #{tpu_custom_call.1} parent=1 // pred_region
      %147 = dma.done [#allocation13], 131072
    $region69: #{tpu_custom_call.1} parent=1 // pred_fallthru
      _
    // Predicated region
    $region70: #{tpu_custom_call.1} parent=1 // pred_check
      _
    $region71: #{tpu_custom_call.1} parent=1 // pred_check_branch
      %149 = sbr.rel (0) target = $region73
    $region72: #{tpu_custom_call.1} parent=1 // pred_region
      %150 = dma.done [#allocation13], 256
    $region73: #{tpu_custom_call.1} parent=1 // pred_fallthru
      _
    // Predicated region
    $region74: #{tpu_custom_call.1} parent=1 // pred_check
      _
    $region75: #{tpu_custom_call.1} parent=1 // pred_check_branch
      %152 = sbr.rel (0) target = $region77
    $region76: #{tpu_custom_call.1} parent=1 // pred_region
      %153 = dma.done [#allocation16], 1024
    $region77: #{tpu_custom_call.1} parent=1 // pred_fallthru
      _
    // Predicated region
    $region78: #{tpu_custom_call.1} parent=1 // pred_check
      _
    $region79: #{tpu_custom_call.1} parent=1 // pred_check_branch
      %155 = sbr.rel (0) target = $region81
    $region80: #{tpu_custom_call.1} parent=1 // pred_region
      %156 = dma.done [#allocation16], 8192
    $region81: #{tpu_custom_call.1} parent=1 // pred_fallthru
      _
    // Predicated region
    $region82: #{tpu_custom_call.1} parent=1 // pred_check
      _
    $region83: #{tpu_custom_call.1} parent=1 // pred_check_branch
      %158 = sbr.rel (0) target = $region85
    $region84: #{tpu_custom_call.1} parent=1 // pred_region
      %159 = dma.done [#allocation19], 1024
    $region85: #{tpu_custom_call.1} parent=1 // pred_fallthru
      _
    // Predicated region
    $region86: #{tpu_custom_call.1} parent=1 // pred_check
      _
    $region87: #{tpu_custom_call.1} parent=1 // pred_check_branch
      %161 = sbr.rel (0) target = $region89
    $region88: #{tpu_custom_call.1} parent=1 // pred_region
      %162 = dma.done [#allocation19], 16
    $region89: #{tpu_custom_call.1} parent=1 // pred_fallthru
      _
    %v163 = vld [vmem:[#allocation6] sm:$0xff]
    %v164 = vld [vmem:[#allocation6 + $0x8] sm:$0xff]
    %v165 = vld [vmem:[#allocation6 + $0x10] sm:$0xff]
    %v166 = vld [vmem:[#allocation6 + $0x18] sm:$0xff]
    %v167 = vld [vmem:[#allocation6 + $0x20] sm:$0xff]
    %v168 = vld [vmem:[#allocation6 + $0x28] sm:$0xff]
    %v169 = vld [vmem:[#allocation6 + $0x30] sm:$0xff]
    %v170 = vld [vmem:[#allocation6 + $0x38] sm:$0xff]
    %v179 = vcombine.high %v163, %v163
    %v180 = vcombine.high %v164, %v164
    %v181 = vcombine.high %v165, %v165
    %v182 = vcombine.high %v166, %v166
    %v183 = vcombine.high %v167, %v167
    %v184 = vcombine.high %v168, %v168
    %v185 = vcombine.high %v169, %v169
    %v186 = vcombine.high %v170, %v170
    %195 = vrot.lane.b32.xlu0 %v163, 8
    %v196 = vpop.permute.xlu0 %195
    %197 = vrot.lane.b32.xlu0 %v179, 8
    %v198 = vpop.permute.xlu0 %197
    %199 = vrot.lane.b32.xlu0 %v164, 8
    %v200 = vpop.permute.xlu0 %199
    %201 = vrot.lane.b32.xlu0 %v180, 8
    %v202 = vpop.permute.xlu0 %201
    %203 = vrot.lane.b32.xlu0 %v165, 8
    %v204 = vpop.permute.xlu0 %203
    %205 = vrot.lane.b32.xlu0 %v181, 8
    %v206 = vpop.permute.xlu0 %205
    %207 = vrot.lane.b32.xlu0 %v166, 8
    %v208 = vpop.permute.xlu0 %207
    %209 = vrot.lane.b32.xlu0 %v182, 8
    %v210 = vpop.permute.xlu0 %209
    %211 = vrot.lane.b32.xlu0 %v167, 8
    %v212 = vpop.permute.xlu0 %211
    %213 = vrot.lane.b32.xlu0 %v183, 8
    %v214 = vpop.permute.xlu0 %213
    %215 = vrot.lane.b32.xlu0 %v168, 8
    %v216 = vpop.permute.xlu0 %215
    %217 = vrot.lane.b32.xlu0 %v184, 8
    %v218 = vpop.permute.xlu0 %217
    %219 = vrot.lane.b32.xlu0 %v169, 8
    %v220 = vpop.permute.xlu0 %219
    %221 = vrot.lane.b32.xlu0 %v185, 8
    %v222 = vpop.permute.xlu0 %221
    %223 = vrot.lane.b32.xlu0 %v170, 8
    %v224 = vpop.permute.xlu0 %223
    %225 = vrot.lane.b32.xlu0 %v186, 8
    %v226 = vpop.permute.xlu0 %225
    %v227 = vlaneseq
    %v228 = vand.u32 %v227, 127
    %vm229 = vcmp.lt.s32.totalorder %v228, 8
    %v230 = vsel %vm229, %v224, %v226
    %v231 = vsel %vm229, %v222, %v224
    %v232 = vsel %vm229, %v220, %v222
    %v233 = vsel %vm229, %v218, %v220
    %v234 = vsel %vm229, %v216, %v218
    %v235 = vsel %vm229, %v214, %v216
    %v236 = vsel %vm229, %v212, %v214
    %v237 = vsel %vm229, %v210, %v212
    %v238 = vsel %vm229, %v208, %v210
    %v239 = vsel %vm229, %v206, %v208
    %v240 = vsel %vm229, %v204, %v206
    %v241 = vsel %vm229, %v202, %v204
    %v242 = vsel %vm229, %v200, %v202
    %v243 = vsel %vm229, %v198, %v200
    %v244 = vsel %vm229, %v196, %v198
    %v245 = vsel %vm229, %v226, %v196
    %v246 = vld [vmem:[#allocation11] ss:$8 sm:$0xf]
    %v247 = vld [vmem:[#allocation11] ss:$8 sm:$0xf0]
    %v248 = vor.u32 %v246, %v247
    %s249 = scalar_lea.vmem [#allocation11], 64
    %v250 = vld [vmem:[%s249] ss:$8 sm:$0xf]
    %v251 = vld [vmem:[%s249] ss:$8 sm:$0xf0]
    %v252 = vor.u32 %v250, %v251
    %v255 = vlaneseq
    %v256 = vshrl.u32 %v255, 7
    %v257 = vsub.s32 0, %v256
    %v258 = vrot.slane %v248, %v257
    %v259 = vlaneseq
    %v260 = vshrl.u32 %v259, 7
    %v261 = vsub.s32 1, %v260
    %v262 = vrot.slane %v248, %v261
    %v263 = vlaneseq
    %v264 = vshrl.u32 %v263, 7
    %v265 = vsub.s32 2, %v264
    %v266 = vrot.slane %v248, %v265
    %v267 = vlaneseq
    %v268 = vshrl.u32 %v267, 7
    %v269 = vsub.s32 3, %v268
    %v270 = vrot.slane %v248, %v269
    %v271 = vlaneseq
    %v272 = vshrl.u32 %v271, 7
    %v273 = vsub.s32 4, %v272
    %v274 = vrot.slane %v248, %v273
    %v275 = vlaneseq
    %v276 = vshrl.u32 %v275, 7
    %v277 = vsub.s32 5, %v276
    %v278 = vrot.slane %v248, %v277
    %v279 = vlaneseq
    %v280 = vshrl.u32 %v279, 7
    %v281 = vsub.s32 6, %v280
    %v282 = vrot.slane %v248, %v281
    %v283 = vlaneseq
    %v284 = vshrl.u32 %v283, 7
    %v285 = vsub.s32 7, %v284
    %v286 = vrot.slane %v248, %v285
    %v287 = vlaneseq
    %v288 = vshrl.u32 %v287, 7
    %v289 = vsub.s32 0, %v288
    %v290 = vrot.slane %v252, %v289
    %v291 = vlaneseq
    %v292 = vshrl.u32 %v291, 7
    %v293 = vsub.s32 1, %v292
    %v294 = vrot.slane %v252, %v293
    %v295 = vlaneseq
    %v296 = vshrl.u32 %v295, 7
    %v297 = vsub.s32 2, %v296
    %v298 = vrot.slane %v252, %v297
    %v299 = vlaneseq
    %v300 = vshrl.u32 %v299, 7
    %v301 = vsub.s32 3, %v300
    %v302 = vrot.slane %v252, %v301
    %v303 = vlaneseq
    %v304 = vshrl.u32 %v303, 7
    %v305 = vsub.s32 4, %v304
    %v306 = vrot.slane %v252, %v305
    %v307 = vlaneseq
    %v308 = vshrl.u32 %v307, 7
    %v309 = vsub.s32 5, %v308
    %v310 = vrot.slane %v252, %v309
    %v311 = vlaneseq
    %v312 = vshrl.u32 %v311, 7
    %v313 = vsub.s32 6, %v312
    %v314 = vrot.slane %v252, %v313
    %v315 = vlaneseq
    %v316 = vshrl.u32 %v315, 7
    %v317 = vsub.s32 7, %v316
    %v318 = vrot.slane %v252, %v317
    %v335 = vmul.f32 %v230, %v258
    %v336 = vmul.f32 %v245, %v262
    %v337 = vmul.f32 %v244, %v266
    %v338 = vmul.f32 %v243, %v270
    %v339 = vmul.f32 %v242, %v274
    %v340 = vmul.f32 %v241, %v278
    %v341 = vmul.f32 %v240, %v282
    %v342 = vmul.f32 %v239, %v286
    %v343 = vmul.f32 %v238, %v290
    %v344 = vmul.f32 %v237, %v294
    %v345 = vmul.f32 %v236, %v298
    %v346 = vmul.f32 %v235, %v302
    %v347 = vmul.f32 %v234, %v306
    %v348 = vmul.f32 %v233, %v310
    %v349 = vmul.f32 %v232, %v314
    %v350 = vmul.f32 %v231, %v318
    %351 = vst [vmem:[#allocation2] sm:$0xf] %v335
    %352 = vst [vmem:[#allocation2 + $0x8] sm:$0xf] %v336
    %353 = vst [vmem:[#allocation2 + $0x10] sm:$0xf] %v337
    %354 = vst [vmem:[#allocation2 + $0x18] sm:$0xf] %v338
    %355 = vst [vmem:[#allocation2 + $0x20] sm:$0xf] %v339
    %356 = vst [vmem:[#allocation2 + $0x28] sm:$0xf] %v340
    %357 = vst [vmem:[#allocation2 + $0x30] sm:$0xf] %v341
    %358 = vst [vmem:[#allocation2 + $0x38] sm:$0xf] %v342
    %359 = vst [vmem:[#allocation2 + $0x40] sm:$0xf] %v343
    %360 = vst [vmem:[#allocation2 + $0x48] sm:$0xf] %v344
    %361 = vst [vmem:[#allocation2 + $0x50] sm:$0xf] %v345
    %362 = vst [vmem:[#allocation2 + $0x58] sm:$0xf] %v346
    %363 = vst [vmem:[#allocation2 + $0x60] sm:$0xf] %v347
    %364 = vst [vmem:[#allocation2 + $0x68] sm:$0xf] %v348
    %365 = vst [vmem:[#allocation2 + $0x70] sm:$0xf] %v349
    %366 = vst [vmem:[#allocation2 + $0x78] sm:$0xf] %v350
    %s367 = scalar_lea.vmem [#allocation11], 1
    %v368 = vld [vmem:[%s367] ss:$8 sm:$0xf]
    %v369 = vld [vmem:[%s367] ss:$8 sm:$0xf0]
    %v370 = vor.u32 %v368, %v369
    %s371 = scalar_lea.vmem [#allocation11], 65
    %v372 = vld [vmem:[%s371] ss:$8 sm:$0xf]
    %v373 = vld [vmem:[%s371] ss:$8 sm:$0xf0]
    %v374 = vor.u32 %v372, %v373
    %v377 = vlaneseq
    %v378 = vshrl.u32 %v377, 7
    %v379 = vsub.s32 0, %v378
    %v380 = vrot.slane %v370, %v379
    %v381 = vlaneseq
    %v382 = vshrl.u32 %v381, 7
    %v383 = vsub.s32 1, %v382
    %v384 = vrot.slane %v370, %v383
    %v385 = vlaneseq
    %v386 = vshrl.u32 %v385, 7
    %v387 = vsub.s32 2, %v386
    %v388 = vrot.slane %v370, %v387
    %v389 = vlaneseq
    %v390 = vshrl.u32 %v389, 7
    %v391 = vsub.s32 3, %v390
    %v392 = vrot.slane %v370, %v391
    %v393 = vlaneseq
    %v394 = vshrl.u32 %v393, 7
    %v395 = vsub.s32 4, %v394
    %v396 = vrot.slane %v370, %v395
    %v397 = vlaneseq
    %v398 = vshrl.u32 %v397, 7
    %v399 = vsub.s32 5, %v398
    %v400 = vrot.slane %v370, %v399
    %v401 = vlaneseq
    %v402 = vshrl.u32 %v401, 7
    %v403 = vsub.s32 6, %v402
    %v404 = vrot.slane %v370, %v403
    %v405 = vlaneseq
    %v406 = vshrl.u32 %v405, 7
    %v407 = vsub.s32 7, %v406
    %v408 = vrot.slane %v370, %v407
    %v409 = vlaneseq
    %v410 = vshrl.u32 %v409, 7
    %v411 = vsub.s32 0, %v410
    %v412 = vrot.slane %v374, %v411
    %v413 = vlaneseq
    %v414 = vshrl.u32 %v413, 7
    %v415 = vsub.s32 1, %v414
    %v416 = vrot.slane %v374, %v415
    %v417 = vlaneseq
    %v418 = vshrl.u32 %v417, 7
    %v419 = vsub.s32 2, %v418
    %v420 = vrot.slane %v374, %v419
    %v421 = vlaneseq
    %v422 = vshrl.u32 %v421, 7
    %v423 = vsub.s32 3, %v422
    %v424 = vrot.slane %v374, %v423
    %v425 = vlaneseq
    %v426 = vshrl.u32 %v425, 7
    %v427 = vsub.s32 4, %v426
    %v428 = vrot.slane %v374, %v427
    %v429 = vlaneseq
    %v430 = vshrl.u32 %v429, 7
    %v431 = vsub.s32 5, %v430
    %v432 = vrot.slane %v374, %v431
    %v433 = vlaneseq
    %v434 = vshrl.u32 %v433, 7
    %v435 = vsub.s32 6, %v434
    %v436 = vrot.slane %v374, %v435
    %v437 = vlaneseq
    %v438 = vshrl.u32 %v437, 7
    %v439 = vsub.s32 7, %v438
    %v440 = vrot.slane %v374, %v439
    %v457 = vmul.f32 %v186, %v380
    %v458 = vmul.f32 %v163, %v384
    %v459 = vmul.f32 %v179, %v388
    %v460 = vmul.f32 %v164, %v392
    %v461 = vmul.f32 %v180, %v396
    %v462 = vmul.f32 %v165, %v400
    %v463 = vmul.f32 %v181, %v404
    %v464 = vmul.f32 %v166, %v408
    %v465 = vmul.f32 %v182, %v412
    %v466 = vmul.f32 %v167, %v416
    %v467 = vmul.f32 %v183, %v420
    %v468 = vmul.f32 %v168, %v424
    %v469 = vmul.f32 %v184, %v428
    %v470 = vmul.f32 %v169, %v432
    %v471 = vmul.f32 %v185, %v436
    %v472 = vmul.f32 %v170, %v440
    %v489 = vrot.slane %v457, 4
    %v490 = vrot.slane %v458, 4
    %v491 = vrot.slane %v459, 4
    %v492 = vrot.slane %v460, 4
    %v493 = vrot.slane %v461, 4
    %v494 = vrot.slane %v462, 4
    %v495 = vrot.slane %v463, 4
    %v496 = vrot.slane %v464, 4
    %v497 = vrot.slane %v465, 4
    %v498 = vrot.slane %v466, 4
    %v499 = vrot.slane %v467, 4
    %v500 = vrot.slane %v468, 4
    %v501 = vrot.slane %v469, 4
    %v502 = vrot.slane %v470, 4
    %v503 = vrot.slane %v471, 4
    %v504 = vrot.slane %v472, 4
    %521 = vst [vmem:[#allocation2] sm:$0xf0] %v489
    %522 = vst [vmem:[#allocation2 + $0x8] sm:$0xf0] %v490
    %523 = vst [vmem:[#allocation2 + $0x10] sm:$0xf0] %v491
    %524 = vst [vmem:[#allocation2 + $0x18] sm:$0xf0] %v492
    %525 = vst [vmem:[#allocation2 + $0x20] sm:$0xf0] %v493
    %526 = vst [vmem:[#allocation2 + $0x28] sm:$0xf0] %v494
    %527 = vst [vmem:[#allocation2 + $0x30] sm:$0xf0] %v495
    %528 = vst [vmem:[#allocation2 + $0x38] sm:$0xf0] %v496
    %529 = vst [vmem:[#allocation2 + $0x40] sm:$0xf0] %v497
    %530 = vst [vmem:[#allocation2 + $0x48] sm:$0xf0] %v498
    %531 = vst [vmem:[#allocation2 + $0x50] sm:$0xf0] %v499
    %532 = vst [vmem:[#allocation2 + $0x58] sm:$0xf0] %v500
    %533 = vst [vmem:[#allocation2 + $0x60] sm:$0xf0] %v501
    %534 = vst [vmem:[#allocation2 + $0x68] sm:$0xf0] %v502
    %535 = vst [vmem:[#allocation2 + $0x70] sm:$0xf0] %v503
    %536 = vst [vmem:[#allocation2 + $0x78] sm:$0xf0] %v504
    %537 = vrot.lane.b32.xlu0 %v163, 120
    %v538 = vpop.permute.xlu0 %537
    %539 = vrot.lane.b32.xlu0 %v179, 120
    %v540 = vpop.permute.xlu0 %539
    %541 = vrot.lane.b32.xlu0 %v164, 120
    %v542 = vpop.permute.xlu0 %541
    %543 = vrot.lane.b32.xlu0 %v180, 120
    %v544 = vpop.permute.xlu0 %543
    %545 = vrot.lane.b32.xlu0 %v165, 120
    %v546 = vpop.permute.xlu0 %545
    %547 = vrot.lane.b32.xlu0 %v181, 120
    %v548 = vpop.permute.xlu0 %547
    %549 = vrot.lane.b32.xlu0 %v166, 120
    %v550 = vpop.permute.xlu0 %549
    %551 = vrot.lane.b32.xlu0 %v182, 120
    %v552 = vpop.permute.xlu0 %551
    %553 = vrot.lane.b32.xlu0 %v167, 120
    %v554 = vpop.permute.xlu0 %553
    %555 = vrot.lane.b32.xlu0 %v183, 120
    %v556 = vpop.permute.xlu0 %555
    %557 = vrot.lane.b32.xlu0 %v168, 120
    %v558 = vpop.permute.xlu0 %557
    %559 = vrot.lane.b32.xlu0 %v184, 120
    %v560 = vpop.permute.xlu0 %559
    %561 = vrot.lane.b32.xlu0 %v169, 120
    %v562 = vpop.permute.xlu0 %561
    %563 = vrot.lane.b32.xlu0 %v185, 120
    %v564 = vpop.permute.xlu0 %563
    %565 = vrot.lane.b32.xlu0 %v170, 120
    %v566 = vpop.permute.xlu0 %565
    %567 = vrot.lane.b32.xlu0 %v186, 120
    %v568 = vpop.permute.xlu0 %567
    %vm569 = vcmp.lt.s32.totalorder %v228, 120
    %v570 = vsel %vm569, %v566, %v568
    %v571 = vsel %vm569, %v564, %v566
    %v572 = vsel %vm569, %v562, %v564
    %v573 = vsel %vm569, %v560, %v562
    %v574 = vsel %vm569, %v558, %v560
    %v575 = vsel %vm569, %v556, %v558
    %v576 = vsel %vm569, %v554, %v556
    %v577 = vsel %vm569, %v552, %v554
    %v578 = vsel %vm569, %v550, %v552
    %v579 = vsel %vm569, %v548, %v550
    %v580 = vsel %vm569, %v546, %v548
    %v581 = vsel %vm569, %v544, %v546
    %v582 = vsel %vm569, %v542, %v544
    %v583 = vsel %vm569, %v540, %v542
    %v584 = vsel %vm569, %v538, %v540
    %v585 = vsel %vm569, %v568, %v538
    %s586 = scalar_lea.vmem [#allocation11], 2
    %v587 = vld [vmem:[%s586] ss:$8 sm:$0xf]
    %v588 = vld [vmem:[%s586] ss:$8 sm:$0xf0]
    %v589 = vor.u32 %v587, %v588
    %s590 = scalar_lea.vmem [#allocation11], 66
    %v591 = vld [vmem:[%s590] ss:$8 sm:$0xf]
    %v592 = vld [vmem:[%s590] ss:$8 sm:$0xf0]
    %v593 = vor.u32 %v591, %v592
    %v596 = vlaneseq
    %v597 = vshrl.u32 %v596, 7
    %v598 = vsub.s32 0, %v597
    %v599 = vrot.slane %v589, %v598
    %v600 = vlaneseq
    %v601 = vshrl.u32 %v600, 7
    %v602 = vsub.s32 1, %v601
    %v603 = vrot.slane %v589, %v602
    %v604 = vlaneseq
    %v605 = vshrl.u32 %v604, 7
    %v606 = vsub.s32 2, %v605
    %v607 = vrot.slane %v589, %v606
    %v608 = vlaneseq
    %v609 = vshrl.u32 %v608, 7
    %v610 = vsub.s32 3, %v609
    %v611 = vrot.slane %v589, %v610
    %v612 = vlaneseq
    %v613 = vshrl.u32 %v612, 7
    %v614 = vsub.s32 4, %v613
    %v615 = vrot.slane %v589, %v614
    %v616 = vlaneseq
    %v617 = vshrl.u32 %v616, 7
    %v618 = vsub.s32 5, %v617
    %v619 = vrot.slane %v589, %v618
    %v620 = vlaneseq
    %v621 = vshrl.u32 %v620, 7
    %v622 = vsub.s32 6, %v621
    %v623 = vrot.slane %v589, %v622
    %v624 = vlaneseq
    %v625 = vshrl.u32 %v624, 7
    %v626 = vsub.s32 7, %v625
    %v627 = vrot.slane %v589, %v626
    %v628 = vlaneseq
    %v629 = vshrl.u32 %v628, 7
    %v630 = vsub.s32 0, %v629
    %v631 = vrot.slane %v593, %v630
    %v632 = vlaneseq
    %v633 = vshrl.u32 %v632, 7
    %v634 = vsub.s32 1, %v633
    %v635 = vrot.slane %v593, %v634
    %v636 = vlaneseq
    %v637 = vshrl.u32 %v636, 7
    %v638 = vsub.s32 2, %v637
    %v639 = vrot.slane %v593, %v638
    %v640 = vlaneseq
    %v641 = vshrl.u32 %v640, 7
    %v642 = vsub.s32 3, %v641
    %v643 = vrot.slane %v593, %v642
    %v644 = vlaneseq
    %v645 = vshrl.u32 %v644, 7
    %v646 = vsub.s32 4, %v645
    %v647 = vrot.slane %v593, %v646
    %v648 = vlaneseq
    %v649 = vshrl.u32 %v648, 7
    %v650 = vsub.s32 5, %v649
    %v651 = vrot.slane %v593, %v650
    %v652 = vlaneseq
    %v653 = vshrl.u32 %v652, 7
    %v654 = vsub.s32 6, %v653
    %v655 = vrot.slane %v593, %v654
    %v656 = vlaneseq
    %v657 = vshrl.u32 %v656, 7
    %v658 = vsub.s32 7, %v657
    %v659 = vrot.slane %v593, %v658
    %v676 = vmul.f32 %v585, %v599
    %v677 = vmul.f32 %v584, %v603
    %v678 = vmul.f32 %v583, %v607
    %v679 = vmul.f32 %v582, %v611
    %v680 = vmul.f32 %v581, %v615
    %v681 = vmul.f32 %v580, %v619
    %v682 = vmul.f32 %v579, %v623
    %v683 = vmul.f32 %v578, %v627
    %v684 = vmul.f32 %v577, %v631
    %v685 = vmul.f32 %v576, %v635
    %v686 = vmul.f32 %v575, %v639
    %v687 = vmul.f32 %v574, %v643
    %v688 = vmul.f32 %v573, %v647
    %v689 = vmul.f32 %v572, %v651
    %v690 = vmul.f32 %v571, %v655
    %v691 = vmul.f32 %v570, %v659
    %692 = vst [vmem:[#allocation2 + $0x80] sm:$0xf] %v676
    %693 = vst [vmem:[#allocation2 + $0x88] sm:$0xf] %v677
    %694 = vst [vmem:[#allocation2 + $0x90] sm:$0xf] %v678
    %695 = vst [vmem:[#allocation2 + $0x98] sm:$0xf] %v679
    %696 = vst [vmem:[#allocation2 + $0xa0] sm:$0xf] %v680
    %697 = vst [vmem:[#allocation2 + $0xa8] sm:$0xf] %v681
    %698 = vst [vmem:[#allocation2 + $0xb0] sm:$0xf] %v682
    %699 = vst [vmem:[#allocation2 + $0xb8] sm:$0xf] %v683
    %700 = vst [vmem:[#allocation2 + $0xc0] sm:$0xf] %v684
    %701 = vst [vmem:[#allocation2 + $0xc8] sm:$0xf] %v685
    %702 = vst [vmem:[#allocation2 + $0xd0] sm:$0xf] %v686
    %703 = vst [vmem:[#allocation2 + $0xd8] sm:$0xf] %v687
    %704 = vst [vmem:[#allocation2 + $0xe0] sm:$0xf] %v688
    %705 = vst [vmem:[#allocation2 + $0xe8] sm:$0xf] %v689
    %706 = vst [vmem:[#allocation2 + $0xf0] sm:$0xf] %v690
    %707 = vst [vmem:[#allocation2 + $0xf8] sm:$0xf] %v691
    %s708 = scalar_lea.vmem [#allocation11], 3
    %v709 = vld [vmem:[%s708] ss:$8 sm:$0xf]
    %v710 = vld [vmem:[%s708] ss:$8 sm:$0xf0]
    %v711 = vor.u32 %v709, %v710
    %s712 = scalar_lea.vmem [#allocation11], 67
    %v713 = vld [vmem:[%s712] ss:$8 sm:$0xf]
    %v714 = vld [vmem:[%s712] ss:$8 sm:$0xf0]
    %v715 = vor.u32 %v713, %v714
    %v718 = vlaneseq
    %v719 = vshrl.u32 %v718, 7
    %v720 = vsub.s32 0, %v719
    %v721 = vrot.slane %v711, %v720
    %v722 = vlaneseq
    %v723 = vshrl.u32 %v722, 7
    %v724 = vsub.s32 1, %v723
    %v725 = vrot.slane %v711, %v724
    %v726 = vlaneseq
    %v727 = vshrl.u32 %v726, 7
    %v728 = vsub.s32 2, %v727
    %v729 = vrot.slane %v711, %v728
    %v730 = vlaneseq
    %v731 = vshrl.u32 %v730, 7
    %v732 = vsub.s32 3, %v731
    %v733 = vrot.slane %v711, %v732
    %v734 = vlaneseq
    %v735 = vshrl.u32 %v734, 7
    %v736 = vsub.s32 4, %v735
    %v737 = vrot.slane %v711, %v736
    %v738 = vlaneseq
    %v739 = vshrl.u32 %v738, 7
    %v740 = vsub.s32 5, %v739
    %v741 = vrot.slane %v711, %v740
    %v742 = vlaneseq
    %v743 = vshrl.u32 %v742, 7
    %v744 = vsub.s32 6, %v743
    %v745 = vrot.slane %v711, %v744
    %v746 = vlaneseq
    %v747 = vshrl.u32 %v746, 7
    %v748 = vsub.s32 7, %v747
    %v749 = vrot.slane %v711, %v748
    %v750 = vlaneseq
    %v751 = vshrl.u32 %v750, 7
    %v752 = vsub.s32 0, %v751
    %v753 = vrot.slane %v715, %v752
    %v754 = vlaneseq
    %v755 = vshrl.u32 %v754, 7
    %v756 = vsub.s32 1, %v755
    %v757 = vrot.slane %v715, %v756
    %v758 = vlaneseq
    %v759 = vshrl.u32 %v758, 7
    %v760 = vsub.s32 2, %v759
    %v761 = vrot.slane %v715, %v760
    %v762 = vlaneseq
    %v763 = vshrl.u32 %v762, 7
    %v764 = vsub.s32 3, %v763
    %v765 = vrot.slane %v715, %v764
    %v766 = vlaneseq
    %v767 = vshrl.u32 %v766, 7
    %v768 = vsub.s32 4, %v767
    %v769 = vrot.slane %v715, %v768
    %v770 = vlaneseq
    %v771 = vshrl.u32 %v770, 7
    %v772 = vsub.s32 5, %v771
    %v773 = vrot.slane %v715, %v772
    %v774 = vlaneseq
    %v775 = vshrl.u32 %v774, 7
    %v776 = vsub.s32 6, %v775
    %v777 = vrot.slane %v715, %v776
    %v778 = vlaneseq
    %v779 = vshrl.u32 %v778, 7
    %v780 = vsub.s32 7, %v779
    %v781 = vrot.slane %v715, %v780
    %v798 = vmul.f32 %v245, %v721
    %v799 = vmul.f32 %v244, %v725
    %v800 = vmul.f32 %v243, %v729
    %v801 = vmul.f32 %v242, %v733
    %v802 = vmul.f32 %v241, %v737
    %v803 = vmul.f32 %v240, %v741
    %v804 = vmul.f32 %v239, %v745
    %v805 = vmul.f32 %v238, %v749
    %v806 = vmul.f32 %v237, %v753
    %v807 = vmul.f32 %v236, %v757
    %v808 = vmul.f32 %v235, %v761
    %v809 = vmul.f32 %v234, %v765
    %v810 = vmul.f32 %v233, %v769
    %v811 = vmul.f32 %v232, %v773
    %v812 = vmul.f32 %v231, %v777
    %v813 = vmul.f32 %v230, %v781
    %v830 = vrot.slane %v798, 4
    %v831 = vrot.slane %v799, 4
    %v832 = vrot.slane %v800, 4
    %v833 = vrot.slane %v801, 4
    %v834 = vrot.slane %v802, 4
    %v835 = vrot.slane %v803, 4
    %v836 = vrot.slane %v804, 4
    %v837 = vrot.slane %v805, 4
    %v838 = vrot.slane %v806, 4
    %v839 = vrot.slane %v807, 4
    %v840 = vrot.slane %v808, 4
    %v841 = vrot.slane %v809, 4
    %v842 = vrot.slane %v810, 4
    %v843 = vrot.slane %v811, 4
    %v844 = vrot.slane %v812, 4
    %v845 = vrot.slane %v813, 4
    %862 = vst [vmem:[#allocation2 + $0x80] sm:$0xf0] %v830
    %863 = vst [vmem:[#allocation2 + $0x88] sm:$0xf0] %v831
    %864 = vst [vmem:[#allocation2 + $0x90] sm:$0xf0] %v832
    %865 = vst [vmem:[#allocation2 + $0x98] sm:$0xf0] %v833
    %866 = vst [vmem:[#allocation2 + $0xa0] sm:$0xf0] %v834
    %867 = vst [vmem:[#allocation2 + $0xa8] sm:$0xf0] %v835
    %868 = vst [vmem:[#allocation2 + $0xb0] sm:$0xf0] %v836
    %869 = vst [vmem:[#allocation2 + $0xb8] sm:$0xf0] %v837
    %870 = vst [vmem:[#allocation2 + $0xc0] sm:$0xf0] %v838
    %871 = vst [vmem:[#allocation2 + $0xc8] sm:$0xf0] %v839
    %872 = vst [vmem:[#allocation2 + $0xd0] sm:$0xf0] %v840
    %873 = vst [vmem:[#allocation2 + $0xd8] sm:$0xf0] %v841
    %874 = vst [vmem:[#allocation2 + $0xe0] sm:$0xf0] %v842
    %875 = vst [vmem:[#allocation2 + $0xe8] sm:$0xf0] %v843
    %876 = vst [vmem:[#allocation2 + $0xf0] sm:$0xf0] %v844
    %877 = vst [vmem:[#allocation2 + $0xf8] sm:$0xf0] %v845
    %878 = vst [vmem:[#allocation2 + $0x100] sm:$0xf] %v163
    %879 = vst [vmem:[#allocation2 + $0x108] sm:$0xf] %v179
    %880 = vst [vmem:[#allocation2 + $0x110] sm:$0xf] %v164
    %881 = vst [vmem:[#allocation2 + $0x118] sm:$0xf] %v180
    %882 = vst [vmem:[#allocation2 + $0x120] sm:$0xf] %v165
    %883 = vst [vmem:[#allocation2 + $0x128] sm:$0xf] %v181
    %884 = vst [vmem:[#allocation2 + $0x130] sm:$0xf] %v166
    %885 = vst [vmem:[#allocation2 + $0x138] sm:$0xf] %v182
    %886 = vst [vmem:[#allocation2 + $0x140] sm:$0xf] %v167
    %887 = vst [vmem:[#allocation2 + $0x148] sm:$0xf] %v183
    %888 = vst [vmem:[#allocation2 + $0x150] sm:$0xf] %v168
    %889 = vst [vmem:[#allocation2 + $0x158] sm:$0xf] %v184
    %890 = vst [vmem:[#allocation2 + $0x160] sm:$0xf] %v169
    %891 = vst [vmem:[#allocation2 + $0x168] sm:$0xf] %v185
    %892 = vst [vmem:[#allocation2 + $0x170] sm:$0xf] %v170
    %893 = vst [vmem:[#allocation2 + $0x178] sm:$0xf] %v186
    %s894 = scalar_lea.vmem [#allocation11], 5
    %v895 = vld [vmem:[%s894] ss:$8 sm:$0xf]
    %v896 = vld [vmem:[%s894] ss:$8 sm:$0xf0]
    %v897 = vor.u32 %v895, %v896
    %s898 = scalar_lea.vmem [#allocation11], 69
    %v899 = vld [vmem:[%s898] ss:$8 sm:$0xf]
    %v900 = vld [vmem:[%s898] ss:$8 sm:$0xf0]
    %v901 = vor.u32 %v899, %v900
    %v904 = vlaneseq
    %v905 = vshrl.u32 %v904, 7
    %v906 = vsub.s32 0, %v905
    %v907 = vrot.slane %v897, %v906
    %v908 = vlaneseq
    %v909 = vshrl.u32 %v908, 7
    %v910 = vsub.s32 1, %v909
    %v911 = vrot.slane %v897, %v910
    %v912 = vlaneseq
    %v913 = vshrl.u32 %v912, 7
    %v914 = vsub.s32 2, %v913
    %v915 = vrot.slane %v897, %v914
    %v916 = vlaneseq
    %v917 = vshrl.u32 %v916, 7
    %v918 = vsub.s32 3, %v917
    %v919 = vrot.slane %v897, %v918
    %v920 = vlaneseq
    %v921 = vshrl.u32 %v920, 7
    %v922 = vsub.s32 4, %v921
    %v923 = vrot.slane %v897, %v922
    %v924 = vlaneseq
    %v925 = vshrl.u32 %v924, 7
    %v926 = vsub.s32 5, %v925
    %v927 = vrot.slane %v897, %v926
    %v928 = vlaneseq
    %v929 = vshrl.u32 %v928, 7
    %v930 = vsub.s32 6, %v929
    %v931 = vrot.slane %v897, %v930
    %v932 = vlaneseq
    %v933 = vshrl.u32 %v932, 7
    %v934 = vsub.s32 7, %v933
    %v935 = vrot.slane %v897, %v934
    %v936 = vlaneseq
    %v937 = vshrl.u32 %v936, 7
    %v938 = vsub.s32 0, %v937
    %v939 = vrot.slane %v901, %v938
    %v940 = vlaneseq
    %v941 = vshrl.u32 %v940, 7
    %v942 = vsub.s32 1, %v941
    %v943 = vrot.slane %v901, %v942
    %v944 = vlaneseq
    %v945 = vshrl.u32 %v944, 7
    %v946 = vsub.s32 2, %v945
    %v947 = vrot.slane %v901, %v946
    %v948 = vlaneseq
    %v949 = vshrl.u32 %v948, 7
    %v950 = vsub.s32 3, %v949
    %v951 = vrot.slane %v901, %v950
    %v952 = vlaneseq
    %v953 = vshrl.u32 %v952, 7
    %v954 = vsub.s32 4, %v953
    %v955 = vrot.slane %v901, %v954
    %v956 = vlaneseq
    %v957 = vshrl.u32 %v956, 7
    %v958 = vsub.s32 5, %v957
    %v959 = vrot.slane %v901, %v958
    %v960 = vlaneseq
    %v961 = vshrl.u32 %v960, 7
    %v962 = vsub.s32 6, %v961
    %v963 = vrot.slane %v901, %v962
    %v964 = vlaneseq
    %v965 = vshrl.u32 %v964, 7
    %v966 = vsub.s32 7, %v965
    %v967 = vrot.slane %v901, %v966
    %v984 = vmul.f32 %v584, %v907
    %v985 = vmul.f32 %v583, %v911
    %v986 = vmul.f32 %v582, %v915
    %v987 = vmul.f32 %v581, %v919
    %v988 = vmul.f32 %v580, %v923
    %v989 = vmul.f32 %v579, %v927
    %v990 = vmul.f32 %v578, %v931
    %v991 = vmul.f32 %v577, %v935
    %v992 = vmul.f32 %v576, %v939
    %v993 = vmul.f32 %v575, %v943
    %v994 = vmul.f32 %v574, %v947
    %v995 = vmul.f32 %v573, %v951
    %v996 = vmul.f32 %v572, %v955
    %v997 = vmul.f32 %v571, %v959
    %v998 = vmul.f32 %v570, %v963
    %v999 = vmul.f32 %v585, %v967
    %v1016 = vrot.slane %v984, 4
    %v1017 = vrot.slane %v985, 4
    %v1018 = vrot.slane %v986, 4
    %v1019 = vrot.slane %v987, 4
    %v1020 = vrot.slane %v988, 4
    %v1021 = vrot.slane %v989, 4
    %v1022 = vrot.slane %v990, 4
    %v1023 = vrot.slane %v991, 4
    %v1024 = vrot.slane %v992, 4
    %v1025 = vrot.slane %v993, 4
    %v1026 = vrot.slane %v994, 4
    %v1027 = vrot.slane %v995, 4
    %v1028 = vrot.slane %v996, 4
    %v1029 = vrot.slane %v997, 4
    %v1030 = vrot.slane %v998, 4
    %v1031 = vrot.slane %v999, 4
    %1048 = vst [vmem:[#allocation2 + $0x100] sm:$0xf0] %v1016
    %1049 = vst [vmem:[#allocation2 + $0x108] sm:$0xf0] %v1017
    %1050 = vst [vmem:[#allocation2 + $0x110] sm:$0xf0] %v1018
    %1051 = vst [vmem:[#allocation2 + $0x118] sm:$0xf0] %v1019
    %1052 = vst [vmem:[#allocation2 + $0x120] sm:$0xf0] %v1020
    %1053 = vst [vmem:[#allocation2 + $0x128] sm:$0xf0] %v1021
    %1054 = vst [vmem:[#allocation2 + $0x130] sm:$0xf0] %v1022
    %1055 = vst [vmem:[#allocation2 + $0x138] sm:$0xf0] %v1023
    %1056 = vst [vmem:[#allocation2 + $0x140] sm:$0xf0] %v1024
    %1057 = vst [vmem:[#allocation2 + $0x148] sm:$0xf0] %v1025
    %1058 = vst [vmem:[#allocation2 + $0x150] sm:$0xf0] %v1026
    %1059 = vst [vmem:[#allocation2 + $0x158] sm:$0xf0] %v1027
    %1060 = vst [vmem:[#allocation2 + $0x160] sm:$0xf0] %v1028
    %1061 = vst [vmem:[#allocation2 + $0x168] sm:$0xf0] %v1029
    %1062 = vst [vmem:[#allocation2 + $0x170] sm:$0xf0] %v1030
    %1063 = vst [vmem:[#allocation2 + $0x178] sm:$0xf0] %v1031
    %s1064 = scalar_lea.vmem [#allocation11], 6
    %v1065 = vld [vmem:[%s1064] ss:$8 sm:$0xf]
    %v1066 = vld [vmem:[%s1064] ss:$8 sm:$0xf0]
    %v1067 = vor.u32 %v1065, %v1066
    %s1068 = scalar_lea.vmem [#allocation11], 70
    %v1069 = vld [vmem:[%s1068] ss:$8 sm:$0xf]
    %v1070 = vld [vmem:[%s1068] ss:$8 sm:$0xf0]
    %v1071 = vor.u32 %v1069, %v1070
    %v1074 = vlaneseq
    %v1075 = vshrl.u32 %v1074, 7
    %v1076 = vsub.s32 0, %v1075
    %v1077 = vrot.slane %v1067, %v1076
    %v1078 = vlaneseq
    %v1079 = vshrl.u32 %v1078, 7
    %v1080 = vsub.s32 1, %v1079
    %v1081 = vrot.slane %v1067, %v1080
    %v1082 = vlaneseq
    %v1083 = vshrl.u32 %v1082, 7
    %v1084 = vsub.s32 2, %v1083
    %v1085 = vrot.slane %v1067, %v1084
    %v1086 = vlaneseq
    %v1087 = vshrl.u32 %v1086, 7
    %v1088 = vsub.s32 3, %v1087
    %v1089 = vrot.slane %v1067, %v1088
    %v1090 = vlaneseq
    %v1091 = vshrl.u32 %v1090, 7
    %v1092 = vsub.s32 4, %v1091
    %v1093 = vrot.slane %v1067, %v1092
    %v1094 = vlaneseq
    %v1095 = vshrl.u32 %v1094, 7
    %v1096 = vsub.s32 5, %v1095
    %v1097 = vrot.slane %v1067, %v1096
    %v1098 = vlaneseq
    %v1099 = vshrl.u32 %v1098, 7
    %v1100 = vsub.s32 6, %v1099
    %v1101 = vrot.slane %v1067, %v1100
    %v1102 = vlaneseq
    %v1103 = vshrl.u32 %v1102, 7
    %v1104 = vsub.s32 7, %v1103
    %v1105 = vrot.slane %v1067, %v1104
    %v1106 = vlaneseq
    %v1107 = vshrl.u32 %v1106, 7
    %v1108 = vsub.s32 0, %v1107
    %v1109 = vrot.slane %v1071, %v1108
    %v1110 = vlaneseq
    %v1111 = vshrl.u32 %v1110, 7
    %v1112 = vsub.s32 1, %v1111
    %v1113 = vrot.slane %v1071, %v1112
    %v1114 = vlaneseq
    %v1115 = vshrl.u32 %v1114, 7
    %v1116 = vsub.s32 2, %v1115
    %v1117 = vrot.slane %v1071, %v1116
    %v1118 = vlaneseq
    %v1119 = vshrl.u32 %v1118, 7
    %v1120 = vsub.s32 3, %v1119
    %v1121 = vrot.slane %v1071, %v1120
    %v1122 = vlaneseq
    %v1123 = vshrl.u32 %v1122, 7
    %v1124 = vsub.s32 4, %v1123
    %v1125 = vrot.slane %v1071, %v1124
    %v1126 = vlaneseq
    %v1127 = vshrl.u32 %v1126, 7
    %v1128 = vsub.s32 5, %v1127
    %v1129 = vrot.slane %v1071, %v1128
    %v1130 = vlaneseq
    %v1131 = vshrl.u32 %v1130, 7
    %v1132 = vsub.s32 6, %v1131
    %v1133 = vrot.slane %v1071, %v1132
    %v1134 = vlaneseq
    %v1135 = vshrl.u32 %v1134, 7
    %v1136 = vsub.s32 7, %v1135
    %v1137 = vrot.slane %v1071, %v1136
    %v1154 = vmul.f32 %v244, %v1077
    %v1155 = vmul.f32 %v243, %v1081
    %v1156 = vmul.f32 %v242, %v1085
    %v1157 = vmul.f32 %v241, %v1089
    %v1158 = vmul.f32 %v240, %v1093
    %v1159 = vmul.f32 %v239, %v1097
    %v1160 = vmul.f32 %v238, %v1101
    %v1161 = vmul.f32 %v237, %v1105
    %v1162 = vmul.f32 %v236, %v1109
    %v1163 = vmul.f32 %v235, %v1113
    %v1164 = vmul.f32 %v234, %v1117
    %v1165 = vmul.f32 %v233, %v1121
    %v1166 = vmul.f32 %v232, %v1125
    %v1167 = vmul.f32 %v231, %v1129
    %v1168 = vmul.f32 %v230, %v1133
    %v1169 = vmul.f32 %v245, %v1137
    %1170 = vst [vmem:[#allocation2 + $0x180] sm:$0xf] %v1154
    %1171 = vst [vmem:[#allocation2 + $0x188] sm:$0xf] %v1155
    %1172 = vst [vmem:[#allocation2 + $0x190] sm:$0xf] %v1156
    %1173 = vst [vmem:[#allocation2 + $0x198] sm:$0xf] %v1157
    %1174 = vst [vmem:[#allocation2 + $0x1a0] sm:$0xf] %v1158
    %1175 = vst [vmem:[#allocation2 + $0x1a8] sm:$0xf] %v1159
    %1176 = vst [vmem:[#allocation2 + $0x1b0] sm:$0xf] %v1160
    %1177 = vst [vmem:[#allocation2 + $0x1b8] sm:$0xf] %v1161
    %1178 = vst [vmem:[#allocation2 + $0x1c0] sm:$0xf] %v1162
    %1179 = vst [vmem:[#allocation2 + $0x1c8] sm:$0xf] %v1163
    %1180 = vst [vmem:[#allocation2 + $0x1d0] sm:$0xf] %v1164
    %1181 = vst [vmem:[#allocation2 + $0x1d8] sm:$0xf] %v1165
    %1182 = vst [vmem:[#allocation2 + $0x1e0] sm:$0xf] %v1166
    %1183 = vst [vmem:[#allocation2 + $0x1e8] sm:$0xf] %v1167
    %1184 = vst [vmem:[#allocation2 + $0x1f0] sm:$0xf] %v1168
    %1185 = vst [vmem:[#allocation2 + $0x1f8] sm:$0xf] %v1169
    %s1186 = scalar_lea.vmem [#allocation11], 7
    %v1187 = vld [vmem:[%s1186] ss:$8 sm:$0xf]
    %v1188 = vld [vmem:[%s1186] ss:$8 sm:$0xf0]
    %v1189 = vor.u32 %v1187, %v1188
    %s1190 = scalar_lea.vmem [#allocation11], 71
    %v1191 = vld [vmem:[%s1190] ss:$8 sm:$0xf]
    %v1192 = vld [vmem:[%s1190] ss:$8 sm:$0xf0]
    %v1193 = vor.u32 %v1191, %v1192
    %v1196 = vlaneseq
    %v1197 = vshrl.u32 %v1196, 7
    %v1198 = vsub.s32 0, %v1197
    %v1199 = vrot.slane %v1189, %v1198
    %v1200 = vlaneseq
    %v1201 = vshrl.u32 %v1200, 7
    %v1202 = vsub.s32 1, %v1201
    %v1203 = vrot.slane %v1189, %v1202
    %v1204 = vlaneseq
    %v1205 = vshrl.u32 %v1204, 7
    %v1206 = vsub.s32 2, %v1205
    %v1207 = vrot.slane %v1189, %v1206
    %v1208 = vlaneseq
    %v1209 = vshrl.u32 %v1208, 7
    %v1210 = vsub.s32 3, %v1209
    %v1211 = vrot.slane %v1189, %v1210
    %v1212 = vlaneseq
    %v1213 = vshrl.u32 %v1212, 7
    %v1214 = vsub.s32 4, %v1213
    %v1215 = vrot.slane %v1189, %v1214
    %v1216 = vlaneseq
    %v1217 = vshrl.u32 %v1216, 7
    %v1218 = vsub.s32 5, %v1217
    %v1219 = vrot.slane %v1189, %v1218
    %v1220 = vlaneseq
    %v1221 = vshrl.u32 %v1220, 7
    %v1222 = vsub.s32 6, %v1221
    %v1223 = vrot.slane %v1189, %v1222
    %v1224 = vlaneseq
    %v1225 = vshrl.u32 %v1224, 7
    %v1226 = vsub.s32 7, %v1225
    %v1227 = vrot.slane %v1189, %v1226
    %v1228 = vlaneseq
    %v1229 = vshrl.u32 %v1228, 7
    %v1230 = vsub.s32 0, %v1229
    %v1231 = vrot.slane %v1193, %v1230
    %v1232 = vlaneseq
    %v1233 = vshrl.u32 %v1232, 7
    %v1234 = vsub.s32 1, %v1233
    %v1235 = vrot.slane %v1193, %v1234
    %v1236 = vlaneseq
    %v1237 = vshrl.u32 %v1236, 7
    %v1238 = vsub.s32 2, %v1237
    %v1239 = vrot.slane %v1193, %v1238
    %v1240 = vlaneseq
    %v1241 = vshrl.u32 %v1240, 7
    %v1242 = vsub.s32 3, %v1241
    %v1243 = vrot.slane %v1193, %v1242
    %v1244 = vlaneseq
    %v1245 = vshrl.u32 %v1244, 7
    %v1246 = vsub.s32 4, %v1245
    %v1247 = vrot.slane %v1193, %v1246
    %v1248 = vlaneseq
    %v1249 = vshrl.u32 %v1248, 7
    %v1250 = vsub.s32 5, %v1249
    %v1251 = vrot.slane %v1193, %v1250
    %v1252 = vlaneseq
    %v1253 = vshrl.u32 %v1252, 7
    %v1254 = vsub.s32 6, %v1253
    %v1255 = vrot.slane %v1193, %v1254
    %v1256 = vlaneseq
    %v1257 = vshrl.u32 %v1256, 7
    %v1258 = vsub.s32 7, %v1257
    %v1259 = vrot.slane %v1193, %v1258
    %v1276 = vmul.f32 %v179, %v1199
    %v1277 = vmul.f32 %v164, %v1203
    %v1278 = vmul.f32 %v180, %v1207
    %v1279 = vmul.f32 %v165, %v1211
    %v1280 = vmul.f32 %v181, %v1215
    %v1281 = vmul.f32 %v166, %v1219
    %v1282 = vmul.f32 %v182, %v1223
    %v1283 = vmul.f32 %v167, %v1227
    %v1284 = vmul.f32 %v183, %v1231
    %v1285 = vmul.f32 %v168, %v1235
    %v1286 = vmul.f32 %v184, %v1239
    %v1287 = vmul.f32 %v169, %v1243
    %v1288 = vmul.f32 %v185, %v1247
    %v1289 = vmul.f32 %v170, %v1251
    %v1290 = vmul.f32 %v186, %v1255
    %v1291 = vmul.f32 %v163, %v1259
    %v1308 = vrot.slane %v1276, 4
    %v1309 = vrot.slane %v1277, 4
    %v1310 = vrot.slane %v1278, 4
    %v1311 = vrot.slane %v1279, 4
    %v1312 = vrot.slane %v1280, 4
    %v1313 = vrot.slane %v1281, 4
    %v1314 = vrot.slane %v1282, 4
    %v1315 = vrot.slane %v1283, 4
    %v1316 = vrot.slane %v1284, 4
    %v1317 = vrot.slane %v1285, 4
    %v1318 = vrot.slane %v1286, 4
    %v1319 = vrot.slane %v1287, 4
    %v1320 = vrot.slane %v1288, 4
    %v1321 = vrot.slane %v1289, 4
    %v1322 = vrot.slane %v1290, 4
    %v1323 = vrot.slane %v1291, 4
    %1340 = vst [vmem:[#allocation2 + $0x180] sm:$0xf0] %v1308
    %1341 = vst [vmem:[#allocation2 + $0x188] sm:$0xf0] %v1309
    %1342 = vst [vmem:[#allocation2 + $0x190] sm:$0xf0] %v1310
    %1343 = vst [vmem:[#allocation2 + $0x198] sm:$0xf0] %v1311
    %1344 = vst [vmem:[#allocation2 + $0x1a0] sm:$0xf0] %v1312
    %1345 = vst [vmem:[#allocation2 + $0x1a8] sm:$0xf0] %v1313
    %1346 = vst [vmem:[#allocation2 + $0x1b0] sm:$0xf0] %v1314
    %1347 = vst [vmem:[#allocation2 + $0x1b8] sm:$0xf0] %v1315
    %1348 = vst [vmem:[#allocation2 + $0x1c0] sm:$0xf0] %v1316
    %1349 = vst [vmem:[#allocation2 + $0x1c8] sm:$0xf0] %v1317
    %1350 = vst [vmem:[#allocation2 + $0x1d0] sm:$0xf0] %v1318
    %1351 = vst [vmem:[#allocation2 + $0x1d8] sm:$0xf0] %v1319
    %1352 = vst [vmem:[#allocation2 + $0x1e0] sm:$0xf0] %v1320
    %1353 = vst [vmem:[#allocation2 + $0x1e8] sm:$0xf0] %v1321
    %1354 = vst [vmem:[#allocation2 + $0x1f0] sm:$0xf0] %v1322
    %1355 = vst [vmem:[#allocation2 + $0x1f8] sm:$0xf0] %v1323
    %s1356 = scalar_lea.vmem [#allocation11], 128
    %v1357 = vld [vmem:[%s1356] ss:$8 sm:$0xf]
    %v1358 = vld [vmem:[%s1356] ss:$8 sm:$0xf0]
    %v1359 = vor.u32 %v1357, %v1358
    %s1360 = scalar_lea.vmem [#allocation11], 192
    %v1361 = vld [vmem:[%s1360] ss:$8 sm:$0xf]
    %v1362 = vld [vmem:[%s1360] ss:$8 sm:$0xf0]
    %v1363 = vor.u32 %v1361, %v1362
    %v1366 = vlaneseq
    %v1367 = vshrl.u32 %v1366, 7
    %v1368 = vsub.s32 0, %v1367
    %v1369 = vrot.slane %v1359, %v1368
    %v1370 = vlaneseq
    %v1371 = vshrl.u32 %v1370, 7
    %v1372 = vsub.s32 1, %v1371
    %v1373 = vrot.slane %v1359, %v1372
    %v1374 = vlaneseq
    %v1375 = vshrl.u32 %v1374, 7
    %v1376 = vsub.s32 2, %v1375
    %v1377 = vrot.slane %v1359, %v1376
    %v1378 = vlaneseq
    %v1379 = vshrl.u32 %v1378, 7
    %v1380 = vsub.s32 3, %v1379
    %v1381 = vrot.slane %v1359, %v1380
    %v1382 = vlaneseq
    %v1383 = vshrl.u32 %v1382, 7
    %v1384 = vsub.s32 4, %v1383
    %v1385 = vrot.slane %v1359, %v1384
    %v1386 = vlaneseq
    %v1387 = vshrl.u32 %v1386, 7
    %v1388 = vsub.s32 5, %v1387
    %v1389 = vrot.slane %v1359, %v1388
    %v1390 = vlaneseq
    %v1391 = vshrl.u32 %v1390, 7
    %v1392 = vsub.s32 6, %v1391
    %v1393 = vrot.slane %v1359, %v1392
    %v1394 = vlaneseq
    %v1395 = vshrl.u32 %v1394, 7
    %v1396 = vsub.s32 7, %v1395
    %v1397 = vrot.slane %v1359, %v1396
    %v1398 = vlaneseq
    %v1399 = vshrl.u32 %v1398, 7
    %v1400 = vsub.s32 0, %v1399
    %v1401 = vrot.slane %v1363, %v1400
    %v1402 = vlaneseq
    %v1403 = vshrl.u32 %v1402, 7
    %v1404 = vsub.s32 1, %v1403
    %v1405 = vrot.slane %v1363, %v1404
    %v1406 = vlaneseq
    %v1407 = vshrl.u32 %v1406, 7
    %v1408 = vsub.s32 2, %v1407
    %v1409 = vrot.slane %v1363, %v1408
    %v1410 = vlaneseq
    %v1411 = vshrl.u32 %v1410, 7
    %v1412 = vsub.s32 3, %v1411
    %v1413 = vrot.slane %v1363, %v1412
    %v1414 = vlaneseq
    %v1415 = vshrl.u32 %v1414, 7
    %v1416 = vsub.s32 4, %v1415
    %v1417 = vrot.slane %v1363, %v1416
    %v1418 = vlaneseq
    %v1419 = vshrl.u32 %v1418, 7
    %v1420 = vsub.s32 5, %v1419
    %v1421 = vrot.slane %v1363, %v1420
    %v1422 = vlaneseq
    %v1423 = vshrl.u32 %v1422, 7
    %v1424 = vsub.s32 6, %v1423
    %v1425 = vrot.slane %v1363, %v1424
    %v1426 = vlaneseq
    %v1427 = vshrl.u32 %v1426, 7
    %v1428 = vsub.s32 7, %v1427
    %v1429 = vrot.slane %v1363, %v1428
    %v1446 = vmul.f32 %v583, %v1369
    %v1447 = vmul.f32 %v582, %v1373
    %v1448 = vmul.f32 %v581, %v1377
    %v1449 = vmul.f32 %v580, %v1381
    %v1450 = vmul.f32 %v579, %v1385
    %v1451 = vmul.f32 %v578, %v1389
    %v1452 = vmul.f32 %v577, %v1393
    %v1453 = vmul.f32 %v576, %v1397
    %v1454 = vmul.f32 %v575, %v1401
    %v1455 = vmul.f32 %v574, %v1405
    %v1456 = vmul.f32 %v573, %v1409
    %v1457 = vmul.f32 %v572, %v1413
    %v1458 = vmul.f32 %v571, %v1417
    %v1459 = vmul.f32 %v570, %v1421
    %v1460 = vmul.f32 %v585, %v1425
    %v1461 = vmul.f32 %v584, %v1429
    %1462 = vst [vmem:[#allocation2 + $0x200] sm:$0xf] %v1446
    %1463 = vst [vmem:[#allocation2 + $0x208] sm:$0xf] %v1447
    %1464 = vst [vmem:[#allocation2 + $0x210] sm:$0xf] %v1448
    %1465 = vst [vmem:[#allocation2 + $0x218] sm:$0xf] %v1449
    %1466 = vst [vmem:[#allocation2 + $0x220] sm:$0xf] %v1450
    %1467 = vst [vmem:[#allocation2 + $0x228] sm:$0xf] %v1451
    %1468 = vst [vmem:[#allocation2 + $0x230] sm:$0xf] %v1452
    %1469 = vst [vmem:[#allocation2 + $0x238] sm:$0xf] %v1453
    %1470 = vst [vmem:[#allocation2 + $0x240] sm:$0xf] %v1454
    %1471 = vst [vmem:[#allocation2 + $0x248] sm:$0xf] %v1455
    %1472 = vst [vmem:[#allocation2 + $0x250] sm:$0xf] %v1456
    %1473 = vst [vmem:[#allocation2 + $0x258] sm:$0xf] %v1457
    %1474 = vst [vmem:[#allocation2 + $0x260] sm:$0xf] %v1458
    %1475 = vst [vmem:[#allocation2 + $0x268] sm:$0xf] %v1459
    %1476 = vst [vmem:[#allocation2 + $0x270] sm:$0xf] %v1460
    %1477 = vst [vmem:[#allocation2 + $0x278] sm:$0xf] %v1461
    %v1478 = vld [vmem:[#allocation9] sm:$0xff]
    %v1479 = vld [vmem:[#allocation2] sm:$0xff]
    %v1480 = vld [vmem:[#allocation2 + $0x8] sm:$0xff]
    %v1481 = vld [vmem:[#allocation2 + $0x10] sm:$0xff]
    %v1482 = vld [vmem:[#allocation2 + $0x18] sm:$0xff]
    %v1483 = vld [vmem:[#allocation2 + $0x20] sm:$0xff]
    %v1484 = vld [vmem:[#allocation2 + $0x28] sm:$0xff]
    %v1485 = vld [vmem:[#allocation2 + $0x30] sm:$0xff]
    %v1486 = vld [vmem:[#allocation2 + $0x38] sm:$0xff]
    %v1487 = vld [vmem:[#allocation2 + $0x40] sm:$0xff]
    %v1488 = vld [vmem:[#allocation2 + $0x48] sm:$0xff]
    %v1489 = vld [vmem:[#allocation2 + $0x50] sm:$0xff]
    %v1490 = vld [vmem:[#allocation2 + $0x58] sm:$0xff]
    %v1491 = vld [vmem:[#allocation2 + $0x60] sm:$0xff]
    %v1492 = vld [vmem:[#allocation2 + $0x68] sm:$0xff]
    %v1493 = vld [vmem:[#allocation2 + $0x70] sm:$0xff]
    %v1494 = vld [vmem:[#allocation2 + $0x78] sm:$0xff]
    %v1495 = vld [vmem:[#allocation2 + $0x80] sm:$0xff]
    %v1496 = vld [vmem:[#allocation2 + $0x88] sm:$0xff]
    %v1497 = vld [vmem:[#allocation2 + $0x90] sm:$0xff]
    %v1498 = vld [vmem:[#allocation2 + $0x98] sm:$0xff]
    %v1499 = vld [vmem:[#allocation2 + $0xa0] sm:$0xff]
    %v1500 = vld [vmem:[#allocation2 + $0xa8] sm:$0xff]
    %v1501 = vld [vmem:[#allocation2 + $0xb0] sm:$0xff]
    %v1502 = vld [vmem:[#allocation2 + $0xb8] sm:$0xff]
    %v1503 = vld [vmem:[#allocation2 + $0xc0] sm:$0xff]
    %v1504 = vld [vmem:[#allocation2 + $0xc8] sm:$0xff]
    %v1505 = vld [vmem:[#allocation2 + $0xd0] sm:$0xff]
    %v1506 = vld [vmem:[#allocation2 + $0xd8] sm:$0xff]
    %v1507 = vld [vmem:[#allocation2 + $0xe0] sm:$0xff]
    %v1508 = vld [vmem:[#allocation2 + $0xe8] sm:$0xff]
    %v1509 = vld [vmem:[#allocation2 + $0xf0] sm:$0xff]
    %v1510 = vld [vmem:[#allocation2 + $0xf8] sm:$0xff]
    %v1511 = vld [vmem:[#allocation2 + $0x100] sm:$0xff]
    %v1512 = vld [vmem:[#allocation2 + $0x108] sm:$0xff]
    %v1513 = vld [vmem:[#allocation2 + $0x110] sm:$0xff]
    %v1514 = vld [vmem:[#allocation2 + $0x118] sm:$0xff]
    %v1515 = vld [vmem:[#allocation2 + $0x120] sm:$0xff]
    %v1516 = vld [vmem:[#allocation2 + $0x128] sm:$0xff]
    %v1517 = vld [vmem:[#allocation2 + $0x130] sm:$0xff]
    %v1518 = vld [vmem:[#allocation2 + $0x138] sm:$0xff]
    %v1519 = vld [vmem:[#allocation2 + $0x140] sm:$0xff]
    %v1520 = vld [vmem:[#allocation2 + $0x148] sm:$0xff]
    %v1521 = vld [vmem:[#allocation2 + $0x150] sm:$0xff]
    %v1522 = vld [vmem:[#allocation2 + $0x158] sm:$0xff]
    %v1523 = vld [vmem:[#allocation2 + $0x160] sm:$0xff]
    %v1524 = vld [vmem:[#allocation2 + $0x168] sm:$0xff]
    %v1525 = vld [vmem:[#allocation2 + $0x170] sm:$0xff]
    %v1526 = vld [vmem:[#allocation2 + $0x178] sm:$0xff]
    %v1527 = vld [vmem:[#allocation2 + $0x180] sm:$0xff]
    %v1528 = vld [vmem:[#allocation2 + $0x188] sm:$0xff]
    %v1529 = vld [vmem:[#allocation2 + $0x190] sm:$0xff]
    %v1530 = vld [vmem:[#allocation2 + $0x198] sm:$0xff]
    %v1531 = vld [vmem:[#allocation2 + $0x1a0] sm:$0xff]
    %v1532 = vld [vmem:[#allocation2 + $0x1a8] sm:$0xff]
    %v1533 = vld [vmem:[#allocation2 + $0x1b0] sm:$0xff]
    %v1534 = vld [vmem:[#allocation2 + $0x1b8] sm:$0xff]
    %v1535 = vld [vmem:[#allocation2 + $0x1c0] sm:$0xff]
    %v1536 = vld [vmem:[#allocation2 + $0x1c8] sm:$0xff]
    %v1537 = vld [vmem:[#allocation2 + $0x1d0] sm:$0xff]
    %v1538 = vld [vmem:[#allocation2 + $0x1d8] sm:$0xff]
    %v1539 = vld [vmem:[#allocation2 + $0x1e0] sm:$0xff]
    %v1540 = vld [vmem:[#allocation2 + $0x1e8] sm:$0xff]
    %v1541 = vld [vmem:[#allocation2 + $0x1f0] sm:$0xff]
    %v1542 = vld [vmem:[#allocation2 + $0x1f8] sm:$0xff]
    %v1543 = vld [vmem:[#allocation2 + $0x200] sm:$0xf]
    %v1544 = vld [vmem:[#allocation2 + $0x208] sm:$0xf]
    %v1545 = vld [vmem:[#allocation2 + $0x210] sm:$0xf]
    %v1546 = vld [vmem:[#allocation2 + $0x218] sm:$0xf]
    %v1547 = vld [vmem:[#allocation2 + $0x220] sm:$0xf]
    %v1548 = vld [vmem:[#allocation2 + $0x228] sm:$0xf]
    %v1549 = vld [vmem:[#allocation2 + $0x230] sm:$0xf]
    %v1550 = vld [vmem:[#allocation2 + $0x238] sm:$0xf]
    %v1551 = vld [vmem:[#allocation2 + $0x240] sm:$0xf]
    %v1552 = vld [vmem:[#allocation2 + $0x248] sm:$0xf]
    %v1553 = vld [vmem:[#allocation2 + $0x250] sm:$0xf]
    %v1554 = vld [vmem:[#allocation2 + $0x258] sm:$0xf]
    %v1555 = vld [vmem:[#allocation2 + $0x260] sm:$0xf]
    %v1556 = vld [vmem:[#allocation2 + $0x268] sm:$0xf]
    %v1557 = vld [vmem:[#allocation2 + $0x270] sm:$0xf]
    %v1558 = vld [vmem:[#allocation2 + $0x278] sm:$0xf]
    %v1559 = vld [vmem:[%s2] sm:$0xff]
    %1561 = vset.pattern.permute.xlu0 0
    %1562 = vperm.xlu0 %1561, %v1559
    %v1563 = vpop.permute.xlu0 %1562
    %vm1565 = vcmask 293888
    %v1567 = vsel %vm1565, %v1478, 0
    %vm1569 = vcmask 1043456
    %v1571 = vsel %vm1569, %v1543, 0
    %v1574 = vsel %vm1569, %v1544, 0
    %v1577 = vsel %vm1569, %v1545, 0
    %v1580 = vsel %vm1569, %v1546, 0
    %v1583 = vsel %vm1569, %v1547, 0
    %v1586 = vsel %vm1569, %v1548, 0
    %v1589 = vsel %vm1569, %v1549, 0
    %v1592 = vsel %vm1569, %v1550, 0
    %v1595 = vsel %vm1569, %v1551, 0
    %v1598 = vsel %vm1569, %v1552, 0
    %v1601 = vsel %vm1569, %v1553, 0
    %v1604 = vsel %vm1569, %v1554, 0
    %v1607 = vsel %vm1569, %v1555, 0
    %v1610 = vsel %vm1569, %v1556, 0
    %v1613 = vsel %vm1569, %v1557, 0
    %v1616 = vsel %vm1569, %v1558, 0
    %1618 = vmatprep.subr.mxu0 %v1480
    %1619 = vmatpush1.msra.mxu0 %v1479
    %1620 = vmatprep.subr.mxu0 %v1496
    %1621 = vmatpush1.msra.mxu0 %v1495
    %1622 = vmatprep.subr.mxu0 %v1512
    %1623 = vmatpush1.msra.mxu0 %v1511
    %1624 = vmatprep.subr.mxu0 %v1528
    %1625 = vmatpush1.msra.mxu0 %v1527
    %1626 = vmatprep.subr.mxu0 %v1574
    %1627 = vmatpush1.msra.mxu0 %v1571
    %1628 = vmatprep.subr.mxu0 0.0
    %1629 = vmatpush1.msra.mxu0 0.0
    %1630 = vmatprep.subr.mxu0 0.0
    %1631 = vmatpush1.msra.mxu0 0.0
    %1632 = vmatprep.subr.mxu0 0.0
    %1633 = vmatpush1.msra.mxu0 0.0
    %1634 = vmatprep.subr.mxu0 0.0
    %1635 = vmatpush1.msra.mxu0 0.0
    %1636 = vmatprep.subr.mxu0 0.0
    %1637 = vmatpush1.msra.mxu0 0.0
    %1638 = vmatprep.subr.mxu0 0.0
    %1639 = vmatpush1.msra.mxu0 0.0
    %1640 = vmatprep.subr.mxu0 0.0
    %1641 = vmatpush1.msra.mxu0 0.0
    %1642 = vmatprep.subr.mxu0 0.0
    %1643 = vmatpush1.msra.mxu0 0.0
    %1644 = vmatprep.subr.mxu0 0.0
    %1645 = vmatpush1.msra.mxu0 0.0
    %1646 = vmatprep.subr.mxu0 0.0
    %1647 = vmatpush1.msra.mxu0 0.0
    %1648 = vmatprep.subr.mxu0 0.0
    %1649 = vmatpush1.msra.mxu0 0.0
    %1650 = vmatprep.subr.mxu0 0.0
    %1651 = vmatpush1.msra.mxu0 0.0
    %1652 = vmatprep.subr.mxu0 0.0
    %1653 = vmatpush1.msra.mxu0 0.0
    %1654 = vmatprep.subr.mxu0 0.0
    %1655 = vmatpush1.msra.mxu0 0.0
    %1656 = vmatprep.subr.mxu0 0.0
    %1657 = vmatpush1.msra.mxu0 0.0
    %1658 = vmatprep.subr.mxu0 0.0
    %1659 = vmatpush1.msra.mxu0 0.0
    %1660 = vmatprep.subr.mxu0 0.0
    %1661 = vmatpush1.msra.mxu0 0.0
    %1662 = vmatprep.subr.mxu0 0.0
    %1663 = vmatpush1.msra.mxu0 0.0
    %1664 = vmatprep.subr.mxu0 0.0
    %1665 = vmatpush1.msra.mxu0 0.0
    %1666 = vmatprep.subr.mxu0 0.0
    %1667 = vmatpush1.msra.mxu0 0.0
    %1668 = vmatprep.subr.mxu0 0.0
    %1669 = vmatpush1.msra.mxu0 0.0
    %1670 = vmatprep.subr.mxu0 0.0
    %1671 = vmatpush1.msra.mxu0 0.0
    %1672 = vmatprep.subr.mxu0 0.0
    %1673 = vmatpush1.msra.mxu0 0.0
    %1674 = vmatprep.subr.mxu0 0.0
    %1675 = vmatpush1.msra.mxu0 0.0
    %1676 = vmatprep.subr.mxu0 0.0
    %1677 = vmatpush1.msra.mxu0 0.0
    %1678 = vmatprep.subr.mxu0 0.0
    %1679 = vmatpush1.msra.mxu0 0.0
    %1680 = vmatprep.subr.mxu0 0.0
    %1681 = vmatpush1.msra.mxu0 0.0
    %1682 = vmatprep.mubr.f32.mxu0 0.0
    %1683 = vmatmul.mubr.f32.gmra.mrb[0].mxu0 %v1567
    %v1684 = vpop.f32.mrb[0].mxu0
    %v1685 = vadd.f32 %v1563, %v1684
    %v1686 = vpop.f32.mrb[0].mxu0
    %v1687 = vadd.f32 %v1563, %v1686
    %1688 = vdwg.mxu0
    %1689 = vmatprep.subr.mxu0 %v1482
    %1690 = vmatpush1.msra.mxu0 %v1481
    %1691 = vmatprep.subr.mxu0 %v1498
    %1692 = vmatpush1.msra.mxu0 %v1497
    %1693 = vmatprep.subr.mxu0 %v1514
    %1694 = vmatpush1.msra.mxu0 %v1513
    %1695 = vmatprep.subr.mxu0 %v1530
    %1696 = vmatpush1.msra.mxu0 %v1529
    %1697 = vmatprep.subr.mxu0 %v1580
    %1698 = vmatpush1.msra.mxu0 %v1577
    %1699 = vmatprep.subr.mxu0 0.0
    %1700 = vmatpush1.msra.mxu0 0.0
    %1701 = vmatprep.subr.mxu0 0.0
    %1702 = vmatpush1.msra.mxu0 0.0
    %1703 = vmatprep.subr.mxu0 0.0
    %1704 = vmatpush1.msra.mxu0 0.0
    %1705 = vmatprep.subr.mxu0 0.0
    %1706 = vmatpush1.msra.mxu0 0.0
    %1707 = vmatprep.subr.mxu0 0.0
    %1708 = vmatpush1.msra.mxu0 0.0
    %1709 = vmatprep.subr.mxu0 0.0
    %1710 = vmatpush1.msra.mxu0 0.0
    %1711 = vmatprep.subr.mxu0 0.0
    %1712 = vmatpush1.msra.mxu0 0.0
    %1713 = vmatprep.subr.mxu0 0.0
    %1714 = vmatpush1.msra.mxu0 0.0
    %1715 = vmatprep.subr.mxu0 0.0
    %1716 = vmatpush1.msra.mxu0 0.0
    %1717 = vmatprep.subr.mxu0 0.0
    %1718 = vmatpush1.msra.mxu0 0.0
    %1719 = vmatprep.subr.mxu0 0.0
    %1720 = vmatpush1.msra.mxu0 0.0
    %1721 = vmatprep.subr.mxu0 0.0
    %1722 = vmatpush1.msra.mxu0 0.0
    %1723 = vmatprep.subr.mxu0 0.0
    %1724 = vmatpush1.msra.mxu0 0.0
    %1725 = vmatprep.subr.mxu0 0.0
    %1726 = vmatpush1.msra.mxu0 0.0
    %1727 = vmatprep.subr.mxu0 0.0
    %1728 = vmatpush1.msra.mxu0 0.0
    %1729 = vmatprep.subr.mxu0 0.0
    %1730 = vmatpush1.msra.mxu0 0.0
    %1731 = vmatprep.subr.mxu0 0.0
    %1732 = vmatpush1.msra.mxu0 0.0
    %1733 = vmatprep.subr.mxu0 0.0
    %1734 = vmatpush1.msra.mxu0 0.0
    %1735 = vmatprep.subr.mxu0 0.0
    %1736 = vmatpush1.msra.mxu0 0.0
    %1737 = vmatprep.subr.mxu0 0.0
    %1738 = vmatpush1.msra.mxu0 0.0
    %1739 = vmatprep.subr.mxu0 0.0
    %1740 = vmatpush1.msra.mxu0 0.0
    %1741 = vmatprep.subr.mxu0 0.0
    %1742 = vmatpush1.msra.mxu0 0.0
    %1743 = vmatprep.subr.mxu0 0.0
    %1744 = vmatpush1.msra.mxu0 0.0
    %1745 = vmatprep.subr.mxu0 0.0
    %1746 = vmatpush1.msra.mxu0 0.0
    %1747 = vmatprep.subr.mxu0 0.0
    %1748 = vmatpush1.msra.mxu0 0.0
    %1749 = vmatprep.subr.mxu0 0.0
    %1750 = vmatpush1.msra.mxu0 0.0
    %1751 = vmatprep.subr.mxu0 0.0
    %1752 = vmatpush1.msra.mxu0 0.0
    %1753 = vmatprep.mubr.f32.mxu0 0.0
    %1754 = vmatmul.mubr.f32.gmra.mrb[0].mxu0 %v1567
    %v1755 = vpop.f32.mrb[0].mxu0
    %v1756 = vadd.f32 %v1563, %v1755
    %v1757 = vpop.f32.mrb[0].mxu0
    %v1758 = vadd.f32 %v1563, %v1757
    %1759 = vdwg.mxu0
    %1760 = vmatprep.subr.mxu0 %v1484
    %1761 = vmatpush1.msra.mxu0 %v1483
    %1762 = vmatprep.subr.mxu0 %v1500
    %1763 = vmatpush1.msra.mxu0 %v1499
    %1764 = vmatprep.subr.mxu0 %v1516
    %1765 = vmatpush1.msra.mxu0 %v1515
    %1766 = vmatprep.subr.mxu0 %v1532
    %1767 = vmatpush1.msra.mxu0 %v1531
    %1768 = vmatprep.subr.mxu0 %v1586
    %1769 = vmatpush1.msra.mxu0 %v1583
    %1770 = vmatprep.subr.mxu0 0.0
    %1771 = vmatpush1.msra.mxu0 0.0
    %1772 = vmatprep.subr.mxu0 0.0
    %1773 = vmatpush1.msra.mxu0 0.0
    %1774 = vmatprep.subr.mxu0 0.0
    %1775 = vmatpush1.msra.mxu0 0.0
    %1776 = vmatprep.subr.mxu0 0.0
    %1777 = vmatpush1.msra.mxu0 0.0
    %1778 = vmatprep.subr.mxu0 0.0
    %1779 = vmatpush1.msra.mxu0 0.0
    %1780 = vmatprep.subr.mxu0 0.0
    %1781 = vmatpush1.msra.mxu0 0.0
    %1782 = vmatprep.subr.mxu0 0.0
    %1783 = vmatpush1.msra.mxu0 0.0
    %1784 = vmatprep.subr.mxu0 0.0
    %1785 = vmatpush1.msra.mxu0 0.0
    %1786 = vmatprep.subr.mxu0 0.0
    %1787 = vmatpush1.msra.mxu0 0.0
    %1788 = vmatprep.subr.mxu0 0.0
    %1789 = vmatpush1.msra.mxu0 0.0
    %1790 = vmatprep.subr.mxu0 0.0
    %1791 = vmatpush1.msra.mxu0 0.0
    %1792 = vmatprep.subr.mxu0 0.0
    %1793 = vmatpush1.msra.mxu0 0.0
    %1794 = vmatprep.subr.mxu0 0.0
    %1795 = vmatpush1.msra.mxu0 0.0
    %1796 = vmatprep.subr.mxu0 0.0
    %1797 = vmatpush1.msra.mxu0 0.0
    %1798 = vmatprep.subr.mxu0 0.0
    %1799 = vmatpush1.msra.mxu0 0.0
    %1800 = vmatprep.subr.mxu0 0.0
    %1801 = vmatpush1.msra.mxu0 0.0
    %1802 = vmatprep.subr.mxu0 0.0
    %1803 = vmatpush1.msra.mxu0 0.0
    %1804 = vmatprep.subr.mxu0 0.0
    %1805 = vmatpush1.msra.mxu0 0.0
    %1806 = vmatprep.subr.mxu0 0.0
    %1807 = vmatpush1.msra.mxu0 0.0
    %1808 = vmatprep.subr.mxu0 0.0
    %1809 = vmatpush1.msra.mxu0 0.0
    %1810 = vmatprep.subr.mxu0 0.0
    %1811 = vmatpush1.msra.mxu0 0.0
    %1812 = vmatprep.subr.mxu0 0.0
    %1813 = vmatpush1.msra.mxu0 0.0
    %1814 = vmatprep.subr.mxu0 0.0
    %1815 = vmatpush1.msra.mxu0 0.0
    %1816 = vmatprep.subr.mxu0 0.0
    %1817 = vmatpush1.msra.mxu0 0.0
    %1818 = vmatprep.subr.mxu0 0.0
    %1819 = vmatpush1.msra.mxu0 0.0
    %1820 = vmatprep.subr.mxu0 0.0
    %1821 = vmatpush1.msra.mxu0 0.0
    %1822 = vmatprep.subr.mxu0 0.0
    %1823 = vmatpush1.msra.mxu0 0.0
    %1824 = vmatprep.mubr.f32.mxu0 0.0
    %1825 = vmatmul.mubr.f32.gmra.mrb[0].mxu0 %v1567
    %v1826 = vpop.f32.mrb[0].mxu0
    %v1827 = vadd.f32 %v1563, %v1826
    %v1828 = vpop.f32.mrb[0].mxu0
    %v1829 = vadd.f32 %v1563, %v1828
    %1830 = vdwg.mxu0
    %1831 = vmatprep.subr.mxu0 %v1486
    %1832 = vmatpush1.msra.mxu0 %v1485
    %1833 = vmatprep.subr.mxu0 %v1502
    %1834 = vmatpush1.msra.mxu0 %v1501
    %1835 = vmatprep.subr.mxu0 %v1518
    %1836 = vmatpush1.msra.mxu0 %v1517
    %1837 = vmatprep.subr.mxu0 %v1534
    %1838 = vmatpush1.msra.mxu0 %v1533
    %1839 = vmatprep.subr.mxu0 %v1592
    %1840 = vmatpush1.msra.mxu0 %v1589
    %1841 = vmatprep.subr.mxu0 0.0
    %1842 = vmatpush1.msra.mxu0 0.0
    %1843 = vmatprep.subr.mxu0 0.0
    %1844 = vmatpush1.msra.mxu0 0.0
    %1845 = vmatprep.subr.mxu0 0.0
    %1846 = vmatpush1.msra.mxu0 0.0
    %1847 = vmatprep.subr.mxu0 0.0
    %1848 = vmatpush1.msra.mxu0 0.0
    %1849 = vmatprep.subr.mxu0 0.0
    %1850 = vmatpush1.msra.mxu0 0.0
    %1851 = vmatprep.subr.mxu0 0.0
    %1852 = vmatpush1.msra.mxu0 0.0
    %1853 = vmatprep.subr.mxu0 0.0
    %1854 = vmatpush1.msra.mxu0 0.0
    %1855 = vmatprep.subr.mxu0 0.0
    %1856 = vmatpush1.msra.mxu0 0.0
    %1857 = vmatprep.subr.mxu0 0.0
    %1858 = vmatpush1.msra.mxu0 0.0
    %1859 = vmatprep.subr.mxu0 0.0
    %1860 = vmatpush1.msra.mxu0 0.0
    %1861 = vmatprep.subr.mxu0 0.0
    %1862 = vmatpush1.msra.mxu0 0.0
    %1863 = vmatprep.subr.mxu0 0.0
    %1864 = vmatpush1.msra.mxu0 0.0
    %1865 = vmatprep.subr.mxu0 0.0
    %1866 = vmatpush1.msra.mxu0 0.0
    %1867 = vmatprep.subr.mxu0 0.0
    %1868 = vmatpush1.msra.mxu0 0.0
    %1869 = vmatprep.subr.mxu0 0.0
    %1870 = vmatpush1.msra.mxu0 0.0
    %1871 = vmatprep.subr.mxu0 0.0
    %1872 = vmatpush1.msra.mxu0 0.0
    %1873 = vmatprep.subr.mxu0 0.0
    %1874 = vmatpush1.msra.mxu0 0.0
    %1875 = vmatprep.subr.mxu0 0.0
    %1876 = vmatpush1.msra.mxu0 0.0
    %1877 = vmatprep.subr.mxu0 0.0
    %1878 = vmatpush1.msra.mxu0 0.0
    %1879 = vmatprep.subr.mxu0 0.0
    %1880 = vmatpush1.msra.mxu0 0.0
    %1881 = vmatprep.subr.mxu0 0.0
    %1882 = vmatpush1.msra.mxu0 0.0
    %1883 = vmatprep.subr.mxu0 0.0
    %1884 = vmatpush1.msra.mxu0 0.0
    %1885 = vmatprep.subr.mxu0 0.0
    %1886 = vmatpush1.msra.mxu0 0.0
    %1887 = vmatprep.subr.mxu0 0.0
    %1888 = vmatpush1.msra.mxu0 0.0
    %1889 = vmatprep.subr.mxu0 0.0
    %1890 = vmatpush1.msra.mxu0 0.0
    %1891 = vmatprep.subr.mxu0 0.0
    %1892 = vmatpush1.msra.mxu0 0.0
    %1893 = vmatprep.subr.mxu0 0.0
    %1894 = vmatpush1.msra.mxu0 0.0
    %1895 = vmatprep.mubr.f32.mxu0 0.0
    %1896 = vmatmul.mubr.f32.gmra.mrb[0].mxu0 %v1567
    %v1897 = vpop.f32.mrb[0].mxu0
    %v1898 = vadd.f32 %v1563, %v1897
    %v1899 = vpop.f32.mrb[0].mxu0
    %v1900 = vadd.f32 %v1563, %v1899
    %1901 = vdwg.mxu0
    %1902 = vmatprep.subr.mxu0 %v1488
    %1903 = vmatpush1.msra.mxu0 %v1487
    %1904 = vmatprep.subr.mxu0 %v1504
    %1905 = vmatpush1.msra.mxu0 %v1503
    %1906 = vmatprep.subr.mxu0 %v1520
    %1907 = vmatpush1.msra.mxu0 %v1519
    %1908 = vmatprep.subr.mxu0 %v1536
    %1909 = vmatpush1.msra.mxu0 %v1535
    %1910 = vmatprep.subr.mxu0 %v1598
    %1911 = vmatpush1.msra.mxu0 %v1595
    %1912 = vmatprep.subr.mxu0 0.0
    %1913 = vmatpush1.msra.mxu0 0.0
    %1914 = vmatprep.subr.mxu0 0.0
    %1915 = vmatpush1.msra.mxu0 0.0
    %1916 = vmatprep.subr.mxu0 0.0
    %1917 = vmatpush1.msra.mxu0 0.0
    %1918 = vmatprep.subr.mxu0 0.0
    %1919 = vmatpush1.msra.mxu0 0.0
    %1920 = vmatprep.subr.mxu0 0.0
    %1921 = vmatpush1.msra.mxu0 0.0
    %1922 = vmatprep.subr.mxu0 0.0
    %1923 = vmatpush1.msra.mxu0 0.0
    %1924 = vmatprep.subr.mxu0 0.0
    %1925 = vmatpush1.msra.mxu0 0.0
    %1926 = vmatprep.subr.mxu0 0.0
    %1927 = vmatpush1.msra.mxu0 0.0
    %1928 = vmatprep.subr.mxu0 0.0
    %1929 = vmatpush1.msra.mxu0 0.0
    %1930 = vmatprep.subr.mxu0 0.0
    %1931 = vmatpush1.msra.mxu0 0.0
    %1932 = vmatprep.subr.mxu0 0.0
    %1933 = vmatpush1.msra.mxu0 0.0
    %1934 = vmatprep.subr.mxu0 0.0
    %1935 = vmatpush1.msra.mxu0 0.0
    %1936 = vmatprep.subr.mxu0 0.0
    %1937 = vmatpush1.msra.mxu0 0.0
    %1938 = vmatprep.subr.mxu0 0.0
    %1939 = vmatpush1.msra.mxu0 0.0
    %1940 = vmatprep.subr.mxu0 0.0
    %1941 = vmatpush1.msra.mxu0 0.0
    %1942 = vmatprep.subr.mxu0 0.0
    %1943 = vmatpush1.msra.mxu0 0.0
    %1944 = vmatprep.subr.mxu0 0.0
    %1945 = vmatpush1.msra.mxu0 0.0
    %1946 = vmatprep.subr.mxu0 0.0
    %1947 = vmatpush1.msra.mxu0 0.0
    %1948 = vmatprep.subr.mxu0 0.0
    %1949 = vmatpush1.msra.mxu0 0.0
    %1950 = vmatprep.subr.mxu0 0.0
    %1951 = vmatpush1.msra.mxu0 0.0
    %1952 = vmatprep.subr.mxu0 0.0
    %1953 = vmatpush1.msra.mxu0 0.0
    %1954 = vmatprep.subr.mxu0 0.0
    %1955 = vmatpush1.msra.mxu0 0.0
    %1956 = vmatprep.subr.mxu0 0.0
    %1957 = vmatpush1.msra.mxu0 0.0
    %1958 = vmatprep.subr.mxu0 0.0
    %1959 = vmatpush1.msra.mxu0 0.0
    %1960 = vmatprep.subr.mxu0 0.0
    %1961 = vmatpush1.msra.mxu0 0.0
    %1962 = vmatprep.subr.mxu0 0.0
    %1963 = vmatpush1.msra.mxu0 0.0
    %1964 = vmatprep.subr.mxu0 0.0
    %1965 = vmatpush1.msra.mxu0 0.0
    %1966 = vmatprep.mubr.f32.mxu0 0.0
    %1967 = vmatmul.mubr.f32.gmra.mrb[0].mxu0 %v1567
    %v1968 = vpop.f32.mrb[0].mxu0
    %v1969 = vadd.f32 %v1563, %v1968
    %v1970 = vpop.f32.mrb[0].mxu0
    %v1971 = vadd.f32 %v1563, %v1970
    %1972 = vdwg.mxu0
    %1973 = vmatprep.subr.mxu0 %v1490
    %1974 = vmatpush1.msra.mxu0 %v1489
    %1975 = vmatprep.subr.mxu0 %v1506
    %1976 = vmatpush1.msra.mxu0 %v1505
    %1977 = vmatprep.subr.mxu0 %v1522
    %1978 = vmatpush1.msra.mxu0 %v1521
    %1979 = vmatprep.subr.mxu0 %v1538
    %1980 = vmatpush1.msra.mxu0 %v1537
    %1981 = vmatprep.subr.mxu0 %v1604
    %1982 = vmatpush1.msra.mxu0 %v1601
    %1983 = vmatprep.subr.mxu0 0.0
    %1984 = vmatpush1.msra.mxu0 0.0
    %1985 = vmatprep.subr.mxu0 0.0
    %1986 = vmatpush1.msra.mxu0 0.0
    %1987 = vmatprep.subr.mxu0 0.0
    %1988 = vmatpush1.msra.mxu0 0.0
    %1989 = vmatprep.subr.mxu0 0.0
    %1990 = vmatpush1.msra.mxu0 0.0
    %1991 = vmatprep.subr.mxu0 0.0
    %1992 = vmatpush1.msra.mxu0 0.0
    %1993 = vmatprep.subr.mxu0 0.0
    %1994 = vmatpush1.msra.mxu0 0.0
    %1995 = vmatprep.subr.mxu0 0.0
    %1996 = vmatpush1.msra.mxu0 0.0
    %1997 = vmatprep.subr.mxu0 0.0
    %1998 = vmatpush1.msra.mxu0 0.0
    %1999 = vmatprep.subr.mxu0 0.0
    %2000 = vmatpush1.msra.mxu0 0.0
    %2001 = vmatprep.subr.mxu0 0.0
    %2002 = vmatpush1.msra.mxu0 0.0
    %2003 = vmatprep.subr.mxu0 0.0
    %2004 = vmatpush1.msra.mxu0 0.0
    %2005 = vmatprep.subr.mxu0 0.0
    %2006 = vmatpush1.msra.mxu0 0.0
    %2007 = vmatprep.subr.mxu0 0.0
    %2008 = vmatpush1.msra.mxu0 0.0
    %2009 = vmatprep.subr.mxu0 0.0
    %2010 = vmatpush1.msra.mxu0 0.0
    %2011 = vmatprep.subr.mxu0 0.0
    %2012 = vmatpush1.msra.mxu0 0.0
    %2013 = vmatprep.subr.mxu0 0.0
    %2014 = vmatpush1.msra.mxu0 0.0
    %2015 = vmatprep.subr.mxu0 0.0
    %2016 = vmatpush1.msra.mxu0 0.0
    %2017 = vmatprep.subr.mxu0 0.0
    %2018 = vmatpush1.msra.mxu0 0.0
    %2019 = vmatprep.subr.mxu0 0.0
    %2020 = vmatpush1.msra.mxu0 0.0
    %2021 = vmatprep.subr.mxu0 0.0
    %2022 = vmatpush1.msra.mxu0 0.0
    %2023 = vmatprep.subr.mxu0 0.0
    %2024 = vmatpush1.msra.mxu0 0.0
    %2025 = vmatprep.subr.mxu0 0.0
    %2026 = vmatpush1.msra.mxu0 0.0
    %2027 = vmatprep.subr.mxu0 0.0
    %2028 = vmatpush1.msra.mxu0 0.0
    %2029 = vmatprep.subr.mxu0 0.0
    %2030 = vmatpush1.msra.mxu0 0.0
    %2031 = vmatprep.subr.mxu0 0.0
    %2032 = vmatpush1.msra.mxu0 0.0
    %2033 = vmatprep.subr.mxu0 0.0
    %2034 = vmatpush1.msra.mxu0 0.0
    %2035 = vmatprep.subr.mxu0 0.0
    %2036 = vmatpush1.msra.mxu0 0.0
    %2037 = vmatprep.mubr.f32.mxu0 0.0
    %2038 = vmatmul.mubr.f32.gmra.mrb[0].mxu0 %v1567
    %v2039 = vpop.f32.mrb[0].mxu0
    %v2040 = vadd.f32 %v1563, %v2039
    %v2041 = vpop.f32.mrb[0].mxu0
    %v2042 = vadd.f32 %v1563, %v2041
    %2043 = vdwg.mxu0
    %2044 = vmatprep.subr.mxu0 %v1492
    %2045 = vmatpush1.msra.mxu0 %v1491
    %2046 = vmatprep.subr.mxu0 %v1508
    %2047 = vmatpush1.msra.mxu0 %v1507
    %2048 = vmatprep.subr.mxu0 %v1524
    %2049 = vmatpush1.msra.mxu0 %v1523
    %2050 = vmatprep.subr.mxu0 %v1540
    %2051 = vmatpush1.msra.mxu0 %v1539
    %2052 = vmatprep.subr.mxu0 %v1610
    %2053 = vmatpush1.msra.mxu0 %v1607
    %2054 = vmatprep.subr.mxu0 0.0
    %2055 = vmatpush1.msra.mxu0 0.0
    %2056 = vmatprep.subr.mxu0 0.0
    %2057 = vmatpush1.msra.mxu0 0.0
    %2058 = vmatprep.subr.mxu0 0.0
    %2059 = vmatpush1.msra.mxu0 0.0
    %2060 = vmatprep.subr.mxu0 0.0
    %2061 = vmatpush1.msra.mxu0 0.0
    %2062 = vmatprep.subr.mxu0 0.0
    %2063 = vmatpush1.msra.mxu0 0.0
    %2064 = vmatprep.subr.mxu0 0.0
    %2065 = vmatpush1.msra.mxu0 0.0
    %2066 = vmatprep.subr.mxu0 0.0
    %2067 = vmatpush1.msra.mxu0 0.0
    %2068 = vmatprep.subr.mxu0 0.0
    %2069 = vmatpush1.msra.mxu0 0.0
    %2070 = vmatprep.subr.mxu0 0.0
    %2071 = vmatpush1.msra.mxu0 0.0
    %2072 = vmatprep.subr.mxu0 0.0
    %2073 = vmatpush1.msra.mxu0 0.0
    %2074 = vmatprep.subr.mxu0 0.0
    %2075 = vmatpush1.msra.mxu0 0.0
    %2076 = vmatprep.subr.mxu0 0.0
    %2077 = vmatpush1.msra.mxu0 0.0
    %2078 = vmatprep.subr.mxu0 0.0
    %2079 = vmatpush1.msra.mxu0 0.0
    %2080 = vmatprep.subr.mxu0 0.0
    %2081 = vmatpush1.msra.mxu0 0.0
    %2082 = vmatprep.subr.mxu0 0.0
    %2083 = vmatpush1.msra.mxu0 0.0
    %2084 = vmatprep.subr.mxu0 0.0
    %2085 = vmatpush1.msra.mxu0 0.0
    %2086 = vmatprep.subr.mxu0 0.0
    %2087 = vmatpush1.msra.mxu0 0.0
    %2088 = vmatprep.subr.mxu0 0.0
    %2089 = vmatpush1.msra.mxu0 0.0
    %2090 = vmatprep.subr.mxu0 0.0
    %2091 = vmatpush1.msra.mxu0 0.0
    %2092 = vmatprep.subr.mxu0 0.0
    %2093 = vmatpush1.msra.mxu0 0.0
    %2094 = vmatprep.subr.mxu0 0.0
    %2095 = vmatpush1.msra.mxu0 0.0
    %2096 = vmatprep.subr.mxu0 0.0
    %2097 = vmatpush1.msra.mxu0 0.0
    %2098 = vmatprep.subr.mxu0 0.0
    %2099 = vmatpush1.msra.mxu0 0.0
    %2100 = vmatprep.subr.mxu0 0.0
    %2101 = vmatpush1.msra.mxu0 0.0
    %2102 = vmatprep.subr.mxu0 0.0
    %2103 = vmatpush1.msra.mxu0 0.0
    %2104 = vmatprep.subr.mxu0 0.0
    %2105 = vmatpush1.msra.mxu0 0.0
    %2106 = vmatprep.subr.mxu0 0.0
    %2107 = vmatpush1.msra.mxu0 0.0
    %2108 = vmatprep.mubr.f32.mxu0 0.0
    %2109 = vmatmul.mubr.f32.gmra.mrb[0].mxu0 %v1567
    %v2110 = vpop.f32.mrb[0].mxu0
    %v2111 = vadd.f32 %v1563, %v2110
    %v2112 = vpop.f32.mrb[0].mxu0
    %v2113 = vadd.f32 %v1563, %v2112
    %2114 = vdwg.mxu0
    %2115 = vmatprep.subr.mxu0 %v1494
    %2116 = vmatpush1.msra.mxu0 %v1493
    %2117 = vmatprep.subr.mxu0 %v1510
    %2118 = vmatpush1.msra.mxu0 %v1509
    %2119 = vmatprep.subr.mxu0 %v1526
    %2120 = vmatpush1.msra.mxu0 %v1525
    %2121 = vmatprep.subr.mxu0 %v1542
    %2122 = vmatpush1.msra.mxu0 %v1541
    %2123 = vmatprep.subr.mxu0 %v1616
    %2124 = vmatpush1.msra.mxu0 %v1613
    %2125 = vmatprep.subr.mxu0 0.0
    %2126 = vmatpush1.msra.mxu0 0.0
    %2127 = vmatprep.subr.mxu0 0.0
    %2128 = vmatpush1.msra.mxu0 0.0
    %2129 = vmatprep.subr.mxu0 0.0
    %2130 = vmatpush1.msra.mxu0 0.0
    %2131 = vmatprep.subr.mxu0 0.0
    %2132 = vmatpush1.msra.mxu0 0.0
    %2133 = vmatprep.subr.mxu0 0.0
    %2134 = vmatpush1.msra.mxu0 0.0
    %2135 = vmatprep.subr.mxu0 0.0
    %2136 = vmatpush1.msra.mxu0 0.0
    %2137 = vmatprep.subr.mxu0 0.0
    %2138 = vmatpush1.msra.mxu0 0.0
    %2139 = vmatprep.subr.mxu0 0.0
    %2140 = vmatpush1.msra.mxu0 0.0
    %2141 = vmatprep.subr.mxu0 0.0
    %2142 = vmatpush1.msra.mxu0 0.0
    %2143 = vmatprep.subr.mxu0 0.0
    %2144 = vmatpush1.msra.mxu0 0.0
    %2145 = vmatprep.subr.mxu0 0.0
    %2146 = vmatpush1.msra.mxu0 0.0
    %2147 = vmatprep.subr.mxu0 0.0
    %2148 = vmatpush1.msra.mxu0 0.0
    %2149 = vmatprep.subr.mxu0 0.0
    %2150 = vmatpush1.msra.mxu0 0.0
    %2151 = vmatprep.subr.mxu0 0.0
    %2152 = vmatpush1.msra.mxu0 0.0
    %2153 = vmatprep.subr.mxu0 0.0
    %2154 = vmatpush1.msra.mxu0 0.0
    %2155 = vmatprep.subr.mxu0 0.0
    %2156 = vmatpush1.msra.mxu0 0.0
    %2157 = vmatprep.subr.mxu0 0.0
    %2158 = vmatpush1.msra.mxu0 0.0
    %2159 = vmatprep.subr.mxu0 0.0
    %2160 = vmatpush1.msra.mxu0 0.0
    %2161 = vmatprep.subr.mxu0 0.0
    %2162 = vmatpush1.msra.mxu0 0.0
    %2163 = vmatprep.subr.mxu0 0.0
    %2164 = vmatpush1.msra.mxu0 0.0
    %2165 = vmatprep.subr.mxu0 0.0
    %2166 = vmatpush1.msra.mxu0 0.0
    %2167 = vmatprep.subr.mxu0 0.0
    %2168 = vmatpush1.msra.mxu0 0.0
    %2169 = vmatprep.subr.mxu0 0.0
    %2170 = vmatpush1.msra.mxu0 0.0
    %2171 = vmatprep.subr.mxu0 0.0
    %2172 = vmatpush1.msra.mxu0 0.0
    %2173 = vmatprep.subr.mxu0 0.0
    %2174 = vmatpush1.msra.mxu0 0.0
    %2175 = vmatprep.subr.mxu0 0.0
    %2176 = vmatpush1.msra.mxu0 0.0
    %2177 = vmatprep.subr.mxu0 0.0
    %2178 = vmatpush1.msra.mxu0 0.0
    %2179 = vmatprep.mubr.f32.mxu0 0.0
    %2180 = vmatmul.mubr.f32.gmra.mrb[0].mxu0 %v1567
    %v2181 = vpop.f32.mrb[0].mxu0
    %v2182 = vadd.f32 %v1563, %v2181
    %v2183 = vpop.f32.mrb[0].mxu0
    %v2184 = vadd.f32 %v1563, %v2183
    %2185 = vdwg.mxu0
    %v2186 = vmax.f32 %v1685, 0.0
    %v2187 = vmax.f32 %v1687, 0.0
    %v2188 = vmax.f32 %v1756, 0.0
    %v2189 = vmax.f32 %v1758, 0.0
    %v2190 = vmax.f32 %v1827, 0.0
    %v2191 = vmax.f32 %v1829, 0.0
    %v2192 = vmax.f32 %v1898, 0.0
    %v2193 = vmax.f32 %v1900, 0.0
    %v2194 = vmax.f32 %v1969, 0.0
    %v2195 = vmax.f32 %v1971, 0.0
    %v2196 = vmax.f32 %v2040, 0.0
    %v2197 = vmax.f32 %v2042, 0.0
    %v2198 = vmax.f32 %v2111, 0.0
    %v2199 = vmax.f32 %v2113, 0.0
    %v2200 = vmax.f32 %v2182, 0.0
    %v2201 = vmax.f32 %v2184, 0.0
    %2202 = vrot.lane.b32.xlu0 %v2186, 120
    %v2203 = vpop.permute.xlu0 %2202
    %2204 = vrot.lane.b32.xlu0 %v2187, 120
    %v2205 = vpop.permute.xlu0 %2204
    %2206 = vrot.lane.b32.xlu0 %v2188, 120
    %v2207 = vpop.permute.xlu0 %2206
    %2208 = vrot.lane.b32.xlu0 %v2189, 120
    %v2209 = vpop.permute.xlu0 %2208
    %2210 = vrot.lane.b32.xlu0 %v2190, 120
    %v2211 = vpop.permute.xlu0 %2210
    %2212 = vrot.lane.b32.xlu0 %v2191, 120
    %v2213 = vpop.permute.xlu0 %2212
    %2214 = vrot.lane.b32.xlu0 %v2192, 120
    %v2215 = vpop.permute.xlu0 %2214
    %2216 = vrot.lane.b32.xlu0 %v2193, 120
    %v2217 = vpop.permute.xlu0 %2216
    %2218 = vrot.lane.b32.xlu0 %v2194, 120
    %v2219 = vpop.permute.xlu0 %2218
    %2220 = vrot.lane.b32.xlu0 %v2195, 120
    %v2221 = vpop.permute.xlu0 %2220
    %2222 = vrot.lane.b32.xlu0 %v2196, 120
    %v2223 = vpop.permute.xlu0 %2222
    %2224 = vrot.lane.b32.xlu0 %v2197, 120
    %v2225 = vpop.permute.xlu0 %2224
    %2226 = vrot.lane.b32.xlu0 %v2198, 120
    %v2227 = vpop.permute.xlu0 %2226
    %2228 = vrot.lane.b32.xlu0 %v2199, 120
    %v2229 = vpop.permute.xlu0 %2228
    %2230 = vrot.lane.b32.xlu0 %v2200, 120
    %v2231 = vpop.permute.xlu0 %2230
    %2232 = vrot.lane.b32.xlu0 %v2201, 120
    %v2233 = vpop.permute.xlu0 %2232
    %v2234 = vsel %vm569, %v2231, %v2233
    %v2235 = vsel %vm569, %v2229, %v2231
    %v2236 = vsel %vm569, %v2227, %v2229
    %v2237 = vsel %vm569, %v2225, %v2227
    %v2238 = vsel %vm569, %v2223, %v2225
    %v2239 = vsel %vm569, %v2221, %v2223
    %v2240 = vsel %vm569, %v2219, %v2221
    %v2241 = vsel %vm569, %v2217, %v2219
    %v2242 = vsel %vm569, %v2215, %v2217
    %v2243 = vsel %vm569, %v2213, %v2215
    %v2244 = vsel %vm569, %v2211, %v2213
    %v2245 = vsel %vm569, %v2209, %v2211
    %v2246 = vsel %vm569, %v2207, %v2209
    %v2247 = vsel %vm569, %v2205, %v2207
    %v2248 = vsel %vm569, %v2203, %v2205
    %v2249 = vsel %vm569, %v2233, %v2203
    %v2250 = vmax.f32 %v2186, %v2248
    %v2251 = vmax.f32 %v2187, %v2247
    %v2252 = vmax.f32 %v2188, %v2246
    %v2253 = vmax.f32 %v2189, %v2245
    %v2254 = vmax.f32 %v2190, %v2244
    %v2255 = vmax.f32 %v2191, %v2243
    %v2256 = vmax.f32 %v2192, %v2242
    %v2257 = vmax.f32 %v2193, %v2241
    %v2258 = vmax.f32 %v2194, %v2240
    %v2259 = vmax.f32 %v2195, %v2239
    %v2260 = vmax.f32 %v2196, %v2238
    %v2261 = vmax.f32 %v2197, %v2237
    %v2262 = vmax.f32 %v2198, %v2236
    %v2263 = vmax.f32 %v2199, %v2235
    %v2264 = vmax.f32 %v2200, %v2234
    %v2265 = vmax.f32 %v2201, %v2249
    %v2266 = vmax.f32 %v2250, %v2251
    %v2267 = vmax.f32 %v2251, %v2252
    %v2268 = vmax.f32 %v2252, %v2253
    %v2269 = vmax.f32 %v2253, %v2254
    %v2270 = vmax.f32 %v2254, %v2255
    %v2271 = vmax.f32 %v2255, %v2256
    %v2272 = vmax.f32 %v2256, %v2257
    %v2273 = vmax.f32 %v2257, %v2258
    %v2274 = vmax.f32 %v2258, %v2259
    %v2275 = vmax.f32 %v2259, %v2260
    %v2276 = vmax.f32 %v2260, %v2261
    %v2277 = vmax.f32 %v2261, %v2262
    %v2278 = vmax.f32 %v2262, %v2263
    %v2279 = vmax.f32 %v2263, %v2264
    %v2280 = vmax.f32 %v2264, %v2265
    %v2281 = vmax.f32 %v2265, %v2250
    %v2282 = vld [vmem:[#allocation12] sm:$0xff]
    %v2283 = vld [vmem:[#allocation12 + $0x8] sm:$0xff]
    %v2284 = vld [vmem:[#allocation12 + $0x10] sm:$0xff]
    %v2285 = vld [vmem:[#allocation12 + $0x18] sm:$0xff]
    %v2286 = vld [vmem:[#allocation12 + $0x20] sm:$0xff]
    %v2287 = vld [vmem:[#allocation12 + $0x28] sm:$0xff]
    %v2288 = vld [vmem:[#allocation12 + $0x30] sm:$0xff]
    %v2289 = vld [vmem:[#allocation12 + $0x38] sm:$0xff]
    %v2290 = vld [vmem:[#allocation12 + $0x40] sm:$0xff]
    %v2291 = vld [vmem:[#allocation12 + $0x48] sm:$0xff]
    %v2292 = vld [vmem:[#allocation12 + $0x50] sm:$0xff]
    %v2293 = vld [vmem:[#allocation12 + $0x58] sm:$0xff]
    %v2294 = vld [vmem:[#allocation12 + $0x60] sm:$0xff]
    %v2295 = vld [vmem:[#allocation12 + $0x68] sm:$0xff]
    %v2296 = vld [vmem:[#allocation12 + $0x70] sm:$0xff]
    %v2297 = vld [vmem:[#allocation12 + $0x78] sm:$0xff]
    %v2298 = vld [vmem:[#allocation12 + $0x80] sm:$0xff]
    %v2299 = vld [vmem:[#allocation12 + $0x88] sm:$0xff]
    %v2300 = vld [vmem:[#allocation12 + $0x90] sm:$0xff]
    %v2301 = vld [vmem:[#allocation12 + $0x98] sm:$0xff]
    %v2302 = vld [vmem:[#allocation12 + $0xa0] sm:$0xff]
    %v2303 = vld [vmem:[#allocation12 + $0xa8] sm:$0xff]
    %v2304 = vld [vmem:[#allocation12 + $0xb0] sm:$0xff]
    %v2305 = vld [vmem:[#allocation12 + $0xb8] sm:$0xff]
    %v2306 = vld [vmem:[#allocation12 + $0xc0] sm:$0xff]
    %v2307 = vld [vmem:[#allocation12 + $0xc8] sm:$0xff]
    %v2308 = vld [vmem:[#allocation12 + $0xd0] sm:$0xff]
    %v2309 = vld [vmem:[#allocation12 + $0xd8] sm:$0xff]
    %v2310 = vld [vmem:[#allocation12 + $0xe0] sm:$0xff]
    %v2311 = vld [vmem:[#allocation12 + $0xe8] sm:$0xff]
    %v2312 = vld [vmem:[#allocation12 + $0xf0] sm:$0xff]
    %v2313 = vld [vmem:[#allocation12 + $0xf8] sm:$0xff]
    %v2314 = vld [vmem:[#allocation12 + $0x100] sm:$0xff]
    %v2315 = vld [vmem:[#allocation12 + $0x108] sm:$0xff]
    %v2316 = vld [vmem:[#allocation12 + $0x110] sm:$0xff]
    %v2317 = vld [vmem:[#allocation12 + $0x118] sm:$0xff]
    %v2318 = vld [vmem:[#allocation12 + $0x120] sm:$0xff]
    %v2319 = vld [vmem:[#allocation12 + $0x128] sm:$0xff]
    %v2320 = vld [vmem:[#allocation12 + $0x130] sm:$0xff]
    %v2321 = vld [vmem:[#allocation12 + $0x138] sm:$0xff]
    %v2322 = vld [vmem:[#allocation12 + $0x140] sm:$0xff]
    %v2323 = vld [vmem:[#allocation12 + $0x148] sm:$0xff]
    %v2324 = vld [vmem:[#allocation12 + $0x150] sm:$0xff]
    %v2325 = vld [vmem:[#allocation12 + $0x158] sm:$0xff]
    %v2326 = vld [vmem:[#allocation12 + $0x160] sm:$0xff]
    %v2327 = vld [vmem:[#allocation12 + $0x168] sm:$0xff]
    %v2328 = vld [vmem:[#allocation12 + $0x170] sm:$0xff]
    %v2329 = vld [vmem:[#allocation12 + $0x178] sm:$0xff]
    %v2330 = vld [vmem:[#allocation12 + $0x180] sm:$0xff]
    %v2331 = vld [vmem:[#allocation12 + $0x188] sm:$0xff]
    %v2332 = vld [vmem:[#allocation12 + $0x190] sm:$0xff]
    %v2333 = vld [vmem:[#allocation12 + $0x198] sm:$0xff]
    %v2334 = vld [vmem:[#allocation12 + $0x1a0] sm:$0xff]
    %v2335 = vld [vmem:[#allocation12 + $0x1a8] sm:$0xff]
    %v2336 = vld [vmem:[#allocation12 + $0x1b0] sm:$0xff]
    %v2337 = vld [vmem:[#allocation12 + $0x1b8] sm:$0xff]
    %v2338 = vld [vmem:[#allocation12 + $0x1c0] sm:$0xff]
    %v2339 = vld [vmem:[#allocation12 + $0x1c8] sm:$0xff]
    %v2340 = vld [vmem:[#allocation12 + $0x1d0] sm:$0xff]
    %v2341 = vld [vmem:[#allocation12 + $0x1d8] sm:$0xff]
    %v2342 = vld [vmem:[#allocation12 + $0x1e0] sm:$0xff]
    %v2343 = vld [vmem:[#allocation12 + $0x1e8] sm:$0xff]
    %v2344 = vld [vmem:[#allocation12 + $0x1f0] sm:$0xff]
    %v2345 = vld [vmem:[#allocation12 + $0x1f8] sm:$0xff]
    %v2346 = vld [vmem:[#allocation12 + $0x200] sm:$0xff]
    %v2347 = vld [vmem:[#allocation12 + $0x208] sm:$0xff]
    %v2348 = vld [vmem:[#allocation12 + $0x210] sm:$0xff]
    %v2349 = vld [vmem:[#allocation12 + $0x218] sm:$0xff]
    %v2350 = vld [vmem:[#allocation12 + $0x220] sm:$0xff]
    %v2351 = vld [vmem:[#allocation12 + $0x228] sm:$0xff]
    %v2352 = vld [vmem:[#allocation12 + $0x230] sm:$0xff]
    %v2353 = vld [vmem:[#allocation12 + $0x238] sm:$0xff]
    %v2354 = vld [vmem:[#allocation12 + $0x240] sm:$0xff]
    %v2355 = vld [vmem:[#allocation12 + $0x248] sm:$0xff]
    %v2356 = vld [vmem:[#allocation12 + $0x250] sm:$0xff]
    %v2357 = vld [vmem:[#allocation12 + $0x258] sm:$0xff]
    %v2358 = vld [vmem:[#allocation12 + $0x260] sm:$0xff]
    %v2359 = vld [vmem:[#allocation12 + $0x268] sm:$0xff]
    %v2360 = vld [vmem:[#allocation12 + $0x270] sm:$0xff]
    %v2361 = vld [vmem:[#allocation12 + $0x278] sm:$0xff]
    %v2362 = vld [vmem:[#allocation12 + $0x280] sm:$0xff]
    %v2363 = vld [vmem:[#allocation12 + $0x288] sm:$0xff]
    %v2364 = vld [vmem:[#allocation12 + $0x290] sm:$0xff]
    %v2365 = vld [vmem:[#allocation12 + $0x298] sm:$0xff]
    %v2366 = vld [vmem:[#allocation12 + $0x2a0] sm:$0xff]
    %v2367 = vld [vmem:[#allocation12 + $0x2a8] sm:$0xff]
    %v2368 = vld [vmem:[#allocation12 + $0x2b0] sm:$0xff]
    %v2369 = vld [vmem:[#allocation12 + $0x2b8] sm:$0xff]
    %v2370 = vld [vmem:[#allocation12 + $0x2c0] sm:$0xff]
    %v2371 = vld [vmem:[#allocation12 + $0x2c8] sm:$0xff]
    %v2372 = vld [vmem:[#allocation12 + $0x2d0] sm:$0xff]
    %v2373 = vld [vmem:[#allocation12 + $0x2d8] sm:$0xff]
    %v2374 = vld [vmem:[#allocation12 + $0x2e0] sm:$0xff]
    %v2375 = vld [vmem:[#allocation12 + $0x2e8] sm:$0xff]
    %v2376 = vld [vmem:[#allocation12 + $0x2f0] sm:$0xff]
    %v2377 = vld [vmem:[#allocation12 + $0x2f8] sm:$0xff]
    %v2378 = vld [vmem:[#allocation12 + $0x300] sm:$0xff]
    %v2379 = vld [vmem:[#allocation12 + $0x308] sm:$0xff]
    %v2380 = vld [vmem:[#allocation12 + $0x310] sm:$0xff]
    %v2381 = vld [vmem:[#allocation12 + $0x318] sm:$0xff]
    %v2382 = vld [vmem:[#allocation12 + $0x320] sm:$0xff]
    %v2383 = vld [vmem:[#allocation12 + $0x328] sm:$0xff]
    %v2384 = vld [vmem:[#allocation12 + $0x330] sm:$0xff]
    %v2385 = vld [vmem:[#allocation12 + $0x338] sm:$0xff]
    %v2386 = vld [vmem:[#allocation12 + $0x340] sm:$0xff]
    %v2387 = vld [vmem:[#allocation12 + $0x348] sm:$0xff]
    %v2388 = vld [vmem:[#allocation12 + $0x350] sm:$0xff]
    %v2389 = vld [vmem:[#allocation12 + $0x358] sm:$0xff]
    %v2390 = vld [vmem:[#allocation12 + $0x360] sm:$0xff]
    %v2391 = vld [vmem:[#allocation12 + $0x368] sm:$0xff]
    %v2392 = vld [vmem:[#allocation12 + $0x370] sm:$0xff]
    %v2393 = vld [vmem:[#allocation12 + $0x378] sm:$0xff]
    %v2394 = vld [vmem:[#allocation12 + $0x380] sm:$0xff]
    %v2395 = vld [vmem:[#allocation12 + $0x388] sm:$0xff]
    %v2396 = vld [vmem:[#allocation12 + $0x390] sm:$0xff]
    %v2397 = vld [vmem:[#allocation12 + $0x398] sm:$0xff]
    %v2398 = vld [vmem:[#allocation12 + $0x3a0] sm:$0xff]
    %v2399 = vld [vmem:[#allocation12 + $0x3a8] sm:$0xff]
    %v2400 = vld [vmem:[#allocation12 + $0x3b0] sm:$0xff]
    %v2401 = vld [vmem:[#allocation12 + $0x3b8] sm:$0xff]
    %v2402 = vld [vmem:[#allocation12 + $0x3c0] sm:$0xff]
    %v2403 = vld [vmem:[#allocation12 + $0x3c8] sm:$0xff]
    %v2404 = vld [vmem:[#allocation12 + $0x3d0] sm:$0xff]
    %v2405 = vld [vmem:[#allocation12 + $0x3d8] sm:$0xff]
    %v2406 = vld [vmem:[#allocation12 + $0x3e0] sm:$0xff]
    %v2407 = vld [vmem:[#allocation12 + $0x3e8] sm:$0xff]
    %v2408 = vld [vmem:[#allocation12 + $0x3f0] sm:$0xff]
    %v2409 = vld [vmem:[#allocation12 + $0x3f8] sm:$0xff]
    %v2410 = vld [vmem:[#allocation12 + $0x400] sm:$0xff]
    %v2411 = vld [vmem:[#allocation12 + $0x408] sm:$0xff]
    %v2412 = vld [vmem:[#allocation12 + $0x410] sm:$0xff]
    %v2413 = vld [vmem:[#allocation12 + $0x418] sm:$0xff]
    %v2414 = vld [vmem:[#allocation12 + $0x420] sm:$0xff]
    %v2415 = vld [vmem:[#allocation12 + $0x428] sm:$0xff]
    %v2416 = vld [vmem:[#allocation12 + $0x430] sm:$0xff]
    %v2417 = vld [vmem:[#allocation12 + $0x438] sm:$0xff]
    %v2418 = vld [vmem:[#allocation12 + $0x440] sm:$0xff]
    %v2419 = vld [vmem:[#allocation12 + $0x448] sm:$0xff]
    %v2420 = vld [vmem:[#allocation12 + $0x450] sm:$0xff]
    %v2421 = vld [vmem:[#allocation12 + $0x458] sm:$0xff]
    %v2422 = vld [vmem:[#allocation12 + $0x460] sm:$0xff]
    %v2423 = vld [vmem:[#allocation12 + $0x468] sm:$0xff]
    %v2424 = vld [vmem:[#allocation12 + $0x470] sm:$0xff]
    %v2425 = vld [vmem:[#allocation12 + $0x478] sm:$0xff]
    %v2426 = vld [vmem:[#allocation12 + $0x480] sm:$0xff]
    %v2427 = vld [vmem:[#allocation12 + $0x488] sm:$0xff]
    %v2428 = vld [vmem:[#allocation12 + $0x490] sm:$0xff]
    %v2429 = vld [vmem:[#allocation12 + $0x498] sm:$0xff]
    %v2430 = vld [vmem:[#allocation12 + $0x4a0] sm:$0xff]
    %v2431 = vld [vmem:[#allocation12 + $0x4a8] sm:$0xff]
    %v2432 = vld [vmem:[#allocation12 + $0x4b0] sm:$0xff]
    %v2433 = vld [vmem:[#allocation12 + $0x4b8] sm:$0xff]
    %v2434 = vld [vmem:[#allocation12 + $0x4c0] sm:$0xff]
    %v2435 = vld [vmem:[#allocation12 + $0x4c8] sm:$0xff]
    %v2436 = vld [vmem:[#allocation12 + $0x4d0] sm:$0xff]
    %v2437 = vld [vmem:[#allocation12 + $0x4d8] sm:$0xff]
    %v2438 = vld [vmem:[#allocation12 + $0x4e0] sm:$0xff]
    %v2439 = vld [vmem:[#allocation12 + $0x4e8] sm:$0xff]
    %v2440 = vld [vmem:[#allocation12 + $0x4f0] sm:$0xff]
    %v2441 = vld [vmem:[#allocation12 + $0x4f8] sm:$0xff]
    %v2442 = vld [vmem:[#allocation12 + $0x500] sm:$0xff]
    %v2443 = vld [vmem:[#allocation12 + $0x508] sm:$0xff]
    %v2444 = vld [vmem:[#allocation12 + $0x510] sm:$0xff]
    %v2445 = vld [vmem:[#allocation12 + $0x518] sm:$0xff]
    %v2446 = vld [vmem:[#allocation12 + $0x520] sm:$0xff]
    %v2447 = vld [vmem:[#allocation12 + $0x528] sm:$0xff]
    %v2448 = vld [vmem:[#allocation12 + $0x530] sm:$0xff]
    %v2449 = vld [vmem:[#allocation12 + $0x538] sm:$0xff]
    %v2450 = vld [vmem:[#allocation12 + $0x540] sm:$0xff]
    %v2451 = vld [vmem:[#allocation12 + $0x548] sm:$0xff]
    %v2452 = vld [vmem:[#allocation12 + $0x550] sm:$0xff]
    %v2453 = vld [vmem:[#allocation12 + $0x558] sm:$0xff]
    %v2454 = vld [vmem:[#allocation12 + $0x560] sm:$0xff]
    %v2455 = vld [vmem:[#allocation12 + $0x568] sm:$0xff]
    %v2456 = vld [vmem:[#allocation12 + $0x570] sm:$0xff]
    %v2457 = vld [vmem:[#allocation12 + $0x578] sm:$0xff]
    %v2458 = vld [vmem:[#allocation12 + $0x580] sm:$0xff]
    %v2459 = vld [vmem:[#allocation12 + $0x588] sm:$0xff]
    %v2460 = vld [vmem:[#allocation12 + $0x590] sm:$0xff]
    %v2461 = vld [vmem:[#allocation12 + $0x598] sm:$0xff]
    %v2462 = vld [vmem:[#allocation12 + $0x5a0] sm:$0xff]
    %v2463 = vld [vmem:[#allocation12 + $0x5a8] sm:$0xff]
    %v2464 = vld [vmem:[#allocation12 + $0x5b0] sm:$0xff]
    %v2465 = vld [vmem:[#allocation12 + $0x5b8] sm:$0xff]
    %v2466 = vld [vmem:[#allocation12 + $0x5c0] sm:$0xff]
    %v2467 = vld [vmem:[#allocation12 + $0x5c8] sm:$0xff]
    %v2468 = vld [vmem:[#allocation12 + $0x5d0] sm:$0xff]
    %v2469 = vld [vmem:[#allocation12 + $0x5d8] sm:$0xff]
    %v2470 = vld [vmem:[#allocation12 + $0x5e0] sm:$0xff]
    %v2471 = vld [vmem:[#allocation12 + $0x5e8] sm:$0xff]
    %v2472 = vld [vmem:[#allocation12 + $0x5f0] sm:$0xff]
    %v2473 = vld [vmem:[#allocation12 + $0x5f8] sm:$0xff]
    %v2474 = vld [vmem:[#allocation12 + $0x600] sm:$0xff]
    %v2475 = vld [vmem:[#allocation12 + $0x608] sm:$0xff]
    %v2476 = vld [vmem:[#allocation12 + $0x610] sm:$0xff]
    %v2477 = vld [vmem:[#allocation12 + $0x618] sm:$0xff]
    %v2478 = vld [vmem:[#allocation12 + $0x620] sm:$0xff]
    %v2479 = vld [vmem:[#allocation12 + $0x628] sm:$0xff]
    %v2480 = vld [vmem:[#allocation12 + $0x630] sm:$0xff]
    %v2481 = vld [vmem:[#allocation12 + $0x638] sm:$0xff]
    %v2482 = vld [vmem:[#allocation12 + $0x640] sm:$0xff]
    %v2483 = vld [vmem:[#allocation12 + $0x648] sm:$0xff]
    %v2484 = vld [vmem:[#allocation12 + $0x650] sm:$0xff]
    %v2485 = vld [vmem:[#allocation12 + $0x658] sm:$0xff]
    %v2486 = vld [vmem:[#allocation12 + $0x660] sm:$0xff]
    %v2487 = vld [vmem:[#allocation12 + $0x668] sm:$0xff]
    %v2488 = vld [vmem:[#allocation12 + $0x670] sm:$0xff]
    %v2489 = vld [vmem:[#allocation12 + $0x678] sm:$0xff]
    %v2490 = vld [vmem:[#allocation12 + $0x680] sm:$0xff]
    %v2491 = vld [vmem:[#allocation12 + $0x688] sm:$0xff]
    %v2492 = vld [vmem:[#allocation12 + $0x690] sm:$0xff]
    %v2493 = vld [vmem:[#allocation12 + $0x698] sm:$0xff]
    %v2494 = vld [vmem:[#allocation12 + $0x6a0] sm:$0xff]
    %v2495 = vld [vmem:[#allocation12 + $0x6a8] sm:$0xff]
    %v2496 = vld [vmem:[#allocation12 + $0x6b0] sm:$0xff]
    %v2497 = vld [vmem:[#allocation12 + $0x6b8] sm:$0xff]
    %v2498 = vld [vmem:[#allocation12 + $0x6c0] sm:$0xff]
    %v2499 = vld [vmem:[#allocation12 + $0x6c8] sm:$0xff]
    %v2500 = vld [vmem:[#allocation12 + $0x6d0] sm:$0xff]
    %v2501 = vld [vmem:[#allocation12 + $0x6d8] sm:$0xff]
    %v2502 = vld [vmem:[#allocation12 + $0x6e0] sm:$0xff]
    %v2503 = vld [vmem:[#allocation12 + $0x6e8] sm:$0xff]
    %v2504 = vld [vmem:[#allocation12 + $0x6f0] sm:$0xff]
    %v2505 = vld [vmem:[#allocation12 + $0x6f8] sm:$0xff]
    %v2506 = vld [vmem:[#allocation12 + $0x700] sm:$0xff]
    %v2507 = vld [vmem:[#allocation12 + $0x708] sm:$0xff]
    %v2508 = vld [vmem:[#allocation12 + $0x710] sm:$0xff]
    %v2509 = vld [vmem:[#allocation12 + $0x718] sm:$0xff]
    %v2510 = vld [vmem:[#allocation12 + $0x720] sm:$0xff]
    %v2511 = vld [vmem:[#allocation12 + $0x728] sm:$0xff]
    %v2512 = vld [vmem:[#allocation12 + $0x730] sm:$0xff]
    %v2513 = vld [vmem:[#allocation12 + $0x738] sm:$0xff]
    %v2514 = vld [vmem:[#allocation12 + $0x740] sm:$0xff]
    %v2515 = vld [vmem:[#allocation12 + $0x748] sm:$0xff]
    %v2516 = vld [vmem:[#allocation12 + $0x750] sm:$0xff]
    %v2517 = vld [vmem:[#allocation12 + $0x758] sm:$0xff]
    %v2518 = vld [vmem:[#allocation12 + $0x760] sm:$0xff]
    %v2519 = vld [vmem:[#allocation12 + $0x768] sm:$0xff]
    %v2520 = vld [vmem:[#allocation12 + $0x770] sm:$0xff]
    %v2521 = vld [vmem:[#allocation12 + $0x778] sm:$0xff]
    %v2522 = vld [vmem:[#allocation12 + $0x780] sm:$0xff]
    %v2523 = vld [vmem:[#allocation12 + $0x788] sm:$0xff]
    %v2524 = vld [vmem:[#allocation12 + $0x790] sm:$0xff]
    %v2525 = vld [vmem:[#allocation12 + $0x798] sm:$0xff]
    %v2526 = vld [vmem:[#allocation12 + $0x7a0] sm:$0xff]
    %v2527 = vld [vmem:[#allocation12 + $0x7a8] sm:$0xff]
    %v2528 = vld [vmem:[#allocation12 + $0x7b0] sm:$0xff]
    %v2529 = vld [vmem:[#allocation12 + $0x7b8] sm:$0xff]
    %v2530 = vld [vmem:[#allocation12 + $0x7c0] sm:$0xff]
    %v2531 = vld [vmem:[#allocation12 + $0x7c8] sm:$0xff]
    %v2532 = vld [vmem:[#allocation12 + $0x7d0] sm:$0xff]
    %v2533 = vld [vmem:[#allocation12 + $0x7d8] sm:$0xff]
    %v2534 = vld [vmem:[#allocation12 + $0x7e0] sm:$0xff]
    %v2535 = vld [vmem:[#allocation12 + $0x7e8] sm:$0xff]
    %v2536 = vld [vmem:[#allocation12 + $0x7f0] sm:$0xff]
    %v2537 = vld [vmem:[#allocation12 + $0x7f8] sm:$0xff]
    %v2538 = vld [vmem:[#allocation12 + $0x800] sm:$0xff]
    %v2539 = vld [vmem:[#allocation12 + $0x808] sm:$0xff]
    %v2540 = vld [vmem:[#allocation12 + $0x810] sm:$0xff]
    %v2541 = vld [vmem:[#allocation12 + $0x818] sm:$0xff]
    %v2542 = vld [vmem:[#allocation12 + $0x820] sm:$0xff]
    %v2543 = vld [vmem:[#allocation12 + $0x828] sm:$0xff]
    %v2544 = vld [vmem:[#allocation12 + $0x830] sm:$0xff]
    %v2545 = vld [vmem:[#allocation12 + $0x838] sm:$0xff]
    %v2546 = vld [vmem:[#allocation12 + $0x840] sm:$0xff]
    %v2547 = vld [vmem:[#allocation12 + $0x848] sm:$0xff]
    %v2548 = vld [vmem:[#allocation12 + $0x850] sm:$0xff]
    %v2549 = vld [vmem:[#allocation12 + $0x858] sm:$0xff]
    %v2550 = vld [vmem:[#allocation12 + $0x860] sm:$0xff]
    %v2551 = vld [vmem:[#allocation12 + $0x868] sm:$0xff]
    %v2552 = vld [vmem:[#allocation12 + $0x870] sm:$0xff]
    %v2553 = vld [vmem:[#allocation12 + $0x878] sm:$0xff]
    %v2554 = vld [vmem:[#allocation12 + $0x880] sm:$0xff]
    %v2555 = vld [vmem:[#allocation12 + $0x888] sm:$0xff]
    %v2556 = vld [vmem:[#allocation12 + $0x890] sm:$0xff]
    %v2557 = vld [vmem:[#allocation12 + $0x898] sm:$0xff]
    %v2558 = vld [vmem:[#allocation12 + $0x8a0] sm:$0xff]
    %v2559 = vld [vmem:[#allocation12 + $0x8a8] sm:$0xff]
    %v2560 = vld [vmem:[#allocation12 + $0x8b0] sm:$0xff]
    %v2561 = vld [vmem:[#allocation12 + $0x8b8] sm:$0xff]
    %v2562 = vld [vmem:[#allocation12 + $0x8c0] sm:$0xff]
    %v2563 = vld [vmem:[#allocation12 + $0x8c8] sm:$0xff]
    %v2564 = vld [vmem:[#allocation12 + $0x8d0] sm:$0xff]
    %v2565 = vld [vmem:[#allocation12 + $0x8d8] sm:$0xff]
    %v2566 = vld [vmem:[#allocation12 + $0x8e0] sm:$0xff]
    %v2567 = vld [vmem:[#allocation12 + $0x8e8] sm:$0xff]
    %v2568 = vld [vmem:[#allocation12 + $0x8f0] sm:$0xff]
    %v2569 = vld [vmem:[#allocation12 + $0x8f8] sm:$0xff]
    %v2570 = vld [vmem:[#allocation12 + $0x900] sm:$0xff]
    %v2571 = vld [vmem:[#allocation12 + $0x908] sm:$0xff]
    %v2572 = vld [vmem:[#allocation12 + $0x910] sm:$0xff]
    %v2573 = vld [vmem:[#allocation12 + $0x918] sm:$0xff]
    %v2574 = vld [vmem:[#allocation12 + $0x920] sm:$0xff]
    %v2575 = vld [vmem:[#allocation12 + $0x928] sm:$0xff]
    %v2576 = vld [vmem:[#allocation12 + $0x930] sm:$0xff]
    %v2577 = vld [vmem:[#allocation12 + $0x938] sm:$0xff]
    %v2578 = vld [vmem:[#allocation12 + $0x940] sm:$0xff]
    %v2579 = vld [vmem:[#allocation12 + $0x948] sm:$0xff]
    %v2580 = vld [vmem:[#allocation12 + $0x950] sm:$0xff]
    %v2581 = vld [vmem:[#allocation12 + $0x958] sm:$0xff]
    %v2582 = vld [vmem:[#allocation12 + $0x960] sm:$0xff]
    %v2583 = vld [vmem:[#allocation12 + $0x968] sm:$0xff]
    %v2584 = vld [vmem:[#allocation12 + $0x970] sm:$0xff]
    %v2585 = vld [vmem:[#allocation12 + $0x978] sm:$0xff]
    %v2586 = vld [vmem:[#allocation12 + $0x980] sm:$0xff]
    %v2587 = vld [vmem:[#allocation12 + $0x988] sm:$0xff]
    %v2588 = vld [vmem:[#allocation12 + $0x990] sm:$0xff]
    %v2589 = vld [vmem:[#allocation12 + $0x998] sm:$0xff]
    %v2590 = vld [vmem:[#allocation12 + $0x9a0] sm:$0xff]
    %v2591 = vld [vmem:[#allocation12 + $0x9a8] sm:$0xff]
    %v2592 = vld [vmem:[#allocation12 + $0x9b0] sm:$0xff]
    %v2593 = vld [vmem:[#allocation12 + $0x9b8] sm:$0xff]
    %v2594 = vld [vmem:[#allocation12 + $0x9c0] sm:$0xff]
    %v2595 = vld [vmem:[#allocation12 + $0x9c8] sm:$0xff]
    %v2596 = vld [vmem:[#allocation12 + $0x9d0] sm:$0xff]
    %v2597 = vld [vmem:[#allocation12 + $0x9d8] sm:$0xff]
    %v2598 = vld [vmem:[#allocation12 + $0x9e0] sm:$0xff]
    %v2599 = vld [vmem:[#allocation12 + $0x9e8] sm:$0xff]
    %v2600 = vld [vmem:[#allocation12 + $0x9f0] sm:$0xff]
    %v2601 = vld [vmem:[#allocation12 + $0x9f8] sm:$0xff]
    %v2602 = vld [vmem:[#allocation12 + $0xa00] sm:$0xff]
    %v2603 = vld [vmem:[#allocation12 + $0xa08] sm:$0xff]
    %v2604 = vld [vmem:[#allocation12 + $0xa10] sm:$0xff]
    %v2605 = vld [vmem:[#allocation12 + $0xa18] sm:$0xff]
    %v2606 = vld [vmem:[#allocation12 + $0xa20] sm:$0xff]
    %v2607 = vld [vmem:[#allocation12 + $0xa28] sm:$0xff]
    %v2608 = vld [vmem:[#allocation12 + $0xa30] sm:$0xff]
    %v2609 = vld [vmem:[#allocation12 + $0xa38] sm:$0xff]
    %v2610 = vld [vmem:[#allocation12 + $0xa40] sm:$0xff]
    %v2611 = vld [vmem:[#allocation12 + $0xa48] sm:$0xff]
    %v2612 = vld [vmem:[#allocation12 + $0xa50] sm:$0xff]
    %v2613 = vld [vmem:[#allocation12 + $0xa58] sm:$0xff]
    %v2614 = vld [vmem:[#allocation12 + $0xa60] sm:$0xff]
    %v2615 = vld [vmem:[#allocation12 + $0xa68] sm:$0xff]
    %v2616 = vld [vmem:[#allocation12 + $0xa70] sm:$0xff]
    %v2617 = vld [vmem:[#allocation12 + $0xa78] sm:$0xff]
    %v2618 = vld [vmem:[#allocation12 + $0xa80] sm:$0xff]
    %v2619 = vld [vmem:[#allocation12 + $0xa88] sm:$0xff]
    %v2620 = vld [vmem:[#allocation12 + $0xa90] sm:$0xff]
    %v2621 = vld [vmem:[#allocation12 + $0xa98] sm:$0xff]
    %v2622 = vld [vmem:[#allocation12 + $0xaa0] sm:$0xff]
    %v2623 = vld [vmem:[#allocation12 + $0xaa8] sm:$0xff]
    %v2624 = vld [vmem:[#allocation12 + $0xab0] sm:$0xff]
    %v2625 = vld [vmem:[#allocation12 + $0xab8] sm:$0xff]
    %v2626 = vld [vmem:[#allocation12 + $0xac0] sm:$0xff]
    %v2627 = vld [vmem:[#allocation12 + $0xac8] sm:$0xff]
    %v2628 = vld [vmem:[#allocation12 + $0xad0] sm:$0xff]
    %v2629 = vld [vmem:[#allocation12 + $0xad8] sm:$0xff]
    %v2630 = vld [vmem:[#allocation12 + $0xae0] sm:$0xff]
    %v2631 = vld [vmem:[#allocation12 + $0xae8] sm:$0xff]
    %v2632 = vld [vmem:[#allocation12 + $0xaf0] sm:$0xff]
    %v2633 = vld [vmem:[#allocation12 + $0xaf8] sm:$0xff]
    %v2634 = vld [vmem:[#allocation12 + $0xb00] sm:$0xff]
    %v2635 = vld [vmem:[#allocation12 + $0xb08] sm:$0xff]
    %v2636 = vld [vmem:[#allocation12 + $0xb10] sm:$0xff]
    %v2637 = vld [vmem:[#allocation12 + $0xb18] sm:$0xff]
    %v2638 = vld [vmem:[#allocation12 + $0xb20] sm:$0xff]
    %v2639 = vld [vmem:[#allocation12 + $0xb28] sm:$0xff]
    %v2640 = vld [vmem:[#allocation12 + $0xb30] sm:$0xff]
    %v2641 = vld [vmem:[#allocation12 + $0xb38] sm:$0xff]
    %v2642 = vld [vmem:[#allocation12 + $0xb40] sm:$0xff]
    %v2643 = vld [vmem:[#allocation12 + $0xb48] sm:$0xff]
    %v2644 = vld [vmem:[#allocation12 + $0xb50] sm:$0xff]
    %v2645 = vld [vmem:[#allocation12 + $0xb58] sm:$0xff]
    %v2646 = vld [vmem:[#allocation12 + $0xb60] sm:$0xff]
    %v2647 = vld [vmem:[#allocation12 + $0xb68] sm:$0xff]
    %v2648 = vld [vmem:[#allocation12 + $0xb70] sm:$0xff]
    %v2649 = vld [vmem:[#allocation12 + $0xb78] sm:$0xff]
    %v2650 = vld [vmem:[#allocation12 + $0xb80] sm:$0xff]
    %v2651 = vld [vmem:[#allocation12 + $0xb88] sm:$0xff]
    %v2652 = vld [vmem:[#allocation12 + $0xb90] sm:$0xff]
    %v2653 = vld [vmem:[#allocation12 + $0xb98] sm:$0xff]
    %v2654 = vld [vmem:[#allocation12 + $0xba0] sm:$0xff]
    %v2655 = vld [vmem:[#allocation12 + $0xba8] sm:$0xff]
    %v2656 = vld [vmem:[#allocation12 + $0xbb0] sm:$0xff]
    %v2657 = vld [vmem:[#allocation12 + $0xbb8] sm:$0xff]
    %v2658 = vld [vmem:[#allocation12 + $0xbc0] sm:$0xff]
    %v2659 = vld [vmem:[#allocation12 + $0xbc8] sm:$0xff]
    %v2660 = vld [vmem:[#allocation12 + $0xbd0] sm:$0xff]
    %v2661 = vld [vmem:[#allocation12 + $0xbd8] sm:$0xff]
    %v2662 = vld [vmem:[#allocation12 + $0xbe0] sm:$0xff]
    %v2663 = vld [vmem:[#allocation12 + $0xbe8] sm:$0xff]
    %v2664 = vld [vmem:[#allocation12 + $0xbf0] sm:$0xff]
    %v2665 = vld [vmem:[#allocation12 + $0xbf8] sm:$0xff]
    %v2666 = vld [vmem:[#allocation12 + $0xc00] sm:$0xff]
    %v2667 = vld [vmem:[#allocation12 + $0xc08] sm:$0xff]
    %v2668 = vld [vmem:[#allocation12 + $0xc10] sm:$0xff]
    %v2669 = vld [vmem:[#allocation12 + $0xc18] sm:$0xff]
    %v2670 = vld [vmem:[#allocation12 + $0xc20] sm:$0xff]
    %v2671 = vld [vmem:[#allocation12 + $0xc28] sm:$0xff]
    %v2672 = vld [vmem:[#allocation12 + $0xc30] sm:$0xff]
    %v2673 = vld [vmem:[#allocation12 + $0xc38] sm:$0xff]
    %v2674 = vld [vmem:[#allocation12 + $0xc40] sm:$0xff]
    %v2675 = vld [vmem:[#allocation12 + $0xc48] sm:$0xff]
    %v2676 = vld [vmem:[#allocation12 + $0xc50] sm:$0xff]
    %v2677 = vld [vmem:[#allocation12 + $0xc58] sm:$0xff]
    %v2678 = vld [vmem:[#allocation12 + $0xc60] sm:$0xff]
    %v2679 = vld [vmem:[#allocation12 + $0xc68] sm:$0xff]
    %v2680 = vld [vmem:[#allocation12 + $0xc70] sm:$0xff]
    %v2681 = vld [vmem:[#allocation12 + $0xc78] sm:$0xff]
    %v2682 = vld [vmem:[#allocation12 + $0xc80] sm:$0xff]
    %v2683 = vld [vmem:[#allocation12 + $0xc88] sm:$0xff]
    %v2684 = vld [vmem:[#allocation12 + $0xc90] sm:$0xff]
    %v2685 = vld [vmem:[#allocation12 + $0xc98] sm:$0xff]
    %v2686 = vld [vmem:[#allocation12 + $0xca0] sm:$0xff]
    %v2687 = vld [vmem:[#allocation12 + $0xca8] sm:$0xff]
    %v2688 = vld [vmem:[#allocation12 + $0xcb0] sm:$0xff]
    %v2689 = vld [vmem:[#allocation12 + $0xcb8] sm:$0xff]
    %v2690 = vld [vmem:[#allocation12 + $0xcc0] sm:$0xff]
    %v2691 = vld [vmem:[#allocation12 + $0xcc8] sm:$0xff]
    %v2692 = vld [vmem:[#allocation12 + $0xcd0] sm:$0xff]
    %v2693 = vld [vmem:[#allocation12 + $0xcd8] sm:$0xff]
    %v2694 = vld [vmem:[#allocation12 + $0xce0] sm:$0xff]
    %v2695 = vld [vmem:[#allocation12 + $0xce8] sm:$0xff]
    %v2696 = vld [vmem:[#allocation12 + $0xcf0] sm:$0xff]
    %v2697 = vld [vmem:[#allocation12 + $0xcf8] sm:$0xff]
    %v2698 = vld [vmem:[#allocation12 + $0xd00] sm:$0xff]
    %v2699 = vld [vmem:[#allocation12 + $0xd08] sm:$0xff]
    %v2700 = vld [vmem:[#allocation12 + $0xd10] sm:$0xff]
    %v2701 = vld [vmem:[#allocation12 + $0xd18] sm:$0xff]
    %v2702 = vld [vmem:[#allocation12 + $0xd20] sm:$0xff]
    %v2703 = vld [vmem:[#allocation12 + $0xd28] sm:$0xff]
    %v2704 = vld [vmem:[#allocation12 + $0xd30] sm:$0xff]
    %v2705 = vld [vmem:[#allocation12 + $0xd38] sm:$0xff]
    %v2706 = vld [vmem:[#allocation12 + $0xd40] sm:$0xff]
    %v2707 = vld [vmem:[#allocation12 + $0xd48] sm:$0xff]
    %v2708 = vld [vmem:[#allocation12 + $0xd50] sm:$0xff]
    %v2709 = vld [vmem:[#allocation12 + $0xd58] sm:$0xff]
    %v2710 = vld [vmem:[#allocation12 + $0xd60] sm:$0xff]
    %v2711 = vld [vmem:[#allocation12 + $0xd68] sm:$0xff]
    %v2712 = vld [vmem:[#allocation12 + $0xd70] sm:$0xff]
    %v2713 = vld [vmem:[#allocation12 + $0xd78] sm:$0xff]
    %v2714 = vld [vmem:[#allocation12 + $0xd80] sm:$0xff]
    %v2715 = vld [vmem:[#allocation12 + $0xd88] sm:$0xff]
    %v2716 = vld [vmem:[#allocation12 + $0xd90] sm:$0xff]
    %v2717 = vld [vmem:[#allocation12 + $0xd98] sm:$0xff]
    %v2718 = vld [vmem:[#allocation12 + $0xda0] sm:$0xff]
    %v2719 = vld [vmem:[#allocation12 + $0xda8] sm:$0xff]
    %v2720 = vld [vmem:[#allocation12 + $0xdb0] sm:$0xff]
    %v2721 = vld [vmem:[#allocation12 + $0xdb8] sm:$0xff]
    %v2722 = vld [vmem:[#allocation12 + $0xdc0] sm:$0xff]
    %v2723 = vld [vmem:[#allocation12 + $0xdc8] sm:$0xff]
    %v2724 = vld [vmem:[#allocation12 + $0xdd0] sm:$0xff]
    %v2725 = vld [vmem:[#allocation12 + $0xdd8] sm:$0xff]
    %v2726 = vld [vmem:[#allocation12 + $0xde0] sm:$0xff]
    %v2727 = vld [vmem:[#allocation12 + $0xde8] sm:$0xff]
    %v2728 = vld [vmem:[#allocation12 + $0xdf0] sm:$0xff]
    %v2729 = vld [vmem:[#allocation12 + $0xdf8] sm:$0xff]
    %v2730 = vld [vmem:[#allocation12 + $0xe00] sm:$0xff]
    %v2731 = vld [vmem:[#allocation12 + $0xe08] sm:$0xff]
    %v2732 = vld [vmem:[#allocation12 + $0xe10] sm:$0xff]
    %v2733 = vld [vmem:[#allocation12 + $0xe18] sm:$0xff]
    %v2734 = vld [vmem:[#allocation12 + $0xe20] sm:$0xff]
    %v2735 = vld [vmem:[#allocation12 + $0xe28] sm:$0xff]
    %v2736 = vld [vmem:[#allocation12 + $0xe30] sm:$0xff]
    %v2737 = vld [vmem:[#allocation12 + $0xe38] sm:$0xff]
    %v2738 = vld [vmem:[#allocation12 + $0xe40] sm:$0xff]
    %v2739 = vld [vmem:[#allocation12 + $0xe48] sm:$0xff]
    %v2740 = vld [vmem:[#allocation12 + $0xe50] sm:$0xff]
    %v2741 = vld [vmem:[#allocation12 + $0xe58] sm:$0xff]
    %v2742 = vld [vmem:[#allocation12 + $0xe60] sm:$0xff]
    %v2743 = vld [vmem:[#allocation12 + $0xe68] sm:$0xff]
    %v2744 = vld [vmem:[#allocation12 + $0xe70] sm:$0xff]
    %v2745 = vld [vmem:[#allocation12 + $0xe78] sm:$0xff]
    %v2746 = vld [vmem:[#allocation12 + $0xe80] sm:$0xff]
    %v2747 = vld [vmem:[#allocation12 + $0xe88] sm:$0xff]
    %v2748 = vld [vmem:[#allocation12 + $0xe90] sm:$0xff]
    %v2749 = vld [vmem:[#allocation12 + $0xe98] sm:$0xff]
    %v2750 = vld [vmem:[#allocation12 + $0xea0] sm:$0xff]
    %v2751 = vld [vmem:[#allocation12 + $0xea8] sm:$0xff]
    %v2752 = vld [vmem:[#allocation12 + $0xeb0] sm:$0xff]
    %v2753 = vld [vmem:[#allocation12 + $0xeb8] sm:$0xff]
    %v2754 = vld [vmem:[#allocation12 + $0xec0] sm:$0xff]
    %v2755 = vld [vmem:[#allocation12 + $0xec8] sm:$0xff]
    %v2756 = vld [vmem:[#allocation12 + $0xed0] sm:$0xff]
    %v2757 = vld [vmem:[#allocation12 + $0xed8] sm:$0xff]
    %v2758 = vld [vmem:[#allocation12 + $0xee0] sm:$0xff]
    %v2759 = vld [vmem:[#allocation12 + $0xee8] sm:$0xff]
    %v2760 = vld [vmem:[#allocation12 + $0xef0] sm:$0xff]
    %v2761 = vld [vmem:[#allocation12 + $0xef8] sm:$0xff]
    %v2762 = vld [vmem:[#allocation12 + $0xf00] sm:$0xff]
    %v2763 = vld [vmem:[#allocation12 + $0xf08] sm:$0xff]
    %v2764 = vld [vmem:[#allocation12 + $0xf10] sm:$0xff]
    %v2765 = vld [vmem:[#allocation12 + $0xf18] sm:$0xff]
    %v2766 = vld [vmem:[#allocation12 + $0xf20] sm:$0xff]
    %v2767 = vld [vmem:[#allocation12 + $0xf28] sm:$0xff]
    %v2768 = vld [vmem:[#allocation12 + $0xf30] sm:$0xff]
    %v2769 = vld [vmem:[#allocation12 + $0xf38] sm:$0xff]
    %v2770 = vld [vmem:[#allocation12 + $0xf40] sm:$0xff]
    %v2771 = vld [vmem:[#allocation12 + $0xf48] sm:$0xff]
    %v2772 = vld [vmem:[#allocation12 + $0xf50] sm:$0xff]
    %v2773 = vld [vmem:[#allocation12 + $0xf58] sm:$0xff]
    %v2774 = vld [vmem:[#allocation12 + $0xf60] sm:$0xff]
    %v2775 = vld [vmem:[#allocation12 + $0xf68] sm:$0xff]
    %v2776 = vld [vmem:[#allocation12 + $0xf70] sm:$0xff]
    %v2777 = vld [vmem:[#allocation12 + $0xf78] sm:$0xff]
    %v2778 = vld [vmem:[#allocation12 + $0xf80] sm:$0xff]
    %v2779 = vld [vmem:[#allocation12 + $0xf88] sm:$0xff]
    %v2780 = vld [vmem:[#allocation12 + $0xf90] sm:$0xff]
    %v2781 = vld [vmem:[#allocation12 + $0xf98] sm:$0xff]
    %v2782 = vld [vmem:[#allocation12 + $0xfa0] sm:$0xff]
    %v2783 = vld [vmem:[#allocation12 + $0xfa8] sm:$0xff]
    %v2784 = vld [vmem:[#allocation12 + $0xfb0] sm:$0xff]
    %v2785 = vld [vmem:[#allocation12 + $0xfb8] sm:$0xff]
    %v2786 = vld [vmem:[#allocation12 + $0xfc0] sm:$0xff]
    %v2787 = vld [vmem:[#allocation12 + $0xfc8] sm:$0xff]
    %v2788 = vld [vmem:[#allocation12 + $0xfd0] sm:$0xff]
    %v2789 = vld [vmem:[#allocation12 + $0xfd8] sm:$0xff]
    %v2790 = vld [vmem:[#allocation12 + $0xfe0] sm:$0xff]
    %v2791 = vld [vmem:[#allocation12 + $0xfe8] sm:$0xff]
    %v2792 = vld [vmem:[#allocation12 + $0xff0] sm:$0xff]
    %v2793 = vld [vmem:[#allocation12 + $0xff8] sm:$0xff]
    %v2794 = vld [vmem:[#allocation12 + $0x1000] sm:$0xff]
    %v2795 = vld [vmem:[#allocation12 + $0x1008] sm:$0xff]
    %v2796 = vld [vmem:[#allocation12 + $0x1010] sm:$0xff]
    %v2797 = vld [vmem:[#allocation12 + $0x1018] sm:$0xff]
    %v2798 = vld [vmem:[#allocation12 + $0x1020] sm:$0xff]
    %v2799 = vld [vmem:[#allocation12 + $0x1028] sm:$0xff]
    %v2800 = vld [vmem:[#allocation12 + $0x1030] sm:$0xff]
    %v2801 = vld [vmem:[#allocation12 + $0x1038] sm:$0xff]
    %v2802 = vld [vmem:[#allocation12 + $0x1040] sm:$0xff]
    %v2803 = vld [vmem:[#allocation12 + $0x1048] sm:$0xff]
    %v2804 = vld [vmem:[#allocation12 + $0x1050] sm:$0xff]
    %v2805 = vld [vmem:[#allocation12 + $0x1058] sm:$0xff]
    %v2806 = vld [vmem:[#allocation12 + $0x1060] sm:$0xff]
    %v2807 = vld [vmem:[#allocation12 + $0x1068] sm:$0xff]
    %v2808 = vld [vmem:[#allocation12 + $0x1070] sm:$0xff]
    %v2809 = vld [vmem:[#allocation12 + $0x1078] sm:$0xff]
    %v2810 = vld [vmem:[#allocation12 + $0x1080] sm:$0xff]
    %v2811 = vld [vmem:[#allocation12 + $0x1088] sm:$0xff]
    %v2812 = vld [vmem:[#allocation12 + $0x1090] sm:$0xff]
    %v2813 = vld [vmem:[#allocation12 + $0x1098] sm:$0xff]
    %v2814 = vld [vmem:[#allocation12 + $0x10a0] sm:$0xff]
    %v2815 = vld [vmem:[#allocation12 + $0x10a8] sm:$0xff]
    %v2816 = vld [vmem:[#allocation12 + $0x10b0] sm:$0xff]
    %v2817 = vld [vmem:[#allocation12 + $0x10b8] sm:$0xff]
    %v2818 = vld [vmem:[#allocation12 + $0x10c0] sm:$0xff]
    %v2819 = vld [vmem:[#allocation12 + $0x10c8] sm:$0xff]
    %v2820 = vld [vmem:[#allocation12 + $0x10d0] sm:$0xff]
    %v2821 = vld [vmem:[#allocation12 + $0x10d8] sm:$0xff]
    %v2822 = vld [vmem:[#allocation12 + $0x10e0] sm:$0xff]
    %v2823 = vld [vmem:[#allocation12 + $0x10e8] sm:$0xff]
    %v2824 = vld [vmem:[#allocation12 + $0x10f0] sm:$0xff]
    %v2825 = vld [vmem:[#allocation12 + $0x10f8] sm:$0xff]
    %v2826 = vld [vmem:[#allocation12 + $0x1100] sm:$0xff]
    %v2827 = vld [vmem:[#allocation12 + $0x1108] sm:$0xff]
    %v2828 = vld [vmem:[#allocation12 + $0x1110] sm:$0xff]
    %v2829 = vld [vmem:[#allocation12 + $0x1118] sm:$0xff]
    %v2830 = vld [vmem:[#allocation12 + $0x1120] sm:$0xff]
    %v2831 = vld [vmem:[#allocation12 + $0x1128] sm:$0xff]
    %v2832 = vld [vmem:[#allocation12 + $0x1130] sm:$0xff]
    %v2833 = vld [vmem:[#allocation12 + $0x1138] sm:$0xff]
    %v2834 = vld [vmem:[#allocation12 + $0x1140] sm:$0xff]
    %v2835 = vld [vmem:[#allocation12 + $0x1148] sm:$0xff]
    %v2836 = vld [vmem:[#allocation12 + $0x1150] sm:$0xff]
    %v2837 = vld [vmem:[#allocation12 + $0x1158] sm:$0xff]
    %v2838 = vld [vmem:[#allocation12 + $0x1160] sm:$0xff]
    %v2839 = vld [vmem:[#allocation12 + $0x1168] sm:$0xff]
    %v2840 = vld [vmem:[#allocation12 + $0x1170] sm:$0xff]
    %v2841 = vld [vmem:[#allocation12 + $0x1178] sm:$0xff]
    %v2842 = vld [vmem:[#allocation12 + $0x1180] sm:$0xff]
    %v2843 = vld [vmem:[#allocation12 + $0x1188] sm:$0xff]
    %v2844 = vld [vmem:[#allocation12 + $0x1190] sm:$0xff]
    %v2845 = vld [vmem:[#allocation12 + $0x1198] sm:$0xff]
    %v2846 = vld [vmem:[#allocation12 + $0x11a0] sm:$0xff]
    %v2847 = vld [vmem:[#allocation12 + $0x11a8] sm:$0xff]
    %v2848 = vld [vmem:[#allocation12 + $0x11b0] sm:$0xff]
    %v2849 = vld [vmem:[#allocation12 + $0x11b8] sm:$0xff]
    %v2850 = vld [vmem:[#allocation12 + $0x11c0] sm:$0xff]
    %v2851 = vld [vmem:[#allocation12 + $0x11c8] sm:$0xff]
    %v2852 = vld [vmem:[#allocation12 + $0x11d0] sm:$0xff]
    %v2853 = vld [vmem:[#allocation12 + $0x11d8] sm:$0xff]
    %v2854 = vld [vmem:[#allocation12 + $0x11e0] sm:$0xff]
    %v2855 = vld [vmem:[#allocation12 + $0x11e8] sm:$0xff]
    %v2856 = vld [vmem:[#allocation12 + $0x11f0] sm:$0xff]
    %v2857 = vld [vmem:[#allocation12 + $0x11f8] sm:$0xff]
    %v2858 = vld [vmem:[#allocation12 + $0x1200] sm:$0xff]
    %v2859 = vld [vmem:[#allocation12 + $0x1208] sm:$0xff]
    %v2860 = vld [vmem:[#allocation12 + $0x1210] sm:$0xff]
    %v2861 = vld [vmem:[#allocation12 + $0x1218] sm:$0xff]
    %v2862 = vld [vmem:[#allocation12 + $0x1220] sm:$0xff]
    %v2863 = vld [vmem:[#allocation12 + $0x1228] sm:$0xff]
    %v2864 = vld [vmem:[#allocation12 + $0x1230] sm:$0xff]
    %v2865 = vld [vmem:[#allocation12 + $0x1238] sm:$0xff]
    %v2866 = vld [vmem:[#allocation12 + $0x1240] sm:$0xff]
    %v2867 = vld [vmem:[#allocation12 + $0x1248] sm:$0xff]
    %v2868 = vld [vmem:[#allocation12 + $0x1250] sm:$0xff]
    %v2869 = vld [vmem:[#allocation12 + $0x1258] sm:$0xff]
    %v2870 = vld [vmem:[#allocation12 + $0x1260] sm:$0xff]
    %v2871 = vld [vmem:[#allocation12 + $0x1268] sm:$0xff]
    %v2872 = vld [vmem:[#allocation12 + $0x1270] sm:$0xff]
    %v2873 = vld [vmem:[#allocation12 + $0x1278] sm:$0xff]
    %v2874 = vld [vmem:[#allocation12 + $0x1280] sm:$0xff]
    %v2875 = vld [vmem:[#allocation12 + $0x1288] sm:$0xff]
    %v2876 = vld [vmem:[#allocation12 + $0x1290] sm:$0xff]
    %v2877 = vld [vmem:[#allocation12 + $0x1298] sm:$0xff]
    %v2878 = vld [vmem:[#allocation12 + $0x12a0] sm:$0xff]
    %v2879 = vld [vmem:[#allocation12 + $0x12a8] sm:$0xff]
    %v2880 = vld [vmem:[#allocation12 + $0x12b0] sm:$0xff]
    %v2881 = vld [vmem:[#allocation12 + $0x12b8] sm:$0xff]
    %v2882 = vld [vmem:[#allocation12 + $0x12c0] sm:$0xff]
    %v2883 = vld [vmem:[#allocation12 + $0x12c8] sm:$0xff]
    %v2884 = vld [vmem:[#allocation12 + $0x12d0] sm:$0xff]
    %v2885 = vld [vmem:[#allocation12 + $0x12d8] sm:$0xff]
    %v2886 = vld [vmem:[#allocation12 + $0x12e0] sm:$0xff]
    %v2887 = vld [vmem:[#allocation12 + $0x12e8] sm:$0xff]
    %v2888 = vld [vmem:[#allocation12 + $0x12f0] sm:$0xff]
    %v2889 = vld [vmem:[#allocation12 + $0x12f8] sm:$0xff]
    %v2890 = vld [vmem:[#allocation12 + $0x1300] sm:$0xff]
    %v2891 = vld [vmem:[#allocation12 + $0x1308] sm:$0xff]
    %v2892 = vld [vmem:[#allocation12 + $0x1310] sm:$0xff]
    %v2893 = vld [vmem:[#allocation12 + $0x1318] sm:$0xff]
    %v2894 = vld [vmem:[#allocation12 + $0x1320] sm:$0xff]
    %v2895 = vld [vmem:[#allocation12 + $0x1328] sm:$0xff]
    %v2896 = vld [vmem:[#allocation12 + $0x1330] sm:$0xff]
    %v2897 = vld [vmem:[#allocation12 + $0x1338] sm:$0xff]
    %v2898 = vld [vmem:[#allocation12 + $0x1340] sm:$0xff]
    %v2899 = vld [vmem:[#allocation12 + $0x1348] sm:$0xff]
    %v2900 = vld [vmem:[#allocation12 + $0x1350] sm:$0xff]
    %v2901 = vld [vmem:[#allocation12 + $0x1358] sm:$0xff]
    %v2902 = vld [vmem:[#allocation12 + $0x1360] sm:$0xff]
    %v2903 = vld [vmem:[#allocation12 + $0x1368] sm:$0xff]
    %v2904 = vld [vmem:[#allocation12 + $0x1370] sm:$0xff]
    %v2905 = vld [vmem:[#allocation12 + $0x1378] sm:$0xff]
    %v2906 = vld [vmem:[#allocation12 + $0x1380] sm:$0xff]
    %v2907 = vld [vmem:[#allocation12 + $0x1388] sm:$0xff]
    %v2908 = vld [vmem:[#allocation12 + $0x1390] sm:$0xff]
    %v2909 = vld [vmem:[#allocation12 + $0x1398] sm:$0xff]
    %v2910 = vld [vmem:[#allocation12 + $0x13a0] sm:$0xff]
    %v2911 = vld [vmem:[#allocation12 + $0x13a8] sm:$0xff]
    %v2912 = vld [vmem:[#allocation12 + $0x13b0] sm:$0xff]
    %v2913 = vld [vmem:[#allocation12 + $0x13b8] sm:$0xff]
    %v2914 = vld [vmem:[#allocation12 + $0x13c0] sm:$0xff]
    %v2915 = vld [vmem:[#allocation12 + $0x13c8] sm:$0xff]
    %v2916 = vld [vmem:[#allocation12 + $0x13d0] sm:$0xff]
    %v2917 = vld [vmem:[#allocation12 + $0x13d8] sm:$0xff]
    %v2918 = vld [vmem:[#allocation12 + $0x13e0] sm:$0xff]
    %v2919 = vld [vmem:[#allocation12 + $0x13e8] sm:$0xff]
    %v2920 = vld [vmem:[#allocation12 + $0x13f0] sm:$0xff]
    %v2921 = vld [vmem:[#allocation12 + $0x13f8] sm:$0xff]
    %v2922 = vld [vmem:[#allocation12 + $0x1400] sm:$0xff]
    %v2923 = vld [vmem:[#allocation12 + $0x1408] sm:$0xff]
    %v2924 = vld [vmem:[#allocation12 + $0x1410] sm:$0xff]
    %v2925 = vld [vmem:[#allocation12 + $0x1418] sm:$0xff]
    %v2926 = vld [vmem:[#allocation12 + $0x1420] sm:$0xff]
    %v2927 = vld [vmem:[#allocation12 + $0x1428] sm:$0xff]
    %v2928 = vld [vmem:[#allocation12 + $0x1430] sm:$0xff]
    %v2929 = vld [vmem:[#allocation12 + $0x1438] sm:$0xff]
    %v2930 = vld [vmem:[#allocation12 + $0x1440] sm:$0xff]
    %v2931 = vld [vmem:[#allocation12 + $0x1448] sm:$0xff]
    %v2932 = vld [vmem:[#allocation12 + $0x1450] sm:$0xff]
    %v2933 = vld [vmem:[#allocation12 + $0x1458] sm:$0xff]
    %v2934 = vld [vmem:[#allocation12 + $0x1460] sm:$0xff]
    %v2935 = vld [vmem:[#allocation12 + $0x1468] sm:$0xff]
    %v2936 = vld [vmem:[#allocation12 + $0x1470] sm:$0xff]
    %v2937 = vld [vmem:[#allocation12 + $0x1478] sm:$0xff]
    %v2938 = vld [vmem:[#allocation12 + $0x1480] sm:$0xff]
    %v2939 = vld [vmem:[#allocation12 + $0x1488] sm:$0xff]
    %v2940 = vld [vmem:[#allocation12 + $0x1490] sm:$0xff]
    %v2941 = vld [vmem:[#allocation12 + $0x1498] sm:$0xff]
    %v2942 = vld [vmem:[#allocation12 + $0x14a0] sm:$0xff]
    %v2943 = vld [vmem:[#allocation12 + $0x14a8] sm:$0xff]
    %v2944 = vld [vmem:[#allocation12 + $0x14b0] sm:$0xff]
    %v2945 = vld [vmem:[#allocation12 + $0x14b8] sm:$0xff]
    %v2946 = vld [vmem:[#allocation12 + $0x14c0] sm:$0xff]
    %v2947 = vld [vmem:[#allocation12 + $0x14c8] sm:$0xff]
    %v2948 = vld [vmem:[#allocation12 + $0x14d0] sm:$0xff]
    %v2949 = vld [vmem:[#allocation12 + $0x14d8] sm:$0xff]
    %v2950 = vld [vmem:[#allocation12 + $0x14e0] sm:$0xff]
    %v2951 = vld [vmem:[#allocation12 + $0x14e8] sm:$0xff]
    %v2952 = vld [vmem:[#allocation12 + $0x14f0] sm:$0xff]
    %v2953 = vld [vmem:[#allocation12 + $0x14f8] sm:$0xff]
    %v2954 = vld [vmem:[#allocation12 + $0x1500] sm:$0xff]
    %v2955 = vld [vmem:[#allocation12 + $0x1508] sm:$0xff]
    %v2956 = vld [vmem:[#allocation12 + $0x1510] sm:$0xff]
    %v2957 = vld [vmem:[#allocation12 + $0x1518] sm:$0xff]
    %v2958 = vld [vmem:[#allocation12 + $0x1520] sm:$0xff]
    %v2959 = vld [vmem:[#allocation12 + $0x1528] sm:$0xff]
    %v2960 = vld [vmem:[#allocation12 + $0x1530] sm:$0xff]
    %v2961 = vld [vmem:[#allocation12 + $0x1538] sm:$0xff]
    %v2962 = vld [vmem:[#allocation12 + $0x1540] sm:$0xff]
    %v2963 = vld [vmem:[#allocation12 + $0x1548] sm:$0xff]
    %v2964 = vld [vmem:[#allocation12 + $0x1550] sm:$0xff]
    %v2965 = vld [vmem:[#allocation12 + $0x1558] sm:$0xff]
    %v2966 = vld [vmem:[#allocation12 + $0x1560] sm:$0xff]
    %v2967 = vld [vmem:[#allocation12 + $0x1568] sm:$0xff]
    %v2968 = vld [vmem:[#allocation12 + $0x1570] sm:$0xff]
    %v2969 = vld [vmem:[#allocation12 + $0x1578] sm:$0xff]
    %v2970 = vld [vmem:[#allocation12 + $0x1580] sm:$0xff]
    %v2971 = vld [vmem:[#allocation12 + $0x1588] sm:$0xff]
    %v2972 = vld [vmem:[#allocation12 + $0x1590] sm:$0xff]
    %v2973 = vld [vmem:[#allocation12 + $0x1598] sm:$0xff]
    %v2974 = vld [vmem:[#allocation12 + $0x15a0] sm:$0xff]
    %v2975 = vld [vmem:[#allocation12 + $0x15a8] sm:$0xff]
    %v2976 = vld [vmem:[#allocation12 + $0x15b0] sm:$0xff]
    %v2977 = vld [vmem:[#allocation12 + $0x15b8] sm:$0xff]
    %v2978 = vld [vmem:[#allocation12 + $0x15c0] sm:$0xff]
    %v2979 = vld [vmem:[#allocation12 + $0x15c8] sm:$0xff]
    %v2980 = vld [vmem:[#allocation12 + $0x15d0] sm:$0xff]
    %v2981 = vld [vmem:[#allocation12 + $0x15d8] sm:$0xff]
    %v2982 = vld [vmem:[#allocation12 + $0x15e0] sm:$0xff]
    %v2983 = vld [vmem:[#allocation12 + $0x15e8] sm:$0xff]
    %v2984 = vld [vmem:[#allocation12 + $0x15f0] sm:$0xff]
    %v2985 = vld [vmem:[#allocation12 + $0x15f8] sm:$0xff]
    %v2986 = vld [vmem:[#allocation12 + $0x1600] sm:$0xff]
    %v2987 = vld [vmem:[#allocation12 + $0x1608] sm:$0xff]
    %v2988 = vld [vmem:[#allocation12 + $0x1610] sm:$0xff]
    %v2989 = vld [vmem:[#allocation12 + $0x1618] sm:$0xff]
    %v2990 = vld [vmem:[#allocation12 + $0x1620] sm:$0xff]
    %v2991 = vld [vmem:[#allocation12 + $0x1628] sm:$0xff]
    %v2992 = vld [vmem:[#allocation12 + $0x1630] sm:$0xff]
    %v2993 = vld [vmem:[#allocation12 + $0x1638] sm:$0xff]
    %v2994 = vld [vmem:[#allocation12 + $0x1640] sm:$0xff]
    %v2995 = vld [vmem:[#allocation12 + $0x1648] sm:$0xff]
    %v2996 = vld [vmem:[#allocation12 + $0x1650] sm:$0xff]
    %v2997 = vld [vmem:[#allocation12 + $0x1658] sm:$0xff]
    %v2998 = vld [vmem:[#allocation12 + $0x1660] sm:$0xff]
    %v2999 = vld [vmem:[#allocation12 + $0x1668] sm:$0xff]
    %v3000 = vld [vmem:[#allocation12 + $0x1670] sm:$0xff]
    %v3001 = vld [vmem:[#allocation12 + $0x1678] sm:$0xff]
    %v3002 = vld [vmem:[#allocation12 + $0x1680] sm:$0xff]
    %v3003 = vld [vmem:[#allocation12 + $0x1688] sm:$0xff]
    %v3004 = vld [vmem:[#allocation12 + $0x1690] sm:$0xff]
    %v3005 = vld [vmem:[#allocation12 + $0x1698] sm:$0xff]
    %v3006 = vld [vmem:[#allocation12 + $0x16a0] sm:$0xff]
    %v3007 = vld [vmem:[#allocation12 + $0x16a8] sm:$0xff]
    %v3008 = vld [vmem:[#allocation12 + $0x16b0] sm:$0xff]
    %v3009 = vld [vmem:[#allocation12 + $0x16b8] sm:$0xff]
    %v3010 = vld [vmem:[#allocation12 + $0x16c0] sm:$0xff]
    %v3011 = vld [vmem:[#allocation12 + $0x16c8] sm:$0xff]
    %v3012 = vld [vmem:[#allocation12 + $0x16d0] sm:$0xff]
    %v3013 = vld [vmem:[#allocation12 + $0x16d8] sm:$0xff]
    %v3014 = vld [vmem:[#allocation12 + $0x16e0] sm:$0xff]
    %v3015 = vld [vmem:[#allocation12 + $0x16e8] sm:$0xff]
    %v3016 = vld [vmem:[#allocation12 + $0x16f0] sm:$0xff]
    %v3017 = vld [vmem:[#allocation12 + $0x16f8] sm:$0xff]
    %v3018 = vld [vmem:[#allocation12 + $0x1700] sm:$0xff]
    %v3019 = vld [vmem:[#allocation12 + $0x1708] sm:$0xff]
    %v3020 = vld [vmem:[#allocation12 + $0x1710] sm:$0xff]
    %v3021 = vld [vmem:[#allocation12 + $0x1718] sm:$0xff]
    %v3022 = vld [vmem:[#allocation12 + $0x1720] sm:$0xff]
    %v3023 = vld [vmem:[#allocation12 + $0x1728] sm:$0xff]
    %v3024 = vld [vmem:[#allocation12 + $0x1730] sm:$0xff]
    %v3025 = vld [vmem:[#allocation12 + $0x1738] sm:$0xff]
    %v3026 = vld [vmem:[#allocation12 + $0x1740] sm:$0xff]
    %v3027 = vld [vmem:[#allocation12 + $0x1748] sm:$0xff]
    %v3028 = vld [vmem:[#allocation12 + $0x1750] sm:$0xff]
    %v3029 = vld [vmem:[#allocation12 + $0x1758] sm:$0xff]
    %v3030 = vld [vmem:[#allocation12 + $0x1760] sm:$0xff]
    %v3031 = vld [vmem:[#allocation12 + $0x1768] sm:$0xff]
    %v3032 = vld [vmem:[#allocation12 + $0x1770] sm:$0xff]
    %v3033 = vld [vmem:[#allocation12 + $0x1778] sm:$0xff]
    %v3034 = vld [vmem:[#allocation12 + $0x1780] sm:$0xff]
    %v3035 = vld [vmem:[#allocation12 + $0x1788] sm:$0xff]
    %v3036 = vld [vmem:[#allocation12 + $0x1790] sm:$0xff]
    %v3037 = vld [vmem:[#allocation12 + $0x1798] sm:$0xff]
    %v3038 = vld [vmem:[#allocation12 + $0x17a0] sm:$0xff]
    %v3039 = vld [vmem:[#allocation12 + $0x17a8] sm:$0xff]
    %v3040 = vld [vmem:[#allocation12 + $0x17b0] sm:$0xff]
    %v3041 = vld [vmem:[#allocation12 + $0x17b8] sm:$0xff]
    %v3042 = vld [vmem:[#allocation12 + $0x17c0] sm:$0xff]
    %v3043 = vld [vmem:[#allocation12 + $0x17c8] sm:$0xff]
    %v3044 = vld [vmem:[#allocation12 + $0x17d0] sm:$0xff]
    %v3045 = vld [vmem:[#allocation12 + $0x17d8] sm:$0xff]
    %v3046 = vld [vmem:[#allocation12 + $0x17e0] sm:$0xff]
    %v3047 = vld [vmem:[#allocation12 + $0x17e8] sm:$0xff]
    %v3048 = vld [vmem:[#allocation12 + $0x17f0] sm:$0xff]
    %v3049 = vld [vmem:[#allocation12 + $0x17f8] sm:$0xff]
    %v3050 = vld [vmem:[#allocation12 + $0x1800] sm:$0xff]
    %v3051 = vld [vmem:[#allocation12 + $0x1808] sm:$0xff]
    %v3052 = vld [vmem:[#allocation12 + $0x1810] sm:$0xff]
    %v3053 = vld [vmem:[#allocation12 + $0x1818] sm:$0xff]
    %v3054 = vld [vmem:[#allocation12 + $0x1820] sm:$0xff]
    %v3055 = vld [vmem:[#allocation12 + $0x1828] sm:$0xff]
    %v3056 = vld [vmem:[#allocation12 + $0x1830] sm:$0xff]
    %v3057 = vld [vmem:[#allocation12 + $0x1838] sm:$0xff]
    %v3058 = vld [vmem:[#allocation12 + $0x1840] sm:$0xff]
    %v3059 = vld [vmem:[#allocation12 + $0x1848] sm:$0xff]
    %v3060 = vld [vmem:[#allocation12 + $0x1850] sm:$0xff]
    %v3061 = vld [vmem:[#allocation12 + $0x1858] sm:$0xff]
    %v3062 = vld [vmem:[#allocation12 + $0x1860] sm:$0xff]
    %v3063 = vld [vmem:[#allocation12 + $0x1868] sm:$0xff]
    %v3064 = vld [vmem:[#allocation12 + $0x1870] sm:$0xff]
    %v3065 = vld [vmem:[#allocation12 + $0x1878] sm:$0xff]
    %v3066 = vld [vmem:[#allocation12 + $0x1880] sm:$0xff]
    %v3067 = vld [vmem:[#allocation12 + $0x1888] sm:$0xff]
    %v3068 = vld [vmem:[#allocation12 + $0x1890] sm:$0xff]
    %v3069 = vld [vmem:[#allocation12 + $0x1898] sm:$0xff]
    %v3070 = vld [vmem:[#allocation12 + $0x18a0] sm:$0xff]
    %v3071 = vld [vmem:[#allocation12 + $0x18a8] sm:$0xff]
    %v3072 = vld [vmem:[#allocation12 + $0x18b0] sm:$0xff]
    %v3073 = vld [vmem:[#allocation12 + $0x18b8] sm:$0xff]
    %v3074 = vld [vmem:[#allocation12 + $0x18c0] sm:$0xff]
    %v3075 = vld [vmem:[#allocation12 + $0x18c8] sm:$0xff]
    %v3076 = vld [vmem:[#allocation12 + $0x18d0] sm:$0xff]
    %v3077 = vld [vmem:[#allocation12 + $0x18d8] sm:$0xff]
    %v3078 = vld [vmem:[#allocation12 + $0x18e0] sm:$0xff]
    %v3079 = vld [vmem:[#allocation12 + $0x18e8] sm:$0xff]
    %v3080 = vld [vmem:[#allocation12 + $0x18f0] sm:$0xff]
    %v3081 = vld [vmem:[#allocation12 + $0x18f8] sm:$0xff]
    %v3082 = vld [vmem:[#allocation12 + $0x1900] sm:$0xff]
    %v3083 = vld [vmem:[#allocation12 + $0x1908] sm:$0xff]
    %v3084 = vld [vmem:[#allocation12 + $0x1910] sm:$0xff]
    %v3085 = vld [vmem:[#allocation12 + $0x1918] sm:$0xff]
    %v3086 = vld [vmem:[#allocation12 + $0x1920] sm:$0xff]
    %v3087 = vld [vmem:[#allocation12 + $0x1928] sm:$0xff]
    %v3088 = vld [vmem:[#allocation12 + $0x1930] sm:$0xff]
    %v3089 = vld [vmem:[#allocation12 + $0x1938] sm:$0xff]
    %v3090 = vld [vmem:[#allocation12 + $0x1940] sm:$0xff]
    %v3091 = vld [vmem:[#allocation12 + $0x1948] sm:$0xff]
    %v3092 = vld [vmem:[#allocation12 + $0x1950] sm:$0xff]
    %v3093 = vld [vmem:[#allocation12 + $0x1958] sm:$0xff]
    %v3094 = vld [vmem:[#allocation12 + $0x1960] sm:$0xff]
    %v3095 = vld [vmem:[#allocation12 + $0x1968] sm:$0xff]
    %v3096 = vld [vmem:[#allocation12 + $0x1970] sm:$0xff]
    %v3097 = vld [vmem:[#allocation12 + $0x1978] sm:$0xff]
    %v3098 = vld [vmem:[#allocation12 + $0x1980] sm:$0xff]
    %v3099 = vld [vmem:[#allocation12 + $0x1988] sm:$0xff]
    %v3100 = vld [vmem:[#allocation12 + $0x1990] sm:$0xff]
    %v3101 = vld [vmem:[#allocation12 + $0x1998] sm:$0xff]
    %v3102 = vld [vmem:[#allocation12 + $0x19a0] sm:$0xff]
    %v3103 = vld [vmem:[#allocation12 + $0x19a8] sm:$0xff]
    %v3104 = vld [vmem:[#allocation12 + $0x19b0] sm:$0xff]
    %v3105 = vld [vmem:[#allocation12 + $0x19b8] sm:$0xff]
    %v3106 = vld [vmem:[#allocation12 + $0x19c0] sm:$0xff]
    %v3107 = vld [vmem:[#allocation12 + $0x19c8] sm:$0xff]
    %v3108 = vld [vmem:[#allocation12 + $0x19d0] sm:$0xff]
    %v3109 = vld [vmem:[#allocation12 + $0x19d8] sm:$0xff]
    %v3110 = vld [vmem:[#allocation12 + $0x19e0] sm:$0xff]
    %v3111 = vld [vmem:[#allocation12 + $0x19e8] sm:$0xff]
    %v3112 = vld [vmem:[#allocation12 + $0x19f0] sm:$0xff]
    %v3113 = vld [vmem:[#allocation12 + $0x19f8] sm:$0xff]
    %v3114 = vld [vmem:[#allocation12 + $0x1a00] sm:$0xff]
    %v3115 = vld [vmem:[#allocation12 + $0x1a08] sm:$0xff]
    %v3116 = vld [vmem:[#allocation12 + $0x1a10] sm:$0xff]
    %v3117 = vld [vmem:[#allocation12 + $0x1a18] sm:$0xff]
    %v3118 = vld [vmem:[#allocation12 + $0x1a20] sm:$0xff]
    %v3119 = vld [vmem:[#allocation12 + $0x1a28] sm:$0xff]
    %v3120 = vld [vmem:[#allocation12 + $0x1a30] sm:$0xff]
    %v3121 = vld [vmem:[#allocation12 + $0x1a38] sm:$0xff]
    %v3122 = vld [vmem:[#allocation12 + $0x1a40] sm:$0xff]
    %v3123 = vld [vmem:[#allocation12 + $0x1a48] sm:$0xff]
    %v3124 = vld [vmem:[#allocation12 + $0x1a50] sm:$0xff]
    %v3125 = vld [vmem:[#allocation12 + $0x1a58] sm:$0xff]
    %v3126 = vld [vmem:[#allocation12 + $0x1a60] sm:$0xff]
    %v3127 = vld [vmem:[#allocation12 + $0x1a68] sm:$0xff]
    %v3128 = vld [vmem:[#allocation12 + $0x1a70] sm:$0xff]
    %v3129 = vld [vmem:[#allocation12 + $0x1a78] sm:$0xff]
    %v3130 = vld [vmem:[#allocation12 + $0x1a80] sm:$0xff]
    %v3131 = vld [vmem:[#allocation12 + $0x1a88] sm:$0xff]
    %v3132 = vld [vmem:[#allocation12 + $0x1a90] sm:$0xff]
    %v3133 = vld [vmem:[#allocation12 + $0x1a98] sm:$0xff]
    %v3134 = vld [vmem:[#allocation12 + $0x1aa0] sm:$0xff]
    %v3135 = vld [vmem:[#allocation12 + $0x1aa8] sm:$0xff]
    %v3136 = vld [vmem:[#allocation12 + $0x1ab0] sm:$0xff]
    %v3137 = vld [vmem:[#allocation12 + $0x1ab8] sm:$0xff]
    %v3138 = vld [vmem:[#allocation12 + $0x1ac0] sm:$0xff]
    %v3139 = vld [vmem:[#allocation12 + $0x1ac8] sm:$0xff]
    %v3140 = vld [vmem:[#allocation12 + $0x1ad0] sm:$0xff]
    %v3141 = vld [vmem:[#allocation12 + $0x1ad8] sm:$0xff]
    %v3142 = vld [vmem:[#allocation12 + $0x1ae0] sm:$0xff]
    %v3143 = vld [vmem:[#allocation12 + $0x1ae8] sm:$0xff]
    %v3144 = vld [vmem:[#allocation12 + $0x1af0] sm:$0xff]
    %v3145 = vld [vmem:[#allocation12 + $0x1af8] sm:$0xff]
    %v3146 = vld [vmem:[#allocation12 + $0x1b00] sm:$0xff]
    %v3147 = vld [vmem:[#allocation12 + $0x1b08] sm:$0xff]
    %v3148 = vld [vmem:[#allocation12 + $0x1b10] sm:$0xff]
    %v3149 = vld [vmem:[#allocation12 + $0x1b18] sm:$0xff]
    %v3150 = vld [vmem:[#allocation12 + $0x1b20] sm:$0xff]
    %v3151 = vld [vmem:[#allocation12 + $0x1b28] sm:$0xff]
    %v3152 = vld [vmem:[#allocation12 + $0x1b30] sm:$0xff]
    %v3153 = vld [vmem:[#allocation12 + $0x1b38] sm:$0xff]
    %v3154 = vld [vmem:[#allocation12 + $0x1b40] sm:$0xff]
    %v3155 = vld [vmem:[#allocation12 + $0x1b48] sm:$0xff]
    %v3156 = vld [vmem:[#allocation12 + $0x1b50] sm:$0xff]
    %v3157 = vld [vmem:[#allocation12 + $0x1b58] sm:$0xff]
    %v3158 = vld [vmem:[#allocation12 + $0x1b60] sm:$0xff]
    %v3159 = vld [vmem:[#allocation12 + $0x1b68] sm:$0xff]
    %v3160 = vld [vmem:[#allocation12 + $0x1b70] sm:$0xff]
    %v3161 = vld [vmem:[#allocation12 + $0x1b78] sm:$0xff]
    %v3162 = vld [vmem:[#allocation12 + $0x1b80] sm:$0xff]
    %v3163 = vld [vmem:[#allocation12 + $0x1b88] sm:$0xff]
    %v3164 = vld [vmem:[#allocation12 + $0x1b90] sm:$0xff]
    %v3165 = vld [vmem:[#allocation12 + $0x1b98] sm:$0xff]
    %v3166 = vld [vmem:[#allocation12 + $0x1ba0] sm:$0xff]
    %v3167 = vld [vmem:[#allocation12 + $0x1ba8] sm:$0xff]
    %v3168 = vld [vmem:[#allocation12 + $0x1bb0] sm:$0xff]
    %v3169 = vld [vmem:[#allocation12 + $0x1bb8] sm:$0xff]
    %v3170 = vld [vmem:[#allocation12 + $0x1bc0] sm:$0xff]
    %v3171 = vld [vmem:[#allocation12 + $0x1bc8] sm:$0xff]
    %v3172 = vld [vmem:[#allocation12 + $0x1bd0] sm:$0xff]
    %v3173 = vld [vmem:[#allocation12 + $0x1bd8] sm:$0xff]
    %v3174 = vld [vmem:[#allocation12 + $0x1be0] sm:$0xff]
    %v3175 = vld [vmem:[#allocation12 + $0x1be8] sm:$0xff]
    %v3176 = vld [vmem:[#allocation12 + $0x1bf0] sm:$0xff]
    %v3177 = vld [vmem:[#allocation12 + $0x1bf8] sm:$0xff]
    %v3178 = vld [vmem:[#allocation12 + $0x1c00] sm:$0xff]
    %v3179 = vld [vmem:[#allocation12 + $0x1c08] sm:$0xff]
    %v3180 = vld [vmem:[#allocation12 + $0x1c10] sm:$0xff]
    %v3181 = vld [vmem:[#allocation12 + $0x1c18] sm:$0xff]
    %v3182 = vld [vmem:[#allocation12 + $0x1c20] sm:$0xff]
    %v3183 = vld [vmem:[#allocation12 + $0x1c28] sm:$0xff]
    %v3184 = vld [vmem:[#allocation12 + $0x1c30] sm:$0xff]
    %v3185 = vld [vmem:[#allocation12 + $0x1c38] sm:$0xff]
    %v3186 = vld [vmem:[#allocation12 + $0x1c40] sm:$0xff]
    %v3187 = vld [vmem:[#allocation12 + $0x1c48] sm:$0xff]
    %v3188 = vld [vmem:[#allocation12 + $0x1c50] sm:$0xff]
    %v3189 = vld [vmem:[#allocation12 + $0x1c58] sm:$0xff]
    %v3190 = vld [vmem:[#allocation12 + $0x1c60] sm:$0xff]
    %v3191 = vld [vmem:[#allocation12 + $0x1c68] sm:$0xff]
    %v3192 = vld [vmem:[#allocation12 + $0x1c70] sm:$0xff]
    %v3193 = vld [vmem:[#allocation12 + $0x1c78] sm:$0xff]
    %v3194 = vld [vmem:[#allocation12 + $0x1c80] sm:$0xff]
    %v3195 = vld [vmem:[#allocation12 + $0x1c88] sm:$0xff]
    %v3196 = vld [vmem:[#allocation12 + $0x1c90] sm:$0xff]
    %v3197 = vld [vmem:[#allocation12 + $0x1c98] sm:$0xff]
    %v3198 = vld [vmem:[#allocation12 + $0x1ca0] sm:$0xff]
    %v3199 = vld [vmem:[#allocation12 + $0x1ca8] sm:$0xff]
    %v3200 = vld [vmem:[#allocation12 + $0x1cb0] sm:$0xff]
    %v3201 = vld [vmem:[#allocation12 + $0x1cb8] sm:$0xff]
    %v3202 = vld [vmem:[#allocation12 + $0x1cc0] sm:$0xff]
    %v3203 = vld [vmem:[#allocation12 + $0x1cc8] sm:$0xff]
    %v3204 = vld [vmem:[#allocation12 + $0x1cd0] sm:$0xff]
    %v3205 = vld [vmem:[#allocation12 + $0x1cd8] sm:$0xff]
    %v3206 = vld [vmem:[#allocation12 + $0x1ce0] sm:$0xff]
    %v3207 = vld [vmem:[#allocation12 + $0x1ce8] sm:$0xff]
    %v3208 = vld [vmem:[#allocation12 + $0x1cf0] sm:$0xff]
    %v3209 = vld [vmem:[#allocation12 + $0x1cf8] sm:$0xff]
    %v3210 = vld [vmem:[#allocation12 + $0x1d00] sm:$0xff]
    %v3211 = vld [vmem:[#allocation12 + $0x1d08] sm:$0xff]
    %v3212 = vld [vmem:[#allocation12 + $0x1d10] sm:$0xff]
    %v3213 = vld [vmem:[#allocation12 + $0x1d18] sm:$0xff]
    %v3214 = vld [vmem:[#allocation12 + $0x1d20] sm:$0xff]
    %v3215 = vld [vmem:[#allocation12 + $0x1d28] sm:$0xff]
    %v3216 = vld [vmem:[#allocation12 + $0x1d30] sm:$0xff]
    %v3217 = vld [vmem:[#allocation12 + $0x1d38] sm:$0xff]
    %v3218 = vld [vmem:[#allocation12 + $0x1d40] sm:$0xff]
    %v3219 = vld [vmem:[#allocation12 + $0x1d48] sm:$0xff]
    %v3220 = vld [vmem:[#allocation12 + $0x1d50] sm:$0xff]
    %v3221 = vld [vmem:[#allocation12 + $0x1d58] sm:$0xff]
    %v3222 = vld [vmem:[#allocation12 + $0x1d60] sm:$0xff]
    %v3223 = vld [vmem:[#allocation12 + $0x1d68] sm:$0xff]
    %v3224 = vld [vmem:[#allocation12 + $0x1d70] sm:$0xff]
    %v3225 = vld [vmem:[#allocation12 + $0x1d78] sm:$0xff]
    %v3226 = vld [vmem:[#allocation12 + $0x1d80] sm:$0xff]
    %v3227 = vld [vmem:[#allocation12 + $0x1d88] sm:$0xff]
    %v3228 = vld [vmem:[#allocation12 + $0x1d90] sm:$0xff]
    %v3229 = vld [vmem:[#allocation12 + $0x1d98] sm:$0xff]
    %v3230 = vld [vmem:[#allocation12 + $0x1da0] sm:$0xff]
    %v3231 = vld [vmem:[#allocation12 + $0x1da8] sm:$0xff]
    %v3232 = vld [vmem:[#allocation12 + $0x1db0] sm:$0xff]
    %v3233 = vld [vmem:[#allocation12 + $0x1db8] sm:$0xff]
    %v3234 = vld [vmem:[#allocation12 + $0x1dc0] sm:$0xff]
    %v3235 = vld [vmem:[#allocation12 + $0x1dc8] sm:$0xff]
    %v3236 = vld [vmem:[#allocation12 + $0x1dd0] sm:$0xff]
    %v3237 = vld [vmem:[#allocation12 + $0x1dd8] sm:$0xff]
    %v3238 = vld [vmem:[#allocation12 + $0x1de0] sm:$0xff]
    %v3239 = vld [vmem:[#allocation12 + $0x1de8] sm:$0xff]
    %v3240 = vld [vmem:[#allocation12 + $0x1df0] sm:$0xff]
    %v3241 = vld [vmem:[#allocation12 + $0x1df8] sm:$0xff]
    %v3242 = vld [vmem:[#allocation12 + $0x1e00] sm:$0xff]
    %v3243 = vld [vmem:[#allocation12 + $0x1e08] sm:$0xff]
    %v3244 = vld [vmem:[#allocation12 + $0x1e10] sm:$0xff]
    %v3245 = vld [vmem:[#allocation12 + $0x1e18] sm:$0xff]
    %v3246 = vld [vmem:[#allocation12 + $0x1e20] sm:$0xff]
    %v3247 = vld [vmem:[#allocation12 + $0x1e28] sm:$0xff]
    %v3248 = vld [vmem:[#allocation12 + $0x1e30] sm:$0xff]
    %v3249 = vld [vmem:[#allocation12 + $0x1e38] sm:$0xff]
    %v3250 = vld [vmem:[#allocation12 + $0x1e40] sm:$0xff]
    %v3251 = vld [vmem:[#allocation12 + $0x1e48] sm:$0xff]
    %v3252 = vld [vmem:[#allocation12 + $0x1e50] sm:$0xff]
    %v3253 = vld [vmem:[#allocation12 + $0x1e58] sm:$0xff]
    %v3254 = vld [vmem:[#allocation12 + $0x1e60] sm:$0xff]
    %v3255 = vld [vmem:[#allocation12 + $0x1e68] sm:$0xff]
    %v3256 = vld [vmem:[#allocation12 + $0x1e70] sm:$0xff]
    %v3257 = vld [vmem:[#allocation12 + $0x1e78] sm:$0xff]
    %v3258 = vld [vmem:[#allocation12 + $0x1e80] sm:$0xff]
    %v3259 = vld [vmem:[#allocation12 + $0x1e88] sm:$0xff]
    %v3260 = vld [vmem:[#allocation12 + $0x1e90] sm:$0xff]
    %v3261 = vld [vmem:[#allocation12 + $0x1e98] sm:$0xff]
    %v3262 = vld [vmem:[#allocation12 + $0x1ea0] sm:$0xff]
    %v3263 = vld [vmem:[#allocation12 + $0x1ea8] sm:$0xff]
    %v3264 = vld [vmem:[#allocation12 + $0x1eb0] sm:$0xff]
    %v3265 = vld [vmem:[#allocation12 + $0x1eb8] sm:$0xff]
    %v3266 = vld [vmem:[#allocation12 + $0x1ec0] sm:$0xff]
    %v3267 = vld [vmem:[#allocation12 + $0x1ec8] sm:$0xff]
    %v3268 = vld [vmem:[#allocation12 + $0x1ed0] sm:$0xff]
    %v3269 = vld [vmem:[#allocation12 + $0x1ed8] sm:$0xff]
    %v3270 = vld [vmem:[#allocation12 + $0x1ee0] sm:$0xff]
    %v3271 = vld [vmem:[#allocation12 + $0x1ee8] sm:$0xff]
    %v3272 = vld [vmem:[#allocation12 + $0x1ef0] sm:$0xff]
    %v3273 = vld [vmem:[#allocation12 + $0x1ef8] sm:$0xff]
    %v3274 = vld [vmem:[#allocation12 + $0x1f00] sm:$0xff]
    %v3275 = vld [vmem:[#allocation12 + $0x1f08] sm:$0xff]
    %v3276 = vld [vmem:[#allocation12 + $0x1f10] sm:$0xff]
    %v3277 = vld [vmem:[#allocation12 + $0x1f18] sm:$0xff]
    %v3278 = vld [vmem:[#allocation12 + $0x1f20] sm:$0xff]
    %v3279 = vld [vmem:[#allocation12 + $0x1f28] sm:$0xff]
    %v3280 = vld [vmem:[#allocation12 + $0x1f30] sm:$0xff]
    %v3281 = vld [vmem:[#allocation12 + $0x1f38] sm:$0xff]
    %v3282 = vld [vmem:[#allocation12 + $0x1f40] sm:$0xff]
    %v3283 = vld [vmem:[#allocation12 + $0x1f48] sm:$0xff]
    %v3284 = vld [vmem:[#allocation12 + $0x1f50] sm:$0xff]
    %v3285 = vld [vmem:[#allocation12 + $0x1f58] sm:$0xff]
    %v3286 = vld [vmem:[#allocation12 + $0x1f60] sm:$0xff]
    %v3287 = vld [vmem:[#allocation12 + $0x1f68] sm:$0xff]
    %v3288 = vld [vmem:[#allocation12 + $0x1f70] sm:$0xff]
    %v3289 = vld [vmem:[#allocation12 + $0x1f78] sm:$0xff]
    %v3290 = vld [vmem:[#allocation12 + $0x1f80] sm:$0xff]
    %v3291 = vld [vmem:[#allocation12 + $0x1f88] sm:$0xff]
    %v3292 = vld [vmem:[#allocation12 + $0x1f90] sm:$0xff]
    %v3293 = vld [vmem:[#allocation12 + $0x1f98] sm:$0xff]
    %v3294 = vld [vmem:[#allocation12 + $0x1fa0] sm:$0xff]
    %v3295 = vld [vmem:[#allocation12 + $0x1fa8] sm:$0xff]
    %v3296 = vld [vmem:[#allocation12 + $0x1fb0] sm:$0xff]
    %v3297 = vld [vmem:[#allocation12 + $0x1fb8] sm:$0xff]
    %v3298 = vld [vmem:[#allocation12 + $0x1fc0] sm:$0xff]
    %v3299 = vld [vmem:[#allocation12 + $0x1fc8] sm:$0xff]
    %v3300 = vld [vmem:[#allocation12 + $0x1fd0] sm:$0xff]
    %v3301 = vld [vmem:[#allocation12 + $0x1fd8] sm:$0xff]
    %v3302 = vld [vmem:[#allocation12 + $0x1fe0] sm:$0xff]
    %v3303 = vld [vmem:[#allocation12 + $0x1fe8] sm:$0xff]
    %v3304 = vld [vmem:[#allocation12 + $0x1ff0] sm:$0xff]
    %v3305 = vld [vmem:[#allocation12 + $0x1ff8] sm:$0xff]
    %3306 = vmatprep.subr.mxu0 %v2283
    %3307 = vmatpush1.msra.mxu0 %v2282
    %3308 = vmatprep.subr.mxu0 %v2287
    %3309 = vmatpush1.msra.mxu0 %v2286
    %3310 = vmatprep.subr.mxu0 %v2291
    %3311 = vmatpush1.msra.mxu0 %v2290
    %3312 = vmatprep.subr.mxu0 %v2295
    %3313 = vmatpush1.msra.mxu0 %v2294
    %3314 = vmatprep.subr.mxu0 %v2299
    %3315 = vmatpush1.msra.mxu0 %v2298
    %3316 = vmatprep.subr.mxu0 %v2303
    %3317 = vmatpush1.msra.mxu0 %v2302
    %3318 = vmatprep.subr.mxu0 %v2307
    %3319 = vmatpush1.msra.mxu0 %v2306
    %3320 = vmatprep.subr.mxu0 %v2311
    %3321 = vmatpush1.msra.mxu0 %v2310
    %3322 = vmatprep.subr.mxu0 %v2315
    %3323 = vmatpush1.msra.mxu0 %v2314
    %3324 = vmatprep.subr.mxu0 %v2319
    %3325 = vmatpush1.msra.mxu0 %v2318
    %3326 = vmatprep.subr.mxu0 %v2323
    %3327 = vmatpush1.msra.mxu0 %v2322
    %3328 = vmatprep.subr.mxu0 %v2327
    %3329 = vmatpush1.msra.mxu0 %v2326
    %3330 = vmatprep.subr.mxu0 %v2331
    %3331 = vmatpush1.msra.mxu0 %v2330
    %3332 = vmatprep.subr.mxu0 %v2335
    %3333 = vmatpush1.msra.mxu0 %v2334
    %3334 = vmatprep.subr.mxu0 %v2339
    %3335 = vmatpush1.msra.mxu0 %v2338
    %3336 = vmatprep.subr.mxu0 %v2343
    %3337 = vmatpush1.msra.mxu0 %v2342
    %3338 = vmatprep.subr.mxu0 %v2347
    %3339 = vmatpush1.msra.mxu0 %v2346
    %3340 = vmatprep.subr.mxu0 %v2351
    %3341 = vmatpush1.msra.mxu0 %v2350
    %3342 = vmatprep.subr.mxu0 %v2355
    %3343 = vmatpush1.msra.mxu0 %v2354
    %3344 = vmatprep.subr.mxu0 %v2359
    %3345 = vmatpush1.msra.mxu0 %v2358
    %3346 = vmatprep.subr.mxu0 %v2363
    %3347 = vmatpush1.msra.mxu0 %v2362
    %3348 = vmatprep.subr.mxu0 %v2367
    %3349 = vmatpush1.msra.mxu0 %v2366
    %3350 = vmatprep.subr.mxu0 %v2371
    %3351 = vmatpush1.msra.mxu0 %v2370
    %3352 = vmatprep.subr.mxu0 %v2375
    %3353 = vmatpush1.msra.mxu0 %v2374
    %3354 = vmatprep.subr.mxu0 %v2379
    %3355 = vmatpush1.msra.mxu0 %v2378
    %3356 = vmatprep.subr.mxu0 %v2383
    %3357 = vmatpush1.msra.mxu0 %v2382
    %3358 = vmatprep.subr.mxu0 %v2387
    %3359 = vmatpush1.msra.mxu0 %v2386
    %3360 = vmatprep.subr.mxu0 %v2391
    %3361 = vmatpush1.msra.mxu0 %v2390
    %3362 = vmatprep.subr.mxu0 %v2395
    %3363 = vmatpush1.msra.mxu0 %v2394
    %3364 = vmatprep.subr.mxu0 %v2399
    %3365 = vmatpush1.msra.mxu0 %v2398
    %3366 = vmatprep.subr.mxu0 %v2403
    %3367 = vmatpush1.msra.mxu0 %v2402
    %3368 = vmatprep.subr.mxu0 %v2407
    %3369 = vmatpush1.msra.mxu0 %v2406
    %3370 = vmatprep.mubr.f32.mxu0 %v2267
    %3371 = vmatmul.mubr.f32.gmra.mrb[0].mxu0 %v2266
    %v3372 = vpop.f32.mrb[0].mxu0
    %v3373 = vadd.f32 0.0, %v3372
    %v3374 = vpop.f32.mrb[0].mxu0
    %v3375 = vadd.f32 0.0, %v3374
    %3376 = vdwg.mxu0
    %3377 = vmatprep.subr.mxu0 %v2411
    %3378 = vmatpush1.msra.mxu0 %v2410
    %3379 = vmatprep.subr.mxu0 %v2415
    %3380 = vmatpush1.msra.mxu0 %v2414
    %3381 = vmatprep.subr.mxu0 %v2419
    %3382 = vmatpush1.msra.mxu0 %v2418
    %3383 = vmatprep.subr.mxu0 %v2423
    %3384 = vmatpush1.msra.mxu0 %v2422
    %3385 = vmatprep.subr.mxu0 %v2427
    %3386 = vmatpush1.msra.mxu0 %v2426
    %3387 = vmatprep.subr.mxu0 %v2431
    %3388 = vmatpush1.msra.mxu0 %v2430
    %3389 = vmatprep.subr.mxu0 %v2435
    %3390 = vmatpush1.msra.mxu0 %v2434
    %3391 = vmatprep.subr.mxu0 %v2439
    %3392 = vmatpush1.msra.mxu0 %v2438
    %3393 = vmatprep.subr.mxu0 %v2443
    %3394 = vmatpush1.msra.mxu0 %v2442
    %3395 = vmatprep.subr.mxu0 %v2447
    %3396 = vmatpush1.msra.mxu0 %v2446
    %3397 = vmatprep.subr.mxu0 %v2451
    %3398 = vmatpush1.msra.mxu0 %v2450
    %3399 = vmatprep.subr.mxu0 %v2455
    %3400 = vmatpush1.msra.mxu0 %v2454
    %3401 = vmatprep.subr.mxu0 %v2459
    %3402 = vmatpush1.msra.mxu0 %v2458
    %3403 = vmatprep.subr.mxu0 %v2463
    %3404 = vmatpush1.msra.mxu0 %v2462
    %3405 = vmatprep.subr.mxu0 %v2467
    %3406 = vmatpush1.msra.mxu0 %v2466
    %3407 = vmatprep.subr.mxu0 %v2471
    %3408 = vmatpush1.msra.mxu0 %v2470
    %3409 = vmatprep.subr.mxu0 %v2475
    %3410 = vmatpush1.msra.mxu0 %v2474
    %3411 = vmatprep.subr.mxu0 %v2479
    %3412 = vmatpush1.msra.mxu0 %v2478
    %3413 = vmatprep.subr.mxu0 %v2483
    %3414 = vmatpush1.msra.mxu0 %v2482
    %3415 = vmatprep.subr.mxu0 %v2487
    %3416 = vmatpush1.msra.mxu0 %v2486
    %3417 = vmatprep.subr.mxu0 %v2491
    %3418 = vmatpush1.msra.mxu0 %v2490
    %3419 = vmatprep.subr.mxu0 %v2495
    %3420 = vmatpush1.msra.mxu0 %v2494
    %3421 = vmatprep.subr.mxu0 %v2499
    %3422 = vmatpush1.msra.mxu0 %v2498
    %3423 = vmatprep.subr.mxu0 %v2503
    %3424 = vmatpush1.msra.mxu0 %v2502
    %3425 = vmatprep.subr.mxu0 %v2507
    %3426 = vmatpush1.msra.mxu0 %v2506
    %3427 = vmatprep.subr.mxu0 %v2511
    %3428 = vmatpush1.msra.mxu0 %v2510
    %3429 = vmatprep.subr.mxu0 %v2515
    %3430 = vmatpush1.msra.mxu0 %v2514
    %3431 = vmatprep.subr.mxu0 %v2519
    %3432 = vmatpush1.msra.mxu0 %v2518
    %3433 = vmatprep.subr.mxu0 %v2523
    %3434 = vmatpush1.msra.mxu0 %v2522
    %3435 = vmatprep.subr.mxu0 %v2527
    %3436 = vmatpush1.msra.mxu0 %v2526
    %3437 = vmatprep.subr.mxu0 %v2531
    %3438 = vmatpush1.msra.mxu0 %v2530
    %3439 = vmatprep.subr.mxu0 %v2535
    %3440 = vmatpush1.msra.mxu0 %v2534
    %3441 = vmatprep.mubr.f32.mxu0 %v2269
    %3442 = vmatmul.mubr.f32.gmra.mrb[0].mxu0 %v2268
    %v3443 = vpop.f32.mrb[0].mxu0
    %v3444 = vadd.f32 %v3373, %v3443
    %v3445 = vpop.f32.mrb[0].mxu0
    %v3446 = vadd.f32 %v3375, %v3445
    %3447 = vdwg.mxu0
    %3448 = vmatprep.subr.mxu0 %v2539
    %3449 = vmatpush1.msra.mxu0 %v2538
    %3450 = vmatprep.subr.mxu0 %v2543
    %3451 = vmatpush1.msra.mxu0 %v2542
    %3452 = vmatprep.subr.mxu0 %v2547
    %3453 = vmatpush1.msra.mxu0 %v2546
    %3454 = vmatprep.subr.mxu0 %v2551
    %3455 = vmatpush1.msra.mxu0 %v2550
    %3456 = vmatprep.subr.mxu0 %v2555
    %3457 = vmatpush1.msra.mxu0 %v2554
    %3458 = vmatprep.subr.mxu0 %v2559
    %3459 = vmatpush1.msra.mxu0 %v2558
    %3460 = vmatprep.subr.mxu0 %v2563
    %3461 = vmatpush1.msra.mxu0 %v2562
    %3462 = vmatprep.subr.mxu0 %v2567
    %3463 = vmatpush1.msra.mxu0 %v2566
    %3464 = vmatprep.subr.mxu0 %v2571
    %3465 = vmatpush1.msra.mxu0 %v2570
    %3466 = vmatprep.subr.mxu0 %v2575
    %3467 = vmatpush1.msra.mxu0 %v2574
    %3468 = vmatprep.subr.mxu0 %v2579
    %3469 = vmatpush1.msra.mxu0 %v2578
    %3470 = vmatprep.subr.mxu0 %v2583
    %3471 = vmatpush1.msra.mxu0 %v2582
    %3472 = vmatprep.subr.mxu0 %v2587
    %3473 = vmatpush1.msra.mxu0 %v2586
    %3474 = vmatprep.subr.mxu0 %v2591
    %3475 = vmatpush1.msra.mxu0 %v2590
    %3476 = vmatprep.subr.mxu0 %v2595
    %3477 = vmatpush1.msra.mxu0 %v2594
    %3478 = vmatprep.subr.mxu0 %v2599
    %3479 = vmatpush1.msra.mxu0 %v2598
    %3480 = vmatprep.subr.mxu0 %v2603
    %3481 = vmatpush1.msra.mxu0 %v2602
    %3482 = vmatprep.subr.mxu0 %v2607
    %3483 = vmatpush1.msra.mxu0 %v2606
    %3484 = vmatprep.subr.mxu0 %v2611
    %3485 = vmatpush1.msra.mxu0 %v2610
    %3486 = vmatprep.subr.mxu0 %v2615
    %3487 = vmatpush1.msra.mxu0 %v2614
    %3488 = vmatprep.subr.mxu0 %v2619
    %3489 = vmatpush1.msra.mxu0 %v2618
    %3490 = vmatprep.subr.mxu0 %v2623
    %3491 = vmatpush1.msra.mxu0 %v2622
    %3492 = vmatprep.subr.mxu0 %v2627
    %3493 = vmatpush1.msra.mxu0 %v2626
    %3494 = vmatprep.subr.mxu0 %v2631
    %3495 = vmatpush1.msra.mxu0 %v2630
    %3496 = vmatprep.subr.mxu0 %v2635
    %3497 = vmatpush1.msra.mxu0 %v2634
    %3498 = vmatprep.subr.mxu0 %v2639
    %3499 = vmatpush1.msra.mxu0 %v2638
    %3500 = vmatprep.subr.mxu0 %v2643
    %3501 = vmatpush1.msra.mxu0 %v2642
    %3502 = vmatprep.subr.mxu0 %v2647
    %3503 = vmatpush1.msra.mxu0 %v2646
    %3504 = vmatprep.subr.mxu0 %v2651
    %3505 = vmatpush1.msra.mxu0 %v2650
    %3506 = vmatprep.subr.mxu0 %v2655
    %3507 = vmatpush1.msra.mxu0 %v2654
    %3508 = vmatprep.subr.mxu0 %v2659
    %3509 = vmatpush1.msra.mxu0 %v2658
    %3510 = vmatprep.subr.mxu0 %v2663
    %3511 = vmatpush1.msra.mxu0 %v2662
    %3512 = vmatprep.mubr.f32.mxu0 %v2271
    %3513 = vmatmul.mubr.f32.gmra.mrb[0].mxu0 %v2270
    %v3514 = vpop.f32.mrb[0].mxu0
    %v3515 = vadd.f32 %v3444, %v3514
    %v3516 = vpop.f32.mrb[0].mxu0
    %v3517 = vadd.f32 %v3446, %v3516
    %3518 = vdwg.mxu0
    %3519 = vmatprep.subr.mxu0 %v2667
    %3520 = vmatpush1.msra.mxu0 %v2666
    %3521 = vmatprep.subr.mxu0 %v2671
    %3522 = vmatpush1.msra.mxu0 %v2670
    %3523 = vmatprep.subr.mxu0 %v2675
    %3524 = vmatpush1.msra.mxu0 %v2674
    %3525 = vmatprep.subr.mxu0 %v2679
    %3526 = vmatpush1.msra.mxu0 %v2678
    %3527 = vmatprep.subr.mxu0 %v2683
    %3528 = vmatpush1.msra.mxu0 %v2682
    %3529 = vmatprep.subr.mxu0 %v2687
    %3530 = vmatpush1.msra.mxu0 %v2686
    %3531 = vmatprep.subr.mxu0 %v2691
    %3532 = vmatpush1.msra.mxu0 %v2690
    %3533 = vmatprep.subr.mxu0 %v2695
    %3534 = vmatpush1.msra.mxu0 %v2694
    %3535 = vmatprep.subr.mxu0 %v2699
    %3536 = vmatpush1.msra.mxu0 %v2698
    %3537 = vmatprep.subr.mxu0 %v2703
    %3538 = vmatpush1.msra.mxu0 %v2702
    %3539 = vmatprep.subr.mxu0 %v2707
    %3540 = vmatpush1.msra.mxu0 %v2706
    %3541 = vmatprep.subr.mxu0 %v2711
    %3542 = vmatpush1.msra.mxu0 %v2710
    %3543 = vmatprep.subr.mxu0 %v2715
    %3544 = vmatpush1.msra.mxu0 %v2714
    %3545 = vmatprep.subr.mxu0 %v2719
    %3546 = vmatpush1.msra.mxu0 %v2718
    %3547 = vmatprep.subr.mxu0 %v2723
    %3548 = vmatpush1.msra.mxu0 %v2722
    %3549 = vmatprep.subr.mxu0 %v2727
    %3550 = vmatpush1.msra.mxu0 %v2726
    %3551 = vmatprep.subr.mxu0 %v2731
    %3552 = vmatpush1.msra.mxu0 %v2730
    %3553 = vmatprep.subr.mxu0 %v2735
    %3554 = vmatpush1.msra.mxu0 %v2734
    %3555 = vmatprep.subr.mxu0 %v2739
    %3556 = vmatpush1.msra.mxu0 %v2738
    %3557 = vmatprep.subr.mxu0 %v2743
    %3558 = vmatpush1.msra.mxu0 %v2742
    %3559 = vmatprep.subr.mxu0 %v2747
    %3560 = vmatpush1.msra.mxu0 %v2746
    %3561 = vmatprep.subr.mxu0 %v2751
    %3562 = vmatpush1.msra.mxu0 %v2750
    %3563 = vmatprep.subr.mxu0 %v2755
    %3564 = vmatpush1.msra.mxu0 %v2754
    %3565 = vmatprep.subr.mxu0 %v2759
    %3566 = vmatpush1.msra.mxu0 %v2758
    %3567 = vmatprep.subr.mxu0 %v2763
    %3568 = vmatpush1.msra.mxu0 %v2762
    %3569 = vmatprep.subr.mxu0 %v2767
    %3570 = vmatpush1.msra.mxu0 %v2766
    %3571 = vmatprep.subr.mxu0 %v2771
    %3572 = vmatpush1.msra.mxu0 %v2770
    %3573 = vmatprep.subr.mxu0 %v2775
    %3574 = vmatpush1.msra.mxu0 %v2774
    %3575 = vmatprep.subr.mxu0 %v2779
    %3576 = vmatpush1.msra.mxu0 %v2778
    %3577 = vmatprep.subr.mxu0 %v2783
    %3578 = vmatpush1.msra.mxu0 %v2782
    %3579 = vmatprep.subr.mxu0 %v2787
    %3580 = vmatpush1.msra.mxu0 %v2786
    %3581 = vmatprep.subr.mxu0 %v2791
    %3582 = vmatpush1.msra.mxu0 %v2790
    %3583 = vmatprep.mubr.f32.mxu0 %v2273
    %3584 = vmatmul.mubr.f32.gmra.mrb[0].mxu0 %v2272
    %v3585 = vpop.f32.mrb[0].mxu0
    %v3586 = vadd.f32 %v3515, %v3585
    %v3587 = vpop.f32.mrb[0].mxu0
    %v3588 = vadd.f32 %v3517, %v3587
    %3589 = vdwg.mxu0
    %3590 = vmatprep.subr.mxu0 %v2795
    %3591 = vmatpush1.msra.mxu0 %v2794
    %3592 = vmatprep.subr.mxu0 %v2799
    %3593 = vmatpush1.msra.mxu0 %v2798
    %3594 = vmatprep.subr.mxu0 %v2803
    %3595 = vmatpush1.msra.mxu0 %v2802
    %3596 = vmatprep.subr.mxu0 %v2807
    %3597 = vmatpush1.msra.mxu0 %v2806
    %3598 = vmatprep.subr.mxu0 %v2811
    %3599 = vmatpush1.msra.mxu0 %v2810
    %3600 = vmatprep.subr.mxu0 %v2815
    %3601 = vmatpush1.msra.mxu0 %v2814
    %3602 = vmatprep.subr.mxu0 %v2819
    %3603 = vmatpush1.msra.mxu0 %v2818
    %3604 = vmatprep.subr.mxu0 %v2823
    %3605 = vmatpush1.msra.mxu0 %v2822
    %3606 = vmatprep.subr.mxu0 %v2827
    %3607 = vmatpush1.msra.mxu0 %v2826
    %3608 = vmatprep.subr.mxu0 %v2831
    %3609 = vmatpush1.msra.mxu0 %v2830
    %3610 = vmatprep.subr.mxu0 %v2835
    %3611 = vmatpush1.msra.mxu0 %v2834
    %3612 = vmatprep.subr.mxu0 %v2839
    %3613 = vmatpush1.msra.mxu0 %v2838
    %3614 = vmatprep.subr.mxu0 %v2843
    %3615 = vmatpush1.msra.mxu0 %v2842
    %3616 = vmatprep.subr.mxu0 %v2847
    %3617 = vmatpush1.msra.mxu0 %v2846
    %3618 = vmatprep.subr.mxu0 %v2851
    %3619 = vmatpush1.msra.mxu0 %v2850
    %3620 = vmatprep.subr.mxu0 %v2855
    %3621 = vmatpush1.msra.mxu0 %v2854
    %3622 = vmatprep.subr.mxu0 %v2859
    %3623 = vmatpush1.msra.mxu0 %v2858
    %3624 = vmatprep.subr.mxu0 %v2863
    %3625 = vmatpush1.msra.mxu0 %v2862
    %3626 = vmatprep.subr.mxu0 %v2867
    %3627 = vmatpush1.msra.mxu0 %v2866
    %3628 = vmatprep.subr.mxu0 %v2871
    %3629 = vmatpush1.msra.mxu0 %v2870
    %3630 = vmatprep.subr.mxu0 %v2875
    %3631 = vmatpush1.msra.mxu0 %v2874
    %3632 = vmatprep.subr.mxu0 %v2879
    %3633 = vmatpush1.msra.mxu0 %v2878
    %3634 = vmatprep.subr.mxu0 %v2883
    %3635 = vmatpush1.msra.mxu0 %v2882
    %3636 = vmatprep.subr.mxu0 %v2887
    %3637 = vmatpush1.msra.mxu0 %v2886
    %3638 = vmatprep.subr.mxu0 %v2891
    %3639 = vmatpush1.msra.mxu0 %v2890
    %3640 = vmatprep.subr.mxu0 %v2895
    %3641 = vmatpush1.msra.mxu0 %v2894
    %3642 = vmatprep.subr.mxu0 %v2899
    %3643 = vmatpush1.msra.mxu0 %v2898
    %3644 = vmatprep.subr.mxu0 %v2903
    %3645 = vmatpush1.msra.mxu0 %v2902
    %3646 = vmatprep.subr.mxu0 %v2907
    %3647 = vmatpush1.msra.mxu0 %v2906
    %3648 = vmatprep.subr.mxu0 %v2911
    %3649 = vmatpush1.msra.mxu0 %v2910
    %3650 = vmatprep.subr.mxu0 %v2915
    %3651 = vmatpush1.msra.mxu0 %v2914
    %3652 = vmatprep.subr.mxu0 %v2919
    %3653 = vmatpush1.msra.mxu0 %v2918
    %3654 = vmatprep.mubr.f32.mxu0 %v2275
    %3655 = vmatmul.mubr.f32.gmra.mrb[0].mxu0 %v2274
    %v3656 = vpop.f32.mrb[0].mxu0
    %v3657 = vadd.f32 %v3586, %v3656
    %v3658 = vpop.f32.mrb[0].mxu0
    %v3659 = vadd.f32 %v3588, %v3658
    %3660 = vdwg.mxu0
    %3661 = vmatprep.subr.mxu0 %v2923
    %3662 = vmatpush1.msra.mxu0 %v2922
    %3663 = vmatprep.subr.mxu0 %v2927
    %3664 = vmatpush1.msra.mxu0 %v2926
    %3665 = vmatprep.subr.mxu0 %v2931
    %3666 = vmatpush1.msra.mxu0 %v2930
    %3667 = vmatprep.subr.mxu0 %v2935
    %3668 = vmatpush1.msra.mxu0 %v2934
    %3669 = vmatprep.subr.mxu0 %v2939
    %3670 = vmatpush1.msra.mxu0 %v2938
    %3671 = vmatprep.subr.mxu0 %v2943
    %3672 = vmatpush1.msra.mxu0 %v2942
    %3673 = vmatprep.subr.mxu0 %v2947
    %3674 = vmatpush1.msra.mxu0 %v2946
    %3675 = vmatprep.subr.mxu0 %v2951
    %3676 = vmatpush1.msra.mxu0 %v2950
    %3677 = vmatprep.subr.mxu0 %v2955
    %3678 = vmatpush1.msra.mxu0 %v2954
    %3679 = vmatprep.subr.mxu0 %v2959
    %3680 = vmatpush1.msra.mxu0 %v2958
    %3681 = vmatprep.subr.mxu0 %v2963
    %3682 = vmatpush1.msra.mxu0 %v2962
    %3683 = vmatprep.subr.mxu0 %v2967
    %3684 = vmatpush1.msra.mxu0 %v2966
    %3685 = vmatprep.subr.mxu0 %v2971
    %3686 = vmatpush1.msra.mxu0 %v2970
    %3687 = vmatprep.subr.mxu0 %v2975
    %3688 = vmatpush1.msra.mxu0 %v2974
    %3689 = vmatprep.subr.mxu0 %v2979
    %3690 = vmatpush1.msra.mxu0 %v2978
    %3691 = vmatprep.subr.mxu0 %v2983
    %3692 = vmatpush1.msra.mxu0 %v2982
    %3693 = vmatprep.subr.mxu0 %v2987
    %3694 = vmatpush1.msra.mxu0 %v2986
    %3695 = vmatprep.subr.mxu0 %v2991
    %3696 = vmatpush1.msra.mxu0 %v2990
    %3697 = vmatprep.subr.mxu0 %v2995
    %3698 = vmatpush1.msra.mxu0 %v2994
    %3699 = vmatprep.subr.mxu0 %v2999
    %3700 = vmatpush1.msra.mxu0 %v2998
    %3701 = vmatprep.subr.mxu0 %v3003
    %3702 = vmatpush1.msra.mxu0 %v3002
    %3703 = vmatprep.subr.mxu0 %v3007
    %3704 = vmatpush1.msra.mxu0 %v3006
    %3705 = vmatprep.subr.mxu0 %v3011
    %3706 = vmatpush1.msra.mxu0 %v3010
    %3707 = vmatprep.subr.mxu0 %v3015
    %3708 = vmatpush1.msra.mxu0 %v3014
    %3709 = vmatprep.subr.mxu0 %v3019
    %3710 = vmatpush1.msra.mxu0 %v3018
    %3711 = vmatprep.subr.mxu0 %v3023
    %3712 = vmatpush1.msra.mxu0 %v3022
    %3713 = vmatprep.subr.mxu0 %v3027
    %3714 = vmatpush1.msra.mxu0 %v3026
    %3715 = vmatprep.subr.mxu0 %v3031
    %3716 = vmatpush1.msra.mxu0 %v3030
    %3717 = vmatprep.subr.mxu0 %v3035
    %3718 = vmatpush1.msra.mxu0 %v3034
    %3719 = vmatprep.subr.mxu0 %v3039
    %3720 = vmatpush1.msra.mxu0 %v3038
    %3721 = vmatprep.subr.mxu0 %v3043
    %3722 = vmatpush1.msra.mxu0 %v3042
    %3723 = vmatprep.subr.mxu0 %v3047
    %3724 = vmatpush1.msra.mxu0 %v3046
    %3725 = vmatprep.mubr.f32.mxu0 %v2277
    %3726 = vmatmul.mubr.f32.gmra.mrb[0].mxu0 %v2276
    %v3727 = vpop.f32.mrb[0].mxu0
    %v3728 = vadd.f32 %v3657, %v3727
    %v3729 = vpop.f32.mrb[0].mxu0
    %v3730 = vadd.f32 %v3659, %v3729
    %3731 = vdwg.mxu0
    %3732 = vmatprep.subr.mxu0 %v3051
    %3733 = vmatpush1.msra.mxu0 %v3050
    %3734 = vmatprep.subr.mxu0 %v3055
    %3735 = vmatpush1.msra.mxu0 %v3054
    %3736 = vmatprep.subr.mxu0 %v3059
    %3737 = vmatpush1.msra.mxu0 %v3058
    %3738 = vmatprep.subr.mxu0 %v3063
    %3739 = vmatpush1.msra.mxu0 %v3062
    %3740 = vmatprep.subr.mxu0 %v3067
    %3741 = vmatpush1.msra.mxu0 %v3066
    %3742 = vmatprep.subr.mxu0 %v3071
    %3743 = vmatpush1.msra.mxu0 %v3070
    %3744 = vmatprep.subr.mxu0 %v3075
    %3745 = vmatpush1.msra.mxu0 %v3074
    %3746 = vmatprep.subr.mxu0 %v3079
    %3747 = vmatpush1.msra.mxu0 %v3078
    %3748 = vmatprep.subr.mxu0 %v3083
    %3749 = vmatpush1.msra.mxu0 %v3082
    %3750 = vmatprep.subr.mxu0 %v3087
    %3751 = vmatpush1.msra.mxu0 %v3086
    %3752 = vmatprep.subr.mxu0 %v3091
    %3753 = vmatpush1.msra.mxu0 %v3090
    %3754 = vmatprep.subr.mxu0 %v3095
    %3755 = vmatpush1.msra.mxu0 %v3094
    %3756 = vmatprep.subr.mxu0 %v3099
    %3757 = vmatpush1.msra.mxu0 %v3098
    %3758 = vmatprep.subr.mxu0 %v3103
    %3759 = vmatpush1.msra.mxu0 %v3102
    %3760 = vmatprep.subr.mxu0 %v3107
    %3761 = vmatpush1.msra.mxu0 %v3106
    %3762 = vmatprep.subr.mxu0 %v3111
    %3763 = vmatpush1.msra.mxu0 %v3110
    %3764 = vmatprep.subr.mxu0 %v3115
    %3765 = vmatpush1.msra.mxu0 %v3114
    %3766 = vmatprep.subr.mxu0 %v3119
    %3767 = vmatpush1.msra.mxu0 %v3118
    %3768 = vmatprep.subr.mxu0 %v3123
    %3769 = vmatpush1.msra.mxu0 %v3122
    %3770 = vmatprep.subr.mxu0 %v3127
    %3771 = vmatpush1.msra.mxu0 %v3126
    %3772 = vmatprep.subr.mxu0 %v3131
    %3773 = vmatpush1.msra.mxu0 %v3130
    %3774 = vmatprep.subr.mxu0 %v3135
    %3775 = vmatpush1.msra.mxu0 %v3134
    %3776 = vmatprep.subr.mxu0 %v3139
    %3777 = vmatpush1.msra.mxu0 %v3138
    %3778 = vmatprep.subr.mxu0 %v3143
    %3779 = vmatpush1.msra.mxu0 %v3142
    %3780 = vmatprep.subr.mxu0 %v3147
    %3781 = vmatpush1.msra.mxu0 %v3146
    %3782 = vmatprep.subr.mxu0 %v3151
    %3783 = vmatpush1.msra.mxu0 %v3150
    %3784 = vmatprep.subr.mxu0 %v3155
    %3785 = vmatpush1.msra.mxu0 %v3154
    %3786 = vmatprep.subr.mxu0 %v3159
    %3787 = vmatpush1.msra.mxu0 %v3158
    %3788 = vmatprep.subr.mxu0 %v3163
    %3789 = vmatpush1.msra.mxu0 %v3162
    %3790 = vmatprep.subr.mxu0 %v3167
    %3791 = vmatpush1.msra.mxu0 %v3166
    %3792 = vmatprep.subr.mxu0 %v3171
    %3793 = vmatpush1.msra.mxu0 %v3170
    %3794 = vmatprep.subr.mxu0 %v3175
    %3795 = vmatpush1.msra.mxu0 %v3174
    %3796 = vmatprep.mubr.f32.mxu0 %v2279
    %3797 = vmatmul.mubr.f32.gmra.mrb[0].mxu0 %v2278
    %v3798 = vpop.f32.mrb[0].mxu0
    %v3799 = vadd.f32 %v3728, %v3798
    %v3800 = vpop.f32.mrb[0].mxu0
    %v3801 = vadd.f32 %v3730, %v3800
    %3802 = vdwg.mxu0
    %3803 = vmatprep.subr.mxu0 %v3179
    %3804 = vmatpush1.msra.mxu0 %v3178
    %3805 = vmatprep.subr.mxu0 %v3183
    %3806 = vmatpush1.msra.mxu0 %v3182
    %3807 = vmatprep.subr.mxu0 %v3187
    %3808 = vmatpush1.msra.mxu0 %v3186
    %3809 = vmatprep.subr.mxu0 %v3191
    %3810 = vmatpush1.msra.mxu0 %v3190
    %3811 = vmatprep.subr.mxu0 %v3195
    %3812 = vmatpush1.msra.mxu0 %v3194
    %3813 = vmatprep.subr.mxu0 %v3199
    %3814 = vmatpush1.msra.mxu0 %v3198
    %3815 = vmatprep.subr.mxu0 %v3203
    %3816 = vmatpush1.msra.mxu0 %v3202
    %3817 = vmatprep.subr.mxu0 %v3207
    %3818 = vmatpush1.msra.mxu0 %v3206
    %3819 = vmatprep.subr.mxu0 %v3211
    %3820 = vmatpush1.msra.mxu0 %v3210
    %3821 = vmatprep.subr.mxu0 %v3215
    %3822 = vmatpush1.msra.mxu0 %v3214
    %3823 = vmatprep.subr.mxu0 %v3219
    %3824 = vmatpush1.msra.mxu0 %v3218
    %3825 = vmatprep.subr.mxu0 %v3223
    %3826 = vmatpush1.msra.mxu0 %v3222
    %3827 = vmatprep.subr.mxu0 %v3227
    %3828 = vmatpush1.msra.mxu0 %v3226
    %3829 = vmatprep.subr.mxu0 %v3231
    %3830 = vmatpush1.msra.mxu0 %v3230
    %3831 = vmatprep.subr.mxu0 %v3235
    %3832 = vmatpush1.msra.mxu0 %v3234
    %3833 = vmatprep.subr.mxu0 %v3239
    %3834 = vmatpush1.msra.mxu0 %v3238
    %3835 = vmatprep.subr.mxu0 %v3243
    %3836 = vmatpush1.msra.mxu0 %v3242
    %3837 = vmatprep.subr.mxu0 %v3247
    %3838 = vmatpush1.msra.mxu0 %v3246
    %3839 = vmatprep.subr.mxu0 %v3251
    %3840 = vmatpush1.msra.mxu0 %v3250
    %3841 = vmatprep.subr.mxu0 %v3255
    %3842 = vmatpush1.msra.mxu0 %v3254
    %3843 = vmatprep.subr.mxu0 %v3259
    %3844 = vmatpush1.msra.mxu0 %v3258
    %3845 = vmatprep.subr.mxu0 %v3263
    %3846 = vmatpush1.msra.mxu0 %v3262
    %3847 = vmatprep.subr.mxu0 %v3267
    %3848 = vmatpush1.msra.mxu0 %v3266
    %3849 = vmatprep.subr.mxu0 %v3271
    %3850 = vmatpush1.msra.mxu0 %v3270
    %3851 = vmatprep.subr.mxu0 %v3275
    %3852 = vmatpush1.msra.mxu0 %v3274
    %3853 = vmatprep.subr.mxu0 %v3279
    %3854 = vmatpush1.msra.mxu0 %v3278
    %3855 = vmatprep.subr.mxu0 %v3283
    %3856 = vmatpush1.msra.mxu0 %v3282
    %3857 = vmatprep.subr.mxu0 %v3287
    %3858 = vmatpush1.msra.mxu0 %v3286
    %3859 = vmatprep.subr.mxu0 %v3291
    %3860 = vmatpush1.msra.mxu0 %v3290
    %3861 = vmatprep.subr.mxu0 %v3295
    %3862 = vmatpush1.msra.mxu0 %v3294
    %3863 = vmatprep.subr.mxu0 %v3299
    %3864 = vmatpush1.msra.mxu0 %v3298
    %3865 = vmatprep.subr.mxu0 %v3303
    %3866 = vmatpush1.msra.mxu0 %v3302
    %3867 = vmatprep.mubr.f32.mxu0 %v2281
    %3868 = vmatmul.mubr.f32.gmra.mrb[0].mxu0 %v2280
    %v3869 = vpop.f32.mrb[0].mxu0
    %v3870 = vadd.f32 %v3799, %v3869
    %v3871 = vpop.f32.mrb[0].mxu0
    %v3872 = vadd.f32 %v3801, %v3871
    %3873 = vdwg.mxu0
    %3874 = vmatprep.subr.mxu0 %v2285
    %3875 = vmatpush1.msra.mxu0 %v2284
    %3876 = vmatprep.subr.mxu0 %v2289
    %3877 = vmatpush1.msra.mxu0 %v2288
    %3878 = vmatprep.subr.mxu0 %v2293
    %3879 = vmatpush1.msra.mxu0 %v2292
    %3880 = vmatprep.subr.mxu0 %v2297
    %3881 = vmatpush1.msra.mxu0 %v2296
    %3882 = vmatprep.subr.mxu0 %v2301
    %3883 = vmatpush1.msra.mxu0 %v2300
    %3884 = vmatprep.subr.mxu0 %v2305
    %3885 = vmatpush1.msra.mxu0 %v2304
    %3886 = vmatprep.subr.mxu0 %v2309
    %3887 = vmatpush1.msra.mxu0 %v2308
    %3888 = vmatprep.subr.mxu0 %v2313
    %3889 = vmatpush1.msra.mxu0 %v2312
    %3890 = vmatprep.subr.mxu0 %v2317
    %3891 = vmatpush1.msra.mxu0 %v2316
    %3892 = vmatprep.subr.mxu0 %v2321
    %3893 = vmatpush1.msra.mxu0 %v2320
    %3894 = vmatprep.subr.mxu0 %v2325
    %3895 = vmatpush1.msra.mxu0 %v2324
    %3896 = vmatprep.subr.mxu0 %v2329
    %3897 = vmatpush1.msra.mxu0 %v2328
    %3898 = vmatprep.subr.mxu0 %v2333
    %3899 = vmatpush1.msra.mxu0 %v2332
    %3900 = vmatprep.subr.mxu0 %v2337
    %3901 = vmatpush1.msra.mxu0 %v2336
    %3902 = vmatprep.subr.mxu0 %v2341
    %3903 = vmatpush1.msra.mxu0 %v2340
    %3904 = vmatprep.subr.mxu0 %v2345
    %3905 = vmatpush1.msra.mxu0 %v2344
    %3906 = vmatprep.subr.mxu0 %v2349
    %3907 = vmatpush1.msra.mxu0 %v2348
    %3908 = vmatprep.subr.mxu0 %v2353
    %3909 = vmatpush1.msra.mxu0 %v2352
    %3910 = vmatprep.subr.mxu0 %v2357
    %3911 = vmatpush1.msra.mxu0 %v2356
    %3912 = vmatprep.subr.mxu0 %v2361
    %3913 = vmatpush1.msra.mxu0 %v2360
    %3914 = vmatprep.subr.mxu0 %v2365
    %3915 = vmatpush1.msra.mxu0 %v2364
    %3916 = vmatprep.subr.mxu0 %v2369
    %3917 = vmatpush1.msra.mxu0 %v2368
    %3918 = vmatprep.subr.mxu0 %v2373
    %3919 = vmatpush1.msra.mxu0 %v2372
    %3920 = vmatprep.subr.mxu0 %v2377
    %3921 = vmatpush1.msra.mxu0 %v2376
    %3922 = vmatprep.subr.mxu0 %v2381
    %3923 = vmatpush1.msra.mxu0 %v2380
    %3924 = vmatprep.subr.mxu0 %v2385
    %3925 = vmatpush1.msra.mxu0 %v2384
    %3926 = vmatprep.subr.mxu0 %v2389
    %3927 = vmatpush1.msra.mxu0 %v2388
    %3928 = vmatprep.subr.mxu0 %v2393
    %3929 = vmatpush1.msra.mxu0 %v2392
    %3930 = vmatprep.subr.mxu0 %v2397
    %3931 = vmatpush1.msra.mxu0 %v2396
    %3932 = vmatprep.subr.mxu0 %v2401
    %3933 = vmatpush1.msra.mxu0 %v2400
    %3934 = vmatprep.subr.mxu0 %v2405
    %3935 = vmatpush1.msra.mxu0 %v2404
    %3936 = vmatprep.subr.mxu0 %v2409
    %3937 = vmatpush1.msra.mxu0 %v2408
    %3938 = vmatprep.mubr.f32.mxu0 %v2267
    %3939 = vmatmul.mubr.f32.gmra.mrb[0].mxu0 %v2266
    %v3940 = vpop.f32.mrb[0].mxu0
    %v3941 = vadd.f32 0.0, %v3940
    %v3942 = vpop.f32.mrb[0].mxu0
    %v3943 = vadd.f32 0.0, %v3942
    %3944 = vdwg.mxu0
    %3945 = vmatprep.subr.mxu0 %v2413
    %3946 = vmatpush1.msra.mxu0 %v2412
    %3947 = vmatprep.subr.mxu0 %v2417
    %3948 = vmatpush1.msra.mxu0 %v2416
    %3949 = vmatprep.subr.mxu0 %v2421
    %3950 = vmatpush1.msra.mxu0 %v2420
    %3951 = vmatprep.subr.mxu0 %v2425
    %3952 = vmatpush1.msra.mxu0 %v2424
    %3953 = vmatprep.subr.mxu0 %v2429
    %3954 = vmatpush1.msra.mxu0 %v2428
    %3955 = vmatprep.subr.mxu0 %v2433
    %3956 = vmatpush1.msra.mxu0 %v2432
    %3957 = vmatprep.subr.mxu0 %v2437
    %3958 = vmatpush1.msra.mxu0 %v2436
    %3959 = vmatprep.subr.mxu0 %v2441
    %3960 = vmatpush1.msra.mxu0 %v2440
    %3961 = vmatprep.subr.mxu0 %v2445
    %3962 = vmatpush1.msra.mxu0 %v2444
    %3963 = vmatprep.subr.mxu0 %v2449
    %3964 = vmatpush1.msra.mxu0 %v2448
    %3965 = vmatprep.subr.mxu0 %v2453
    %3966 = vmatpush1.msra.mxu0 %v2452
    %3967 = vmatprep.subr.mxu0 %v2457
    %3968 = vmatpush1.msra.mxu0 %v2456
    %3969 = vmatprep.subr.mxu0 %v2461
    %3970 = vmatpush1.msra.mxu0 %v2460
    %3971 = vmatprep.subr.mxu0 %v2465
    %3972 = vmatpush1.msra.mxu0 %v2464
    %3973 = vmatprep.subr.mxu0 %v2469
    %3974 = vmatpush1.msra.mxu0 %v2468
    %3975 = vmatprep.subr.mxu0 %v2473
    %3976 = vmatpush1.msra.mxu0 %v2472
    %3977 = vmatprep.subr.mxu0 %v2477
    %3978 = vmatpush1.msra.mxu0 %v2476
    %3979 = vmatprep.subr.mxu0 %v2481
    %3980 = vmatpush1.msra.mxu0 %v2480
    %3981 = vmatprep.subr.mxu0 %v2485
    %3982 = vmatpush1.msra.mxu0 %v2484
    %3983 = vmatprep.subr.mxu0 %v2489
    %3984 = vmatpush1.msra.mxu0 %v2488
    %3985 = vmatprep.subr.mxu0 %v2493
    %3986 = vmatpush1.msra.mxu0 %v2492
    %3987 = vmatprep.subr.mxu0 %v2497
    %3988 = vmatpush1.msra.mxu0 %v2496
    %3989 = vmatprep.subr.mxu0 %v2501
    %3990 = vmatpush1.msra.mxu0 %v2500
    %3991 = vmatprep.subr.mxu0 %v2505
    %3992 = vmatpush1.msra.mxu0 %v2504
    %3993 = vmatprep.subr.mxu0 %v2509
    %3994 = vmatpush1.msra.mxu0 %v2508
    %3995 = vmatprep.subr.mxu0 %v2513
    %3996 = vmatpush1.msra.mxu0 %v2512
    %3997 = vmatprep.subr.mxu0 %v2517
    %3998 = vmatpush1.msra.mxu0 %v2516
    %3999 = vmatprep.subr.mxu0 %v2521
    %4000 = vmatpush1.msra.mxu0 %v2520
    %4001 = vmatprep.subr.mxu0 %v2525
    %4002 = vmatpush1.msra.mxu0 %v2524
    %4003 = vmatprep.subr.mxu0 %v2529
    %4004 = vmatpush1.msra.mxu0 %v2528
    %4005 = vmatprep.subr.mxu0 %v2533
    %4006 = vmatpush1.msra.mxu0 %v2532
    %4007 = vmatprep.subr.mxu0 %v2537
    %4008 = vmatpush1.msra.mxu0 %v2536
    %4009 = vmatprep.mubr.f32.mxu0 %v2269
    %4010 = vmatmul.mubr.f32.gmra.mrb[0].mxu0 %v2268
    %v4011 = vpop.f32.mrb[0].mxu0
    %v4012 = vadd.f32 %v3941, %v4011
    %v4013 = vpop.f32.mrb[0].mxu0
    %v4014 = vadd.f32 %v3943, %v4013
    %4015 = vdwg.mxu0
    %4016 = vmatprep.subr.mxu0 %v2541
    %4017 = vmatpush1.msra.mxu0 %v2540
    %4018 = vmatprep.subr.mxu0 %v2545
    %4019 = vmatpush1.msra.mxu0 %v2544
    %4020 = vmatprep.subr.mxu0 %v2549
    %4021 = vmatpush1.msra.mxu0 %v2548
    %4022 = vmatprep.subr.mxu0 %v2553
    %4023 = vmatpush1.msra.mxu0 %v2552
    %4024 = vmatprep.subr.mxu0 %v2557
    %4025 = vmatpush1.msra.mxu0 %v2556
    %4026 = vmatprep.subr.mxu0 %v2561
    %4027 = vmatpush1.msra.mxu0 %v2560
    %4028 = vmatprep.subr.mxu0 %v2565
    %4029 = vmatpush1.msra.mxu0 %v2564
    %4030 = vmatprep.subr.mxu0 %v2569
    %4031 = vmatpush1.msra.mxu0 %v2568
    %4032 = vmatprep.subr.mxu0 %v2573
    %4033 = vmatpush1.msra.mxu0 %v2572
    %4034 = vmatprep.subr.mxu0 %v2577
    %4035 = vmatpush1.msra.mxu0 %v2576
    %4036 = vmatprep.subr.mxu0 %v2581
    %4037 = vmatpush1.msra.mxu0 %v2580
    %4038 = vmatprep.subr.mxu0 %v2585
    %4039 = vmatpush1.msra.mxu0 %v2584
    %4040 = vmatprep.subr.mxu0 %v2589
    %4041 = vmatpush1.msra.mxu0 %v2588
    %4042 = vmatprep.subr.mxu0 %v2593
    %4043 = vmatpush1.msra.mxu0 %v2592
    %4044 = vmatprep.subr.mxu0 %v2597
    %4045 = vmatpush1.msra.mxu0 %v2596
    %4046 = vmatprep.subr.mxu0 %v2601
    %4047 = vmatpush1.msra.mxu0 %v2600
    %4048 = vmatprep.subr.mxu0 %v2605
    %4049 = vmatpush1.msra.mxu0 %v2604
    %4050 = vmatprep.subr.mxu0 %v2609
    %4051 = vmatpush1.msra.mxu0 %v2608
    %4052 = vmatprep.subr.mxu0 %v2613
    %4053 = vmatpush1.msra.mxu0 %v2612
    %4054 = vmatprep.subr.mxu0 %v2617
    %4055 = vmatpush1.msra.mxu0 %v2616
    %4056 = vmatprep.subr.mxu0 %v2621
    %4057 = vmatpush1.msra.mxu0 %v2620
    %4058 = vmatprep.subr.mxu0 %v2625
    %4059 = vmatpush1.msra.mxu0 %v2624
    %4060 = vmatprep.subr.mxu0 %v2629
    %4061 = vmatpush1.msra.mxu0 %v2628
    %4062 = vmatprep.subr.mxu0 %v2633
    %4063 = vmatpush1.msra.mxu0 %v2632
    %4064 = vmatprep.subr.mxu0 %v2637
    %4065 = vmatpush1.msra.mxu0 %v2636
    %4066 = vmatprep.subr.mxu0 %v2641
    %4067 = vmatpush1.msra.mxu0 %v2640
    %4068 = vmatprep.subr.mxu0 %v2645
    %4069 = vmatpush1.msra.mxu0 %v2644
    %4070 = vmatprep.subr.mxu0 %v2649
    %4071 = vmatpush1.msra.mxu0 %v2648
    %4072 = vmatprep.subr.mxu0 %v2653
    %4073 = vmatpush1.msra.mxu0 %v2652
    %4074 = vmatprep.subr.mxu0 %v2657
    %4075 = vmatpush1.msra.mxu0 %v2656
    %4076 = vmatprep.subr.mxu0 %v2661
    %4077 = vmatpush1.msra.mxu0 %v2660
    %4078 = vmatprep.subr.mxu0 %v2665
    %4079 = vmatpush1.msra.mxu0 %v2664
    %4080 = vmatprep.mubr.f32.mxu0 %v2271
    %4081 = vmatmul.mubr.f32.gmra.mrb[0].mxu0 %v2270
    %v4082 = vpop.f32.mrb[0].mxu0
    %v4083 = vadd.f32 %v4012, %v4082
    %v4084 = vpop.f32.mrb[0].mxu0
    %v4085 = vadd.f32 %v4014, %v4084
    %4086 = vdwg.mxu0
    %4087 = vmatprep.subr.mxu0 %v2669
    %4088 = vmatpush1.msra.mxu0 %v2668
    %4089 = vmatprep.subr.mxu0 %v2673
    %4090 = vmatpush1.msra.mxu0 %v2672
    %4091 = vmatprep.subr.mxu0 %v2677
    %4092 = vmatpush1.msra.mxu0 %v2676
    %4093 = vmatprep.subr.mxu0 %v2681
    %4094 = vmatpush1.msra.mxu0 %v2680
    %4095 = vmatprep.subr.mxu0 %v2685
    %4096 = vmatpush1.msra.mxu0 %v2684
    %4097 = vmatprep.subr.mxu0 %v2689
    %4098 = vmatpush1.msra.mxu0 %v2688
    %4099 = vmatprep.subr.mxu0 %v2693
    %4100 = vmatpush1.msra.mxu0 %v2692
    %4101 = vmatprep.subr.mxu0 %v2697
    %4102 = vmatpush1.msra.mxu0 %v2696
    %4103 = vmatprep.subr.mxu0 %v2701
    %4104 = vmatpush1.msra.mxu0 %v2700
    %4105 = vmatprep.subr.mxu0 %v2705
    %4106 = vmatpush1.msra.mxu0 %v2704
    %4107 = vmatprep.subr.mxu0 %v2709
    %4108 = vmatpush1.msra.mxu0 %v2708
    %4109 = vmatprep.subr.mxu0 %v2713
    %4110 = vmatpush1.msra.mxu0 %v2712
    %4111 = vmatprep.subr.mxu0 %v2717
    %4112 = vmatpush1.msra.mxu0 %v2716
    %4113 = vmatprep.subr.mxu0 %v2721
    %4114 = vmatpush1.msra.mxu0 %v2720
    %4115 = vmatprep.subr.mxu0 %v2725
    %4116 = vmatpush1.msra.mxu0 %v2724
    %4117 = vmatprep.subr.mxu0 %v2729
    %4118 = vmatpush1.msra.mxu0 %v2728
    %4119 = vmatprep.subr.mxu0 %v2733
    %4120 = vmatpush1.msra.mxu0 %v2732
    %4121 = vmatprep.subr.mxu0 %v2737
    %4122 = vmatpush1.msra.mxu0 %v2736
    %4123 = vmatprep.subr.mxu0 %v2741
    %4124 = vmatpush1.msra.mxu0 %v2740
    %4125 = vmatprep.subr.mxu0 %v2745
    %4126 = vmatpush1.msra.mxu0 %v2744
    %4127 = vmatprep.subr.mxu0 %v2749
    %4128 = vmatpush1.msra.mxu0 %v2748
    %4129 = vmatprep.subr.mxu0 %v2753
    %4130 = vmatpush1.msra.mxu0 %v2752
    %4131 = vmatprep.subr.mxu0 %v2757
    %4132 = vmatpush1.msra.mxu0 %v2756
    %4133 = vmatprep.subr.mxu0 %v2761
    %4134 = vmatpush1.msra.mxu0 %v2760
    %4135 = vmatprep.subr.mxu0 %v2765
    %4136 = vmatpush1.msra.mxu0 %v2764
    %4137 = vmatprep.subr.mxu0 %v2769
    %4138 = vmatpush1.msra.mxu0 %v2768
    %4139 = vmatprep.subr.mxu0 %v2773
    %4140 = vmatpush1.msra.mxu0 %v2772
    %4141 = vmatprep.subr.mxu0 %v2777
    %4142 = vmatpush1.msra.mxu0 %v2776
    %4143 = vmatprep.subr.mxu0 %v2781
    %4144 = vmatpush1.msra.mxu0 %v2780
    %4145 = vmatprep.subr.mxu0 %v2785
    %4146 = vmatpush1.msra.mxu0 %v2784
    %4147 = vmatprep.subr.mxu0 %v2789
    %4148 = vmatpush1.msra.mxu0 %v2788
    %4149 = vmatprep.subr.mxu0 %v2793
    %4150 = vmatpush1.msra.mxu0 %v2792
    %4151 = vmatprep.mubr.f32.mxu0 %v2273
    %4152 = vmatmul.mubr.f32.gmra.mrb[0].mxu0 %v2272
    %v4153 = vpop.f32.mrb[0].mxu0
    %v4154 = vadd.f32 %v4083, %v4153
    %v4155 = vpop.f32.mrb[0].mxu0
    %v4156 = vadd.f32 %v4085, %v4155
    %4157 = vdwg.mxu0
    %4158 = vmatprep.subr.mxu0 %v2797
    %4159 = vmatpush1.msra.mxu0 %v2796
    %4160 = vmatprep.subr.mxu0 %v2801
    %4161 = vmatpush1.msra.mxu0 %v2800
    %4162 = vmatprep.subr.mxu0 %v2805
    %4163 = vmatpush1.msra.mxu0 %v2804
    %4164 = vmatprep.subr.mxu0 %v2809
    %4165 = vmatpush1.msra.mxu0 %v2808
    %4166 = vmatprep.subr.mxu0 %v2813
    %4167 = vmatpush1.msra.mxu0 %v2812
    %4168 = vmatprep.subr.mxu0 %v2817
    %4169 = vmatpush1.msra.mxu0 %v2816
    %4170 = vmatprep.subr.mxu0 %v2821
    %4171 = vmatpush1.msra.mxu0 %v2820
    %4172 = vmatprep.subr.mxu0 %v2825
    %4173 = vmatpush1.msra.mxu0 %v2824
    %4174 = vmatprep.subr.mxu0 %v2829
    %4175 = vmatpush1.msra.mxu0 %v2828
    %4176 = vmatprep.subr.mxu0 %v2833
    %4177 = vmatpush1.msra.mxu0 %v2832
    %4178 = vmatprep.subr.mxu0 %v2837
    %4179 = vmatpush1.msra.mxu0 %v2836
    %4180 = vmatprep.subr.mxu0 %v2841
    %4181 = vmatpush1.msra.mxu0 %v2840
    %4182 = vmatprep.subr.mxu0 %v2845
    %4183 = vmatpush1.msra.mxu0 %v2844
    %4184 = vmatprep.subr.mxu0 %v2849
    %4185 = vmatpush1.msra.mxu0 %v2848
    %4186 = vmatprep.subr.mxu0 %v2853
    %4187 = vmatpush1.msra.mxu0 %v2852
    %4188 = vmatprep.subr.mxu0 %v2857
    %4189 = vmatpush1.msra.mxu0 %v2856
    %4190 = vmatprep.subr.mxu0 %v2861
    %4191 = vmatpush1.msra.mxu0 %v2860
    %4192 = vmatprep.subr.mxu0 %v2865
    %4193 = vmatpush1.msra.mxu0 %v2864
    %4194 = vmatprep.subr.mxu0 %v2869
    %4195 = vmatpush1.msra.mxu0 %v2868
    %4196 = vmatprep.subr.mxu0 %v2873
    %4197 = vmatpush1.msra.mxu0 %v2872
    %4198 = vmatprep.subr.mxu0 %v2877
    %4199 = vmatpush1.msra.mxu0 %v2876
    %4200 = vmatprep.subr.mxu0 %v2881
    %4201 = vmatpush1.msra.mxu0 %v2880
    %4202 = vmatprep.subr.mxu0 %v2885
    %4203 = vmatpush1.msra.mxu0 %v2884
    %4204 = vmatprep.subr.mxu0 %v2889
    %4205 = vmatpush1.msra.mxu0 %v2888
    %4206 = vmatprep.subr.mxu0 %v2893
    %4207 = vmatpush1.msra.mxu0 %v2892
    %4208 = vmatprep.subr.mxu0 %v2897
    %4209 = vmatpush1.msra.mxu0 %v2896
    %4210 = vmatprep.subr.mxu0 %v2901
    %4211 = vmatpush1.msra.mxu0 %v2900
    %4212 = vmatprep.subr.mxu0 %v2905
    %4213 = vmatpush1.msra.mxu0 %v2904
    %4214 = vmatprep.subr.mxu0 %v2909
    %4215 = vmatpush1.msra.mxu0 %v2908
    %4216 = vmatprep.subr.mxu0 %v2913
    %4217 = vmatpush1.msra.mxu0 %v2912
    %4218 = vmatprep.subr.mxu0 %v2917
    %4219 = vmatpush1.msra.mxu0 %v2916
    %4220 = vmatprep.subr.mxu0 %v2921
    %4221 = vmatpush1.msra.mxu0 %v2920
    %4222 = vmatprep.mubr.f32.mxu0 %v2275
    %4223 = vmatmul.mubr.f32.gmra.mrb[0].mxu0 %v2274
    %v4224 = vpop.f32.mrb[0].mxu0
    %v4225 = vadd.f32 %v4154, %v4224
    %v4226 = vpop.f32.mrb[0].mxu0
    %v4227 = vadd.f32 %v4156, %v4226
    %4228 = vdwg.mxu0
    %4229 = vmatprep.subr.mxu0 %v2925
    %4230 = vmatpush1.msra.mxu0 %v2924
    %4231 = vmatprep.subr.mxu0 %v2929
    %4232 = vmatpush1.msra.mxu0 %v2928
    %4233 = vmatprep.subr.mxu0 %v2933
    %4234 = vmatpush1.msra.mxu0 %v2932
    %4235 = vmatprep.subr.mxu0 %v2937
    %4236 = vmatpush1.msra.mxu0 %v2936
    %4237 = vmatprep.subr.mxu0 %v2941
    %4238 = vmatpush1.msra.mxu0 %v2940
    %4239 = vmatprep.subr.mxu0 %v2945
    %4240 = vmatpush1.msra.mxu0 %v2944
    %4241 = vmatprep.subr.mxu0 %v2949
    %4242 = vmatpush1.msra.mxu0 %v2948
    %4243 = vmatprep.subr.mxu0 %v2953
    %4244 = vmatpush1.msra.mxu0 %v2952
    %4245 = vmatprep.subr.mxu0 %v2957
    %4246 = vmatpush1.msra.mxu0 %v2956
    %4247 = vmatprep.subr.mxu0 %v2961
    %4248 = vmatpush1.msra.mxu0 %v2960
    %4249 = vmatprep.subr.mxu0 %v2965
    %4250 = vmatpush1.msra.mxu0 %v2964
    %4251 = vmatprep.subr.mxu0 %v2969
    %4252 = vmatpush1.msra.mxu0 %v2968
    %4253 = vmatprep.subr.mxu0 %v2973
    %4254 = vmatpush1.msra.mxu0 %v2972
    %4255 = vmatprep.subr.mxu0 %v2977
    %4256 = vmatpush1.msra.mxu0 %v2976
    %4257 = vmatprep.subr.mxu0 %v2981
    %4258 = vmatpush1.msra.mxu0 %v2980
    %4259 = vmatprep.subr.mxu0 %v2985
    %4260 = vmatpush1.msra.mxu0 %v2984
    %4261 = vmatprep.subr.mxu0 %v2989
    %4262 = vmatpush1.msra.mxu0 %v2988
    %4263 = vmatprep.subr.mxu0 %v2993
    %4264 = vmatpush1.msra.mxu0 %v2992
    %4265 = vmatprep.subr.mxu0 %v2997
    %4266 = vmatpush1.msra.mxu0 %v2996
    %4267 = vmatprep.subr.mxu0 %v3001
    %4268 = vmatpush1.msra.mxu0 %v3000
    %4269 = vmatprep.subr.mxu0 %v3005
    %4270 = vmatpush1.msra.mxu0 %v3004
    %4271 = vmatprep.subr.mxu0 %v3009
    %4272 = vmatpush1.msra.mxu0 %v3008
    %4273 = vmatprep.subr.mxu0 %v3013
    %4274 = vmatpush1.msra.mxu0 %v3012
    %4275 = vmatprep.subr.mxu0 %v3017
    %4276 = vmatpush1.msra.mxu0 %v3016
    %4277 = vmatprep.subr.mxu0 %v3021
    %4278 = vmatpush1.msra.mxu0 %v3020
    %4279 = vmatprep.subr.mxu0 %v3025
    %4280 = vmatpush1.msra.mxu0 %v3024
    %4281 = vmatprep.subr.mxu0 %v3029
    %4282 = vmatpush1.msra.mxu0 %v3028
    %4283 = vmatprep.subr.mxu0 %v3033
    %4284 = vmatpush1.msra.mxu0 %v3032
    %4285 = vmatprep.subr.mxu0 %v3037
    %4286 = vmatpush1.msra.mxu0 %v3036
    %4287 = vmatprep.subr.mxu0 %v3041
    %4288 = vmatpush1.msra.mxu0 %v3040
    %4289 = vmatprep.subr.mxu0 %v3045
    %4290 = vmatpush1.msra.mxu0 %v3044
    %4291 = vmatprep.subr.mxu0 %v3049
    %4292 = vmatpush1.msra.mxu0 %v3048
    %4293 = vmatprep.mubr.f32.mxu0 %v2277
    %4294 = vmatmul.mubr.f32.gmra.mrb[0].mxu0 %v2276
    %v4295 = vpop.f32.mrb[0].mxu0
    %v4296 = vadd.f32 %v4225, %v4295
    %v4297 = vpop.f32.mrb[0].mxu0
    %v4298 = vadd.f32 %v4227, %v4297
    %4299 = vdwg.mxu0
    %4300 = vmatprep.subr.mxu0 %v3053
    %4301 = vmatpush1.msra.mxu0 %v3052
    %4302 = vmatprep.subr.mxu0 %v3057
    %4303 = vmatpush1.msra.mxu0 %v3056
    %4304 = vmatprep.subr.mxu0 %v3061
    %4305 = vmatpush1.msra.mxu0 %v3060
    %4306 = vmatprep.subr.mxu0 %v3065
    %4307 = vmatpush1.msra.mxu0 %v3064
    %4308 = vmatprep.subr.mxu0 %v3069
    %4309 = vmatpush1.msra.mxu0 %v3068
    %4310 = vmatprep.subr.mxu0 %v3073
    %4311 = vmatpush1.msra.mxu0 %v3072
    %4312 = vmatprep.subr.mxu0 %v3077
    %4313 = vmatpush1.msra.mxu0 %v3076
    %4314 = vmatprep.subr.mxu0 %v3081
    %4315 = vmatpush1.msra.mxu0 %v3080
    %4316 = vmatprep.subr.mxu0 %v3085
    %4317 = vmatpush1.msra.mxu0 %v3084
    %4318 = vmatprep.subr.mxu0 %v3089
    %4319 = vmatpush1.msra.mxu0 %v3088
    %4320 = vmatprep.subr.mxu0 %v3093
    %4321 = vmatpush1.msra.mxu0 %v3092
    %4322 = vmatprep.subr.mxu0 %v3097
    %4323 = vmatpush1.msra.mxu0 %v3096
    %4324 = vmatprep.subr.mxu0 %v3101
    %4325 = vmatpush1.msra.mxu0 %v3100
    %4326 = vmatprep.subr.mxu0 %v3105
    %4327 = vmatpush1.msra.mxu0 %v3104
    %4328 = vmatprep.subr.mxu0 %v3109
    %4329 = vmatpush1.msra.mxu0 %v3108
    %4330 = vmatprep.subr.mxu0 %v3113
    %4331 = vmatpush1.msra.mxu0 %v3112
    %4332 = vmatprep.subr.mxu0 %v3117
    %4333 = vmatpush1.msra.mxu0 %v3116
    %4334 = vmatprep.subr.mxu0 %v3121
    %4335 = vmatpush1.msra.mxu0 %v3120
    %4336 = vmatprep.subr.mxu0 %v3125
    %4337 = vmatpush1.msra.mxu0 %v3124
    %4338 = vmatprep.subr.mxu0 %v3129
    %4339 = vmatpush1.msra.mxu0 %v3128
    %4340 = vmatprep.subr.mxu0 %v3133
    %4341 = vmatpush1.msra.mxu0 %v3132
    %4342 = vmatprep.subr.mxu0 %v3137
    %4343 = vmatpush1.msra.mxu0 %v3136
    %4344 = vmatprep.subr.mxu0 %v3141
    %4345 = vmatpush1.msra.mxu0 %v3140
    %4346 = vmatprep.subr.mxu0 %v3145
    %4347 = vmatpush1.msra.mxu0 %v3144
    %4348 = vmatprep.subr.mxu0 %v3149
    %4349 = vmatpush1.msra.mxu0 %v3148
    %4350 = vmatprep.subr.mxu0 %v3153
    %4351 = vmatpush1.msra.mxu0 %v3152
    %4352 = vmatprep.subr.mxu0 %v3157
    %4353 = vmatpush1.msra.mxu0 %v3156
    %4354 = vmatprep.subr.mxu0 %v3161
    %4355 = vmatpush1.msra.mxu0 %v3160
    %4356 = vmatprep.subr.mxu0 %v3165
    %4357 = vmatpush1.msra.mxu0 %v3164
    %4358 = vmatprep.subr.mxu0 %v3169
    %4359 = vmatpush1.msra.mxu0 %v3168
    %4360 = vmatprep.subr.mxu0 %v3173
    %4361 = vmatpush1.msra.mxu0 %v3172
    %4362 = vmatprep.subr.mxu0 %v3177
    %4363 = vmatpush1.msra.mxu0 %v3176
    %4364 = vmatprep.mubr.f32.mxu0 %v2279
    %4365 = vmatmul.mubr.f32.gmra.mrb[0].mxu0 %v2278
    %v4366 = vpop.f32.mrb[0].mxu0
    %v4367 = vadd.f32 %v4296, %v4366
    %v4368 = vpop.f32.mrb[0].mxu0
    %v4369 = vadd.f32 %v4298, %v4368
    %4370 = vdwg.mxu0
    %4371 = vmatprep.subr.mxu0 %v3181
    %4372 = vmatpush1.msra.mxu0 %v3180
    %4373 = vmatprep.subr.mxu0 %v3185
    %4374 = vmatpush1.msra.mxu0 %v3184
    %4375 = vmatprep.subr.mxu0 %v3189
    %4376 = vmatpush1.msra.mxu0 %v3188
    %4377 = vmatprep.subr.mxu0 %v3193
    %4378 = vmatpush1.msra.mxu0 %v3192
    %4379 = vmatprep.subr.mxu0 %v3197
    %4380 = vmatpush1.msra.mxu0 %v3196
    %4381 = vmatprep.subr.mxu0 %v3201
    %4382 = vmatpush1.msra.mxu0 %v3200
    %4383 = vmatprep.subr.mxu0 %v3205
    %4384 = vmatpush1.msra.mxu0 %v3204
    %4385 = vmatprep.subr.mxu0 %v3209
    %4386 = vmatpush1.msra.mxu0 %v3208
    %4387 = vmatprep.subr.mxu0 %v3213
    %4388 = vmatpush1.msra.mxu0 %v3212
    %4389 = vmatprep.subr.mxu0 %v3217
    %4390 = vmatpush1.msra.mxu0 %v3216
    %4391 = vmatprep.subr.mxu0 %v3221
    %4392 = vmatpush1.msra.mxu0 %v3220
    %4393 = vmatprep.subr.mxu0 %v3225
    %4394 = vmatpush1.msra.mxu0 %v3224
    %4395 = vmatprep.subr.mxu0 %v3229
    %4396 = vmatpush1.msra.mxu0 %v3228
    %4397 = vmatprep.subr.mxu0 %v3233
    %4398 = vmatpush1.msra.mxu0 %v3232
    %4399 = vmatprep.subr.mxu0 %v3237
    %4400 = vmatpush1.msra.mxu0 %v3236
    %4401 = vmatprep.subr.mxu0 %v3241
    %4402 = vmatpush1.msra.mxu0 %v3240
    %4403 = vmatprep.subr.mxu0 %v3245
    %4404 = vmatpush1.msra.mxu0 %v3244
    %4405 = vmatprep.subr.mxu0 %v3249
    %4406 = vmatpush1.msra.mxu0 %v3248
    %4407 = vmatprep.subr.mxu0 %v3253
    %4408 = vmatpush1.msra.mxu0 %v3252
    %4409 = vmatprep.subr.mxu0 %v3257
    %4410 = vmatpush1.msra.mxu0 %v3256
    %4411 = vmatprep.subr.mxu0 %v3261
    %4412 = vmatpush1.msra.mxu0 %v3260
    %4413 = vmatprep.subr.mxu0 %v3265
    %4414 = vmatpush1.msra.mxu0 %v3264
    %4415 = vmatprep.subr.mxu0 %v3269
    %4416 = vmatpush1.msra.mxu0 %v3268
    %4417 = vmatprep.subr.mxu0 %v3273
    %4418 = vmatpush1.msra.mxu0 %v3272
    %4419 = vmatprep.subr.mxu0 %v3277
    %4420 = vmatpush1.msra.mxu0 %v3276
    %4421 = vmatprep.subr.mxu0 %v3281
    %4422 = vmatpush1.msra.mxu0 %v3280
    %4423 = vmatprep.subr.mxu0 %v3285
    %4424 = vmatpush1.msra.mxu0 %v3284
    %4425 = vmatprep.subr.mxu0 %v3289
    %4426 = vmatpush1.msra.mxu0 %v3288
    %4427 = vmatprep.subr.mxu0 %v3293
    %4428 = vmatpush1.msra.mxu0 %v3292
    %4429 = vmatprep.subr.mxu0 %v3297
    %4430 = vmatpush1.msra.mxu0 %v3296
    %4431 = vmatprep.subr.mxu0 %v3301
    %4432 = vmatpush1.msra.mxu0 %v3300
    %4433 = vmatprep.subr.mxu0 %v3305
    %4434 = vmatpush1.msra.mxu0 %v3304
    %4435 = vmatprep.mubr.f32.mxu0 %v2281
    %4436 = vmatmul.mubr.f32.gmra.mrb[0].mxu0 %v2280
    %v4437 = vpop.f32.mrb[0].mxu0
    %v4438 = vadd.f32 %v4367, %v4437
    %v4439 = vpop.f32.mrb[0].mxu0
    %v4440 = vadd.f32 %v4369, %v4439
    %4441 = vdwg.mxu0
    %4442 = vrot.lane.b32.xlu0 %v3870, 72
    %v4443 = vpop.permute.xlu0 %4442
    %4444 = vrot.lane.b32.xlu0 %v3872, 72
    %v4445 = vpop.permute.xlu0 %4444
    %4446 = vrot.lane.b32.xlu0 %v4438, 72
    %v4447 = vpop.permute.xlu0 %4446
    %4448 = vrot.lane.b32.xlu0 %v4440, 72
    %v4449 = vpop.permute.xlu0 %4448
    %vm4450 = vcmp.lt.s32.totalorder %v228, 72
    %v4451 = vsel %vm4450, %v4447, %v4449
    %v4452 = vsel %vm4450, %v4445, %v4447
    %v4453 = vsel %vm4450, %v4443, %v4445
    %v4454 = vsel %vm4450, %v4449, %v4443
    %v4455 = vld [vmem:[#allocation15] ss:$8 sm:$0xf]
    %v4457 = vlaneseq
    %v4458 = vshrl.u32 %v4457, 7
    %v4459 = vsub.s32 0, %v4458
    %v4460 = vrot.slane %v4455, %v4459
    %v4461 = vlaneseq
    %v4462 = vshrl.u32 %v4461, 7
    %v4463 = vsub.s32 1, %v4462
    %v4464 = vrot.slane %v4455, %v4463
    %v4465 = vlaneseq
    %v4466 = vshrl.u32 %v4465, 7
    %v4467 = vsub.s32 2, %v4466
    %v4468 = vrot.slane %v4455, %v4467
    %v4469 = vlaneseq
    %v4470 = vshrl.u32 %v4469, 7
    %v4471 = vsub.s32 3, %v4470
    %v4472 = vrot.slane %v4455, %v4471
    %v4477 = vmul.f32 %v4454, %v4460
    %v4478 = vmul.f32 %v4453, %v4464
    %v4479 = vmul.f32 %v4452, %v4468
    %v4480 = vmul.f32 %v4451, %v4472
    %4481 = vst [vmem:[#allocation3] sm:$0xff] %v4477
    %4482 = vst [vmem:[#allocation3 + $0x8] sm:$0xff] %v4478
    %4483 = vst [vmem:[#allocation3 + $0x10] sm:$0xff] %v4479
    %4484 = vst [vmem:[#allocation3 + $0x18] sm:$0xff] %v4480
    %4485 = vrot.lane.b32.xlu0 %v3870, 64
    %v4486 = vpop.permute.xlu0 %4485
    %4487 = vrot.lane.b32.xlu0 %v3872, 64
    %v4488 = vpop.permute.xlu0 %4487
    %4489 = vrot.lane.b32.xlu0 %v4438, 64
    %v4490 = vpop.permute.xlu0 %4489
    %4491 = vrot.lane.b32.xlu0 %v4440, 64
    %v4492 = vpop.permute.xlu0 %4491
    %vm4493 = vcmp.lt.s32.totalorder %v228, 64
    %v4494 = vsel %vm4493, %v4490, %v4492
    %v4495 = vsel %vm4493, %v4488, %v4490
    %v4496 = vsel %vm4493, %v4486, %v4488
    %v4497 = vsel %vm4493, %v4492, %v4486
    %s4498 = scalar_lea.vmem [#allocation15], 1
    %v4499 = vld [vmem:[%s4498] ss:$8 sm:$0xf]
    %v4501 = vlaneseq
    %v4502 = vshrl.u32 %v4501, 7
    %v4503 = vsub.s32 0, %v4502
    %v4504 = vrot.slane %v4499, %v4503
    %v4505 = vlaneseq
    %v4506 = vshrl.u32 %v4505, 7
    %v4507 = vsub.s32 1, %v4506
    %v4508 = vrot.slane %v4499, %v4507
    %v4509 = vlaneseq
    %v4510 = vshrl.u32 %v4509, 7
    %v4511 = vsub.s32 2, %v4510
    %v4512 = vrot.slane %v4499, %v4511
    %v4513 = vlaneseq
    %v4514 = vshrl.u32 %v4513, 7
    %v4515 = vsub.s32 3, %v4514
    %v4516 = vrot.slane %v4499, %v4515
    %v4521 = vmul.f32 %v4497, %v4504
    %v4522 = vmul.f32 %v4496, %v4508
    %v4523 = vmul.f32 %v4495, %v4512
    %v4524 = vmul.f32 %v4494, %v4516
    %4525 = vst [vmem:[#allocation3 + $0x20] sm:$0xff] %v4521
    %4526 = vst [vmem:[#allocation3 + $0x28] sm:$0xff] %v4522
    %4527 = vst [vmem:[#allocation3 + $0x30] sm:$0xff] %v4523
    %4528 = vst [vmem:[#allocation3 + $0x38] sm:$0xff] %v4524
    %4529 = vrot.lane.b32.xlu0 %v3870, 56
    %v4530 = vpop.permute.xlu0 %4529
    %4531 = vrot.lane.b32.xlu0 %v3872, 56
    %v4532 = vpop.permute.xlu0 %4531
    %4533 = vrot.lane.b32.xlu0 %v4438, 56
    %v4534 = vpop.permute.xlu0 %4533
    %4535 = vrot.lane.b32.xlu0 %v4440, 56
    %v4536 = vpop.permute.xlu0 %4535
    %vm4537 = vcmp.lt.s32.totalorder %v228, 56
    %v4538 = vsel %vm4537, %v4534, %v4536
    %v4539 = vsel %vm4537, %v4532, %v4534
    %v4540 = vsel %vm4537, %v4530, %v4532
    %v4541 = vsel %vm4537, %v4536, %v4530
    %s4542 = scalar_lea.vmem [#allocation15], 2
    %v4543 = vld [vmem:[%s4542] ss:$8 sm:$0xf]
    %v4545 = vlaneseq
    %v4546 = vshrl.u32 %v4545, 7
    %v4547 = vsub.s32 0, %v4546
    %v4548 = vrot.slane %v4543, %v4547
    %v4549 = vlaneseq
    %v4550 = vshrl.u32 %v4549, 7
    %v4551 = vsub.s32 1, %v4550
    %v4552 = vrot.slane %v4543, %v4551
    %v4553 = vlaneseq
    %v4554 = vshrl.u32 %v4553, 7
    %v4555 = vsub.s32 2, %v4554
    %v4556 = vrot.slane %v4543, %v4555
    %v4557 = vlaneseq
    %v4558 = vshrl.u32 %v4557, 7
    %v4559 = vsub.s32 3, %v4558
    %v4560 = vrot.slane %v4543, %v4559
    %v4565 = vmul.f32 %v4541, %v4548
    %v4566 = vmul.f32 %v4540, %v4552
    %v4567 = vmul.f32 %v4539, %v4556
    %v4568 = vmul.f32 %v4538, %v4560
    %4569 = vst [vmem:[#allocation3 + $0x40] sm:$0xff] %v4565
    %4570 = vst [vmem:[#allocation3 + $0x48] sm:$0xff] %v4566
    %4571 = vst [vmem:[#allocation3 + $0x50] sm:$0xff] %v4567
    %4572 = vst [vmem:[#allocation3 + $0x58] sm:$0xff] %v4568
    %4573 = vrot.lane.b32.xlu0 %v3870, 8
    %v4574 = vpop.permute.xlu0 %4573
    %4575 = vrot.lane.b32.xlu0 %v3872, 8
    %v4576 = vpop.permute.xlu0 %4575
    %4577 = vrot.lane.b32.xlu0 %v4438, 8
    %v4578 = vpop.permute.xlu0 %4577
    %4579 = vrot.lane.b32.xlu0 %v4440, 8
    %v4580 = vpop.permute.xlu0 %4579
    %v4581 = vsel %vm229, %v4578, %v4580
    %v4582 = vsel %vm229, %v4576, %v4578
    %v4583 = vsel %vm229, %v4574, %v4576
    %v4584 = vsel %vm229, %v4580, %v4574
    %s4585 = scalar_lea.vmem [#allocation15], 3
    %v4586 = vld [vmem:[%s4585] ss:$8 sm:$0xf]
    %v4588 = vlaneseq
    %v4589 = vshrl.u32 %v4588, 7
    %v4590 = vsub.s32 0, %v4589
    %v4591 = vrot.slane %v4586, %v4590
    %v4592 = vlaneseq
    %v4593 = vshrl.u32 %v4592, 7
    %v4594 = vsub.s32 1, %v4593
    %v4595 = vrot.slane %v4586, %v4594
    %v4596 = vlaneseq
    %v4597 = vshrl.u32 %v4596, 7
    %v4598 = vsub.s32 2, %v4597
    %v4599 = vrot.slane %v4586, %v4598
    %v4600 = vlaneseq
    %v4601 = vshrl.u32 %v4600, 7
    %v4602 = vsub.s32 3, %v4601
    %v4603 = vrot.slane %v4586, %v4602
    %v4608 = vmul.f32 %v4584, %v4591
    %v4609 = vmul.f32 %v4583, %v4595
    %v4610 = vmul.f32 %v4582, %v4599
    %v4611 = vmul.f32 %v4581, %v4603
    %4612 = vst [vmem:[#allocation3 + $0x60] sm:$0xff] %v4608
    %4613 = vst [vmem:[#allocation3 + $0x68] sm:$0xff] %v4609
    %4614 = vst [vmem:[#allocation3 + $0x70] sm:$0xff] %v4610
    %4615 = vst [vmem:[#allocation3 + $0x78] sm:$0xff] %v4611
    %4616 = vst [vmem:[#allocation3 + $0x80] sm:$0xff] %v3870
    %4617 = vst [vmem:[#allocation3 + $0x88] sm:$0xff] %v3872
    %4618 = vst [vmem:[#allocation3 + $0x90] sm:$0xff] %v4438
    %4619 = vst [vmem:[#allocation3 + $0x98] sm:$0xff] %v4440
    %4620 = vrot.lane.b32.xlu0 %v3870, 120
    %v4621 = vpop.permute.xlu0 %4620
    %4622 = vrot.lane.b32.xlu0 %v3872, 120
    %v4623 = vpop.permute.xlu0 %4622
    %4624 = vrot.lane.b32.xlu0 %v4438, 120
    %v4625 = vpop.permute.xlu0 %4624
    %4626 = vrot.lane.b32.xlu0 %v4440, 120
    %v4627 = vpop.permute.xlu0 %4626
    %v4628 = vsel %vm569, %v4625, %v4627
    %v4629 = vsel %vm569, %v4623, %v4625
    %v4630 = vsel %vm569, %v4621, %v4623
    %v4631 = vsel %vm569, %v4627, %v4621
    %s4632 = scalar_lea.vmem [#allocation15], 5
    %v4633 = vld [vmem:[%s4632] ss:$8 sm:$0xf]
    %v4635 = vlaneseq
    %v4636 = vshrl.u32 %v4635, 7
    %v4637 = vsub.s32 0, %v4636
    %v4638 = vrot.slane %v4633, %v4637
    %v4639 = vlaneseq
    %v4640 = vshrl.u32 %v4639, 7
    %v4641 = vsub.s32 1, %v4640
    %v4642 = vrot.slane %v4633, %v4641
    %v4643 = vlaneseq
    %v4644 = vshrl.u32 %v4643, 7
    %v4645 = vsub.s32 2, %v4644
    %v4646 = vrot.slane %v4633, %v4645
    %v4647 = vlaneseq
    %v4648 = vshrl.u32 %v4647, 7
    %v4649 = vsub.s32 3, %v4648
    %v4650 = vrot.slane %v4633, %v4649
    %v4655 = vmul.f32 %v4630, %v4638
    %v4656 = vmul.f32 %v4629, %v4642
    %v4657 = vmul.f32 %v4628, %v4646
    %v4658 = vmul.f32 %v4631, %v4650
    %4659 = vst [vmem:[#allocation3 + $0xa0] sm:$0xff] %v4655
    %4660 = vst [vmem:[#allocation3 + $0xa8] sm:$0xff] %v4656
    %4661 = vst [vmem:[#allocation3 + $0xb0] sm:$0xff] %v4657
    %4662 = vst [vmem:[#allocation3 + $0xb8] sm:$0xff] %v4658
    %s4663 = scalar_lea.vmem [#allocation15], 6
    %v4664 = vld [vmem:[%s4663] ss:$8 sm:$0xf]
    %v4666 = vlaneseq
    %v4667 = vshrl.u32 %v4666, 7
    %v4668 = vsub.s32 0, %v4667
    %v4669 = vrot.slane %v4664, %v4668
    %v4670 = vlaneseq
    %v4671 = vshrl.u32 %v4670, 7
    %v4672 = vsub.s32 1, %v4671
    %v4673 = vrot.slane %v4664, %v4672
    %v4674 = vlaneseq
    %v4675 = vshrl.u32 %v4674, 7
    %v4676 = vsub.s32 2, %v4675
    %v4677 = vrot.slane %v4664, %v4676
    %v4678 = vlaneseq
    %v4679 = vshrl.u32 %v4678, 7
    %v4680 = vsub.s32 3, %v4679
    %v4681 = vrot.slane %v4664, %v4680
    %v4686 = vmul.f32 %v4453, %v4669
    %v4687 = vmul.f32 %v4452, %v4673
    %v4688 = vmul.f32 %v4451, %v4677
    %v4689 = vmul.f32 %v4454, %v4681
    %4690 = vst [vmem:[#allocation3 + $0xc0] sm:$0xff] %v4686
    %4691 = vst [vmem:[#allocation3 + $0xc8] sm:$0xff] %v4687
    %4692 = vst [vmem:[#allocation3 + $0xd0] sm:$0xff] %v4688
    %4693 = vst [vmem:[#allocation3 + $0xd8] sm:$0xff] %v4689
    %s4694 = scalar_lea.vmem [#allocation15], 7
    %v4695 = vld [vmem:[%s4694] ss:$8 sm:$0xf]
    %v4697 = vlaneseq
    %v4698 = vshrl.u32 %v4697, 7
    %v4699 = vsub.s32 0, %v4698
    %v4700 = vrot.slane %v4695, %v4699
    %v4701 = vlaneseq
    %v4702 = vshrl.u32 %v4701, 7
    %v4703 = vsub.s32 1, %v4702
    %v4704 = vrot.slane %v4695, %v4703
    %v4705 = vlaneseq
    %v4706 = vshrl.u32 %v4705, 7
    %v4707 = vsub.s32 2, %v4706
    %v4708 = vrot.slane %v4695, %v4707
    %v4709 = vlaneseq
    %v4710 = vshrl.u32 %v4709, 7
    %v4711 = vsub.s32 3, %v4710
    %v4712 = vrot.slane %v4695, %v4711
    %v4717 = vmul.f32 %v4496, %v4700
    %v4718 = vmul.f32 %v4495, %v4704
    %v4719 = vmul.f32 %v4494, %v4708
    %v4720 = vmul.f32 %v4497, %v4712
    %4721 = vst [vmem:[#allocation3 + $0xe0] sm:$0xff] %v4717
    %4722 = vst [vmem:[#allocation3 + $0xe8] sm:$0xff] %v4718
    %4723 = vst [vmem:[#allocation3 + $0xf0] sm:$0xff] %v4719
    %4724 = vst [vmem:[#allocation3 + $0xf8] sm:$0xff] %v4720
    %s4725 = scalar_lea.vmem [#allocation15], 32
    %v4726 = vld [vmem:[%s4725] ss:$8 sm:$0xf]
    %v4728 = vlaneseq
    %v4729 = vshrl.u32 %v4728, 7
    %v4730 = vsub.s32 0, %v4729
    %v4731 = vrot.slane %v4726, %v4730
    %v4732 = vlaneseq
    %v4733 = vshrl.u32 %v4732, 7
    %v4734 = vsub.s32 1, %v4733
    %v4735 = vrot.slane %v4726, %v4734
    %v4736 = vlaneseq
    %v4737 = vshrl.u32 %v4736, 7
    %v4738 = vsub.s32 2, %v4737
    %v4739 = vrot.slane %v4726, %v4738
    %v4740 = vlaneseq
    %v4741 = vshrl.u32 %v4740, 7
    %v4742 = vsub.s32 3, %v4741
    %v4743 = vrot.slane %v4726, %v4742
    %v4748 = vmul.f32 %v4540, %v4731
    %v4749 = vmul.f32 %v4539, %v4735
    %v4750 = vmul.f32 %v4538, %v4739
    %v4751 = vmul.f32 %v4541, %v4743
    %4752 = vst [vmem:[#allocation3 + $0x100] sm:$0xff] %v4748
    %4753 = vst [vmem:[#allocation3 + $0x108] sm:$0xff] %v4749
    %4754 = vst [vmem:[#allocation3 + $0x110] sm:$0xff] %v4750
    %4755 = vst [vmem:[#allocation3 + $0x118] sm:$0xff] %v4751
    %v4756 = vld [vmem:[#allocation14] sm:$0xff]
    %v4757 = vld [vmem:[#allocation14 + $0x8] sm:$0xff]
    %v4758 = vld [vmem:[#allocation3] sm:$0xff]
    %v4759 = vld [vmem:[#allocation3 + $0x8] sm:$0xff]
    %v4760 = vld [vmem:[#allocation3 + $0x10] sm:$0xff]
    %v4761 = vld [vmem:[#allocation3 + $0x18] sm:$0xff]
    %v4762 = vld [vmem:[#allocation3 + $0x20] sm:$0xff]
    %v4763 = vld [vmem:[#allocation3 + $0x28] sm:$0xff]
    %v4764 = vld [vmem:[#allocation3 + $0x30] sm:$0xff]
    %v4765 = vld [vmem:[#allocation3 + $0x38] sm:$0xff]
    %v4766 = vld [vmem:[#allocation3 + $0x40] sm:$0xff]
    %v4767 = vld [vmem:[#allocation3 + $0x48] sm:$0xff]
    %v4768 = vld [vmem:[#allocation3 + $0x50] sm:$0xff]
    %v4769 = vld [vmem:[#allocation3 + $0x58] sm:$0xff]
    %v4770 = vld [vmem:[#allocation3 + $0x60] sm:$0xff]
    %v4771 = vld [vmem:[#allocation3 + $0x68] sm:$0xff]
    %v4772 = vld [vmem:[#allocation3 + $0x70] sm:$0xff]
    %v4773 = vld [vmem:[#allocation3 + $0x78] sm:$0xff]
    %v4774 = vld [vmem:[#allocation3 + $0x80] sm:$0xff]
    %v4775 = vld [vmem:[#allocation3 + $0x88] sm:$0xff]
    %v4776 = vld [vmem:[#allocation3 + $0x90] sm:$0xff]
    %v4777 = vld [vmem:[#allocation3 + $0x98] sm:$0xff]
    %v4778 = vld [vmem:[#allocation3 + $0xa0] sm:$0xff]
    %v4779 = vld [vmem:[#allocation3 + $0xa8] sm:$0xff]
    %v4780 = vld [vmem:[#allocation3 + $0xb0] sm:$0xff]
    %v4781 = vld [vmem:[#allocation3 + $0xb8] sm:$0xff]
    %v4782 = vld [vmem:[#allocation3 + $0xc0] sm:$0xff]
    %v4783 = vld [vmem:[#allocation3 + $0xc8] sm:$0xff]
    %v4784 = vld [vmem:[#allocation3 + $0xd0] sm:$0xff]
    %v4785 = vld [vmem:[#allocation3 + $0xd8] sm:$0xff]
    %v4786 = vld [vmem:[#allocation3 + $0xe0] sm:$0xff]
    %v4787 = vld [vmem:[#allocation3 + $0xe8] sm:$0xff]
    %v4788 = vld [vmem:[#allocation3 + $0xf0] sm:$0xff]
    %v4789 = vld [vmem:[#allocation3 + $0xf8] sm:$0xff]
    %v4790 = vld [vmem:[#allocation3 + $0x100] sm:$0xff]
    %v4791 = vld [vmem:[#allocation3 + $0x108] sm:$0xff]
    %v4792 = vld [vmem:[#allocation3 + $0x110] sm:$0xff]
    %v4793 = vld [vmem:[#allocation3 + $0x118] sm:$0xff]
    %v4794 = vld [vmem:[%s6] sm:$0xff]
    %v4795 = vld [vmem:[%s6 + $0x8] sm:$0xff]
    %4797 = vset.pattern.permute.xlu0 0
    %4798 = vperm.xlu0 %4797, %v4794
    %v4799 = vpop.permute.xlu0 %4798
    %4802 = vset.pattern.permute.xlu0 0
    %4803 = vperm.xlu0 %4802, %v4795
    %v4804 = vpop.permute.xlu0 %4803
    %vm4806 = vcmask 588800
    %v4808 = vsel %vm4806, %v4756, 0
    %v4811 = vsel %vm4806, %v4757, 0
    %4813 = vmatprep.subr.mxu0 %v4759
    %4814 = vmatpush1.msra.mxu0 %v4758
    %4815 = vmatprep.subr.mxu0 %v4763
    %4816 = vmatpush1.msra.mxu0 %v4762
    %4817 = vmatprep.subr.mxu0 %v4767
    %4818 = vmatpush1.msra.mxu0 %v4766
    %4819 = vmatprep.subr.mxu0 %v4771
    %4820 = vmatpush1.msra.mxu0 %v4770
    %4821 = vmatprep.subr.mxu0 %v4775
    %4822 = vmatpush1.msra.mxu0 %v4774
    %4823 = vmatprep.subr.mxu0 %v4779
    %4824 = vmatpush1.msra.mxu0 %v4778
    %4825 = vmatprep.subr.mxu0 %v4783
    %4826 = vmatpush1.msra.mxu0 %v4782
    %4827 = vmatprep.subr.mxu0 %v4787
    %4828 = vmatpush1.msra.mxu0 %v4786
    %4829 = vmatprep.subr.mxu0 %v4791
    %4830 = vmatpush1.msra.mxu0 %v4790
    %4831 = vmatprep.subr.mxu0 0.0
    %4832 = vmatpush1.msra.mxu0 0.0
    %4833 = vmatprep.subr.mxu0 0.0
    %4834 = vmatpush1.msra.mxu0 0.0
    %4835 = vmatprep.subr.mxu0 0.0
    %4836 = vmatpush1.msra.mxu0 0.0
    %4837 = vmatprep.subr.mxu0 0.0
    %4838 = vmatpush1.msra.mxu0 0.0
    %4839 = vmatprep.subr.mxu0 0.0
    %4840 = vmatpush1.msra.mxu0 0.0
    %4841 = vmatprep.subr.mxu0 0.0
    %4842 = vmatpush1.msra.mxu0 0.0
    %4843 = vmatprep.subr.mxu0 0.0
    %4844 = vmatpush1.msra.mxu0 0.0
    %4845 = vmatprep.subr.mxu0 0.0
    %4846 = vmatpush1.msra.mxu0 0.0
    %4847 = vmatprep.subr.mxu0 0.0
    %4848 = vmatpush1.msra.mxu0 0.0
    %4849 = vmatprep.subr.mxu0 0.0
    %4850 = vmatpush1.msra.mxu0 0.0
    %4851 = vmatprep.subr.mxu0 0.0
    %4852 = vmatpush1.msra.mxu0 0.0
    %4853 = vmatprep.subr.mxu0 0.0
    %4854 = vmatpush1.msra.mxu0 0.0
    %4855 = vmatprep.subr.mxu0 0.0
    %4856 = vmatpush1.msra.mxu0 0.0
    %4857 = vmatprep.subr.mxu0 0.0
    %4858 = vmatpush1.msra.mxu0 0.0
    %4859 = vmatprep.subr.mxu0 0.0
    %4860 = vmatpush1.msra.mxu0 0.0
    %4861 = vmatprep.subr.mxu0 0.0
    %4862 = vmatpush1.msra.mxu0 0.0
    %4863 = vmatprep.subr.mxu0 0.0
    %4864 = vmatpush1.msra.mxu0 0.0
    %4865 = vmatprep.subr.mxu0 0.0
    %4866 = vmatpush1.msra.mxu0 0.0
    %4867 = vmatprep.subr.mxu0 0.0
    %4868 = vmatpush1.msra.mxu0 0.0
    %4869 = vmatprep.subr.mxu0 0.0
    %4870 = vmatpush1.msra.mxu0 0.0
    %4871 = vmatprep.subr.mxu0 0.0
    %4872 = vmatpush1.msra.mxu0 0.0
    %4873 = vmatprep.subr.mxu0 0.0
    %4874 = vmatpush1.msra.mxu0 0.0
    %4875 = vmatprep.subr.mxu0 0.0
    %4876 = vmatpush1.msra.mxu0 0.0
    %4877 = vmatprep.mubr.f32.mxu0 0.0
    %4878 = vmatmul.mubr.f32.gmra.mrb[0].mxu0 %v4808
    %v4879 = vpop.f32.mrb[0].mxu0
    %v4880 = vadd.f32 %v4799, %v4879
    %v4881 = vpop.f32.mrb[0].mxu0
    %v4882 = vadd.f32 %v4799, %v4881
    %4883 = vmatprep.mubr.f32.mxu0 0.0
    %4884 = vmatmul.mubr.f32.gmra.mrb[0].mxu0 %v4811
    %v4885 = vpop.f32.mrb[0].mxu0
    %v4886 = vadd.f32 %v4804, %v4885
    %v4887 = vpop.f32.mrb[0].mxu0
    %v4888 = vadd.f32 %v4804, %v4887
    %4889 = vdwg.mxu0
    %4890 = vmatprep.subr.mxu0 %v4761
    %4891 = vmatpush1.msra.mxu0 %v4760
    %4892 = vmatprep.subr.mxu0 %v4765
    %4893 = vmatpush1.msra.mxu0 %v4764
    %4894 = vmatprep.subr.mxu0 %v4769
    %4895 = vmatpush1.msra.mxu0 %v4768
    %4896 = vmatprep.subr.mxu0 %v4773
    %4897 = vmatpush1.msra.mxu0 %v4772
    %4898 = vmatprep.subr.mxu0 %v4777
    %4899 = vmatpush1.msra.mxu0 %v4776
    %4900 = vmatprep.subr.mxu0 %v4781
    %4901 = vmatpush1.msra.mxu0 %v4780
    %4902 = vmatprep.subr.mxu0 %v4785
    %4903 = vmatpush1.msra.mxu0 %v4784
    %4904 = vmatprep.subr.mxu0 %v4789
    %4905 = vmatpush1.msra.mxu0 %v4788
    %4906 = vmatprep.subr.mxu0 %v4793
    %4907 = vmatpush1.msra.mxu0 %v4792
    %4908 = vmatprep.subr.mxu0 0.0
    %4909 = vmatpush1.msra.mxu0 0.0
    %4910 = vmatprep.subr.mxu0 0.0
    %4911 = vmatpush1.msra.mxu0 0.0
    %4912 = vmatprep.subr.mxu0 0.0
    %4913 = vmatpush1.msra.mxu0 0.0
    %4914 = vmatprep.subr.mxu0 0.0
    %4915 = vmatpush1.msra.mxu0 0.0
    %4916 = vmatprep.subr.mxu0 0.0
    %4917 = vmatpush1.msra.mxu0 0.0
    %4918 = vmatprep.subr.mxu0 0.0
    %4919 = vmatpush1.msra.mxu0 0.0
    %4920 = vmatprep.subr.mxu0 0.0
    %4921 = vmatpush1.msra.mxu0 0.0
    %4922 = vmatprep.subr.mxu0 0.0
    %4923 = vmatpush1.msra.mxu0 0.0
    %4924 = vmatprep.subr.mxu0 0.0
    %4925 = vmatpush1.msra.mxu0 0.0
    %4926 = vmatprep.subr.mxu0 0.0
    %4927 = vmatpush1.msra.mxu0 0.0
    %4928 = vmatprep.subr.mxu0 0.0
    %4929 = vmatpush1.msra.mxu0 0.0
    %4930 = vmatprep.subr.mxu0 0.0
    %4931 = vmatpush1.msra.mxu0 0.0
    %4932 = vmatprep.subr.mxu0 0.0
    %4933 = vmatpush1.msra.mxu0 0.0
    %4934 = vmatprep.subr.mxu0 0.0
    %4935 = vmatpush1.msra.mxu0 0.0
    %4936 = vmatprep.subr.mxu0 0.0
    %4937 = vmatpush1.msra.mxu0 0.0
    %4938 = vmatprep.subr.mxu0 0.0
    %4939 = vmatpush1.msra.mxu0 0.0
    %4940 = vmatprep.subr.mxu0 0.0
    %4941 = vmatpush1.msra.mxu0 0.0
    %4942 = vmatprep.subr.mxu0 0.0
    %4943 = vmatpush1.msra.mxu0 0.0
    %4944 = vmatprep.subr.mxu0 0.0
    %4945 = vmatpush1.msra.mxu0 0.0
    %4946 = vmatprep.subr.mxu0 0.0
    %4947 = vmatpush1.msra.mxu0 0.0
    %4948 = vmatprep.subr.mxu0 0.0
    %4949 = vmatpush1.msra.mxu0 0.0
    %4950 = vmatprep.subr.mxu0 0.0
    %4951 = vmatpush1.msra.mxu0 0.0
    %4952 = vmatprep.subr.mxu0 0.0
    %4953 = vmatpush1.msra.mxu0 0.0
    %4954 = vmatprep.mubr.f32.mxu0 0.0
    %4955 = vmatmul.mubr.f32.gmra.mrb[0].mxu0 %v4808
    %v4956 = vpop.f32.mrb[0].mxu0
    %v4957 = vadd.f32 %v4799, %v4956
    %v4958 = vpop.f32.mrb[0].mxu0
    %v4959 = vadd.f32 %v4799, %v4958
    %4960 = vmatprep.mubr.f32.mxu0 0.0
    %4961 = vmatmul.mubr.f32.gmra.mrb[0].mxu0 %v4811
    %v4962 = vpop.f32.mrb[0].mxu0
    %v4963 = vadd.f32 %v4804, %v4962
    %v4964 = vpop.f32.mrb[0].mxu0
    %v4965 = vadd.f32 %v4804, %v4964
    %4966 = vdwg.mxu0
    %v4967 = vmax.f32 %v4880, 0.0
    %v4968 = vmax.f32 %v4882, 0.0
    %v4969 = vmax.f32 %v4957, 0.0
    %v4970 = vmax.f32 %v4959, 0.0
    %v4971 = vmax.f32 %v4886, 0.0
    %v4972 = vmax.f32 %v4888, 0.0
    %v4973 = vmax.f32 %v4963, 0.0
    %v4974 = vmax.f32 %v4965, 0.0
    %4975 = vrot.lane.b32.xlu0 %v4967, 120
    %v4976 = vpop.permute.xlu0 %4975
    %4977 = vrot.lane.b32.xlu0 %v4971, 120
    %v4978 = vpop.permute.xlu0 %4977
    %4979 = vrot.lane.b32.xlu0 %v4968, 120
    %v4980 = vpop.permute.xlu0 %4979
    %4981 = vrot.lane.b32.xlu0 %v4972, 120
    %v4982 = vpop.permute.xlu0 %4981
    %4983 = vrot.lane.b32.xlu0 %v4969, 120
    %v4984 = vpop.permute.xlu0 %4983
    %4985 = vrot.lane.b32.xlu0 %v4973, 120
    %v4986 = vpop.permute.xlu0 %4985
    %4987 = vrot.lane.b32.xlu0 %v4970, 120
    %v4988 = vpop.permute.xlu0 %4987
    %4989 = vrot.lane.b32.xlu0 %v4974, 120
    %v4990 = vpop.permute.xlu0 %4989
    %v4991 = vsel %vm569, %v4984, %v4988
    %v4992 = vsel %vm569, %v4986, %v4990
    %v4993 = vsel %vm569, %v4980, %v4984
    %v4994 = vsel %vm569, %v4982, %v4986
    %v4995 = vsel %vm569, %v4976, %v4980
    %v4996 = vsel %vm569, %v4978, %v4982
    %v4997 = vsel %vm569, %v4988, %v4976
    %v4998 = vsel %vm569, %v4990, %v4978
    %v4999 = vmax.f32 %v4967, %v4995
    %v5000 = vmax.f32 %v4968, %v4993
    %v5001 = vmax.f32 %v4969, %v4991
    %v5002 = vmax.f32 %v4970, %v4997
    %v5003 = vmax.f32 %v4971, %v4996
    %v5004 = vmax.f32 %v4972, %v4994
    %v5005 = vmax.f32 %v4973, %v4992
    %v5006 = vmax.f32 %v4974, %v4998
    %5007 = vrot.lane.b32.xlu0 %v4999, 64
    %v5008 = vpop.permute.xlu0 %5007
    %5009 = vrot.lane.b32.xlu0 %v5003, 64
    %v5010 = vpop.permute.xlu0 %5009
    %5011 = vrot.lane.b32.xlu0 %v5000, 64
    %v5012 = vpop.permute.xlu0 %5011
    %5013 = vrot.lane.b32.xlu0 %v5004, 64
    %v5014 = vpop.permute.xlu0 %5013
    %5015 = vrot.lane.b32.xlu0 %v5001, 64
    %v5016 = vpop.permute.xlu0 %5015
    %5017 = vrot.lane.b32.xlu0 %v5005, 64
    %v5018 = vpop.permute.xlu0 %5017
    %5019 = vrot.lane.b32.xlu0 %v5002, 64
    %v5020 = vpop.permute.xlu0 %5019
    %5021 = vrot.lane.b32.xlu0 %v5006, 64
    %v5022 = vpop.permute.xlu0 %5021
    %v5023 = vsel %vm4493, %v5016, %v5020
    %v5024 = vsel %vm4493, %v5018, %v5022
    %v5025 = vsel %vm4493, %v5012, %v5016
    %v5026 = vsel %vm4493, %v5014, %v5018
    %v5027 = vsel %vm4493, %v5008, %v5012
    %v5028 = vsel %vm4493, %v5010, %v5014
    %v5029 = vsel %vm4493, %v5020, %v5008
    %v5030 = vsel %vm4493, %v5022, %v5010
    %v5031 = vmax.f32 %v4999, %v5027
    %v5032 = vmax.f32 %v5000, %v5025
    %v5033 = vmax.f32 %v5001, %v5023
    %v5034 = vmax.f32 %v5002, %v5029
    %v5035 = vmax.f32 %v5003, %v5028
    %v5036 = vmax.f32 %v5004, %v5026
    %v5037 = vmax.f32 %v5005, %v5024
    %v5038 = vmax.f32 %v5006, %v5030
    %v5039 = vld [vmem:[#allocation17] sm:$0xff]
    %v5040 = vld [vmem:[#allocation17 + $0x8] sm:$0xff]
    %v5041 = vld [vmem:[#allocation17 + $0x10] sm:$0xff]
    %v5042 = vld [vmem:[#allocation17 + $0x18] sm:$0xff]
    %v5043 = vld [vmem:[#allocation17 + $0x20] sm:$0xff]
    %v5044 = vld [vmem:[#allocation17 + $0x28] sm:$0xff]
    %v5045 = vld [vmem:[#allocation17 + $0x30] sm:$0xff]
    %v5046 = vld [vmem:[#allocation17 + $0x38] sm:$0xff]
    %v5047 = vld [vmem:[#allocation17 + $0x40] sm:$0xff]
    %v5048 = vld [vmem:[#allocation17 + $0x48] sm:$0xff]
    %v5049 = vld [vmem:[#allocation17 + $0x50] sm:$0xff]
    %v5050 = vld [vmem:[#allocation17 + $0x58] sm:$0xff]
    %v5051 = vld [vmem:[#allocation17 + $0x60] sm:$0xff]
    %v5052 = vld [vmem:[#allocation17 + $0x68] sm:$0xff]
    %v5053 = vld [vmem:[#allocation17 + $0x70] sm:$0xff]
    %v5054 = vld [vmem:[#allocation17 + $0x78] sm:$0xff]
    %v5055 = vld [vmem:[#allocation17 + $0x80] sm:$0xff]
    %v5056 = vld [vmem:[#allocation17 + $0x88] sm:$0xff]
    %v5057 = vld [vmem:[#allocation17 + $0x90] sm:$0xff]
    %v5058 = vld [vmem:[#allocation17 + $0x98] sm:$0xff]
    %v5059 = vld [vmem:[#allocation17 + $0xa0] sm:$0xff]
    %v5060 = vld [vmem:[#allocation17 + $0xa8] sm:$0xff]
    %v5061 = vld [vmem:[#allocation17 + $0xb0] sm:$0xff]
    %v5062 = vld [vmem:[#allocation17 + $0xb8] sm:$0xff]
    %v5063 = vld [vmem:[#allocation17 + $0xc0] sm:$0xff]
    %v5064 = vld [vmem:[#allocation17 + $0xc8] sm:$0xff]
    %v5065 = vld [vmem:[#allocation17 + $0xd0] sm:$0xff]
    %v5066 = vld [vmem:[#allocation17 + $0xd8] sm:$0xff]
    %v5067 = vld [vmem:[#allocation17 + $0xe0] sm:$0xff]
    %v5068 = vld [vmem:[#allocation17 + $0xe8] sm:$0xff]
    %v5069 = vld [vmem:[#allocation17 + $0xf0] sm:$0xff]
    %v5070 = vld [vmem:[#allocation17 + $0xf8] sm:$0xff]
    %v5071 = vld [vmem:[#allocation17 + $0x100] sm:$0xff]
    %v5072 = vld [vmem:[#allocation17 + $0x108] sm:$0xff]
    %v5073 = vld [vmem:[#allocation17 + $0x110] sm:$0xff]
    %v5074 = vld [vmem:[#allocation17 + $0x118] sm:$0xff]
    %v5075 = vld [vmem:[#allocation17 + $0x120] sm:$0xff]
    %v5076 = vld [vmem:[#allocation17 + $0x128] sm:$0xff]
    %v5077 = vld [vmem:[#allocation17 + $0x130] sm:$0xff]
    %v5078 = vld [vmem:[#allocation17 + $0x138] sm:$0xff]
    %v5079 = vld [vmem:[#allocation17 + $0x140] sm:$0xff]
    %v5080 = vld [vmem:[#allocation17 + $0x148] sm:$0xff]
    %v5081 = vld [vmem:[#allocation17 + $0x150] sm:$0xff]
    %v5082 = vld [vmem:[#allocation17 + $0x158] sm:$0xff]
    %v5083 = vld [vmem:[#allocation17 + $0x160] sm:$0xff]
    %v5084 = vld [vmem:[#allocation17 + $0x168] sm:$0xff]
    %v5085 = vld [vmem:[#allocation17 + $0x170] sm:$0xff]
    %v5086 = vld [vmem:[#allocation17 + $0x178] sm:$0xff]
    %v5087 = vld [vmem:[#allocation17 + $0x180] sm:$0xff]
    %v5088 = vld [vmem:[#allocation17 + $0x188] sm:$0xff]
    %v5089 = vld [vmem:[#allocation17 + $0x190] sm:$0xff]
    %v5090 = vld [vmem:[#allocation17 + $0x198] sm:$0xff]
    %v5091 = vld [vmem:[#allocation17 + $0x1a0] sm:$0xff]
    %v5092 = vld [vmem:[#allocation17 + $0x1a8] sm:$0xff]
    %v5093 = vld [vmem:[#allocation17 + $0x1b0] sm:$0xff]
    %v5094 = vld [vmem:[#allocation17 + $0x1b8] sm:$0xff]
    %v5095 = vld [vmem:[#allocation17 + $0x1c0] sm:$0xff]
    %v5096 = vld [vmem:[#allocation17 + $0x1c8] sm:$0xff]
    %v5097 = vld [vmem:[#allocation17 + $0x1d0] sm:$0xff]
    %v5098 = vld [vmem:[#allocation17 + $0x1d8] sm:$0xff]
    %v5099 = vld [vmem:[#allocation17 + $0x1e0] sm:$0xff]
    %v5100 = vld [vmem:[#allocation17 + $0x1e8] sm:$0xff]
    %v5101 = vld [vmem:[#allocation17 + $0x1f0] sm:$0xff]
    %v5102 = vld [vmem:[#allocation17 + $0x1f8] sm:$0xff]
    %5103 = vmatprep.subr.mxu0 0.0
    %5104 = vmatpush1.msra.mxu0 %v5039
    %5105 = vmatprep.subr.mxu0 0.0
    %5106 = vmatpush1.msra.mxu0 %v5040
    %5107 = vmatprep.subr.mxu0 0.0
    %5108 = vmatpush1.msra.mxu0 %v5041
    %5109 = vmatprep.subr.mxu0 0.0
    %5110 = vmatpush1.msra.mxu0 %v5042
    %5111 = vmatprep.subr.mxu0 0.0
    %5112 = vmatpush1.msra.mxu0 %v5043
    %5113 = vmatprep.subr.mxu0 0.0
    %5114 = vmatpush1.msra.mxu0 %v5044
    %5115 = vmatprep.subr.mxu0 0.0
    %5116 = vmatpush1.msra.mxu0 %v5045
    %5117 = vmatprep.subr.mxu0 0.0
    %5118 = vmatpush1.msra.mxu0 %v5046
    %5119 = vmatprep.subr.mxu0 0.0
    %5120 = vmatpush1.msra.mxu0 %v5047
    %5121 = vmatprep.subr.mxu0 0.0
    %5122 = vmatpush1.msra.mxu0 %v5048
    %5123 = vmatprep.subr.mxu0 0.0
    %5124 = vmatpush1.msra.mxu0 %v5049
    %5125 = vmatprep.subr.mxu0 0.0
    %5126 = vmatpush1.msra.mxu0 %v5050
    %5127 = vmatprep.subr.mxu0 0.0
    %5128 = vmatpush1.msra.mxu0 %v5051
    %5129 = vmatprep.subr.mxu0 0.0
    %5130 = vmatpush1.msra.mxu0 %v5052
    %5131 = vmatprep.subr.mxu0 0.0
    %5132 = vmatpush1.msra.mxu0 %v5053
    %5133 = vmatprep.subr.mxu0 0.0
    %5134 = vmatpush1.msra.mxu0 %v5054
    %5135 = vmatprep.subr.mxu0 0.0
    %5136 = vmatpush1.msra.mxu0 %v5055
    %5137 = vmatprep.subr.mxu0 0.0
    %5138 = vmatpush1.msra.mxu0 %v5056
    %5139 = vmatprep.subr.mxu0 0.0
    %5140 = vmatpush1.msra.mxu0 %v5057
    %5141 = vmatprep.subr.mxu0 0.0
    %5142 = vmatpush1.msra.mxu0 %v5058
    %5143 = vmatprep.subr.mxu0 0.0
    %5144 = vmatpush1.msra.mxu0 %v5059
    %5145 = vmatprep.subr.mxu0 0.0
    %5146 = vmatpush1.msra.mxu0 %v5060
    %5147 = vmatprep.subr.mxu0 0.0
    %5148 = vmatpush1.msra.mxu0 %v5061
    %5149 = vmatprep.subr.mxu0 0.0
    %5150 = vmatpush1.msra.mxu0 %v5062
    %5151 = vmatprep.subr.mxu0 0.0
    %5152 = vmatpush1.msra.mxu0 %v5063
    %5153 = vmatprep.subr.mxu0 0.0
    %5154 = vmatpush1.msra.mxu0 %v5064
    %5155 = vmatprep.subr.mxu0 0.0
    %5156 = vmatpush1.msra.mxu0 %v5065
    %5157 = vmatprep.subr.mxu0 0.0
    %5158 = vmatpush1.msra.mxu0 %v5066
    %5159 = vmatprep.subr.mxu0 0.0
    %5160 = vmatpush1.msra.mxu0 %v5067
    %5161 = vmatprep.subr.mxu0 0.0
    %5162 = vmatpush1.msra.mxu0 %v5068
    %5163 = vmatprep.subr.mxu0 0.0
    %5164 = vmatpush1.msra.mxu0 %v5069
    %5165 = vmatprep.subr.mxu0 0.0
    %5166 = vmatpush1.msra.mxu0 %v5070
    %5167 = vmatprep.mubr.f32.mxu0 %v5032
    %5168 = vmatmul.mubr.f32.gmra.mrb[0].mxu0 %v5031
    %v5169 = vpop.f32.mrb[0].mxu0
    %v5170 = vadd.f32 0.0, %v5169
    %v5171 = vpop.f32.mrb[0].mxu0
    %5172 = vmatprep.mubr.f32.mxu0 %v5036
    %5173 = vmatmul.mubr.f32.gmra.mrb[0].mxu0 %v5035
    %v5174 = vpop.f32.mrb[0].mxu0
    %v5175 = vadd.f32 0.0, %v5174
    %v5176 = vpop.f32.mrb[0].mxu0
    %5177 = vdwg.mxu0
    %5178 = vmatprep.subr.mxu0 0.0
    %5179 = vmatpush1.msra.mxu0 %v5071
    %5180 = vmatprep.subr.mxu0 0.0
    %5181 = vmatpush1.msra.mxu0 %v5072
    %5182 = vmatprep.subr.mxu0 0.0
    %5183 = vmatpush1.msra.mxu0 %v5073
    %5184 = vmatprep.subr.mxu0 0.0
    %5185 = vmatpush1.msra.mxu0 %v5074
    %5186 = vmatprep.subr.mxu0 0.0
    %5187 = vmatpush1.msra.mxu0 %v5075
    %5188 = vmatprep.subr.mxu0 0.0
    %5189 = vmatpush1.msra.mxu0 %v5076
    %5190 = vmatprep.subr.mxu0 0.0
    %5191 = vmatpush1.msra.mxu0 %v5077
    %5192 = vmatprep.subr.mxu0 0.0
    %5193 = vmatpush1.msra.mxu0 %v5078
    %5194 = vmatprep.subr.mxu0 0.0
    %5195 = vmatpush1.msra.mxu0 %v5079
    %5196 = vmatprep.subr.mxu0 0.0
    %5197 = vmatpush1.msra.mxu0 %v5080
    %5198 = vmatprep.subr.mxu0 0.0
    %5199 = vmatpush1.msra.mxu0 %v5081
    %5200 = vmatprep.subr.mxu0 0.0
    %5201 = vmatpush1.msra.mxu0 %v5082
    %5202 = vmatprep.subr.mxu0 0.0
    %5203 = vmatpush1.msra.mxu0 %v5083
    %5204 = vmatprep.subr.mxu0 0.0
    %5205 = vmatpush1.msra.mxu0 %v5084
    %5206 = vmatprep.subr.mxu0 0.0
    %5207 = vmatpush1.msra.mxu0 %v5085
    %5208 = vmatprep.subr.mxu0 0.0
    %5209 = vmatpush1.msra.mxu0 %v5086
    %5210 = vmatprep.subr.mxu0 0.0
    %5211 = vmatpush1.msra.mxu0 %v5087
    %5212 = vmatprep.subr.mxu0 0.0
    %5213 = vmatpush1.msra.mxu0 %v5088
    %5214 = vmatprep.subr.mxu0 0.0
    %5215 = vmatpush1.msra.mxu0 %v5089
    %5216 = vmatprep.subr.mxu0 0.0
    %5217 = vmatpush1.msra.mxu0 %v5090
    %5218 = vmatprep.subr.mxu0 0.0
    %5219 = vmatpush1.msra.mxu0 %v5091
    %5220 = vmatprep.subr.mxu0 0.0
    %5221 = vmatpush1.msra.mxu0 %v5092
    %5222 = vmatprep.subr.mxu0 0.0
    %5223 = vmatpush1.msra.mxu0 %v5093
    %5224 = vmatprep.subr.mxu0 0.0
    %5225 = vmatpush1.msra.mxu0 %v5094
    %5226 = vmatprep.subr.mxu0 0.0
    %5227 = vmatpush1.msra.mxu0 %v5095
    %5228 = vmatprep.subr.mxu0 0.0
    %5229 = vmatpush1.msra.mxu0 %v5096
    %5230 = vmatprep.subr.mxu0 0.0
    %5231 = vmatpush1.msra.mxu0 %v5097
    %5232 = vmatprep.subr.mxu0 0.0
    %5233 = vmatpush1.msra.mxu0 %v5098
    %5234 = vmatprep.subr.mxu0 0.0
    %5235 = vmatpush1.msra.mxu0 %v5099
    %5236 = vmatprep.subr.mxu0 0.0
    %5237 = vmatpush1.msra.mxu0 %v5100
    %5238 = vmatprep.subr.mxu0 0.0
    %5239 = vmatpush1.msra.mxu0 %v5101
    %5240 = vmatprep.subr.mxu0 0.0
    %5241 = vmatpush1.msra.mxu0 %v5102
    %5242 = vmatprep.mubr.f32.mxu0 %v5034
    %5243 = vmatmul.mubr.f32.gmra.mrb[0].mxu0 %v5033
    %v5244 = vpop.f32.mrb[0].mxu0
    %v5245 = vadd.f32 %v5170, %v5244
    %v5246 = vpop.f32.mrb[0].mxu0
    %5247 = vmatprep.mubr.f32.mxu0 %v5038
    %5248 = vmatmul.mubr.f32.gmra.mrb[0].mxu0 %v5037
    %v5249 = vpop.f32.mrb[0].mxu0
    %v5250 = vadd.f32 %v5175, %v5249
    %v5251 = vpop.f32.mrb[0].mxu0
    %5252 = vdwg.mxu0
    %vm5253 = vcmask 64512
    %5254 = vst.msk [vmem:[#allocation4] sm:$0xff] %vm5253, %v5245
    %5255 = vst.msk [vmem:[#allocation4 + $0x8] sm:$0xff] %vm5253, %v5250
    %5258 = vrot.lane.b32.xlu0 %v5245, 120
    %v5259 = vpop.permute.xlu0 %5258
    %5260 = vrot.lane.b32.xlu0 %v5250, 120
    %v5261 = vpop.permute.xlu0 %5260
    %5264 = vst.msk [vmem:[#allocation4 + $0x10] sm:$0xff] %vm5253, %v5259
    %5265 = vst.msk [vmem:[#allocation4 + $0x18] sm:$0xff] %vm5253, %v5261
    %5266 = vrot.lane.b32.xlu0 %v5245, 112
    %v5267 = vpop.permute.xlu0 %5266
    %5268 = vrot.lane.b32.xlu0 %v5250, 112
    %v5269 = vpop.permute.xlu0 %5268
    %5272 = vst.msk [vmem:[#allocation4 + $0x20] sm:$0xff] %vm5253, %v5267
    %5273 = vst.msk [vmem:[#allocation4 + $0x28] sm:$0xff] %vm5253, %v5269
    %5274 = vrot.lane.b32.xlu0 %v5245, 104
    %v5275 = vpop.permute.xlu0 %5274
    %5276 = vrot.lane.b32.xlu0 %v5250, 104
    %v5277 = vpop.permute.xlu0 %5276
    %5280 = vst.msk [vmem:[#allocation4 + $0x30] sm:$0xff] %vm5253, %v5275
    %5281 = vst.msk [vmem:[#allocation4 + $0x38] sm:$0xff] %vm5253, %v5277
    %5282 = vrot.lane.b32.xlu0 %v5245, 96
    %v5283 = vpop.permute.xlu0 %5282
    %5284 = vrot.lane.b32.xlu0 %v5250, 96
    %v5285 = vpop.permute.xlu0 %5284
    %5288 = vst.msk [vmem:[#allocation4 + $0x40] sm:$0xff] %vm5253, %v5283
    %5289 = vst.msk [vmem:[#allocation4 + $0x48] sm:$0xff] %vm5253, %v5285
    %5290 = vrot.lane.b32.xlu0 %v5245, 88
    %v5291 = vpop.permute.xlu0 %5290
    %5292 = vrot.lane.b32.xlu0 %v5250, 88
    %v5293 = vpop.permute.xlu0 %5292
    %5296 = vst.msk [vmem:[#allocation4 + $0x50] sm:$0xff] %vm5253, %v5291
    %5297 = vst.msk [vmem:[#allocation4 + $0x58] sm:$0xff] %vm5253, %v5293
    %5298 = vrot.lane.b32.xlu0 %v5245, 80
    %v5299 = vpop.permute.xlu0 %5298
    %5300 = vrot.lane.b32.xlu0 %v5250, 80
    %v5301 = vpop.permute.xlu0 %5300
    %5304 = vst.msk [vmem:[#allocation4 + $0x60] sm:$0xff] %vm5253, %v5299
    %5305 = vst.msk [vmem:[#allocation4 + $0x68] sm:$0xff] %vm5253, %v5301
    %5306 = vrot.lane.b32.xlu0 %v5245, 72
    %v5307 = vpop.permute.xlu0 %5306
    %5308 = vrot.lane.b32.xlu0 %v5250, 72
    %v5309 = vpop.permute.xlu0 %5308
    %5312 = vst.msk [vmem:[#allocation4 + $0x70] sm:$0xff] %vm5253, %v5307
    %5313 = vst.msk [vmem:[#allocation4 + $0x78] sm:$0xff] %vm5253, %v5309
    %5314 = vrot.lane.b32.xlu0 %v5245, 64
    %v5315 = vpop.permute.xlu0 %5314
    %5316 = vrot.lane.b32.xlu0 %v5250, 64
    %v5317 = vpop.permute.xlu0 %5316
    %5320 = vst.msk [vmem:[#allocation4 + $0x80] sm:$0xff] %vm5253, %v5315
    %5321 = vst.msk [vmem:[#allocation4 + $0x88] sm:$0xff] %vm5253, %v5317
    %5322 = vrot.lane.b32.xlu0 %v5245, 56
    %v5323 = vpop.permute.xlu0 %5322
    %5324 = vrot.lane.b32.xlu0 %v5250, 56
    %v5325 = vpop.permute.xlu0 %5324
    %5328 = vst.msk [vmem:[#allocation4 + $0x90] sm:$0xff] %vm5253, %v5323
    %5329 = vst.msk [vmem:[#allocation4 + $0x98] sm:$0xff] %vm5253, %v5325
    %5330 = vrot.lane.b32.xlu0 %v5245, 48
    %v5331 = vpop.permute.xlu0 %5330
    %5332 = vrot.lane.b32.xlu0 %v5250, 48
    %v5333 = vpop.permute.xlu0 %5332
    %5336 = vst.msk [vmem:[#allocation4 + $0xa0] sm:$0xff] %vm5253, %v5331
    %5337 = vst.msk [vmem:[#allocation4 + $0xa8] sm:$0xff] %vm5253, %v5333
    %5338 = vrot.lane.b32.xlu0 %v5245, 40
    %v5339 = vpop.permute.xlu0 %5338
    %5340 = vrot.lane.b32.xlu0 %v5250, 40
    %v5341 = vpop.permute.xlu0 %5340
    %5344 = vst.msk [vmem:[#allocation4 + $0xb0] sm:$0xff] %vm5253, %v5339
    %5345 = vst.msk [vmem:[#allocation4 + $0xb8] sm:$0xff] %vm5253, %v5341
    %5346 = vrot.lane.b32.xlu0 %v5245, 32
    %v5347 = vpop.permute.xlu0 %5346
    %5348 = vrot.lane.b32.xlu0 %v5250, 32
    %v5349 = vpop.permute.xlu0 %5348
    %5352 = vst.msk [vmem:[#allocation4 + $0xc0] sm:$0xff] %vm5253, %v5347
    %5353 = vst.msk [vmem:[#allocation4 + $0xc8] sm:$0xff] %vm5253, %v5349
    %5354 = vrot.lane.b32.xlu0 %v5245, 24
    %v5355 = vpop.permute.xlu0 %5354
    %5356 = vrot.lane.b32.xlu0 %v5250, 24
    %v5357 = vpop.permute.xlu0 %5356
    %5360 = vst.msk [vmem:[#allocation4 + $0xd0] sm:$0xff] %vm5253, %v5355
    %5361 = vst.msk [vmem:[#allocation4 + $0xd8] sm:$0xff] %vm5253, %v5357
    %5362 = vrot.lane.b32.xlu0 %v5245, 16
    %v5363 = vpop.permute.xlu0 %5362
    %5364 = vrot.lane.b32.xlu0 %v5250, 16
    %v5365 = vpop.permute.xlu0 %5364
    %5368 = vst.msk [vmem:[#allocation4 + $0xe0] sm:$0xff] %vm5253, %v5363
    %5369 = vst.msk [vmem:[#allocation4 + $0xe8] sm:$0xff] %vm5253, %v5365
    %5370 = vrot.lane.b32.xlu0 %v5245, 8
    %v5371 = vpop.permute.xlu0 %5370
    %5372 = vrot.lane.b32.xlu0 %v5250, 8
    %v5373 = vpop.permute.xlu0 %5372
    %5376 = vst.msk [vmem:[#allocation4 + $0xf0] sm:$0xff] %vm5253, %v5371
    %5377 = vst.msk [vmem:[#allocation4 + $0xf8] sm:$0xff] %vm5253, %v5373
    %v5378 = vld [vmem:[#allocation18] sm:$0xff]
    %v5379 = vld [vmem:[#allocation18 + $0x8] sm:$0xff]
    %v5380 = vld [vmem:[#allocation18 + $0x10] sm:$0xff]
    %v5381 = vld [vmem:[#allocation18 + $0x18] sm:$0xff]
    %v5382 = vld [vmem:[#allocation18 + $0x20] sm:$0xff]
    %v5383 = vld [vmem:[#allocation18 + $0x28] sm:$0xff]
    %v5384 = vld [vmem:[#allocation18 + $0x30] sm:$0xff]
    %v5385 = vld [vmem:[#allocation18 + $0x38] sm:$0xff]
    %v5386 = vld [vmem:[#allocation4] sm:$0xff]
    %v5387 = vld [vmem:[#allocation4 + $0x8] sm:$0xff]
    %v5388 = vld [vmem:[#allocation4 + $0x10] sm:$0xff]
    %v5389 = vld [vmem:[#allocation4 + $0x18] sm:$0xff]
    %v5390 = vld [vmem:[#allocation4 + $0x20] sm:$0xff]
    %v5391 = vld [vmem:[#allocation4 + $0x28] sm:$0xff]
    %v5392 = vld [vmem:[#allocation4 + $0x30] sm:$0xff]
    %v5393 = vld [vmem:[#allocation4 + $0x38] sm:$0xff]
    %v5394 = vld [vmem:[#allocation4 + $0x40] sm:$0xff]
    %v5395 = vld [vmem:[#allocation4 + $0x48] sm:$0xff]
    %v5396 = vld [vmem:[#allocation4 + $0x50] sm:$0xff]
    %v5397 = vld [vmem:[#allocation4 + $0x58] sm:$0xff]
    %v5398 = vld [vmem:[#allocation4 + $0x60] sm:$0xff]
    %v5399 = vld [vmem:[#allocation4 + $0x68] sm:$0xff]
    %v5400 = vld [vmem:[#allocation4 + $0x70] sm:$0xff]
    %v5401 = vld [vmem:[#allocation4 + $0x78] sm:$0xff]
    %v5402 = vld [vmem:[#allocation4 + $0x80] sm:$0xff]
    %v5403 = vld [vmem:[#allocation4 + $0x88] sm:$0xff]
    %v5404 = vld [vmem:[#allocation4 + $0x90] sm:$0xff]
    %v5405 = vld [vmem:[#allocation4 + $0x98] sm:$0xff]
    %v5406 = vld [vmem:[#allocation4 + $0xa0] sm:$0xff]
    %v5407 = vld [vmem:[#allocation4 + $0xa8] sm:$0xff]
    %v5408 = vld [vmem:[#allocation4 + $0xb0] sm:$0xff]
    %v5409 = vld [vmem:[#allocation4 + $0xb8] sm:$0xff]
    %v5410 = vld [vmem:[#allocation4 + $0xc0] sm:$0xff]
    %v5411 = vld [vmem:[#allocation4 + $0xc8] sm:$0xff]
    %v5412 = vld [vmem:[#allocation4 + $0xd0] sm:$0xff]
    %v5413 = vld [vmem:[#allocation4 + $0xd8] sm:$0xff]
    %v5414 = vld [vmem:[#allocation4 + $0xe0] sm:$0xff]
    %v5415 = vld [vmem:[#allocation4 + $0xe8] sm:$0xff]
    %v5416 = vld [vmem:[#allocation4 + $0xf0] sm:$0xff]
    %v5417 = vld [vmem:[#allocation4 + $0xf8] sm:$0xff]
    %v5418 = vld [vmem:[%s10] sm:$0xff]
    %v5419 = vld [vmem:[%s10 + $0x8] sm:$0xff]
    %v5420 = vld [vmem:[%s10 + $0x10] sm:$0xff]
    %v5421 = vld [vmem:[%s10 + $0x18] sm:$0xff]
    %5423 = vset.pattern.permute.xlu0 0
    %5424 = vperm.xlu0 %5423, %v5418
    %v5425 = vpop.permute.xlu0 %5424
    %5428 = vset.pattern.permute.xlu0 0
    %5429 = vperm.xlu0 %5428, %v5419
    %v5430 = vpop.permute.xlu0 %5429
    %5433 = vset.pattern.permute.xlu0 0
    %5434 = vperm.xlu0 %5433, %v5420
    %v5435 = vpop.permute.xlu0 %5434
    %5438 = vset.pattern.permute.xlu0 0
    %5439 = vperm.xlu0 %5438, %v5421
    %v5440 = vpop.permute.xlu0 %5439
    %5442 = vmatprep.subr.mxu0 0.0
    %5443 = vmatpush1.msra.mxu0 %v5386
    %5444 = vmatprep.subr.mxu0 0.0
    %5445 = vmatpush1.msra.mxu0 %v5387
    %5446 = vmatprep.subr.mxu0 0.0
    %5447 = vmatpush1.msra.mxu0 %v5388
    %5448 = vmatprep.subr.mxu0 0.0
    %5449 = vmatpush1.msra.mxu0 %v5389
    %5450 = vmatprep.subr.mxu0 0.0
    %5451 = vmatpush1.msra.mxu0 %v5390
    %5452 = vmatprep.subr.mxu0 0.0
    %5453 = vmatpush1.msra.mxu0 %v5391
    %5454 = vmatprep.subr.mxu0 0.0
    %5455 = vmatpush1.msra.mxu0 %v5392
    %5456 = vmatprep.subr.mxu0 0.0
    %5457 = vmatpush1.msra.mxu0 %v5393
    %5458 = vmatprep.subr.mxu0 0.0
    %5459 = vmatpush1.msra.mxu0 %v5394
    %5460 = vmatprep.subr.mxu0 0.0
    %5461 = vmatpush1.msra.mxu0 %v5395
    %5462 = vmatprep.subr.mxu0 0.0
    %5463 = vmatpush1.msra.mxu0 %v5396
    %5464 = vmatprep.subr.mxu0 0.0
    %5465 = vmatpush1.msra.mxu0 %v5397
    %5466 = vmatprep.subr.mxu0 0.0
    %5467 = vmatpush1.msra.mxu0 %v5398
    %5468 = vmatprep.subr.mxu0 0.0
    %5469 = vmatpush1.msra.mxu0 %v5399
    %5470 = vmatprep.subr.mxu0 0.0
    %5471 = vmatpush1.msra.mxu0 %v5400
    %5472 = vmatprep.subr.mxu0 0.0
    %5473 = vmatpush1.msra.mxu0 %v5401
    %5474 = vmatprep.subr.mxu0 0.0
    %5475 = vmatpush1.msra.mxu0 %v5402
    %5476 = vmatprep.subr.mxu0 0.0
    %5477 = vmatpush1.msra.mxu0 %v5403
    %5478 = vmatprep.subr.mxu0 0.0
    %5479 = vmatpush1.msra.mxu0 %v5404
    %5480 = vmatprep.subr.mxu0 0.0
    %5481 = vmatpush1.msra.mxu0 %v5405
    %5482 = vmatprep.subr.mxu0 0.0
    %5483 = vmatpush1.msra.mxu0 %v5406
    %5484 = vmatprep.subr.mxu0 0.0
    %5485 = vmatpush1.msra.mxu0 %v5407
    %5486 = vmatprep.subr.mxu0 0.0
    %5487 = vmatpush1.msra.mxu0 %v5408
    %5488 = vmatprep.subr.mxu0 0.0
    %5489 = vmatpush1.msra.mxu0 %v5409
    %5490 = vmatprep.subr.mxu0 0.0
    %5491 = vmatpush1.msra.mxu0 %v5410
    %5492 = vmatprep.subr.mxu0 0.0
    %5493 = vmatpush1.msra.mxu0 %v5411
    %5494 = vmatprep.subr.mxu0 0.0
    %5495 = vmatpush1.msra.mxu0 %v5412
    %5496 = vmatprep.subr.mxu0 0.0
    %5497 = vmatpush1.msra.mxu0 %v5413
    %5498 = vmatprep.subr.mxu0 0.0
    %5499 = vmatpush1.msra.mxu0 %v5414
    %5500 = vmatprep.subr.mxu0 0.0
    %5501 = vmatpush1.msra.mxu0 %v5415
    %5502 = vmatprep.subr.mxu0 0.0
    %5503 = vmatpush1.msra.mxu0 %v5416
    %5504 = vmatprep.subr.mxu0 0.0
    %5505 = vmatpush1.msra.mxu0 %v5417
    %5506 = vmatprep.mubr.f32.mxu0 %v5379
    %5507 = vmatmul.mubr.f32.gmra.mrb[0].mxu0 %v5378
    %v5508 = vpop.f32.mrb[0].mxu0
    %v5509 = vadd.f32 %v5425, %v5508
    %v5510 = vpop.f32.mrb[0].mxu0
    %5511 = vmatprep.mubr.f32.mxu0 %v5381
    %5512 = vmatmul.mubr.f32.gmra.mrb[0].mxu0 %v5380
    %v5513 = vpop.f32.mrb[0].mxu0
    %v5514 = vadd.f32 %v5430, %v5513
    %v5515 = vpop.f32.mrb[0].mxu0
    %5516 = vmatprep.mubr.f32.mxu0 %v5383
    %5517 = vmatmul.mubr.f32.gmra.mrb[0].mxu0 %v5382
    %v5518 = vpop.f32.mrb[0].mxu0
    %v5519 = vadd.f32 %v5435, %v5518
    %v5520 = vpop.f32.mrb[0].mxu0
    %5521 = vmatprep.mubr.f32.mxu0 %v5385
    %5522 = vmatmul.mubr.f32.gmra.mrb[0].mxu0 %v5384
    %v5523 = vpop.f32.mrb[0].mxu0
    %v5524 = vadd.f32 %v5440, %v5523
    %v5525 = vpop.f32.mrb[0].mxu0
    %5526 = vdwg.mxu0
    %v5527 = vmax.f32 %v5509, 0.0
    %v5528 = vmax.f32 %v5514, 0.0
    %v5529 = vmax.f32 %v5519, 0.0
    %v5530 = vmax.f32 %v5524, 0.0
    %v5531 = vld [vmem:[#allocation20] sm:$0x1]
    %v5532 = vld [vmem:[#allocation5] sm:$0x1]
    %5534 = vset.pattern.permute.xlu0 0
    %5535 = vperm.xlu0 %5534, %v5532
    %v5536 = vpop.permute.xlu0 %5535
    %v5538 = vlaneseq
    %v5539 = vshrl.u32 %v5538, 7
    %v5540 = vsub.s32 0, %v5539
    %v5541 = vrot.slane %v5536, %v5540
    %vm5542 = vcmask 261120
    %v5544 = vsel %vm5542, %v5531, 0
    %5546 = vmatprep.subr.mxu0 0.0
    %5547 = vmatpush1.msra.mxu0 %v5527
    %5548 = vmatprep.subr.mxu0 0.0
    %5549 = vmatpush1.msra.mxu0 %v5528
    %5550 = vmatprep.subr.mxu0 0.0
    %5551 = vmatpush1.msra.mxu0 %v5529
    %5552 = vmatprep.subr.mxu0 0.0
    %5553 = vmatpush1.msra.mxu0 %v5530
    %5554 = vmatprep.subr.mxu0 0.0
    %5555 = vmatpush1.msra.mxu0 0.0
    %5556 = vmatprep.subr.mxu0 0.0
    %5557 = vmatpush1.msra.mxu0 0.0
    %5558 = vmatprep.subr.mxu0 0.0
    %5559 = vmatpush1.msra.mxu0 0.0
    %5560 = vmatprep.subr.mxu0 0.0
    %5561 = vmatpush1.msra.mxu0 0.0
    %5562 = vmatprep.subr.mxu0 0.0
    %5563 = vmatpush1.msra.mxu0 0.0
    %5564 = vmatprep.subr.mxu0 0.0
    %5565 = vmatpush1.msra.mxu0 0.0
    %5566 = vmatprep.subr.mxu0 0.0
    %5567 = vmatpush1.msra.mxu0 0.0
    %5568 = vmatprep.subr.mxu0 0.0
    %5569 = vmatpush1.msra.mxu0 0.0
    %5570 = vmatprep.subr.mxu0 0.0
    %5571 = vmatpush1.msra.mxu0 0.0
    %5572 = vmatprep.subr.mxu0 0.0
    %5573 = vmatpush1.msra.mxu0 0.0
    %5574 = vmatprep.subr.mxu0 0.0
    %5575 = vmatpush1.msra.mxu0 0.0
    %5576 = vmatprep.subr.mxu0 0.0
    %5577 = vmatpush1.msra.mxu0 0.0
    %5578 = vmatprep.subr.mxu0 0.0
    %5579 = vmatpush1.msra.mxu0 0.0
    %5580 = vmatprep.subr.mxu0 0.0
    %5581 = vmatpush1.msra.mxu0 0.0
    %5582 = vmatprep.subr.mxu0 0.0
    %5583 = vmatpush1.msra.mxu0 0.0
    %5584 = vmatprep.subr.mxu0 0.0
    %5585 = vmatpush1.msra.mxu0 0.0
    %5586 = vmatprep.subr.mxu0 0.0
    %5587 = vmatpush1.msra.mxu0 0.0
    %5588 = vmatprep.subr.mxu0 0.0
    %5589 = vmatpush1.msra.mxu0 0.0
    %5590 = vmatprep.subr.mxu0 0.0
    %5591 = vmatpush1.msra.mxu0 0.0
    %5592 = vmatprep.subr.mxu0 0.0
    %5593 = vmatpush1.msra.mxu0 0.0
    %5594 = vmatprep.subr.mxu0 0.0
    %5595 = vmatpush1.msra.mxu0 0.0
    %5596 = vmatprep.subr.mxu0 0.0
    %5597 = vmatpush1.msra.mxu0 0.0
    %5598 = vmatprep.subr.mxu0 0.0
    %5599 = vmatpush1.msra.mxu0 0.0
    %5600 = vmatprep.subr.mxu0 0.0
    %5601 = vmatpush1.msra.mxu0 0.0
    %5602 = vmatprep.subr.mxu0 0.0
    %5603 = vmatpush1.msra.mxu0 0.0
    %5604 = vmatprep.subr.mxu0 0.0
    %5605 = vmatpush1.msra.mxu0 0.0
    %5606 = vmatprep.subr.mxu0 0.0
    %5607 = vmatpush1.msra.mxu0 0.0
    %5608 = vmatprep.subr.mxu0 0.0
    %5609 = vmatpush1.msra.mxu0 0.0
    %5610 = vmatprep.mubr.f32.mxu0 0.0
    %5611 = vmatmul.mubr.f32.gmra.mrb[0].mxu0 %v5544
    %v5612 = vpop.f32.mrb[0].mxu0
    %v5613 = vadd.f32 %v5541, %v5612
    %v5614 = vpop.f32.mrb[0].mxu0
    %5615 = vdwg.mxu0
    %v5616 = vmul.f32 %v5613, 0.5
    %v5617 = vtanh.pop %v5616
    %v5618 = vadd.f32 %v5617, 1.0
    %v5619 = vmul.f32 %v5618, 0.5
    %vm5620 = vcmask 57344
    %5621 = vst.msk [vmem:[#allocation21] sm:$0x1] %vm5620, %v5619
    // Predicated region
    $region90: #{tpu_custom_call.1} parent=1 // pred_check
      _
    $region91: #{tpu_custom_call.1} parent=1 // pred_check_branch
      %5623 = sbr.rel (0) target = $region93
    $region92: #{tpu_custom_call.1} parent=1 // pred_region
      %s5625 = ssub.s32 16, 16
      %5626 = vsyncadd [#allocation8], %s5625
      %s5628 = sshll.u32 [#allocation21], 4
      %s5629 = int_to_ptr.vmem [resolvable:$true] %s5628
      %5631 = dma.vmem_to_hbm [thread:$0]  %s5629, 16, %s13, [#allocation8]
    $region93: #{tpu_custom_call.1} parent=1 // pred_fallthru
      _
    // Predicated region
    $region94: #{tpu_custom_call.1} parent=1 // pred_check
      _
    $region95: #{tpu_custom_call.1} parent=1 // pred_check_branch
      %5633 = sbr.rel (0) target = $region97
    $region96: #{tpu_custom_call.1} parent=1 // pred_region
      %5634 = dma.done [#allocation8], 16
    $region97: #{tpu_custom_call.1} parent=1 // pred_fallthru
      _
    %5635 = vsyncpa [#allocation7], 1
    %5636 = vsyncpa [#allocation10], 1
    %5637 = vsyncpa [#allocation13], 1
    %5638 = vsyncpa [#allocation16], 1
    %5639 = vsyncpa [#allocation19], 1
    %5640 = vsyncpa [#allocation8], 1

</llo_original>
